<compile_context>
chip_gen: v6e
topology: v6e:2x2x1
jax: 0.10.0
libtpu: 0.0.40
codegen_flags: <defaults>
</compile_context>

<pallas_src>
import functools

import jax
import jax.numpy as jnp
from jax.experimental import pallas as pl
from jax.experimental.pallas import tpu as pltpu


def _round_up(x, m):
    return (x + m - 1) // m * m


def basic_block_kernel(x_ref, w1_ref, b1_ref, w2_ref, b2_ref, mask_ref,
                       o_ref, h_ref, *, H, W, Cp):
    Wp = W + 2          # flat-layout row stride (padded width)
    M = H * Wp          # number of flat output positions computed per image
    L = h_ref.shape[0]  # (H+3)*Wp rounded up to a multiple of 8

    def conv3x3(load_slice, w_ref):
        # 3x3 conv: 9 shifted (M, Cp) x (Cp, Cp) bf16 MXU matmuls, f32 accum.
        acc = None
        for dy in range(3):
            for dx in range(3):
                off = dy * Wp + dx
                lhs = load_slice(off).astype(jnp.bfloat16)
                part = jnp.dot(lhs, w_ref[dy * 3 + dx],
                               preferred_element_type=jnp.float32)
                acc = part if acc is None else acc + part
        return acc

    # ---- conv1 (BN1 scale folded into weights) + bias + ReLU ----
    acc1 = conv3x3(lambda off: x_ref[0, off:off + M, :], w1_ref)
    out1 = jnp.maximum(acc1 + b1_ref[...], 0.0)
    # dropout: eval mode / p=0 -> identity.

    # Zero the two junk columns of every flat row: once shifted into the
    # scratch they become conv2's left/right zero-padding columns.
    out1 = out1 * mask_ref[...]

    # ---- stage conv2's zero-padded input in the flat halo scratch ----
    # Only the border rows are zeroed (interior is fully overwritten); done
    # each step so uninitialized per-core scratch can never leak in.
    h_ref[0:Wp + 1, :] = jnp.zeros((Wp + 1, Cp), jnp.float32)
    h_ref[Wp + 1 + M:L, :] = jnp.zeros((L - (Wp + 1 + M), Cp), jnp.float32)
    h_ref[Wp + 1:Wp + 1 + M, :] = out1

    # ---- conv2 (BN2 scale folded) + bias + residual + ReLU ----
    acc2 = conv3x3(lambda off: h_ref[off:off + M, :], w2_ref)
    residual = x_ref[0, Wp + 1:Wp + 1 + M, :]
    o_ref[0] = jnp.maximum(acc2 + b2_ref[...] + residual, 0.0)


def basic_block_pallas(x_nchw, w1, g1, beta1, mean1, var1,
                       w2, g2, beta2, mean2, var2, eps=1e-5):
    """BasicBlock forward (stride=1, downsample=None, dropout p=0 / eval)."""
    N, Cin, H, W = x_nchw.shape
    Cout = w1.shape[0]
    assert Cin == Cout, "identity residual requires inplanes == planes"
    C = Cin
    Cp = _round_up(max(C, 128), 128)   # lane-dense channel padding
    Wp = W + 2
    M = H * Wp
    L = _round_up((H + 3) * Wp, 8)     # extra zero rows so all 9 taps stay in-bounds

    # activations: NCHW -> NHWC, spatial zero-pad, channel-pad, flatten (H, W)
    # into one flat axis of row stride Wp.
    x = jnp.transpose(x_nchw, (0, 2, 3, 1)).astype(jnp.float32)
    x = jnp.pad(x, ((0, 0), (1, 1), (1, 1), (0, 0)))        # (N, H+2, Wp, C)
    x = jnp.pad(x, ((0, 0), (0, 0), (0, 0), (0, Cp - C)))   # (N, H+2, Wp, Cp)
    x_flat = x.reshape(N, (H + 2) * Wp, Cp)
    x_flat = jnp.pad(x_flat, ((0, 0), (0, L - (H + 2) * Wp), (0, 0)))

    # fold BatchNorm scale into the conv weights; keep the bias separate.
    inv1 = g1 / jnp.sqrt(var1 + eps)
    inv2 = g2 / jnp.sqrt(var2 + eps)
    b1 = jnp.pad(beta1 - mean1 * inv1, (0, Cp - C)).reshape(1, Cp).astype(jnp.float32)
    b2 = jnp.pad(beta2 - mean2 * inv2, (0, Cp - C)).reshape(1, Cp).astype(jnp.float32)

    def prep_w(w, scale):
        # OIHW -> (tap, in, out); BN scale folded per output channel; bf16 MXU.
        w = w * scale[:, None, None, None]
        w = jnp.transpose(w, (2, 3, 1, 0)).reshape(9, C, C)
        w = jnp.pad(w, ((0, 0), (0, Cp - C), (0, Cp - C)))
        return w.astype(jnp.bfloat16)

    w1_t = prep_w(w1, inv1)
    w2_t = prep_w(w2, inv2)

    # per-flat-row column mask: 1 for the W real columns, 0 for the 2 junk ones.
    col = jnp.arange(M, dtype=jnp.int32) % Wp
    mask = (col < W).astype(jnp.float32).reshape(M, 1)

    kernel = functools.partial(basic_block_kernel, H=H, W=W, Cp=Cp)

    out_flat = pl.pallas_call(
        kernel,
        out_shape=jax.ShapeDtypeStruct((N, M, Cp), jnp.float32),
        grid_spec=pltpu.PrefetchScalarGridSpec(
            num_scalar_prefetch=0,
            grid=(N,),
            in_specs=[
                pl.BlockSpec((1, L, Cp), lambda n: (n, 0, 0)),   # x_flat
                pl.BlockSpec((9, Cp, Cp), lambda n: (0, 0, 0)),  # w1 (folded)
                pl.BlockSpec((1, Cp), lambda n: (0, 0)),         # b1
                pl.BlockSpec((9, Cp, Cp), lambda n: (0, 0, 0)),  # w2 (folded)
                pl.BlockSpec((1, Cp), lambda n: (0, 0)),         # b2
                pl.BlockSpec((M, 1), lambda n: (0, 0)),          # column mask
            ],
            out_specs=pl.BlockSpec((1, M, Cp), lambda n: (n, 0, 0)),
            scratch_shapes=[pltpu.VMEM((L, Cp), jnp.float32)],   # conv2 halo
        ),
        compiler_params=pltpu.CompilerParams(
            dimension_semantics=("parallel",)),
    )(x_flat, w1_t, b1, w2_t, b2, mask)

    # flat q = y*Wp + x -> (H, Wp); keep the W real columns / C real channels.
    out = out_flat.reshape(N, H, Wp, Cp)[:, :, :W, :C]
    return jnp.transpose(out, (0, 3, 1, 2))


def basic_block_reference_f32(x, w1, g1, beta1, mean1, var1,
                              w2, g2, beta2, mean2, var2, eps=1e-5):
    """Plain-JAX full-f32 reference (PyTorch eval-mode BasicBlock, NCHW)."""
    def conv(a, w):
        return jax.lax.conv_general_dilated(
            a, w, window_strides=(1, 1), padding="SAME",
            dimension_numbers=("NCHW", "OIHW", "NCHW"))

    def bn(a, g, b, m, v):
        inv = (g / jnp.sqrt(v + eps))[None, :, None, None]
        return (a - m[None, :, None, None]) * inv + b[None, :, None, None]

    out = jnp.maximum(bn(conv(x, w1), g1, beta1, mean1, var1), 0.0)
    out = bn(conv(out, w2), g2, beta2, mean2, var2)
    return jnp.maximum(out + x, 0.0)


def basic_block_reference_bf16(x, w1, g1, beta1, mean1, var1,
                               w2, g2, beta2, mean2, var2, eps=1e-5):
    """Reference at the kernel's exact precision: bf16 conv inputs / weights
    (with BN scale folded into the weights before the bf16 cast), f32
    accumulation, f32 bias / residual math.  Identical semantics to the
    PyTorch eval-mode forward up to bf16 rounding of the conv inputs."""
    def conv(a, w):
        return jax.lax.conv_general_dilated(
            a.astype(jnp.bfloat16), w.astype(jnp.bfloat16),
            window_strides=(1, 1), padding="SAME",
            dimension_numbers=("NCHW", "OIHW", "NCHW"),
            preferred_element_type=jnp.float32)

    inv1 = g1 / jnp.sqrt(var1 + eps)
    inv2 = g2 / jnp.sqrt(var2 + eps)
    b1 = (beta1 - mean1 * inv1)[None, :, None, None]
    b2 = (beta2 - mean2 * inv2)[None, :, None, None]
    out = jnp.maximum(conv(x, w1 * inv1[:, None, None, None]) + b1, 0.0)
    out = conv(out, w2 * inv2[:, None, None, None]) + b2
    return jnp.maximum(out + x, 0.0)


if __name__ == "__main__":
    # Small deterministic configuration: inplanes = planes = 8, 16x16 spatial.
    N, C, H, W = 2, 8, 16, 16
    key = jax.random.PRNGKey(0)
    keys = jax.random.split(key, 12)

    x = jax.random.normal(keys[0], (N, C, H, W), jnp.float32)

    fan = C * 3 * 3
    w1 = jax.random.normal(keys[1], (C, C, 3, 3), jnp.float32) * (2.0 / fan) ** 0.5
    w2 = jax.random.normal(keys[2], (C, C, 3, 3), jnp.float32) * (2.0 / fan) ** 0.5

    g1 = 1.0 + 0.1 * jax.random.normal(keys[3], (C,), jnp.float32)
    beta1 = 0.1 * jax.random.normal(keys[4], (C,), jnp.float32)
    mean1 = 0.05 * jax.random.normal(keys[5], (C,), jnp.float32)
    var1 = 0.9 + 0.2 * jax.random.uniform(keys[6], (C,), jnp.float32)
    g2 = 1.0 + 0.1 * jax.random.normal(keys[7], (C,), jnp.float32)
    beta2 = 0.1 * jax.random.normal(keys[8], (C,), jnp.float32)
    mean2 = 0.05 * jax.random.normal(keys[9], (C,), jnp.float32)
    var2 = 0.9 + 0.2 * jax.random.uniform(keys[10], (C,), jnp.float32)

    out = basic_block_pallas(x, w1, g1, beta1, mean1, var1,
                             w2, g2, beta2, mean2, var2)
    out = jax.block_until_ready(out)
    assert out.shape == (N, C, H, W)

    # tight check against the precision-matched reference (catches any kernel
    # indexing / folding bug; only f32 accumulation-order noise remains).
    ref_m = basic_block_reference_bf16(x, w1, g1, beta1, mean1, var1,
                                       w2, g2, beta2, mean2, var2)
    err_m = float(jnp.max(jnp.abs(out - ref_m)))
    assert err_m < 5e-3, f"mismatch vs precision-matched reference: {err_m}"

    # sanity check against the full-f32 reference (loose tolerance accounts
    # for the intentional bf16 rounding of the MXU inputs).
    ref_f = basic_block_reference_f32(x, w1, g1, beta1, mean1, var1,
                                      w2, g2, beta2, mean2, var2)
    err_f = float(jnp.max(jnp.abs(out - ref_f)))
    assert err_f < 2e-1, f"mismatch vs f32 reference: {err_f}"

    print("KERNEL_OK")
</pallas_src>

<mosaic_0001>
module attributes {stable_mosaic.version = 11 : i64} {
  func.func @basic_block_kernel(%arg0: i32, %arg1: memref<1x344x128xf32, #tpu.memory_space<vmem>>, %arg2: memref<9x128x128xbf16, #tpu.memory_space<vmem>>, %arg3: memref<1x128xf32, #tpu.memory_space<vmem>>, %arg4: memref<9x128x128xbf16, #tpu.memory_space<vmem>>, %arg5: memref<1x128xf32, #tpu.memory_space<vmem>>, %arg6: memref<288x1xf32, #tpu.memory_space<vmem>>, %arg7: memref<1x288x128xf32, #tpu.memory_space<vmem>>, %arg8: memref<344x128xf32, #tpu.memory_space<vmem>>) attributes {dimension_semantics = [#tpu.dimension_semantics<parallel>], iteration_bounds = array<i64: 2>, scalar_prefetch = 0 : i64, scratch_operands = 1 : i64, tpu.core_type = #tpu.core_type<tc>, window_params = [{transform_indices = @transform_0, window_bounds = array<i64: 1, 344, 128>}, {pipeline_mode = #tpu.pipeline_mode<synchronous>, transform_indices = @transform_1, window_bounds = array<i64: 9, 128, 128>}, {pipeline_mode = #tpu.pipeline_mode<synchronous>, transform_indices = @transform_2, window_bounds = array<i64: 1, 128>}, {pipeline_mode = #tpu.pipeline_mode<synchronous>, transform_indices = @transform_3, window_bounds = array<i64: 9, 128, 128>}, {pipeline_mode = #tpu.pipeline_mode<synchronous>, transform_indices = @transform_4, window_bounds = array<i64: 1, 128>}, {pipeline_mode = #tpu.pipeline_mode<synchronous>, transform_indices = @transform_5, window_bounds = array<i64: 288, 1>}, {transform_indices = @transform_6, window_bounds = array<i64: 1, 288, 128>}]} {
    %c0 = arith.constant 0 : index
    %c0_0 = arith.constant 0 : index
    %c0_1 = arith.constant 0 : index
    %0 = vector.load %arg1[%c0, %c0_0, %c0_1] : memref<1x344x128xf32, #tpu.memory_space<vmem>>, vector<1x288x128xf32>
    %1 = vector.shape_cast %0 : vector<1x288x128xf32> to vector<288x128xf32>
    %2 = arith.truncf %1 : vector<288x128xf32> to vector<288x128xbf16>
    %c0_2 = arith.constant 0 : index
    %c0_3 = arith.constant 0 : index
    %c0_4 = arith.constant 0 : index
    %3 = vector.load %arg2[%c0_2, %c0_3, %c0_4] : memref<9x128x128xbf16, #tpu.memory_space<vmem>>, vector<1x128x128xbf16>
    %4 = vector.shape_cast %3 : vector<1x128x128xbf16> to vector<128x128xbf16>
    %cst = arith.constant dense<0.000000e+00> : vector<288x128xf32>
    %5 = tpu.matmul %2, %4, %cst {dimension_numbers = #tpu.dot_dimension_numbers<[1], [0], [0], [1], [0, 0, 1, 1], [], []>} : vector<288x128xbf16>, vector<128x128xbf16>, vector<288x128xf32> -> vector<288x128xf32>
    %c0_5 = arith.constant 0 : index
    %c1 = arith.constant 1 : index
    %c0_6 = arith.constant 0 : index
    %6 = vector.load %arg1[%c0_5, %c1, %c0_6] : memref<1x344x128xf32, #tpu.memory_space<vmem>>, vector<1x288x128xf32>
    %7 = vector.shape_cast %6 : vector<1x288x128xf32> to vector<288x128xf32>
    %8 = arith.truncf %7 : vector<288x128xf32> to vector<288x128xbf16>
    %c1_7 = arith.constant 1 : index
    %c0_8 = arith.constant 0 : index
    %c0_9 = arith.constant 0 : index
    %9 = vector.load %arg2[%c1_7, %c0_8, %c0_9] : memref<9x128x128xbf16, #tpu.memory_space<vmem>>, vector<1x128x128xbf16>
    %10 = vector.shape_cast %9 : vector<1x128x128xbf16> to vector<128x128xbf16>
    %cst_10 = arith.constant dense<0.000000e+00> : vector<288x128xf32>
    %11 = tpu.matmul %8, %10, %cst_10 {dimension_numbers = #tpu.dot_dimension_numbers<[1], [0], [0], [1], [0, 0, 1, 1], [], []>} : vector<288x128xbf16>, vector<128x128xbf16>, vector<288x128xf32> -> vector<288x128xf32>
    %12 = arith.addf %5, %11 : vector<288x128xf32>
    %c0_11 = arith.constant 0 : index
    %c2 = arith.constant 2 : index
    %c0_12 = arith.constant 0 : index
    %13 = vector.load %arg1[%c0_11, %c2, %c0_12] : memref<1x344x128xf32, #tpu.memory_space<vmem>>, vector<1x288x128xf32>
    %14 = vector.shape_cast %13 : vector<1x288x128xf32> to vector<288x128xf32>
    %15 = arith.truncf %14 : vector<288x128xf32> to vector<288x128xbf16>
    %c2_13 = arith.constant 2 : index
    %c0_14 = arith.constant 0 : index
    %c0_15 = arith.constant 0 : index
    %16 = vector.load %arg2[%c2_13, %c0_14, %c0_15] : memref<9x128x128xbf16, #tpu.memory_space<vmem>>, vector<1x128x128xbf16>
    %17 = vector.shape_cast %16 : vector<1x128x128xbf16> to vector<128x128xbf16>
    %cst_16 = arith.constant dense<0.000000e+00> : vector<288x128xf32>
    %18 = tpu.matmul %15, %17, %cst_16 {dimension_numbers = #tpu.dot_dimension_numbers<[1], [0], [0], [1], [0, 0, 1, 1], [], []>} : vector<288x128xbf16>, vector<128x128xbf16>, vector<288x128xf32> -> vector<288x128xf32>
    %19 = arith.addf %12, %18 : vector<288x128xf32>
    %c0_17 = arith.constant 0 : index
    %c18 = arith.constant 18 : index
    %c0_18 = arith.constant 0 : index
    %20 = vector.load %arg1[%c0_17, %c18, %c0_18] : memref<1x344x128xf32, #tpu.memory_space<vmem>>, vector<1x288x128xf32>
    %21 = vector.shape_cast %20 : vector<1x288x128xf32> to vector<288x128xf32>
    %22 = arith.truncf %21 : vector<288x128xf32> to vector<288x128xbf16>
    %c3 = arith.constant 3 : index
    %c0_19 = arith.constant 0 : index
    %c0_20 = arith.constant 0 : index
    %23 = vector.load %arg2[%c3, %c0_19, %c0_20] : memref<9x128x128xbf16, #tpu.memory_space<vmem>>, vector<1x128x128xbf16>
    %24 = vector.shape_cast %23 : vector<1x128x128xbf16> to vector<128x128xbf16>
    %cst_21 = arith.constant dense<0.000000e+00> : vector<288x128xf32>
    %25 = tpu.matmul %22, %24, %cst_21 {dimension_numbers = #tpu.dot_dimension_numbers<[1], [0], [0], [1], [0, 0, 1, 1], [], []>} : vector<288x128xbf16>, vector<128x128xbf16>, vector<288x128xf32> -> vector<288x128xf32>
    %26 = arith.addf %19, %25 : vector<288x128xf32>
    %c0_22 = arith.constant 0 : index
    %c19 = arith.constant 19 : index
    %c0_23 = arith.constant 0 : index
    %27 = vector.load %arg1[%c0_22, %c19, %c0_23] : memref<1x344x128xf32, #tpu.memory_space<vmem>>, vector<1x288x128xf32>
    %28 = vector.shape_cast %27 : vector<1x288x128xf32> to vector<288x128xf32>
    %29 = arith.truncf %28 : vector<288x128xf32> to vector<288x128xbf16>
    %c4 = arith.constant 4 : index
    %c0_24 = arith.constant 0 : index
    %c0_25 = arith.constant 0 : index
    %30 = vector.load %arg2[%c4, %c0_24, %c0_25] : memref<9x128x128xbf16, #tpu.memory_space<vmem>>, vector<1x128x128xbf16>
    %31 = vector.shape_cast %30 : vector<1x128x128xbf16> to vector<128x128xbf16>
    %cst_26 = arith.constant dense<0.000000e+00> : vector<288x128xf32>
    %32 = tpu.matmul %29, %31, %cst_26 {dimension_numbers = #tpu.dot_dimension_numbers<[1], [0], [0], [1], [0, 0, 1, 1], [], []>} : vector<288x128xbf16>, vector<128x128xbf16>, vector<288x128xf32> -> vector<288x128xf32>
    %33 = arith.addf %26, %32 : vector<288x128xf32>
    %c0_27 = arith.constant 0 : index
    %c20 = arith.constant 20 : index
    %c0_28 = arith.constant 0 : index
    %34 = vector.load %arg1[%c0_27, %c20, %c0_28] : memref<1x344x128xf32, #tpu.memory_space<vmem>>, vector<1x288x128xf32>
    %35 = vector.shape_cast %34 : vector<1x288x128xf32> to vector<288x128xf32>
    %36 = arith.truncf %35 : vector<288x128xf32> to vector<288x128xbf16>
    %c5 = arith.constant 5 : index
    %c0_29 = arith.constant 0 : index
    %c0_30 = arith.constant 0 : index
    %37 = vector.load %arg2[%c5, %c0_29, %c0_30] : memref<9x128x128xbf16, #tpu.memory_space<vmem>>, vector<1x128x128xbf16>
    %38 = vector.shape_cast %37 : vector<1x128x128xbf16> to vector<128x128xbf16>
    %cst_31 = arith.constant dense<0.000000e+00> : vector<288x128xf32>
    %39 = tpu.matmul %36, %38, %cst_31 {dimension_numbers = #tpu.dot_dimension_numbers<[1], [0], [0], [1], [0, 0, 1, 1], [], []>} : vector<288x128xbf16>, vector<128x128xbf16>, vector<288x128xf32> -> vector<288x128xf32>
    %40 = arith.addf %33, %39 : vector<288x128xf32>
    %c0_32 = arith.constant 0 : index
    %c36 = arith.constant 36 : index
    %c0_33 = arith.constant 0 : index
    %41 = vector.load %arg1[%c0_32, %c36, %c0_33] : memref<1x344x128xf32, #tpu.memory_space<vmem>>, vector<1x288x128xf32>
    %42 = vector.shape_cast %41 : vector<1x288x128xf32> to vector<288x128xf32>
    %43 = arith.truncf %42 : vector<288x128xf32> to vector<288x128xbf16>
    %c6 = arith.constant 6 : index
    %c0_34 = arith.constant 0 : index
    %c0_35 = arith.constant 0 : index
    %44 = vector.load %arg2[%c6, %c0_34, %c0_35] : memref<9x128x128xbf16, #tpu.memory_space<vmem>>, vector<1x128x128xbf16>
    %45 = vector.shape_cast %44 : vector<1x128x128xbf16> to vector<128x128xbf16>
    %cst_36 = arith.constant dense<0.000000e+00> : vector<288x128xf32>
    %46 = tpu.matmul %43, %45, %cst_36 {dimension_numbers = #tpu.dot_dimension_numbers<[1], [0], [0], [1], [0, 0, 1, 1], [], []>} : vector<288x128xbf16>, vector<128x128xbf16>, vector<288x128xf32> -> vector<288x128xf32>
    %47 = arith.addf %40, %46 : vector<288x128xf32>
    %c0_37 = arith.constant 0 : index
    %c37 = arith.constant 37 : index
    %c0_38 = arith.constant 0 : index
    %48 = vector.load %arg1[%c0_37, %c37, %c0_38] : memref<1x344x128xf32, #tpu.memory_space<vmem>>, vector<1x288x128xf32>
    %49 = vector.shape_cast %48 : vector<1x288x128xf32> to vector<288x128xf32>
    %50 = arith.truncf %49 : vector<288x128xf32> to vector<288x128xbf16>
    %c7 = arith.constant 7 : index
    %c0_39 = arith.constant 0 : index
    %c0_40 = arith.constant 0 : index
    %51 = vector.load %arg2[%c7, %c0_39, %c0_40] : memref<9x128x128xbf16, #tpu.memory_space<vmem>>, vector<1x128x128xbf16>
    %52 = vector.shape_cast %51 : vector<1x128x128xbf16> to vector<128x128xbf16>
    %cst_41 = arith.constant dense<0.000000e+00> : vector<288x128xf32>
    %53 = tpu.matmul %50, %52, %cst_41 {dimension_numbers = #tpu.dot_dimension_numbers<[1], [0], [0], [1], [0, 0, 1, 1], [], []>} : vector<288x128xbf16>, vector<128x128xbf16>, vector<288x128xf32> -> vector<288x128xf32>
    %54 = arith.addf %47, %53 : vector<288x128xf32>
    %c0_42 = arith.constant 0 : index
    %c38 = arith.constant 38 : index
    %c0_43 = arith.constant 0 : index
    %55 = vector.load %arg1[%c0_42, %c38, %c0_43] : memref<1x344x128xf32, #tpu.memory_space<vmem>>, vector<1x288x128xf32>
    %56 = vector.shape_cast %55 : vector<1x288x128xf32> to vector<288x128xf32>
    %57 = arith.truncf %56 : vector<288x128xf32> to vector<288x128xbf16>
    %c8 = arith.constant 8 : index
    %c0_44 = arith.constant 0 : index
    %c0_45 = arith.constant 0 : index
    %58 = vector.load %arg2[%c8, %c0_44, %c0_45] : memref<9x128x128xbf16, #tpu.memory_space<vmem>>, vector<1x128x128xbf16>
    %59 = vector.shape_cast %58 : vector<1x128x128xbf16> to vector<128x128xbf16>
    %cst_46 = arith.constant dense<0.000000e+00> : vector<288x128xf32>
    %60 = tpu.matmul %57, %59, %cst_46 {dimension_numbers = #tpu.dot_dimension_numbers<[1], [0], [0], [1], [0, 0, 1, 1], [], []>} : vector<288x128xbf16>, vector<128x128xbf16>, vector<288x128xf32> -> vector<288x128xf32>
    %61 = arith.addf %54, %60 : vector<288x128xf32>
    %c0_47 = arith.constant 0 : index
    %c0_48 = arith.constant 0 : index
    %62 = vector.load %arg3[%c0_47, %c0_48] : memref<1x128xf32, #tpu.memory_space<vmem>>, vector<1x128xf32>
    %63 = vector.broadcast %62 : vector<1x128xf32> to vector<288x128xf32>
    %64 = arith.addf %61, %63 : vector<288x128xf32>
    %cst_49 = arith.constant 0.000000e+00 : f32
    %65 = vector.broadcast %cst_49 : f32 to vector<288x128xf32>
    %66 = arith.maximumf %64, %65 : vector<288x128xf32>
    %c0_50 = arith.constant 0 : index
    %c0_51 = arith.constant 0 : index
    %67 = vector.load %arg6[%c0_50, %c0_51] : memref<288x1xf32, #tpu.memory_space<vmem>>, vector<288x1xf32>
    %68 = vector.broadcast %67 : vector<288x1xf32> to vector<288x128xf32>
    %69 = arith.mulf %66, %68 : vector<288x128xf32>
    %cst_52 = arith.constant 0.000000e+00 : f32
    %70 = vector.broadcast %cst_52 : f32 to vector<19x128xf32>
    %c0_53 = arith.constant 0 : index
    %c0_54 = arith.constant 0 : index
    %71 = vector.load %arg8[%c0_53, %c0_54] : memref<344x128xf32, #tpu.memory_space<vmem>>, vector<19x128xf32>
    tpu.vector_store %arg8[%c0_53, %c0_54], %70 {strides = array<i32>} : memref<344x128xf32, #tpu.memory_space<vmem>>, vector<19x128xf32>,
    %cst_55 = arith.constant 0.000000e+00 : f32
    %72 = vector.broadcast %cst_55 : f32 to vector<37x128xf32>
    %c307 = arith.constant 307 : index
    %c0_56 = arith.constant 0 : index
    %73 = vector.load %arg8[%c307, %c0_56] : memref<344x128xf32, #tpu.memory_space<vmem>>, vector<37x128xf32>
    tpu.vector_store %arg8[%c307, %c0_56], %72 {strides = array<i32>} : memref<344x128xf32, #tpu.memory_space<vmem>>, vector<37x128xf32>,
    %c19_57 = arith.constant 19 : index
    %c0_58 = arith.constant 0 : index
    %74 = vector.load %arg8[%c19_57, %c0_58] : memref<344x128xf32, #tpu.memory_space<vmem>>, vector<288x128xf32>
    tpu.vector_store %arg8[%c19_57, %c0_58], %69 {strides = array<i32>} : memref<344x128xf32, #tpu.memory_space<vmem>>, vector<288x128xf32>,
    %c0_59 = arith.constant 0 : index
    %c0_60 = arith.constant 0 : index
    %75 = vector.load %arg8[%c0_59, %c0_60] : memref<344x128xf32, #tpu.memory_space<vmem>>, vector<288x128xf32>
    %76 = arith.truncf %75 : vector<288x128xf32> to vector<288x128xbf16>
    %c0_61 = arith.constant 0 : index
    %c0_62 = arith.constant 0 : index
    %c0_63 = arith.constant 0 : index
    %77 = vector.load %arg4[%c0_61, %c0_62, %c0_63] : memref<9x128x128xbf16, #tpu.memory_space<vmem>>, vector<1x128x128xbf16>
    %78 = vector.shape_cast %77 : vector<1x128x128xbf16> to vector<128x128xbf16>
    %cst_64 = arith.constant dense<0.000000e+00> : vector<288x128xf32>
    %79 = tpu.matmul %76, %78, %cst_64 {dimension_numbers = #tpu.dot_dimension_numbers<[1], [0], [0], [1], [0, 0, 1, 1], [], []>} : vector<288x128xbf16>, vector<128x128xbf16>, vector<288x128xf32> -> vector<288x128xf32>
    %c1_65 = arith.constant 1 : index
    %c0_66 = arith.constant 0 : index
    %80 = vector.load %arg8[%c1_65, %c0_66] : memref<344x128xf32, #tpu.memory_space<vmem>>, vector<288x128xf32>
    %81 = arith.truncf %80 : vector<288x128xf32> to vector<288x128xbf16>
    %c1_67 = arith.constant 1 : index
    %c0_68 = arith.constant 0 : index
    %c0_69 = arith.constant 0 : index
    %82 = vector.load %arg4[%c1_67, %c0_68, %c0_69] : memref<9x128x128xbf16, #tpu.memory_space<vmem>>, vector<1x128x128xbf16>
    %83 = vector.shape_cast %82 : vector<1x128x128xbf16> to vector<128x128xbf16>
    %cst_70 = arith.constant dense<0.000000e+00> : vector<288x128xf32>
    %84 = tpu.matmul %81, %83, %cst_70 {dimension_numbers = #tpu.dot_dimension_numbers<[1], [0], [0], [1], [0, 0, 1, 1], [], []>} : vector<288x128xbf16>, vector<128x128xbf16>, vector<288x128xf32> -> vector<288x128xf32>
    %85 = arith.addf %79, %84 : vector<288x128xf32>
    %c2_71 = arith.constant 2 : index
    %c0_72 = arith.constant 0 : index
    %86 = vector.load %arg8[%c2_71, %c0_72] : memref<344x128xf32, #tpu.memory_space<vmem>>, vector<288x128xf32>
    %87 = arith.truncf %86 : vector<288x128xf32> to vector<288x128xbf16>
    %c2_73 = arith.constant 2 : index
    %c0_74 = arith.constant 0 : index
    %c0_75 = arith.constant 0 : index
    %88 = vector.load %arg4[%c2_73, %c0_74, %c0_75] : memref<9x128x128xbf16, #tpu.memory_space<vmem>>, vector<1x128x128xbf16>
    %89 = vector.shape_cast %88 : vector<1x128x128xbf16> to vector<128x128xbf16>
    %cst_76 = arith.constant dense<0.000000e+00> : vector<288x128xf32>
    %90 = tpu.matmul %87, %89, %cst_76 {dimension_numbers = #tpu.dot_dimension_numbers<[1], [0], [0], [1], [0, 0, 1, 1], [], []>} : vector<288x128xbf16>, vector<128x128xbf16>, vector<288x128xf32> -> vector<288x128xf32>
    %91 = arith.addf %85, %90 : vector<288x128xf32>
    %c18_77 = arith.constant 18 : index
    %c0_78 = arith.constant 0 : index
    %92 = vector.load %arg8[%c18_77, %c0_78] : memref<344x128xf32, #tpu.memory_space<vmem>>, vector<288x128xf32>
    %93 = arith.truncf %92 : vector<288x128xf32> to vector<288x128xbf16>
    %c3_79 = arith.constant 3 : index
    %c0_80 = arith.constant 0 : index
    %c0_81 = arith.constant 0 : index
    %94 = vector.load %arg4[%c3_79, %c0_80, %c0_81] : memref<9x128x128xbf16, #tpu.memory_space<vmem>>, vector<1x128x128xbf16>
    %95 = vector.shape_cast %94 : vector<1x128x128xbf16> to vector<128x128xbf16>
    %cst_82 = arith.constant dense<0.000000e+00> : vector<288x128xf32>
    %96 = tpu.matmul %93, %95, %cst_82 {dimension_numbers = #tpu.dot_dimension_numbers<[1], [0], [0], [1], [0, 0, 1, 1], [], []>} : vector<288x128xbf16>, vector<128x128xbf16>, vector<288x128xf32> -> vector<288x128xf32>
    %97 = arith.addf %91, %96 : vector<288x128xf32>
    %c19_83 = arith.constant 19 : index
    %c0_84 = arith.constant 0 : index
    %98 = vector.load %arg8[%c19_83, %c0_84] : memref<344x128xf32, #tpu.memory_space<vmem>>, vector<288x128xf32>
    %99 = arith.truncf %98 : vector<288x128xf32> to vector<288x128xbf16>
    %c4_85 = arith.constant 4 : index
    %c0_86 = arith.constant 0 : index
    %c0_87 = arith.constant 0 : index
    %100 = vector.load %arg4[%c4_85, %c0_86, %c0_87] : memref<9x128x128xbf16, #tpu.memory_space<vmem>>, vector<1x128x128xbf16>
    %101 = vector.shape_cast %100 : vector<1x128x128xbf16> to vector<128x128xbf16>
    %cst_88 = arith.constant dense<0.000000e+00> : vector<288x128xf32>
    %102 = tpu.matmul %99, %101, %cst_88 {dimension_numbers = #tpu.dot_dimension_numbers<[1], [0], [0], [1], [0, 0, 1, 1], [], []>} : vector<288x128xbf16>, vector<128x128xbf16>, vector<288x128xf32> -> vector<288x128xf32>
    %103 = arith.addf %97, %102 : vector<288x128xf32>
    %c20_89 = arith.constant 20 : index
    %c0_90 = arith.constant 0 : index
    %104 = vector.load %arg8[%c20_89, %c0_90] : memref<344x128xf32, #tpu.memory_space<vmem>>, vector<288x128xf32>
    %105 = arith.truncf %104 : vector<288x128xf32> to vector<288x128xbf16>
    %c5_91 = arith.constant 5 : index
    %c0_92 = arith.constant 0 : index
    %c0_93 = arith.constant 0 : index
    %106 = vector.load %arg4[%c5_91, %c0_92, %c0_93] : memref<9x128x128xbf16, #tpu.memory_space<vmem>>, vector<1x128x128xbf16>
    %107 = vector.shape_cast %106 : vector<1x128x128xbf16> to vector<128x128xbf16>
    %cst_94 = arith.constant dense<0.000000e+00> : vector<288x128xf32>
    %108 = tpu.matmul %105, %107, %cst_94 {dimension_numbers = #tpu.dot_dimension_numbers<[1], [0], [0], [1], [0, 0, 1, 1], [], []>} : vector<288x128xbf16>, vector<128x128xbf16>, vector<288x128xf32> -> vector<288x128xf32>
    %109 = arith.addf %103, %108 : vector<288x128xf32>
    %c36_95 = arith.constant 36 : index
    %c0_96 = arith.constant 0 : index
    %110 = vector.load %arg8[%c36_95, %c0_96] : memref<344x128xf32, #tpu.memory_space<vmem>>, vector<288x128xf32>
    %111 = arith.truncf %110 : vector<288x128xf32> to vector<288x128xbf16>
    %c6_97 = arith.constant 6 : index
    %c0_98 = arith.constant 0 : index
    %c0_99 = arith.constant 0 : index
    %112 = vector.load %arg4[%c6_97, %c0_98, %c0_99] : memref<9x128x128xbf16, #tpu.memory_space<vmem>>, vector<1x128x128xbf16>
    %113 = vector.shape_cast %112 : vector<1x128x128xbf16> to vector<128x128xbf16>
    %cst_100 = arith.constant dense<0.000000e+00> : vector<288x128xf32>
    %114 = tpu.matmul %111, %113, %cst_100 {dimension_numbers = #tpu.dot_dimension_numbers<[1], [0], [0], [1], [0, 0, 1, 1], [], []>} : vector<288x128xbf16>, vector<128x128xbf16>, vector<288x128xf32> -> vector<288x128xf32>
    %115 = arith.addf %109, %114 : vector<288x128xf32>
    %c37_101 = arith.constant 37 : index
    %c0_102 = arith.constant 0 : index
    %116 = vector.load %arg8[%c37_101, %c0_102] : memref<344x128xf32, #tpu.memory_space<vmem>>, vector<288x128xf32>
    %117 = arith.truncf %116 : vector<288x128xf32> to vector<288x128xbf16>
    %c7_103 = arith.constant 7 : index
    %c0_104 = arith.constant 0 : index
    %c0_105 = arith.constant 0 : index
    %118 = vector.load %arg4[%c7_103, %c0_104, %c0_105] : memref<9x128x128xbf16, #tpu.memory_space<vmem>>, vector<1x128x128xbf16>
    %119 = vector.shape_cast %118 : vector<1x128x128xbf16> to vector<128x128xbf16>
    %cst_106 = arith.constant dense<0.000000e+00> : vector<288x128xf32>
    %120 = tpu.matmul %117, %119, %cst_106 {dimension_numbers = #tpu.dot_dimension_numbers<[1], [0], [0], [1], [0, 0, 1, 1], [], []>} : vector<288x128xbf16>, vector<128x128xbf16>, vector<288x128xf32> -> vector<288x128xf32>
    %121 = arith.addf %115, %120 : vector<288x128xf32>
    %c38_107 = arith.constant 38 : index
    %c0_108 = arith.constant 0 : index
    %122 = vector.load %arg8[%c38_107, %c0_108] : memref<344x128xf32, #tpu.memory_space<vmem>>, vector<288x128xf32>
    %123 = arith.truncf %122 : vector<288x128xf32> to vector<288x128xbf16>
    %c8_109 = arith.constant 8 : index
    %c0_110 = arith.constant 0 : index
    %c0_111 = arith.constant 0 : index
    %124 = vector.load %arg4[%c8_109, %c0_110, %c0_111] : memref<9x128x128xbf16, #tpu.memory_space<vmem>>, vector<1x128x128xbf16>
    %125 = vector.shape_cast %124 : vector<1x128x128xbf16> to vector<128x128xbf16>
    %cst_112 = arith.constant dense<0.000000e+00> : vector<288x128xf32>
    %126 = tpu.matmul %123, %125, %cst_112 {dimension_numbers = #tpu.dot_dimension_numbers<[1], [0], [0], [1], [0, 0, 1, 1], [], []>} : vector<288x128xbf16>, vector<128x128xbf16>, vector<288x128xf32> -> vector<288x128xf32>
    %127 = arith.addf %121, %126 : vector<288x128xf32>
    %c0_113 = arith.constant 0 : index
    %c19_114 = arith.constant 19 : index
    %c0_115 = arith.constant 0 : index
    %128 = vector.load %arg1[%c0_113, %c19_114, %c0_115] : memref<1x344x128xf32, #tpu.memory_space<vmem>>, vector<1x288x128xf32>
    %129 = vector.shape_cast %128 : vector<1x288x128xf32> to vector<288x128xf32>
    %c0_116 = arith.constant 0 : index
    %c0_117 = arith.constant 0 : index
    %130 = vector.load %arg5[%c0_116, %c0_117] : memref<1x128xf32, #tpu.memory_space<vmem>>, vector<1x128xf32>
    %131 = vector.broadcast %130 : vector<1x128xf32> to vector<288x128xf32>
    %132 = arith.addf %127, %131 : vector<288x128xf32>
    %133 = arith.addf %132, %129 : vector<288x128xf32>
    %cst_118 = arith.constant 0.000000e+00 : f32
    %134 = vector.broadcast %cst_118 : f32 to vector<288x128xf32>
    %135 = arith.maximumf %133, %134 : vector<288x128xf32>
    %c0_119 = arith.constant 0 : index
    %c0_120 = arith.constant 0 : index
    %c0_121 = arith.constant 0 : index
    %136 = vector.load %arg7[%c0_119, %c0_120, %c0_121] : memref<1x288x128xf32, #tpu.memory_space<vmem>>, vector<1x288x128xf32>
    %137 = vector.shape_cast %136 : vector<1x288x128xf32> to vector<288x128xf32>
    %138 = vector.shape_cast %135 : vector<288x128xf32> to vector<1x288x128xf32>
    tpu.vector_store %arg7[%c0_119, %c0_120, %c0_121], %138 {strides = array<i32>} : memref<1x288x128xf32, #tpu.memory_space<vmem>>, vector<1x288x128xf32>,
    return
  }
  func.func @transform_0(%arg0: i32) -> (i32, i32, i32) {
    %c0_i32 = arith.constant 0 : i32
    %c0_i32_0 = arith.constant 0 : i32
    %c0_i32_1 = arith.constant 0 : i32
    return %arg0, %c0_i32, %c0_i32_0 : i32, i32, i32
  }
  func.func @transform_1(%arg0: i32) -> (i32, i32, i32) {
    %c0_i32 = arith.constant 0 : i32
    %c0_i32_0 = arith.constant 0 : i32
    %c0_i32_1 = arith.constant 0 : i32
    %c0_i32_2 = arith.constant 0 : i32
    return %c0_i32, %c0_i32_0, %c0_i32_1 : i32, i32, i32
  }
  func.func @transform_2(%arg0: i32) -> (i32, i32) {
    %c0_i32 = arith.constant 0 : i32
    %c0_i32_0 = arith.constant 0 : i32
    %c0_i32_1 = arith.constant 0 : i32
    return %c0_i32, %c0_i32_0 : i32, i32
  }
  func.func @transform_3(%arg0: i32) -> (i32, i32, i32) {
    %c0_i32 = arith.constant 0 : i32
    %c0_i32_0 = arith.constant 0 : i32
    %c0_i32_1 = arith.constant 0 : i32
    %c0_i32_2 = arith.constant 0 : i32
    return %c0_i32, %c0_i32_0, %c0_i32_1 : i32, i32, i32
  }
  func.func @transform_4(%arg0: i32) -> (i32, i32) {
    %c0_i32 = arith.constant 0 : i32
    %c0_i32_0 = arith.constant 0 : i32
    %c0_i32_1 = arith.constant 0 : i32
    return %c0_i32, %c0_i32_0 : i32, i32
  }
  func.func @transform_5(%arg0: i32) -> (i32, i32) {
    %c0_i32 = arith.constant 0 : i32
    %c0_i32_0 = arith.constant 0 : i32
    %c0_i32_1 = arith.constant 0 : i32
    return %c0_i32, %c0_i32_0 : i32, i32
  }
  func.func @transform_6(%arg0: i32) -> (i32, i32, i32) {
    %c0_i32 = arith.constant 0 : i32
    %c0_i32_0 = arith.constant 0 : i32
    %c0_i32_1 = arith.constant 0 : i32
    return %arg0, %c0_i32, %c0_i32_0 : i32, i32, i32
  }
}

</mosaic_0001>

<llo_original>
// kernel: tpu_custom_call.1
$region0: #{tpu_custom_call.1}
  #allocation0 [shape = 'u32[]', space=smem, size = 0x4, offset = 0x4, fixed_abs, tag = 'smem constant byte address 0x4 - core index']
  #allocation1 [shape = 'u32[144,128]{1,0:T(1,128)}', space=vmem, size = 0x12000, scoped, tag = 'internal scratch']
  #allocation2 [shape = 'f32[344,128]{1,0:T(8,128)}', space=vmem, size = 0x2b000, scoped, tag = 'scratch operand']
  %s0 = inlined_call_operand.hbm [shape: f32[2,344,128], index: 0, kind: input, shape index: {}]
  %s1 = inlined_call_operand.hbm [shape: bf16[9,128,128], index: 1, kind: input, shape index: {}]
  %s2 = inlined_call_operand.vmem [shape: f32[1,128], index: 2, kind: input, shape index: {}]
  %s3 = inlined_call_operand.hbm [shape: bf16[9,128,128], index: 3, kind: input, shape index: {}]
  %s4 = inlined_call_operand.vmem [shape: f32[1,128], index: 4, kind: input, shape index: {}]
  %s5 = inlined_call_operand.vmem [shape: f32[288,1], index: 5, kind: input, shape index: {}]
  %s6 = inlined_call_operand.hbm [shape: f32[2,288,128], index: 6, kind: output, shape index: {}]
  %s7 = sld [smem:[#allocation0]]
  $region69: #{tpu_custom_call.1} parent=0
    _
  %s9 = ssub.s32 1, %s7
  %s10 = scalar_select 0, %s9, %s7
  $region1: #{tpu_custom_call.1} parent=0
    #allocation3 [shape = 'u8[352256]{0}', space=vmem, size = 0x56000, scoped, tag = 'input window, operand 0']
    #allocation4 [shape = 's32[2]{0}', space=sflag, size = 0x8, scoped, tag = 'scoped memory for tpu_custom_call.1']
    #allocation5 [shape = 's32[2]{0}', space=sflag, size = 0x8, scoped, tag = 'scoped memory for tpu_custom_call.1']
    #allocation6 [shape = 'u8[294912]{0}', space=vmem, size = 0x48000, scoped, tag = 'input window, operand 1, single buffered']
    #allocation7 [shape = 's32[1]{0}', space=sflag, size = 0x4, scoped, tag = 'scoped memory for tpu_custom_call.1']
    #allocation8 [shape = 'u8[294912]{0}', space=vmem, size = 0x48000, scoped, tag = 'input window, operand 3, single buffered']
    #allocation9 [shape = 'u8[294912]{0}', space=vmem, size = 0x48000, scoped, tag = 'output window, operand 0']
    %11 = vsyncpa [#allocation4], 0
    %s12 = scalar_lea.sflag [#allocation4], 1
    %13 = vsyncpa %s12, 0
    %14 = vsyncpa [#allocation7], 0
    %15 = vsyncpa [#allocation5], 0
    %s16 = scalar_lea.sflag [#allocation5], 1
    %17 = vsyncpa %s16, 0
    loop: start=0, step=1, limit=4
    $region2: #{tpu_custom_call.1} parent=1 // loop_pre_header
      _
    $region3: #{tpu_custom_call.1} parent=1 // loop_header
      %s19 = sphi 0, %s23
      %p20 = scmp.ge.s32.totalorder %s19, 4
      %s29 = sphi 0, %s31
      %s32 = sphi 0, %s29
      %s33 = sphi 0, %s32
      %s49 = sphi 0, %s33
      %s53 = sphi 0, %s53
      %s55 = sphi 0, %s53
      %s56 = sphi 0, %s55
      %s70 = sphi 0, %s56
      %s74 = sphi 0, %s74
      %s76 = sphi 0, %s74
      %s77 = sphi 0, %s76
      %s91 = sphi 0, %s77
      %s95 = sphi 0, %s95
      %s97 = sphi 0, %s95
      %s98 = sphi 0, %s97
      %s112 = sphi 0, %s98
      %s116 = sphi 0, %s116
      %s118 = sphi 0, %s116
      %s119 = sphi 0, %s118
      %s133 = sphi 0, %s119
      %s137 = sphi 0, %s137
      %s139 = sphi 0, %s137
      %s140 = sphi 0, %s139
      %s154 = sphi 0, %s140
      %s160 = sphi 0, %s162
      %s163 = sphi 0, %s160
      %s164 = sphi 0, %s163
      %s180 = sphi 0, %s164
    $region4: #{tpu_custom_call.1} parent=1 // loop_header_branch
      %22 = sbr.rel (%p20) target = $region8
    $region5: #{tpu_custom_call.1} parent=1 // loop_body
      %s24 = ssub.s32 %s19, 1
      %s25 = ssub.s32 %s19, 2
      %s26 = sadd.s32 %s19, 1
      %s27 = ssub.s32 %s19, %s26
      %p28 = scmp.eq.s32.totalorder %s27, 0
      %s30 = sadd.s32 %s29, 1
      %s31 = scalar_select %p28, %s29, %s30
      %p34 = pneg %p28
      %p35 = scmp.eq.s32.totalorder %s19, 1
      %p36 = por %p34, %p35
      %p37 = scmp.ne.s32.totalorder %s29, %s32
      %p38 = scmp.eq.s32.totalorder %s19, 0
      %p39 = por %p37, %p38
      %p40 = scmp.ne.s32.totalorder %s29, %s32
      %p41 = scmp.eq.s32.totalorder %s24, 1
      %p42 = por %p40, %p41
      %p43 = scmp.ne.s32.totalorder %s32, %s33
      %p44 = scmp.eq.s32.totalorder %s24, 0
      %p45 = por %p43, %p44
      %p46 = scmp.ne.s32.totalorder %s32, %s33
      %p47 = scmp.eq.s32.totalorder %s25, 1
      %p48 = por %p46, %p47
      %p50 = scmp.ne.s32.totalorder %s33, %s49
      %p51 = scmp.eq.s32.totalorder %s25, 0
      %p52 = por %p50, %p51
      %s54 = sadd.s32 %s53, 1
      %p57 = scmp.eq.s32.totalorder %s19, 1
      %p58 = scmp.ne.s32.totalorder %s53, %s55
      %p59 = scmp.eq.s32.totalorder %s19, 0
      %p60 = por %p58, %p59
      %p61 = scmp.ne.s32.totalorder %s53, %s55
      %p62 = scmp.eq.s32.totalorder %s24, 1
      %p63 = por %p61, %p62
      %p64 = scmp.ne.s32.totalorder %s55, %s56
      %p65 = scmp.eq.s32.totalorder %s24, 0
      %p66 = por %p64, %p65
      %p67 = scmp.ne.s32.totalorder %s55, %s56
      %p68 = scmp.eq.s32.totalorder %s25, 1
      %p69 = por %p67, %p68
      %p71 = scmp.ne.s32.totalorder %s56, %s70
      %p72 = scmp.eq.s32.totalorder %s25, 0
      %p73 = por %p71, %p72
      %s75 = sadd.s32 %s74, 1
      %p78 = scmp.eq.s32.totalorder %s19, 1
      %p79 = scmp.ne.s32.totalorder %s74, %s76
      %p80 = scmp.eq.s32.totalorder %s19, 0
      %p81 = por %p79, %p80
      %p82 = scmp.ne.s32.totalorder %s74, %s76
      %p83 = scmp.eq.s32.totalorder %s24, 1
      %p84 = por %p82, %p83
      %p85 = scmp.ne.s32.totalorder %s76, %s77
      %p86 = scmp.eq.s32.totalorder %s24, 0
      %p87 = por %p85, %p86
      %p88 = scmp.ne.s32.totalorder %s76, %s77
      %p89 = scmp.eq.s32.totalorder %s25, 1
      %p90 = por %p88, %p89
      %p92 = scmp.ne.s32.totalorder %s77, %s91
      %p93 = scmp.eq.s32.totalorder %s25, 0
      %p94 = por %p92, %p93
      %s96 = sadd.s32 %s95, 1
      %p99 = scmp.eq.s32.totalorder %s19, 1
      %p100 = scmp.ne.s32.totalorder %s95, %s97
      %p101 = scmp.eq.s32.totalorder %s19, 0
      %p102 = por %p100, %p101
      %p103 = scmp.ne.s32.totalorder %s95, %s97
      %p104 = scmp.eq.s32.totalorder %s24, 1
      %p105 = por %p103, %p104
      %p106 = scmp.ne.s32.totalorder %s97, %s98
      %p107 = scmp.eq.s32.totalorder %s24, 0
      %p108 = por %p106, %p107
      %p109 = scmp.ne.s32.totalorder %s97, %s98
      %p110 = scmp.eq.s32.totalorder %s25, 1
      %p111 = por %p109, %p110
      %p113 = scmp.ne.s32.totalorder %s98, %s112
      %p114 = scmp.eq.s32.totalorder %s25, 0
      %p115 = por %p113, %p114
      %s117 = sadd.s32 %s116, 1
      %p120 = scmp.eq.s32.totalorder %s19, 1
      %p121 = scmp.ne.s32.totalorder %s116, %s118
      %p122 = scmp.eq.s32.totalorder %s19, 0
      %p123 = por %p121, %p122
      %p124 = scmp.ne.s32.totalorder %s116, %s118
      %p125 = scmp.eq.s32.totalorder %s24, 1
      %p126 = por %p124, %p125
      %p127 = scmp.ne.s32.totalorder %s118, %s119
      %p128 = scmp.eq.s32.totalorder %s24, 0
      %p129 = por %p127, %p128
      %p130 = scmp.ne.s32.totalorder %s118, %s119
      %p131 = scmp.eq.s32.totalorder %s25, 1
      %p132 = por %p130, %p131
      %p134 = scmp.ne.s32.totalorder %s119, %s133
      %p135 = scmp.eq.s32.totalorder %s25, 0
      %p136 = por %p134, %p135
      %s138 = sadd.s32 %s137, 1
      %p141 = scmp.eq.s32.totalorder %s19, 1
      %p142 = scmp.ne.s32.totalorder %s137, %s139
      %p143 = scmp.eq.s32.totalorder %s19, 0
      %p144 = por %p142, %p143
      %p145 = scmp.ne.s32.totalorder %s137, %s139
      %p146 = scmp.eq.s32.totalorder %s24, 1
      %p147 = por %p145, %p146
      %p148 = scmp.ne.s32.totalorder %s139, %s140
      %p149 = scmp.eq.s32.totalorder %s24, 0
      %p150 = por %p148, %p149
      %p151 = scmp.ne.s32.totalorder %s139, %s140
      %p152 = scmp.eq.s32.totalorder %s25, 1
      %p153 = por %p151, %p152
      %p155 = scmp.ne.s32.totalorder %s140, %s154
      %p156 = scmp.eq.s32.totalorder %s25, 0
      %p157 = por %p155, %p156
      %s158 = ssub.s32 %s19, %s26
      %p159 = scmp.eq.s32.totalorder %s158, 0
      %s161 = sadd.s32 %s160, 1
      %s162 = scalar_select %p159, %s160, %s161
      %p165 = pneg %p159
      %p166 = scmp.eq.s32.totalorder %s19, 1
      %p167 = por %p165, %p166
      %p168 = scmp.ne.s32.totalorder %s160, %s163
      %p169 = scmp.eq.s32.totalorder %s19, 0
      %p170 = por %p168, %p169
      %p171 = scmp.ne.s32.totalorder %s160, %s163
      %p172 = scmp.eq.s32.totalorder %s24, 1
      %p173 = por %p171, %p172
      %p174 = scmp.ne.s32.totalorder %s163, %s164
      %p175 = scmp.eq.s32.totalorder %s24, 0
      %p176 = por %p174, %p175
      %p177 = scmp.ne.s32.totalorder %s163, %s164
      %p178 = scmp.eq.s32.totalorder %s25, 1
      %p179 = por %p177, %p178
      %p181 = scmp.ne.s32.totalorder %s164, %s180
      %p182 = scmp.eq.s32.totalorder %s25, 0
      %p183 = por %p181, %p182
      %p184 = scmp.le.s32.totalorder 1, %s19
      %p185 = scmp.lt.s32.totalorder %s19, 3
      %p186 = pnand %p184, %p185
      %p187 = pneg %p186
      // Predicated region
      $region9: #{tpu_custom_call.1} parent=5 // pred_check
        _
      $region10: #{tpu_custom_call.1} parent=5 // pred_check_branch
        %189 = sbr.rel (%p186) target = $region12
      $region11: #{tpu_custom_call.1} parent=5 // pred_region
        %s190 = ssub.s32 %s19, 1
        // Predicated region
        $region13: #{tpu_custom_call.1} parent=11 // pred_check
          %p191 = pneg %p66
        $region14: #{tpu_custom_call.1} parent=11 // pred_check_branch
          %193 = sbr.rel (%p191) target = $region16
        $region15: #{tpu_custom_call.1} parent=11 // pred_region
          %s195 = ssub.s32 9216, 9216
          %196 = vsyncadd [#allocation7], %s195
          %s197 = sshll.u32 [#allocation6], 4
          %s198 = int_to_ptr.vmem [resolvable:$true] %s197
          %203 = dma.hbm_to_vmem [thread:$0]  %s1, 9216, %s198, [#allocation7], 64, 64, 4
        $region16: #{tpu_custom_call.1} parent=11 // pred_fallthru
          _
        // Predicated region
        $region17: #{tpu_custom_call.1} parent=11 // pred_check
          %p204 = pneg %p87
        $region18: #{tpu_custom_call.1} parent=11 // pred_check_branch
          %206 = sbr.rel (%p204) target = $region20
        $region19: #{tpu_custom_call.1} parent=11 // pred_region
          _
        $region20: #{tpu_custom_call.1} parent=11 // pred_fallthru
          _
        // Predicated region
        $region21: #{tpu_custom_call.1} parent=11 // pred_check
          %p207 = pneg %p108
        $region22: #{tpu_custom_call.1} parent=11 // pred_check_branch
          %209 = sbr.rel (%p207) target = $region24
        $region23: #{tpu_custom_call.1} parent=11 // pred_region
          %s211 = ssub.s32 9216, 9216
          %212 = vsyncadd [#allocation7], %s211
          %s213 = sshll.u32 [#allocation8], 4
          %s214 = int_to_ptr.vmem [resolvable:$true] %s213
          %219 = dma.hbm_to_vmem [thread:$0]  %s3, 9216, %s214, [#allocation7], 64, 64, 4
        $region24: #{tpu_custom_call.1} parent=11 // pred_fallthru
          _
        // Predicated region
        $region25: #{tpu_custom_call.1} parent=11 // pred_check
          %p220 = pneg %p129
        $region26: #{tpu_custom_call.1} parent=11 // pred_check_branch
          %222 = sbr.rel (%p220) target = $region28
        $region27: #{tpu_custom_call.1} parent=11 // pred_region
          _
        $region28: #{tpu_custom_call.1} parent=11 // pred_fallthru
          _
        // Predicated region
        $region29: #{tpu_custom_call.1} parent=11 // pred_check
          %p223 = pneg %p150
        $region30: #{tpu_custom_call.1} parent=11 // pred_check_branch
          %225 = sbr.rel (%p223) target = $region32
        $region31: #{tpu_custom_call.1} parent=11 // pred_region
          _
        $region32: #{tpu_custom_call.1} parent=11 // pred_fallthru
          _
      $region12: #{tpu_custom_call.1} parent=5 // pred_fallthru
        _
      %p226 = scmp.lt.s32.totalorder %s19, 2
      // Predicated region
      $region33: #{tpu_custom_call.1} parent=5 // pred_check
        %p227 = pneg %p226
      $region34: #{tpu_custom_call.1} parent=5 // pred_check_branch
        %229 = sbr.rel (%p227) target = $region36
      $region35: #{tpu_custom_call.1} parent=5 // pred_region
        // Predicated region
        $region37: #{tpu_custom_call.1} parent=35 // pred_check
          %p230 = pneg %p39
        $region38: #{tpu_custom_call.1} parent=35 // pred_check_branch
          %232 = sbr.rel (%p230) target = $region40
        $region39: #{tpu_custom_call.1} parent=35 // pred_region
          %s233 = sand.u32 %s29, 1
          %s234 = scalar_lea.sflag [#allocation4], %s233
          %s235 = sand.u32 %s29, 1
          %s236 = smul.addr %s235, 344
          %s237 = scalar_lea.vmem [#allocation3], %s236
          %s239 = ssub.s32 5504, 5504
          %240 = vsyncadd %s234, %s239
          %s241 = smul.addr %s19, 43
          %s242 = smul.addr %s241, 128
          %s243 = scalar_lea.hbm %s0, %s242
          %s244 = sshll.u32 %s237, 4
          %s245 = int_to_ptr.vmem [resolvable:$true] %s244
          %250 = dma.hbm_to_vmem [thread:$0]  %s243, 5504, %s245, %s234, 128, 128, 8
        $region40: #{tpu_custom_call.1} parent=35 // pred_fallthru
          _
      $region36: #{tpu_custom_call.1} parent=5 // pred_fallthru
        _
      %p251 = scmp.le.s32.totalorder 1, %s19
      %p252 = scmp.lt.s32.totalorder %s19, 3
      %p253 = pnand %p251, %p252
      %p254 = pneg %p253
      // Predicated region
      $region41: #{tpu_custom_call.1} parent=5 // pred_check
        _
      $region42: #{tpu_custom_call.1} parent=5 // pred_check_branch
        %256 = sbr.rel (%p253) target = $region44
      $region43: #{tpu_custom_call.1} parent=5 // pred_region
        %s257 = ssub.s32 %s19, 1
        %s258 = sand.u32 %s32, 1
        %s259 = scalar_lea.sflag [#allocation4], %s258
        %s260 = sand.u32 %s32, 1
        %s261 = smul.addr %s260, 344
        %s262 = scalar_lea.vmem [#allocation3], %s261
        // Predicated region
        $region45: #{tpu_custom_call.1} parent=43 // pred_check
          %p263 = pneg %p45
        $region46: #{tpu_custom_call.1} parent=43 // pred_check_branch
          %265 = sbr.rel (%p263) target = $region48
        $region47: #{tpu_custom_call.1} parent=43 // pred_region
          %266 = dma.done %s259, 5504
        $region48: #{tpu_custom_call.1} parent=43 // pred_fallthru
          _
        // Predicated region
        $region49: #{tpu_custom_call.1} parent=43 // pred_check
          %p267 = pneg %p66
        $region50: #{tpu_custom_call.1} parent=43 // pred_check_branch
          %269 = sbr.rel (%p267) target = $region52
        $region51: #{tpu_custom_call.1} parent=43 // pred_region
          %270 = dma.done [#allocation7], 9216
        $region52: #{tpu_custom_call.1} parent=43 // pred_fallthru
          _
        // Predicated region
        $region53: #{tpu_custom_call.1} parent=43 // pred_check
          %p271 = pneg %p108
        $region54: #{tpu_custom_call.1} parent=43 // pred_check_branch
          %273 = sbr.rel (%p271) target = $region56
        $region55: #{tpu_custom_call.1} parent=43 // pred_region
          %274 = dma.done [#allocation7], 9216
        $region56: #{tpu_custom_call.1} parent=43 // pred_fallthru
          _
        %s275 = sand.u32 %s32, 1
        %s276 = scalar_lea.sflag [#allocation4], %s275
        %s277 = sand.u32 %s32, 1
        %s278 = smul.addr %s277, 344
        %s279 = scalar_lea.vmem [#allocation3], %s278
        %p280 = pneg %p45
        %p281 = pneg %p42
        %p282 = pneg %p66
        %p283 = pneg %p63
        %p284 = pneg %p87
        %p285 = pneg %p84
        %p286 = pneg %p108
        %p287 = pneg %p105
        %p288 = pneg %p129
        %p289 = pneg %p126
        %p290 = pneg %p150
        %p291 = pneg %p147
        %p292 = pneg %p176
        %p293 = pneg %p173
        %s294 = sand.u32 %s163, 1
        %s295 = scalar_lea.sflag [#allocation5], %s294
        %s296 = sand.u32 %s163, 1
        %s297 = smul.addr %s296, 288
        %s298 = scalar_lea.vmem [#allocation9], %s297
        %v300 = vld [vmem:[%s262] sm:$0xff]
        %v301 = vld [vmem:[%s262 + $0x8] sm:$0xff]
        %v302 = vld [vmem:[%s262 + $0x10] sm:$0xff]
        %v303 = vld [vmem:[%s262 + $0x18] sm:$0xff]
        %v304 = vld [vmem:[%s262 + $0x20] sm:$0xff]
        %v305 = vld [vmem:[%s262 + $0x28] sm:$0xff]
        %v306 = vld [vmem:[%s262 + $0x30] sm:$0xff]
        %v307 = vld [vmem:[%s262 + $0x38] sm:$0xff]
        %v308 = vld [vmem:[%s262 + $0x40] sm:$0xff]
        %v309 = vld [vmem:[%s262 + $0x48] sm:$0xff]
        %v310 = vld [vmem:[%s262 + $0x50] sm:$0xff]
        %v311 = vld [vmem:[%s262 + $0x58] sm:$0xff]
        %v312 = vld [vmem:[%s262 + $0x60] sm:$0xff]
        %v313 = vld [vmem:[%s262 + $0x68] sm:$0xff]
        %v314 = vld [vmem:[%s262 + $0x70] sm:$0xff]
        %v315 = vld [vmem:[%s262 + $0x78] sm:$0xff]
        %v316 = vld [vmem:[%s262 + $0x80] sm:$0xff]
        %v317 = vld [vmem:[%s262 + $0x88] sm:$0xff]
        %v318 = vld [vmem:[%s262 + $0x90] sm:$0xff]
        %v319 = vld [vmem:[%s262 + $0x98] sm:$0xff]
        %v320 = vld [vmem:[%s262 + $0xa0] sm:$0xff]
        %v321 = vld [vmem:[%s262 + $0xa8] sm:$0xff]
        %v322 = vld [vmem:[%s262 + $0xb0] sm:$0xff]
        %v323 = vld [vmem:[%s262 + $0xb8] sm:$0xff]
        %v324 = vld [vmem:[%s262 + $0xc0] sm:$0xff]
        %v325 = vld [vmem:[%s262 + $0xc8] sm:$0xff]
        %v326 = vld [vmem:[%s262 + $0xd0] sm:$0xff]
        %v327 = vld [vmem:[%s262 + $0xd8] sm:$0xff]
        %v328 = vld [vmem:[%s262 + $0xe0] sm:$0xff]
        %v329 = vld [vmem:[%s262 + $0xe8] sm:$0xff]
        %v330 = vld [vmem:[%s262 + $0xf0] sm:$0xff]
        %v331 = vld [vmem:[%s262 + $0xf8] sm:$0xff]
        %v332 = vld [vmem:[%s262 + $0x100] sm:$0xff]
        %v333 = vld [vmem:[%s262 + $0x108] sm:$0xff]
        %v334 = vld [vmem:[%s262 + $0x110] sm:$0xff]
        %v335 = vld [vmem:[%s262 + $0x118] sm:$0xff]
        %v336 = vpack.c.bf16 %v301, %v300
        %v337 = vpack.c.bf16 %v303, %v302
        %v338 = vpack.c.bf16 %v305, %v304
        %v339 = vpack.c.bf16 %v307, %v306
        %v340 = vpack.c.bf16 %v309, %v308
        %v341 = vpack.c.bf16 %v311, %v310
        %v342 = vpack.c.bf16 %v313, %v312
        %v343 = vpack.c.bf16 %v315, %v314
        %v344 = vpack.c.bf16 %v317, %v316
        %v345 = vpack.c.bf16 %v319, %v318
        %v346 = vpack.c.bf16 %v321, %v320
        %v347 = vpack.c.bf16 %v323, %v322
        %v348 = vpack.c.bf16 %v325, %v324
        %v349 = vpack.c.bf16 %v327, %v326
        %v350 = vpack.c.bf16 %v329, %v328
        %v351 = vpack.c.bf16 %v331, %v330
        %v352 = vpack.c.bf16 %v333, %v332
        %v353 = vpack.c.bf16 %v335, %v334
        %v354 = vld [vmem:[#allocation6] sm:$0xf]
        %v355 = vld [vmem:[#allocation6 + $0x4] sm:$0xf]
        %v356 = vld [vmem:[#allocation6 + $0x8] sm:$0xf]
        %v357 = vld [vmem:[#allocation6 + $0xc] sm:$0xf]
        %v358 = vld [vmem:[#allocation6 + $0x10] sm:$0xf]
        %v359 = vld [vmem:[#allocation6 + $0x14] sm:$0xf]
        %v360 = vld [vmem:[#allocation6 + $0x18] sm:$0xf]
        %v361 = vld [vmem:[#allocation6 + $0x1c] sm:$0xf]
        %v362 = vld [vmem:[#allocation6 + $0x20] sm:$0xf]
        %v363 = vld [vmem:[#allocation6 + $0x24] sm:$0xf]
        %v364 = vld [vmem:[#allocation6 + $0x28] sm:$0xf]
        %v365 = vld [vmem:[#allocation6 + $0x2c] sm:$0xf]
        %v366 = vld [vmem:[#allocation6 + $0x30] sm:$0xf]
        %v367 = vld [vmem:[#allocation6 + $0x34] sm:$0xf]
        %v368 = vld [vmem:[#allocation6 + $0x38] sm:$0xf]
        %v369 = vld [vmem:[#allocation6 + $0x3c] sm:$0xf]
        %v370 = vld [vmem:[%s262 + $0x1] sm:$0xff]
        %v371 = vld [vmem:[%s262 + $0x9] sm:$0xff]
        %v372 = vld [vmem:[%s262 + $0x11] sm:$0xff]
        %v373 = vld [vmem:[%s262 + $0x19] sm:$0xff]
        %v374 = vld [vmem:[%s262 + $0x21] sm:$0xff]
        %v375 = vld [vmem:[%s262 + $0x29] sm:$0xff]
        %v376 = vld [vmem:[%s262 + $0x31] sm:$0xff]
        %v377 = vld [vmem:[%s262 + $0x39] sm:$0xff]
        %v378 = vld [vmem:[%s262 + $0x41] sm:$0xff]
        %v379 = vld [vmem:[%s262 + $0x49] sm:$0xff]
        %v380 = vld [vmem:[%s262 + $0x51] sm:$0xff]
        %v381 = vld [vmem:[%s262 + $0x59] sm:$0xff]
        %v382 = vld [vmem:[%s262 + $0x61] sm:$0xff]
        %v383 = vld [vmem:[%s262 + $0x69] sm:$0xff]
        %v384 = vld [vmem:[%s262 + $0x71] sm:$0xff]
        %v385 = vld [vmem:[%s262 + $0x79] sm:$0xff]
        %v386 = vld [vmem:[%s262 + $0x81] sm:$0xff]
        %v387 = vld [vmem:[%s262 + $0x89] sm:$0xff]
        %v388 = vld [vmem:[%s262 + $0x91] sm:$0xff]
        %v389 = vld [vmem:[%s262 + $0x99] sm:$0xff]
        %v390 = vld [vmem:[%s262 + $0xa1] sm:$0xff]
        %v391 = vld [vmem:[%s262 + $0xa9] sm:$0xff]
        %v392 = vld [vmem:[%s262 + $0xb1] sm:$0xff]
        %v393 = vld [vmem:[%s262 + $0xb9] sm:$0xff]
        %v394 = vld [vmem:[%s262 + $0xc1] sm:$0xff]
        %v395 = vld [vmem:[%s262 + $0xc9] sm:$0xff]
        %v396 = vld [vmem:[%s262 + $0xd1] sm:$0xff]
        %v397 = vld [vmem:[%s262 + $0xd9] sm:$0xff]
        %v398 = vld [vmem:[%s262 + $0xe1] sm:$0xff]
        %v399 = vld [vmem:[%s262 + $0xe9] sm:$0xff]
        %v400 = vld [vmem:[%s262 + $0xf1] sm:$0xff]
        %v401 = vld [vmem:[%s262 + $0xf9] sm:$0xff]
        %v402 = vld [vmem:[%s262 + $0x101] sm:$0xff]
        %v403 = vld [vmem:[%s262 + $0x109] sm:$0xff]
        %v404 = vld [vmem:[%s262 + $0x111] sm:$0xff]
        %v405 = vld [vmem:[%s262 + $0x119] sm:$0xff]
        %v406 = vpack.c.bf16 %v371, %v370
        %v407 = vpack.c.bf16 %v373, %v372
        %v408 = vpack.c.bf16 %v375, %v374
        %v409 = vpack.c.bf16 %v377, %v376
        %v410 = vpack.c.bf16 %v379, %v378
        %v411 = vpack.c.bf16 %v381, %v380
        %v412 = vpack.c.bf16 %v383, %v382
        %v413 = vpack.c.bf16 %v385, %v384
        %v414 = vpack.c.bf16 %v387, %v386
        %v415 = vpack.c.bf16 %v389, %v388
        %v416 = vpack.c.bf16 %v391, %v390
        %v417 = vpack.c.bf16 %v393, %v392
        %v418 = vpack.c.bf16 %v395, %v394
        %v419 = vpack.c.bf16 %v397, %v396
        %v420 = vpack.c.bf16 %v399, %v398
        %v421 = vpack.c.bf16 %v401, %v400
        %v422 = vpack.c.bf16 %v403, %v402
        %v423 = vpack.c.bf16 %v405, %v404
        %s424 = scalar_lea.vmem [#allocation6], 64
        %v425 = vld [vmem:[%s424] sm:$0xf]
        %v426 = vld [vmem:[%s424 + $0x4] sm:$0xf]
        %v427 = vld [vmem:[%s424 + $0x8] sm:$0xf]
        %v428 = vld [vmem:[%s424 + $0xc] sm:$0xf]
        %v429 = vld [vmem:[%s424 + $0x10] sm:$0xf]
        %v430 = vld [vmem:[%s424 + $0x14] sm:$0xf]
        %v431 = vld [vmem:[%s424 + $0x18] sm:$0xf]
        %v432 = vld [vmem:[%s424 + $0x1c] sm:$0xf]
        %v433 = vld [vmem:[%s424 + $0x20] sm:$0xf]
        %v434 = vld [vmem:[%s424 + $0x24] sm:$0xf]
        %v435 = vld [vmem:[%s424 + $0x28] sm:$0xf]
        %v436 = vld [vmem:[%s424 + $0x2c] sm:$0xf]
        %v437 = vld [vmem:[%s424 + $0x30] sm:$0xf]
        %v438 = vld [vmem:[%s424 + $0x34] sm:$0xf]
        %v439 = vld [vmem:[%s424 + $0x38] sm:$0xf]
        %v440 = vld [vmem:[%s424 + $0x3c] sm:$0xf]
        %v457 = vunpack.c.l.b16 %v425
        %v458 = vunpack.c.l.b16 %v426
        %v459 = vunpack.c.l.b16 %v427
        %v460 = vunpack.c.l.b16 %v428
        %v461 = vunpack.c.l.b16 %v429
        %v462 = vunpack.c.l.b16 %v430
        %v463 = vunpack.c.l.b16 %v431
        %v464 = vunpack.c.l.b16 %v432
        %v465 = vunpack.c.l.b16 %v433
        %v466 = vunpack.c.l.b16 %v434
        %v467 = vunpack.c.l.b16 %v435
        %v468 = vunpack.c.l.b16 %v436
        %v469 = vunpack.c.l.b16 %v437
        %v470 = vunpack.c.l.b16 %v438
        %v471 = vunpack.c.l.b16 %v439
        %v472 = vunpack.c.l.b16 %v440
        %v473 = vpack.c.b16 %v458, %v457
        %v474 = vpack.c.b16 %v460, %v459
        %v475 = vpack.c.b16 %v462, %v461
        %v476 = vpack.c.b16 %v464, %v463
        %v477 = vpack.c.b16 %v466, %v465
        %v478 = vpack.c.b16 %v468, %v467
        %v479 = vpack.c.b16 %v470, %v469
        %v480 = vpack.c.b16 %v472, %v471
        %489 = vmatprep.subr.bf16.mxu0 0
        %490 = vmatpush1.bf16.msra.mxu0 %v480
        %491 = vmatprep.subr.bf16.mxu0 0
        %492 = vmatpush1.bf16.msra.mxu0 %v479
        %493 = vmatprep.subr.bf16.mxu0 0
        %494 = vmatpush1.bf16.msra.mxu0 %v478
        %495 = vmatprep.subr.bf16.mxu0 0
        %496 = vmatpush1.bf16.msra.mxu0 %v477
        %497 = vmatprep.subr.bf16.mxu0 0
        %498 = vmatpush1.bf16.msra.mxu0 %v476
        %499 = vmatprep.subr.bf16.mxu0 0
        %500 = vmatpush1.bf16.msra.mxu0 %v475
        %501 = vmatprep.subr.bf16.mxu0 0
        %502 = vmatpush1.bf16.msra.mxu0 %v474
        %503 = vmatprep.subr.bf16.mxu0 0
        %504 = vmatpush1.bf16.msra.mxu0 %v473
        %505 = vmatprep.subr.bf16.mxu0 0
        %506 = vmatpush2.bf16.msra.mxu0 0
        %507 = vmatprep.subr.bf16.mxu0 0
        %508 = vmatpush2.bf16.msra.mxu0 0
        %509 = vmatprep.subr.bf16.mxu0 0
        %510 = vmatpush2.bf16.msra.mxu0 0
        %511 = vmatprep.subr.bf16.mxu0 0
        %512 = vmatpush2.bf16.msra.mxu0 0
        %513 = vmatprep.subr.bf16.mxu0 0
        %514 = vmatpush2.bf16.msra.mxu0 0
        %515 = vmatprep.subr.bf16.mxu0 0
        %516 = vmatpush2.bf16.msra.mxu0 0
        %517 = vmatprep.subr.bf16.mxu0 0
        %518 = vmatpush2.bf16.msra.mxu0 0
        %519 = vmatprep.subr.bf16.mxu0 0
        %520 = vmatpush2.bf16.msra.mxu0 0
        %521 = vmatprep.mubr.bf16.mxu0 0
        %522 = vmatmul.mubr.bf16.gmra.mxu0 %v406
        %v523 = vpop.f32.mrf.mxu0
        %v524 = vadd.f32 0.0, %v523
        %v525 = vpop.f32.mrf.mxu0
        %v526 = vpop.f32.mrf.mxu0
        %v527 = vadd.f32 0.0, %v526
        %v528 = vpop.f32.mrf.mxu0
        %529 = vmatprep.mubr.bf16.mxu0 0
        %530 = vmatmul.mubr.bf16.gmra.mxu0 %v407
        %v531 = vpop.f32.mrf.mxu0
        %v532 = vadd.f32 0.0, %v531
        %v533 = vpop.f32.mrf.mxu0
        %v534 = vpop.f32.mrf.mxu0
        %v535 = vadd.f32 0.0, %v534
        %v536 = vpop.f32.mrf.mxu0
        %537 = vmatprep.mubr.bf16.mxu0 0
        %538 = vmatmul.mubr.bf16.gmra.mxu0 %v408
        %v539 = vpop.f32.mrf.mxu0
        %v540 = vadd.f32 0.0, %v539
        %v541 = vpop.f32.mrf.mxu0
        %v542 = vpop.f32.mrf.mxu0
        %v543 = vadd.f32 0.0, %v542
        %v544 = vpop.f32.mrf.mxu0
        %545 = vmatprep.mubr.bf16.mxu0 0
        %546 = vmatmul.mubr.bf16.gmra.mxu0 %v409
        %v547 = vpop.f32.mrf.mxu0
        %v548 = vadd.f32 0.0, %v547
        %v549 = vpop.f32.mrf.mxu0
        %v550 = vpop.f32.mrf.mxu0
        %v551 = vadd.f32 0.0, %v550
        %v552 = vpop.f32.mrf.mxu0
        %553 = vmatprep.mubr.bf16.mxu0 0
        %554 = vmatmul.mubr.bf16.gmra.mxu0 %v410
        %v555 = vpop.f32.mrf.mxu0
        %v556 = vadd.f32 0.0, %v555
        %v557 = vpop.f32.mrf.mxu0
        %v558 = vpop.f32.mrf.mxu0
        %v559 = vadd.f32 0.0, %v558
        %v560 = vpop.f32.mrf.mxu0
        %561 = vmatprep.mubr.bf16.mxu0 0
        %562 = vmatmul.mubr.bf16.gmra.mxu0 %v411
        %v563 = vpop.f32.mrf.mxu0
        %v564 = vadd.f32 0.0, %v563
        %v565 = vpop.f32.mrf.mxu0
        %v566 = vpop.f32.mrf.mxu0
        %v567 = vadd.f32 0.0, %v566
        %v568 = vpop.f32.mrf.mxu0
        %569 = vmatprep.mubr.bf16.mxu0 0
        %570 = vmatmul.mubr.bf16.gmra.mxu0 %v412
        %v571 = vpop.f32.mrf.mxu0
        %v572 = vadd.f32 0.0, %v571
        %v573 = vpop.f32.mrf.mxu0
        %v574 = vpop.f32.mrf.mxu0
        %v575 = vadd.f32 0.0, %v574
        %v576 = vpop.f32.mrf.mxu0
        %577 = vmatprep.mubr.bf16.mxu0 0
        %578 = vmatmul.mubr.bf16.gmra.mxu0 %v413
        %v579 = vpop.f32.mrf.mxu0
        %v580 = vadd.f32 0.0, %v579
        %v581 = vpop.f32.mrf.mxu0
        %v582 = vpop.f32.mrf.mxu0
        %v583 = vadd.f32 0.0, %v582
        %v584 = vpop.f32.mrf.mxu0
        %585 = vmatprep.mubr.bf16.mxu0 0
        %586 = vmatmul.mubr.bf16.gmra.mxu0 %v414
        %v587 = vpop.f32.mrf.mxu0
        %v588 = vadd.f32 0.0, %v587
        %v589 = vpop.f32.mrf.mxu0
        %v590 = vpop.f32.mrf.mxu0
        %v591 = vadd.f32 0.0, %v590
        %v592 = vpop.f32.mrf.mxu0
        %593 = vmatprep.mubr.bf16.mxu0 0
        %594 = vmatmul.mubr.bf16.gmra.mxu0 %v415
        %v595 = vpop.f32.mrf.mxu0
        %v596 = vadd.f32 0.0, %v595
        %v597 = vpop.f32.mrf.mxu0
        %v598 = vpop.f32.mrf.mxu0
        %v599 = vadd.f32 0.0, %v598
        %v600 = vpop.f32.mrf.mxu0
        %601 = vmatprep.mubr.bf16.mxu0 0
        %602 = vmatmul.mubr.bf16.gmra.mxu0 %v416
        %v603 = vpop.f32.mrf.mxu0
        %v604 = vadd.f32 0.0, %v603
        %v605 = vpop.f32.mrf.mxu0
        %v606 = vpop.f32.mrf.mxu0
        %v607 = vadd.f32 0.0, %v606
        %v608 = vpop.f32.mrf.mxu0
        %609 = vmatprep.mubr.bf16.mxu0 0
        %610 = vmatmul.mubr.bf16.gmra.mxu0 %v417
        %v611 = vpop.f32.mrf.mxu0
        %v612 = vadd.f32 0.0, %v611
        %v613 = vpop.f32.mrf.mxu0
        %v614 = vpop.f32.mrf.mxu0
        %v615 = vadd.f32 0.0, %v614
        %v616 = vpop.f32.mrf.mxu0
        %617 = vmatprep.mubr.bf16.mxu0 0
        %618 = vmatmul.mubr.bf16.gmra.mxu0 %v418
        %v619 = vpop.f32.mrf.mxu0
        %v620 = vadd.f32 0.0, %v619
        %v621 = vpop.f32.mrf.mxu0
        %v622 = vpop.f32.mrf.mxu0
        %v623 = vadd.f32 0.0, %v622
        %v624 = vpop.f32.mrf.mxu0
        %625 = vmatprep.mubr.bf16.mxu0 0
        %626 = vmatmul.mubr.bf16.gmra.mxu0 %v419
        %v627 = vpop.f32.mrf.mxu0
        %v628 = vadd.f32 0.0, %v627
        %v629 = vpop.f32.mrf.mxu0
        %v630 = vpop.f32.mrf.mxu0
        %v631 = vadd.f32 0.0, %v630
        %v632 = vpop.f32.mrf.mxu0
        %633 = vmatprep.mubr.bf16.mxu0 0
        %634 = vmatmul.mubr.bf16.gmra.mxu0 %v420
        %v635 = vpop.f32.mrf.mxu0
        %v636 = vadd.f32 0.0, %v635
        %v637 = vpop.f32.mrf.mxu0
        %v638 = vpop.f32.mrf.mxu0
        %v639 = vadd.f32 0.0, %v638
        %v640 = vpop.f32.mrf.mxu0
        %641 = vmatprep.mubr.bf16.mxu0 0
        %642 = vmatmul.mubr.bf16.gmra.mxu0 %v421
        %v643 = vpop.f32.mrf.mxu0
        %v644 = vadd.f32 0.0, %v643
        %v645 = vpop.f32.mrf.mxu0
        %v646 = vpop.f32.mrf.mxu0
        %v647 = vadd.f32 0.0, %v646
        %v648 = vpop.f32.mrf.mxu0
        %649 = vmatprep.mubr.bf16.mxu0 0
        %650 = vmatmul.mubr.bf16.gmra.mxu0 %v422
        %v651 = vpop.f32.mrf.mxu0
        %v652 = vadd.f32 0.0, %v651
        %v653 = vpop.f32.mrf.mxu0
        %v654 = vpop.f32.mrf.mxu0
        %v655 = vadd.f32 0.0, %v654
        %v656 = vpop.f32.mrf.mxu0
        %657 = vmatprep.mubr.bf16.mxu0 0
        %658 = vmatmul.mubr.bf16.gmra.mxu0 %v423
        %v659 = vpop.f32.mrf.mxu0
        %v660 = vadd.f32 0.0, %v659
        %v661 = vpop.f32.mrf.mxu0
        %v662 = vpop.f32.mrf.mxu0
        %v663 = vadd.f32 0.0, %v662
        %v664 = vpop.f32.mrf.mxu0
        %665 = vdwg.mxu0
        %v682 = vunpack.c.l.b16 %v354
        %v683 = vunpack.c.l.b16 %v355
        %v684 = vunpack.c.l.b16 %v356
        %v685 = vunpack.c.l.b16 %v357
        %v686 = vunpack.c.l.b16 %v358
        %v687 = vunpack.c.l.b16 %v359
        %v688 = vunpack.c.l.b16 %v360
        %v689 = vunpack.c.l.b16 %v361
        %v690 = vunpack.c.l.b16 %v362
        %v691 = vunpack.c.l.b16 %v363
        %v692 = vunpack.c.l.b16 %v364
        %v693 = vunpack.c.l.b16 %v365
        %v694 = vunpack.c.l.b16 %v366
        %v695 = vunpack.c.l.b16 %v367
        %v696 = vunpack.c.l.b16 %v368
        %v697 = vunpack.c.l.b16 %v369
        %v698 = vpack.c.b16 %v683, %v682
        %v699 = vpack.c.b16 %v685, %v684
        %v700 = vpack.c.b16 %v687, %v686
        %v701 = vpack.c.b16 %v689, %v688
        %v702 = vpack.c.b16 %v691, %v690
        %v703 = vpack.c.b16 %v693, %v692
        %v704 = vpack.c.b16 %v695, %v694
        %v705 = vpack.c.b16 %v697, %v696
        %714 = vmatprep.subr.bf16.mxu0 0
        %715 = vmatpush1.bf16.msra.mxu0 %v705
        %716 = vmatprep.subr.bf16.mxu0 0
        %717 = vmatpush1.bf16.msra.mxu0 %v704
        %718 = vmatprep.subr.bf16.mxu0 0
        %719 = vmatpush1.bf16.msra.mxu0 %v703
        %720 = vmatprep.subr.bf16.mxu0 0
        %721 = vmatpush1.bf16.msra.mxu0 %v702
        %722 = vmatprep.subr.bf16.mxu0 0
        %723 = vmatpush1.bf16.msra.mxu0 %v701
        %724 = vmatprep.subr.bf16.mxu0 0
        %725 = vmatpush1.bf16.msra.mxu0 %v700
        %726 = vmatprep.subr.bf16.mxu0 0
        %727 = vmatpush1.bf16.msra.mxu0 %v699
        %728 = vmatprep.subr.bf16.mxu0 0
        %729 = vmatpush1.bf16.msra.mxu0 %v698
        %730 = vmatprep.subr.bf16.mxu0 0
        %731 = vmatpush2.bf16.msra.mxu0 0
        %732 = vmatprep.subr.bf16.mxu0 0
        %733 = vmatpush2.bf16.msra.mxu0 0
        %734 = vmatprep.subr.bf16.mxu0 0
        %735 = vmatpush2.bf16.msra.mxu0 0
        %736 = vmatprep.subr.bf16.mxu0 0
        %737 = vmatpush2.bf16.msra.mxu0 0
        %738 = vmatprep.subr.bf16.mxu0 0
        %739 = vmatpush2.bf16.msra.mxu0 0
        %740 = vmatprep.subr.bf16.mxu0 0
        %741 = vmatpush2.bf16.msra.mxu0 0
        %742 = vmatprep.subr.bf16.mxu0 0
        %743 = vmatpush2.bf16.msra.mxu0 0
        %744 = vmatprep.subr.bf16.mxu0 0
        %745 = vmatpush2.bf16.msra.mxu0 0
        %746 = vmatprep.mubr.bf16.mxu0 0
        %747 = vmatmul.mubr.bf16.gmra.mxu0 %v336
        %v748 = vpop.f32.mrf.mxu0
        %v749 = vadd.f32 %v524, %v748
        %v750 = vpop.f32.mrf.mxu0
        %v751 = vpop.f32.mrf.mxu0
        %v752 = vadd.f32 %v527, %v751
        %v753 = vpop.f32.mrf.mxu0
        %754 = vmatprep.mubr.bf16.mxu0 0
        %755 = vmatmul.mubr.bf16.gmra.mxu0 %v337
        %v756 = vpop.f32.mrf.mxu0
        %v757 = vadd.f32 %v532, %v756
        %v758 = vpop.f32.mrf.mxu0
        %v759 = vpop.f32.mrf.mxu0
        %v760 = vadd.f32 %v535, %v759
        %v761 = vpop.f32.mrf.mxu0
        %762 = vmatprep.mubr.bf16.mxu0 0
        %763 = vmatmul.mubr.bf16.gmra.mxu0 %v338
        %v764 = vpop.f32.mrf.mxu0
        %v765 = vadd.f32 %v540, %v764
        %v766 = vpop.f32.mrf.mxu0
        %v767 = vpop.f32.mrf.mxu0
        %v768 = vadd.f32 %v543, %v767
        %v769 = vpop.f32.mrf.mxu0
        %770 = vmatprep.mubr.bf16.mxu0 0
        %771 = vmatmul.mubr.bf16.gmra.mxu0 %v339
        %v772 = vpop.f32.mrf.mxu0
        %v773 = vadd.f32 %v548, %v772
        %v774 = vpop.f32.mrf.mxu0
        %v775 = vpop.f32.mrf.mxu0
        %v776 = vadd.f32 %v551, %v775
        %v777 = vpop.f32.mrf.mxu0
        %778 = vmatprep.mubr.bf16.mxu0 0
        %779 = vmatmul.mubr.bf16.gmra.mxu0 %v340
        %v780 = vpop.f32.mrf.mxu0
        %v781 = vadd.f32 %v556, %v780
        %v782 = vpop.f32.mrf.mxu0
        %v783 = vpop.f32.mrf.mxu0
        %v784 = vadd.f32 %v559, %v783
        %v785 = vpop.f32.mrf.mxu0
        %786 = vmatprep.mubr.bf16.mxu0 0
        %787 = vmatmul.mubr.bf16.gmra.mxu0 %v341
        %v788 = vpop.f32.mrf.mxu0
        %v789 = vadd.f32 %v564, %v788
        %v790 = vpop.f32.mrf.mxu0
        %v791 = vpop.f32.mrf.mxu0
        %v792 = vadd.f32 %v567, %v791
        %v793 = vpop.f32.mrf.mxu0
        %794 = vmatprep.mubr.bf16.mxu0 0
        %795 = vmatmul.mubr.bf16.gmra.mxu0 %v342
        %v796 = vpop.f32.mrf.mxu0
        %v797 = vadd.f32 %v572, %v796
        %v798 = vpop.f32.mrf.mxu0
        %v799 = vpop.f32.mrf.mxu0
        %v800 = vadd.f32 %v575, %v799
        %v801 = vpop.f32.mrf.mxu0
        %802 = vmatprep.mubr.bf16.mxu0 0
        %803 = vmatmul.mubr.bf16.gmra.mxu0 %v343
        %v804 = vpop.f32.mrf.mxu0
        %v805 = vadd.f32 %v580, %v804
        %v806 = vpop.f32.mrf.mxu0
        %v807 = vpop.f32.mrf.mxu0
        %v808 = vadd.f32 %v583, %v807
        %v809 = vpop.f32.mrf.mxu0
        %810 = vmatprep.mubr.bf16.mxu0 0
        %811 = vmatmul.mubr.bf16.gmra.mxu0 %v344
        %v812 = vpop.f32.mrf.mxu0
        %v813 = vadd.f32 %v588, %v812
        %v814 = vpop.f32.mrf.mxu0
        %v815 = vpop.f32.mrf.mxu0
        %v816 = vadd.f32 %v591, %v815
        %v817 = vpop.f32.mrf.mxu0
        %818 = vmatprep.mubr.bf16.mxu0 0
        %819 = vmatmul.mubr.bf16.gmra.mxu0 %v345
        %v820 = vpop.f32.mrf.mxu0
        %v821 = vadd.f32 %v596, %v820
        %v822 = vpop.f32.mrf.mxu0
        %v823 = vpop.f32.mrf.mxu0
        %v824 = vadd.f32 %v599, %v823
        %v825 = vpop.f32.mrf.mxu0
        %826 = vmatprep.mubr.bf16.mxu0 0
        %827 = vmatmul.mubr.bf16.gmra.mxu0 %v346
        %v828 = vpop.f32.mrf.mxu0
        %v829 = vadd.f32 %v604, %v828
        %v830 = vpop.f32.mrf.mxu0
        %v831 = vpop.f32.mrf.mxu0
        %v832 = vadd.f32 %v607, %v831
        %v833 = vpop.f32.mrf.mxu0
        %834 = vmatprep.mubr.bf16.mxu0 0
        %835 = vmatmul.mubr.bf16.gmra.mxu0 %v347
        %v836 = vpop.f32.mrf.mxu0
        %v837 = vadd.f32 %v612, %v836
        %v838 = vpop.f32.mrf.mxu0
        %v839 = vpop.f32.mrf.mxu0
        %v840 = vadd.f32 %v615, %v839
        %v841 = vpop.f32.mrf.mxu0
        %842 = vmatprep.mubr.bf16.mxu0 0
        %843 = vmatmul.mubr.bf16.gmra.mxu0 %v348
        %v844 = vpop.f32.mrf.mxu0
        %v845 = vadd.f32 %v620, %v844
        %v846 = vpop.f32.mrf.mxu0
        %v847 = vpop.f32.mrf.mxu0
        %v848 = vadd.f32 %v623, %v847
        %v849 = vpop.f32.mrf.mxu0
        %850 = vmatprep.mubr.bf16.mxu0 0
        %851 = vmatmul.mubr.bf16.gmra.mxu0 %v349
        %v852 = vpop.f32.mrf.mxu0
        %v853 = vadd.f32 %v628, %v852
        %v854 = vpop.f32.mrf.mxu0
        %v855 = vpop.f32.mrf.mxu0
        %v856 = vadd.f32 %v631, %v855
        %v857 = vpop.f32.mrf.mxu0
        %858 = vmatprep.mubr.bf16.mxu0 0
        %859 = vmatmul.mubr.bf16.gmra.mxu0 %v350
        %v860 = vpop.f32.mrf.mxu0
        %v861 = vadd.f32 %v636, %v860
        %v862 = vpop.f32.mrf.mxu0
        %v863 = vpop.f32.mrf.mxu0
        %v864 = vadd.f32 %v639, %v863
        %v865 = vpop.f32.mrf.mxu0
        %866 = vmatprep.mubr.bf16.mxu0 0
        %867 = vmatmul.mubr.bf16.gmra.mxu0 %v351
        %v868 = vpop.f32.mrf.mxu0
        %v869 = vadd.f32 %v644, %v868
        %v870 = vpop.f32.mrf.mxu0
        %v871 = vpop.f32.mrf.mxu0
        %v872 = vadd.f32 %v647, %v871
        %v873 = vpop.f32.mrf.mxu0
        %874 = vmatprep.mubr.bf16.mxu0 0
        %875 = vmatmul.mubr.bf16.gmra.mxu0 %v352
        %v876 = vpop.f32.mrf.mxu0
        %v877 = vadd.f32 %v652, %v876
        %v878 = vpop.f32.mrf.mxu0
        %v879 = vpop.f32.mrf.mxu0
        %v880 = vadd.f32 %v655, %v879
        %v881 = vpop.f32.mrf.mxu0
        %882 = vmatprep.mubr.bf16.mxu0 0
        %883 = vmatmul.mubr.bf16.gmra.mxu0 %v353
        %v884 = vpop.f32.mrf.mxu0
        %v885 = vadd.f32 %v660, %v884
        %v886 = vpop.f32.mrf.mxu0
        %v887 = vpop.f32.mrf.mxu0
        %v888 = vadd.f32 %v663, %v887
        %v889 = vpop.f32.mrf.mxu0
        %890 = vdwg.mxu0
        %v891 = vld [vmem:[%s262 + $0x2] sm:$0xff]
        %v892 = vld [vmem:[%s262 + $0xa] sm:$0xff]
        %v893 = vld [vmem:[%s262 + $0x12] sm:$0xff]
        %v894 = vld [vmem:[%s262 + $0x1a] sm:$0xff]
        %v895 = vld [vmem:[%s262 + $0x22] sm:$0xff]
        %v896 = vld [vmem:[%s262 + $0x2a] sm:$0xff]
        %v897 = vld [vmem:[%s262 + $0x32] sm:$0xff]
        %v898 = vld [vmem:[%s262 + $0x3a] sm:$0xff]
        %v899 = vld [vmem:[%s262 + $0x42] sm:$0xff]
        %v900 = vld [vmem:[%s262 + $0x4a] sm:$0xff]
        %v901 = vld [vmem:[%s262 + $0x52] sm:$0xff]
        %v902 = vld [vmem:[%s262 + $0x5a] sm:$0xff]
        %v903 = vld [vmem:[%s262 + $0x62] sm:$0xff]
        %v904 = vld [vmem:[%s262 + $0x6a] sm:$0xff]
        %v905 = vld [vmem:[%s262 + $0x72] sm:$0xff]
        %v906 = vld [vmem:[%s262 + $0x7a] sm:$0xff]
        %v907 = vld [vmem:[%s262 + $0x82] sm:$0xff]
        %v908 = vld [vmem:[%s262 + $0x8a] sm:$0xff]
        %v909 = vld [vmem:[%s262 + $0x92] sm:$0xff]
        %v910 = vld [vmem:[%s262 + $0x9a] sm:$0xff]
        %v911 = vld [vmem:[%s262 + $0xa2] sm:$0xff]
        %v912 = vld [vmem:[%s262 + $0xaa] sm:$0xff]
        %v913 = vld [vmem:[%s262 + $0xb2] sm:$0xff]
        %v914 = vld [vmem:[%s262 + $0xba] sm:$0xff]
        %v915 = vld [vmem:[%s262 + $0xc2] sm:$0xff]
        %v916 = vld [vmem:[%s262 + $0xca] sm:$0xff]
        %v917 = vld [vmem:[%s262 + $0xd2] sm:$0xff]
        %v918 = vld [vmem:[%s262 + $0xda] sm:$0xff]
        %v919 = vld [vmem:[%s262 + $0xe2] sm:$0xff]
        %v920 = vld [vmem:[%s262 + $0xea] sm:$0xff]
        %v921 = vld [vmem:[%s262 + $0xf2] sm:$0xff]
        %v922 = vld [vmem:[%s262 + $0xfa] sm:$0xff]
        %v923 = vld [vmem:[%s262 + $0x102] sm:$0xff]
        %v924 = vld [vmem:[%s262 + $0x10a] sm:$0xff]
        %v925 = vld [vmem:[%s262 + $0x112] sm:$0xff]
        %v926 = vld [vmem:[%s262 + $0x11a] sm:$0xff]
        %v927 = vpack.c.bf16 %v892, %v891
        %v928 = vpack.c.bf16 %v894, %v893
        %v929 = vpack.c.bf16 %v896, %v895
        %v930 = vpack.c.bf16 %v898, %v897
        %v931 = vpack.c.bf16 %v900, %v899
        %v932 = vpack.c.bf16 %v902, %v901
        %v933 = vpack.c.bf16 %v904, %v903
        %v934 = vpack.c.bf16 %v906, %v905
        %v935 = vpack.c.bf16 %v908, %v907
        %v936 = vpack.c.bf16 %v910, %v909
        %v937 = vpack.c.bf16 %v912, %v911
        %v938 = vpack.c.bf16 %v914, %v913
        %v939 = vpack.c.bf16 %v916, %v915
        %v940 = vpack.c.bf16 %v918, %v917
        %v941 = vpack.c.bf16 %v920, %v919
        %v942 = vpack.c.bf16 %v922, %v921
        %v943 = vpack.c.bf16 %v924, %v923
        %v944 = vpack.c.bf16 %v926, %v925
        %s945 = scalar_lea.vmem [#allocation6], 128
        %v946 = vld [vmem:[%s945] sm:$0xf]
        %v947 = vld [vmem:[%s945 + $0x4] sm:$0xf]
        %v948 = vld [vmem:[%s945 + $0x8] sm:$0xf]
        %v949 = vld [vmem:[%s945 + $0xc] sm:$0xf]
        %v950 = vld [vmem:[%s945 + $0x10] sm:$0xf]
        %v951 = vld [vmem:[%s945 + $0x14] sm:$0xf]
        %v952 = vld [vmem:[%s945 + $0x18] sm:$0xf]
        %v953 = vld [vmem:[%s945 + $0x1c] sm:$0xf]
        %v954 = vld [vmem:[%s945 + $0x20] sm:$0xf]
        %v955 = vld [vmem:[%s945 + $0x24] sm:$0xf]
        %v956 = vld [vmem:[%s945 + $0x28] sm:$0xf]
        %v957 = vld [vmem:[%s945 + $0x2c] sm:$0xf]
        %v958 = vld [vmem:[%s945 + $0x30] sm:$0xf]
        %v959 = vld [vmem:[%s945 + $0x34] sm:$0xf]
        %v960 = vld [vmem:[%s945 + $0x38] sm:$0xf]
        %v961 = vld [vmem:[%s945 + $0x3c] sm:$0xf]
        %v978 = vunpack.c.l.b16 %v946
        %v979 = vunpack.c.l.b16 %v947
        %v980 = vunpack.c.l.b16 %v948
        %v981 = vunpack.c.l.b16 %v949
        %v982 = vunpack.c.l.b16 %v950
        %v983 = vunpack.c.l.b16 %v951
        %v984 = vunpack.c.l.b16 %v952
        %v985 = vunpack.c.l.b16 %v953
        %v986 = vunpack.c.l.b16 %v954
        %v987 = vunpack.c.l.b16 %v955
        %v988 = vunpack.c.l.b16 %v956
        %v989 = vunpack.c.l.b16 %v957
        %v990 = vunpack.c.l.b16 %v958
        %v991 = vunpack.c.l.b16 %v959
        %v992 = vunpack.c.l.b16 %v960
        %v993 = vunpack.c.l.b16 %v961
        %v994 = vpack.c.b16 %v979, %v978
        %v995 = vpack.c.b16 %v981, %v980
        %v996 = vpack.c.b16 %v983, %v982
        %v997 = vpack.c.b16 %v985, %v984
        %v998 = vpack.c.b16 %v987, %v986
        %v999 = vpack.c.b16 %v989, %v988
        %v1000 = vpack.c.b16 %v991, %v990
        %v1001 = vpack.c.b16 %v993, %v992
        %1010 = vmatprep.subr.bf16.mxu0 0
        %1011 = vmatpush1.bf16.msra.mxu0 %v1001
        %1012 = vmatprep.subr.bf16.mxu0 0
        %1013 = vmatpush1.bf16.msra.mxu0 %v1000
        %1014 = vmatprep.subr.bf16.mxu0 0
        %1015 = vmatpush1.bf16.msra.mxu0 %v999
        %1016 = vmatprep.subr.bf16.mxu0 0
        %1017 = vmatpush1.bf16.msra.mxu0 %v998
        %1018 = vmatprep.subr.bf16.mxu0 0
        %1019 = vmatpush1.bf16.msra.mxu0 %v997
        %1020 = vmatprep.subr.bf16.mxu0 0
        %1021 = vmatpush1.bf16.msra.mxu0 %v996
        %1022 = vmatprep.subr.bf16.mxu0 0
        %1023 = vmatpush1.bf16.msra.mxu0 %v995
        %1024 = vmatprep.subr.bf16.mxu0 0
        %1025 = vmatpush1.bf16.msra.mxu0 %v994
        %1026 = vmatprep.subr.bf16.mxu0 0
        %1027 = vmatpush2.bf16.msra.mxu0 0
        %1028 = vmatprep.subr.bf16.mxu0 0
        %1029 = vmatpush2.bf16.msra.mxu0 0
        %1030 = vmatprep.subr.bf16.mxu0 0
        %1031 = vmatpush2.bf16.msra.mxu0 0
        %1032 = vmatprep.subr.bf16.mxu0 0
        %1033 = vmatpush2.bf16.msra.mxu0 0
        %1034 = vmatprep.subr.bf16.mxu0 0
        %1035 = vmatpush2.bf16.msra.mxu0 0
        %1036 = vmatprep.subr.bf16.mxu0 0
        %1037 = vmatpush2.bf16.msra.mxu0 0
        %1038 = vmatprep.subr.bf16.mxu0 0
        %1039 = vmatpush2.bf16.msra.mxu0 0
        %1040 = vmatprep.subr.bf16.mxu0 0
        %1041 = vmatpush2.bf16.msra.mxu0 0
        %1042 = vmatprep.mubr.bf16.mxu0 0
        %1043 = vmatmul.mubr.bf16.gmra.mxu0 %v927
        %v1044 = vpop.f32.mrf.mxu0
        %v1045 = vadd.f32 0.0, %v1044
        %v1046 = vpop.f32.mrf.mxu0
        %v1047 = vpop.f32.mrf.mxu0
        %v1048 = vadd.f32 0.0, %v1047
        %v1049 = vpop.f32.mrf.mxu0
        %1050 = vmatprep.mubr.bf16.mxu0 0
        %1051 = vmatmul.mubr.bf16.gmra.mxu0 %v928
        %v1052 = vpop.f32.mrf.mxu0
        %v1053 = vadd.f32 0.0, %v1052
        %v1054 = vpop.f32.mrf.mxu0
        %v1055 = vpop.f32.mrf.mxu0
        %v1056 = vadd.f32 0.0, %v1055
        %v1057 = vpop.f32.mrf.mxu0
        %1058 = vmatprep.mubr.bf16.mxu0 0
        %1059 = vmatmul.mubr.bf16.gmra.mxu0 %v929
        %v1060 = vpop.f32.mrf.mxu0
        %v1061 = vadd.f32 0.0, %v1060
        %v1062 = vpop.f32.mrf.mxu0
        %v1063 = vpop.f32.mrf.mxu0
        %v1064 = vadd.f32 0.0, %v1063
        %v1065 = vpop.f32.mrf.mxu0
        %1066 = vmatprep.mubr.bf16.mxu0 0
        %1067 = vmatmul.mubr.bf16.gmra.mxu0 %v930
        %v1068 = vpop.f32.mrf.mxu0
        %v1069 = vadd.f32 0.0, %v1068
        %v1070 = vpop.f32.mrf.mxu0
        %v1071 = vpop.f32.mrf.mxu0
        %v1072 = vadd.f32 0.0, %v1071
        %v1073 = vpop.f32.mrf.mxu0
        %1074 = vmatprep.mubr.bf16.mxu0 0
        %1075 = vmatmul.mubr.bf16.gmra.mxu0 %v931
        %v1076 = vpop.f32.mrf.mxu0
        %v1077 = vadd.f32 0.0, %v1076
        %v1078 = vpop.f32.mrf.mxu0
        %v1079 = vpop.f32.mrf.mxu0
        %v1080 = vadd.f32 0.0, %v1079
        %v1081 = vpop.f32.mrf.mxu0
        %1082 = vmatprep.mubr.bf16.mxu0 0
        %1083 = vmatmul.mubr.bf16.gmra.mxu0 %v932
        %v1084 = vpop.f32.mrf.mxu0
        %v1085 = vadd.f32 0.0, %v1084
        %v1086 = vpop.f32.mrf.mxu0
        %v1087 = vpop.f32.mrf.mxu0
        %v1088 = vadd.f32 0.0, %v1087
        %v1089 = vpop.f32.mrf.mxu0
        %1090 = vmatprep.mubr.bf16.mxu0 0
        %1091 = vmatmul.mubr.bf16.gmra.mxu0 %v933
        %v1092 = vpop.f32.mrf.mxu0
        %v1093 = vadd.f32 0.0, %v1092
        %v1094 = vpop.f32.mrf.mxu0
        %v1095 = vpop.f32.mrf.mxu0
        %v1096 = vadd.f32 0.0, %v1095
        %v1097 = vpop.f32.mrf.mxu0
        %1098 = vmatprep.mubr.bf16.mxu0 0
        %1099 = vmatmul.mubr.bf16.gmra.mxu0 %v934
        %v1100 = vpop.f32.mrf.mxu0
        %v1101 = vadd.f32 0.0, %v1100
        %v1102 = vpop.f32.mrf.mxu0
        %v1103 = vpop.f32.mrf.mxu0
        %v1104 = vadd.f32 0.0, %v1103
        %v1105 = vpop.f32.mrf.mxu0
        %1106 = vmatprep.mubr.bf16.mxu0 0
        %1107 = vmatmul.mubr.bf16.gmra.mxu0 %v935
        %v1108 = vpop.f32.mrf.mxu0
        %v1109 = vadd.f32 0.0, %v1108
        %v1110 = vpop.f32.mrf.mxu0
        %v1111 = vpop.f32.mrf.mxu0
        %v1112 = vadd.f32 0.0, %v1111
        %v1113 = vpop.f32.mrf.mxu0
        %1114 = vmatprep.mubr.bf16.mxu0 0
        %1115 = vmatmul.mubr.bf16.gmra.mxu0 %v936
        %v1116 = vpop.f32.mrf.mxu0
        %v1117 = vadd.f32 0.0, %v1116
        %v1118 = vpop.f32.mrf.mxu0
        %v1119 = vpop.f32.mrf.mxu0
        %v1120 = vadd.f32 0.0, %v1119
        %v1121 = vpop.f32.mrf.mxu0
        %1122 = vmatprep.mubr.bf16.mxu0 0
        %1123 = vmatmul.mubr.bf16.gmra.mxu0 %v937
        %v1124 = vpop.f32.mrf.mxu0
        %v1125 = vadd.f32 0.0, %v1124
        %v1126 = vpop.f32.mrf.mxu0
        %v1127 = vpop.f32.mrf.mxu0
        %v1128 = vadd.f32 0.0, %v1127
        %v1129 = vpop.f32.mrf.mxu0
        %1130 = vmatprep.mubr.bf16.mxu0 0
        %1131 = vmatmul.mubr.bf16.gmra.mxu0 %v938
        %v1132 = vpop.f32.mrf.mxu0
        %v1133 = vadd.f32 0.0, %v1132
        %v1134 = vpop.f32.mrf.mxu0
        %v1135 = vpop.f32.mrf.mxu0
        %v1136 = vadd.f32 0.0, %v1135
        %v1137 = vpop.f32.mrf.mxu0
        %1138 = vmatprep.mubr.bf16.mxu0 0
        %1139 = vmatmul.mubr.bf16.gmra.mxu0 %v939
        %v1140 = vpop.f32.mrf.mxu0
        %v1141 = vadd.f32 0.0, %v1140
        %v1142 = vpop.f32.mrf.mxu0
        %v1143 = vpop.f32.mrf.mxu0
        %v1144 = vadd.f32 0.0, %v1143
        %v1145 = vpop.f32.mrf.mxu0
        %1146 = vmatprep.mubr.bf16.mxu0 0
        %1147 = vmatmul.mubr.bf16.gmra.mxu0 %v940
        %v1148 = vpop.f32.mrf.mxu0
        %v1149 = vadd.f32 0.0, %v1148
        %v1150 = vpop.f32.mrf.mxu0
        %v1151 = vpop.f32.mrf.mxu0
        %v1152 = vadd.f32 0.0, %v1151
        %v1153 = vpop.f32.mrf.mxu0
        %1154 = vmatprep.mubr.bf16.mxu0 0
        %1155 = vmatmul.mubr.bf16.gmra.mxu0 %v941
        %v1156 = vpop.f32.mrf.mxu0
        %v1157 = vadd.f32 0.0, %v1156
        %v1158 = vpop.f32.mrf.mxu0
        %v1159 = vpop.f32.mrf.mxu0
        %v1160 = vadd.f32 0.0, %v1159
        %v1161 = vpop.f32.mrf.mxu0
        %1162 = vmatprep.mubr.bf16.mxu0 0
        %1163 = vmatmul.mubr.bf16.gmra.mxu0 %v942
        %v1164 = vpop.f32.mrf.mxu0
        %v1165 = vadd.f32 0.0, %v1164
        %v1166 = vpop.f32.mrf.mxu0
        %v1167 = vpop.f32.mrf.mxu0
        %v1168 = vadd.f32 0.0, %v1167
        %v1169 = vpop.f32.mrf.mxu0
        %1170 = vmatprep.mubr.bf16.mxu0 0
        %1171 = vmatmul.mubr.bf16.gmra.mxu0 %v943
        %v1172 = vpop.f32.mrf.mxu0
        %v1173 = vadd.f32 0.0, %v1172
        %v1174 = vpop.f32.mrf.mxu0
        %v1175 = vpop.f32.mrf.mxu0
        %v1176 = vadd.f32 0.0, %v1175
        %v1177 = vpop.f32.mrf.mxu0
        %1178 = vmatprep.mubr.bf16.mxu0 0
        %1179 = vmatmul.mubr.bf16.gmra.mxu0 %v944
        %v1180 = vpop.f32.mrf.mxu0
        %v1181 = vadd.f32 0.0, %v1180
        %v1182 = vpop.f32.mrf.mxu0
        %v1183 = vpop.f32.mrf.mxu0
        %v1184 = vadd.f32 0.0, %v1183
        %v1185 = vpop.f32.mrf.mxu0
        %1186 = vdwg.mxu0
        %v1187 = vadd.f32 %v749, %v1045
        %v1188 = vadd.f32 %v752, %v1048
        %v1189 = vadd.f32 %v757, %v1053
        %v1190 = vadd.f32 %v760, %v1056
        %v1191 = vadd.f32 %v765, %v1061
        %v1192 = vadd.f32 %v768, %v1064
        %v1193 = vadd.f32 %v773, %v1069
        %v1194 = vadd.f32 %v776, %v1072
        %v1195 = vadd.f32 %v781, %v1077
        %v1196 = vadd.f32 %v784, %v1080
        %v1197 = vadd.f32 %v789, %v1085
        %v1198 = vadd.f32 %v792, %v1088
        %v1199 = vadd.f32 %v797, %v1093
        %v1200 = vadd.f32 %v800, %v1096
        %v1201 = vadd.f32 %v805, %v1101
        %v1202 = vadd.f32 %v808, %v1104
        %v1203 = vadd.f32 %v813, %v1109
        %v1204 = vadd.f32 %v816, %v1112
        %v1205 = vadd.f32 %v821, %v1117
        %v1206 = vadd.f32 %v824, %v1120
        %v1207 = vadd.f32 %v829, %v1125
        %v1208 = vadd.f32 %v832, %v1128
        %v1209 = vadd.f32 %v837, %v1133
        %v1210 = vadd.f32 %v840, %v1136
        %v1211 = vadd.f32 %v845, %v1141
        %v1212 = vadd.f32 %v848, %v1144
        %v1213 = vadd.f32 %v853, %v1149
        %v1214 = vadd.f32 %v856, %v1152
        %v1215 = vadd.f32 %v861, %v1157
        %v1216 = vadd.f32 %v864, %v1160
        %v1217 = vadd.f32 %v869, %v1165
        %v1218 = vadd.f32 %v872, %v1168
        %v1219 = vadd.f32 %v877, %v1173
        %v1220 = vadd.f32 %v880, %v1176
        %v1221 = vadd.f32 %v885, %v1181
        %v1222 = vadd.f32 %v888, %v1184
        %v1223 = vld [vmem:[%s262 + $0x12] sm:$0xff]
        %v1224 = vld [vmem:[%s262 + $0x1a] sm:$0xff]
        %v1225 = vld [vmem:[%s262 + $0x22] sm:$0xff]
        %v1226 = vld [vmem:[%s262 + $0x2a] sm:$0xff]
        %v1227 = vld [vmem:[%s262 + $0x32] sm:$0xff]
        %v1228 = vld [vmem:[%s262 + $0x3a] sm:$0xff]
        %v1229 = vld [vmem:[%s262 + $0x42] sm:$0xff]
        %v1230 = vld [vmem:[%s262 + $0x4a] sm:$0xff]
        %v1231 = vld [vmem:[%s262 + $0x52] sm:$0xff]
        %v1232 = vld [vmem:[%s262 + $0x5a] sm:$0xff]
        %v1233 = vld [vmem:[%s262 + $0x62] sm:$0xff]
        %v1234 = vld [vmem:[%s262 + $0x6a] sm:$0xff]
        %v1235 = vld [vmem:[%s262 + $0x72] sm:$0xff]
        %v1236 = vld [vmem:[%s262 + $0x7a] sm:$0xff]
        %v1237 = vld [vmem:[%s262 + $0x82] sm:$0xff]
        %v1238 = vld [vmem:[%s262 + $0x8a] sm:$0xff]
        %v1239 = vld [vmem:[%s262 + $0x92] sm:$0xff]
        %v1240 = vld [vmem:[%s262 + $0x9a] sm:$0xff]
        %v1241 = vld [vmem:[%s262 + $0xa2] sm:$0xff]
        %v1242 = vld [vmem:[%s262 + $0xaa] sm:$0xff]
        %v1243 = vld [vmem:[%s262 + $0xb2] sm:$0xff]
        %v1244 = vld [vmem:[%s262 + $0xba] sm:$0xff]
        %v1245 = vld [vmem:[%s262 + $0xc2] sm:$0xff]
        %v1246 = vld [vmem:[%s262 + $0xca] sm:$0xff]
        %v1247 = vld [vmem:[%s262 + $0xd2] sm:$0xff]
        %v1248 = vld [vmem:[%s262 + $0xda] sm:$0xff]
        %v1249 = vld [vmem:[%s262 + $0xe2] sm:$0xff]
        %v1250 = vld [vmem:[%s262 + $0xea] sm:$0xff]
        %v1251 = vld [vmem:[%s262 + $0xf2] sm:$0xff]
        %v1252 = vld [vmem:[%s262 + $0xfa] sm:$0xff]
        %v1253 = vld [vmem:[%s262 + $0x102] sm:$0xff]
        %v1254 = vld [vmem:[%s262 + $0x10a] sm:$0xff]
        %v1255 = vld [vmem:[%s262 + $0x112] sm:$0xff]
        %v1256 = vld [vmem:[%s262 + $0x11a] sm:$0xff]
        %v1257 = vld [vmem:[%s262 + $0x122] sm:$0xff]
        %v1258 = vld [vmem:[%s262 + $0x12a] sm:$0xff]
        %v1259 = vpack.c.bf16 %v1224, %v1223
        %v1260 = vpack.c.bf16 %v1226, %v1225
        %v1261 = vpack.c.bf16 %v1228, %v1227
        %v1262 = vpack.c.bf16 %v1230, %v1229
        %v1263 = vpack.c.bf16 %v1232, %v1231
        %v1264 = vpack.c.bf16 %v1234, %v1233
        %v1265 = vpack.c.bf16 %v1236, %v1235
        %v1266 = vpack.c.bf16 %v1238, %v1237
        %v1267 = vpack.c.bf16 %v1240, %v1239
        %v1268 = vpack.c.bf16 %v1242, %v1241
        %v1269 = vpack.c.bf16 %v1244, %v1243
        %v1270 = vpack.c.bf16 %v1246, %v1245
        %v1271 = vpack.c.bf16 %v1248, %v1247
        %v1272 = vpack.c.bf16 %v1250, %v1249
        %v1273 = vpack.c.bf16 %v1252, %v1251
        %v1274 = vpack.c.bf16 %v1254, %v1253
        %v1275 = vpack.c.bf16 %v1256, %v1255
        %v1276 = vpack.c.bf16 %v1258, %v1257
        %s1277 = scalar_lea.vmem [#allocation6], 192
        %v1278 = vld [vmem:[%s1277] sm:$0xf]
        %v1279 = vld [vmem:[%s1277 + $0x4] sm:$0xf]
        %v1280 = vld [vmem:[%s1277 + $0x8] sm:$0xf]
        %v1281 = vld [vmem:[%s1277 + $0xc] sm:$0xf]
        %v1282 = vld [vmem:[%s1277 + $0x10] sm:$0xf]
        %v1283 = vld [vmem:[%s1277 + $0x14] sm:$0xf]
        %v1284 = vld [vmem:[%s1277 + $0x18] sm:$0xf]
        %v1285 = vld [vmem:[%s1277 + $0x1c] sm:$0xf]
        %v1286 = vld [vmem:[%s1277 + $0x20] sm:$0xf]
        %v1287 = vld [vmem:[%s1277 + $0x24] sm:$0xf]
        %v1288 = vld [vmem:[%s1277 + $0x28] sm:$0xf]
        %v1289 = vld [vmem:[%s1277 + $0x2c] sm:$0xf]
        %v1290 = vld [vmem:[%s1277 + $0x30] sm:$0xf]
        %v1291 = vld [vmem:[%s1277 + $0x34] sm:$0xf]
        %v1292 = vld [vmem:[%s1277 + $0x38] sm:$0xf]
        %v1293 = vld [vmem:[%s1277 + $0x3c] sm:$0xf]
        %v1310 = vunpack.c.l.b16 %v1278
        %v1311 = vunpack.c.l.b16 %v1279
        %v1312 = vunpack.c.l.b16 %v1280
        %v1313 = vunpack.c.l.b16 %v1281
        %v1314 = vunpack.c.l.b16 %v1282
        %v1315 = vunpack.c.l.b16 %v1283
        %v1316 = vunpack.c.l.b16 %v1284
        %v1317 = vunpack.c.l.b16 %v1285
        %v1318 = vunpack.c.l.b16 %v1286
        %v1319 = vunpack.c.l.b16 %v1287
        %v1320 = vunpack.c.l.b16 %v1288
        %v1321 = vunpack.c.l.b16 %v1289
        %v1322 = vunpack.c.l.b16 %v1290
        %v1323 = vunpack.c.l.b16 %v1291
        %v1324 = vunpack.c.l.b16 %v1292
        %v1325 = vunpack.c.l.b16 %v1293
        %v1326 = vpack.c.b16 %v1311, %v1310
        %v1327 = vpack.c.b16 %v1313, %v1312
        %v1328 = vpack.c.b16 %v1315, %v1314
        %v1329 = vpack.c.b16 %v1317, %v1316
        %v1330 = vpack.c.b16 %v1319, %v1318
        %v1331 = vpack.c.b16 %v1321, %v1320
        %v1332 = vpack.c.b16 %v1323, %v1322
        %v1333 = vpack.c.b16 %v1325, %v1324
        %1342 = vmatprep.subr.bf16.mxu0 0
        %1343 = vmatpush1.bf16.msra.mxu0 %v1333
        %1344 = vmatprep.subr.bf16.mxu0 0
        %1345 = vmatpush1.bf16.msra.mxu0 %v1332
        %1346 = vmatprep.subr.bf16.mxu0 0
        %1347 = vmatpush1.bf16.msra.mxu0 %v1331
        %1348 = vmatprep.subr.bf16.mxu0 0
        %1349 = vmatpush1.bf16.msra.mxu0 %v1330
        %1350 = vmatprep.subr.bf16.mxu0 0
        %1351 = vmatpush1.bf16.msra.mxu0 %v1329
        %1352 = vmatprep.subr.bf16.mxu0 0
        %1353 = vmatpush1.bf16.msra.mxu0 %v1328
        %1354 = vmatprep.subr.bf16.mxu0 0
        %1355 = vmatpush1.bf16.msra.mxu0 %v1327
        %1356 = vmatprep.subr.bf16.mxu0 0
        %1357 = vmatpush1.bf16.msra.mxu0 %v1326
        %1358 = vmatprep.subr.bf16.mxu0 0
        %1359 = vmatpush2.bf16.msra.mxu0 0
        %1360 = vmatprep.subr.bf16.mxu0 0
        %1361 = vmatpush2.bf16.msra.mxu0 0
        %1362 = vmatprep.subr.bf16.mxu0 0
        %1363 = vmatpush2.bf16.msra.mxu0 0
        %1364 = vmatprep.subr.bf16.mxu0 0
        %1365 = vmatpush2.bf16.msra.mxu0 0
        %1366 = vmatprep.subr.bf16.mxu0 0
        %1367 = vmatpush2.bf16.msra.mxu0 0
        %1368 = vmatprep.subr.bf16.mxu0 0
        %1369 = vmatpush2.bf16.msra.mxu0 0
        %1370 = vmatprep.subr.bf16.mxu0 0
        %1371 = vmatpush2.bf16.msra.mxu0 0
        %1372 = vmatprep.subr.bf16.mxu0 0
        %1373 = vmatpush2.bf16.msra.mxu0 0
        %1374 = vmatprep.mubr.bf16.mxu0 0
        %1375 = vmatmul.mubr.bf16.gmra.mxu0 %v1259
        %v1376 = vpop.f32.mrf.mxu0
        %v1377 = vadd.f32 0.0, %v1376
        %v1378 = vpop.f32.mrf.mxu0
        %v1379 = vpop.f32.mrf.mxu0
        %v1380 = vadd.f32 0.0, %v1379
        %v1381 = vpop.f32.mrf.mxu0
        %1382 = vmatprep.mubr.bf16.mxu0 0
        %1383 = vmatmul.mubr.bf16.gmra.mxu0 %v1260
        %v1384 = vpop.f32.mrf.mxu0
        %v1385 = vadd.f32 0.0, %v1384
        %v1386 = vpop.f32.mrf.mxu0
        %v1387 = vpop.f32.mrf.mxu0
        %v1388 = vadd.f32 0.0, %v1387
        %v1389 = vpop.f32.mrf.mxu0
        %1390 = vmatprep.mubr.bf16.mxu0 0
        %1391 = vmatmul.mubr.bf16.gmra.mxu0 %v1261
        %v1392 = vpop.f32.mrf.mxu0
        %v1393 = vadd.f32 0.0, %v1392
        %v1394 = vpop.f32.mrf.mxu0
        %v1395 = vpop.f32.mrf.mxu0
        %v1396 = vadd.f32 0.0, %v1395
        %v1397 = vpop.f32.mrf.mxu0
        %1398 = vmatprep.mubr.bf16.mxu0 0
        %1399 = vmatmul.mubr.bf16.gmra.mxu0 %v1262
        %v1400 = vpop.f32.mrf.mxu0
        %v1401 = vadd.f32 0.0, %v1400
        %v1402 = vpop.f32.mrf.mxu0
        %v1403 = vpop.f32.mrf.mxu0
        %v1404 = vadd.f32 0.0, %v1403
        %v1405 = vpop.f32.mrf.mxu0
        %1406 = vmatprep.mubr.bf16.mxu0 0
        %1407 = vmatmul.mubr.bf16.gmra.mxu0 %v1263
        %v1408 = vpop.f32.mrf.mxu0
        %v1409 = vadd.f32 0.0, %v1408
        %v1410 = vpop.f32.mrf.mxu0
        %v1411 = vpop.f32.mrf.mxu0
        %v1412 = vadd.f32 0.0, %v1411
        %v1413 = vpop.f32.mrf.mxu0
        %1414 = vmatprep.mubr.bf16.mxu0 0
        %1415 = vmatmul.mubr.bf16.gmra.mxu0 %v1264
        %v1416 = vpop.f32.mrf.mxu0
        %v1417 = vadd.f32 0.0, %v1416
        %v1418 = vpop.f32.mrf.mxu0
        %v1419 = vpop.f32.mrf.mxu0
        %v1420 = vadd.f32 0.0, %v1419
        %v1421 = vpop.f32.mrf.mxu0
        %1422 = vmatprep.mubr.bf16.mxu0 0
        %1423 = vmatmul.mubr.bf16.gmra.mxu0 %v1265
        %v1424 = vpop.f32.mrf.mxu0
        %v1425 = vadd.f32 0.0, %v1424
        %v1426 = vpop.f32.mrf.mxu0
        %v1427 = vpop.f32.mrf.mxu0
        %v1428 = vadd.f32 0.0, %v1427
        %v1429 = vpop.f32.mrf.mxu0
        %1430 = vmatprep.mubr.bf16.mxu0 0
        %1431 = vmatmul.mubr.bf16.gmra.mxu0 %v1266
        %v1432 = vpop.f32.mrf.mxu0
        %v1433 = vadd.f32 0.0, %v1432
        %v1434 = vpop.f32.mrf.mxu0
        %v1435 = vpop.f32.mrf.mxu0
        %v1436 = vadd.f32 0.0, %v1435
        %v1437 = vpop.f32.mrf.mxu0
        %1438 = vmatprep.mubr.bf16.mxu0 0
        %1439 = vmatmul.mubr.bf16.gmra.mxu0 %v1267
        %v1440 = vpop.f32.mrf.mxu0
        %v1441 = vadd.f32 0.0, %v1440
        %v1442 = vpop.f32.mrf.mxu0
        %v1443 = vpop.f32.mrf.mxu0
        %v1444 = vadd.f32 0.0, %v1443
        %v1445 = vpop.f32.mrf.mxu0
        %1446 = vmatprep.mubr.bf16.mxu0 0
        %1447 = vmatmul.mubr.bf16.gmra.mxu0 %v1268
        %v1448 = vpop.f32.mrf.mxu0
        %v1449 = vadd.f32 0.0, %v1448
        %v1450 = vpop.f32.mrf.mxu0
        %v1451 = vpop.f32.mrf.mxu0
        %v1452 = vadd.f32 0.0, %v1451
        %v1453 = vpop.f32.mrf.mxu0
        %1454 = vmatprep.mubr.bf16.mxu0 0
        %1455 = vmatmul.mubr.bf16.gmra.mxu0 %v1269
        %v1456 = vpop.f32.mrf.mxu0
        %v1457 = vadd.f32 0.0, %v1456
        %v1458 = vpop.f32.mrf.mxu0
        %v1459 = vpop.f32.mrf.mxu0
        %v1460 = vadd.f32 0.0, %v1459
        %v1461 = vpop.f32.mrf.mxu0
        %1462 = vmatprep.mubr.bf16.mxu0 0
        %1463 = vmatmul.mubr.bf16.gmra.mxu0 %v1270
        %v1464 = vpop.f32.mrf.mxu0
        %v1465 = vadd.f32 0.0, %v1464
        %v1466 = vpop.f32.mrf.mxu0
        %v1467 = vpop.f32.mrf.mxu0
        %v1468 = vadd.f32 0.0, %v1467
        %v1469 = vpop.f32.mrf.mxu0
        %1470 = vmatprep.mubr.bf16.mxu0 0
        %1471 = vmatmul.mubr.bf16.gmra.mxu0 %v1271
        %v1472 = vpop.f32.mrf.mxu0
        %v1473 = vadd.f32 0.0, %v1472
        %v1474 = vpop.f32.mrf.mxu0
        %v1475 = vpop.f32.mrf.mxu0
        %v1476 = vadd.f32 0.0, %v1475
        %v1477 = vpop.f32.mrf.mxu0
        %1478 = vmatprep.mubr.bf16.mxu0 0
        %1479 = vmatmul.mubr.bf16.gmra.mxu0 %v1272
        %v1480 = vpop.f32.mrf.mxu0
        %v1481 = vadd.f32 0.0, %v1480
        %v1482 = vpop.f32.mrf.mxu0
        %v1483 = vpop.f32.mrf.mxu0
        %v1484 = vadd.f32 0.0, %v1483
        %v1485 = vpop.f32.mrf.mxu0
        %1486 = vmatprep.mubr.bf16.mxu0 0
        %1487 = vmatmul.mubr.bf16.gmra.mxu0 %v1273
        %v1488 = vpop.f32.mrf.mxu0
        %v1489 = vadd.f32 0.0, %v1488
        %v1490 = vpop.f32.mrf.mxu0
        %v1491 = vpop.f32.mrf.mxu0
        %v1492 = vadd.f32 0.0, %v1491
        %v1493 = vpop.f32.mrf.mxu0
        %1494 = vmatprep.mubr.bf16.mxu0 0
        %1495 = vmatmul.mubr.bf16.gmra.mxu0 %v1274
        %v1496 = vpop.f32.mrf.mxu0
        %v1497 = vadd.f32 0.0, %v1496
        %v1498 = vpop.f32.mrf.mxu0
        %v1499 = vpop.f32.mrf.mxu0
        %v1500 = vadd.f32 0.0, %v1499
        %v1501 = vpop.f32.mrf.mxu0
        %1502 = vmatprep.mubr.bf16.mxu0 0
        %1503 = vmatmul.mubr.bf16.gmra.mxu0 %v1275
        %v1504 = vpop.f32.mrf.mxu0
        %v1505 = vadd.f32 0.0, %v1504
        %v1506 = vpop.f32.mrf.mxu0
        %v1507 = vpop.f32.mrf.mxu0
        %v1508 = vadd.f32 0.0, %v1507
        %v1509 = vpop.f32.mrf.mxu0
        %1510 = vmatprep.mubr.bf16.mxu0 0
        %1511 = vmatmul.mubr.bf16.gmra.mxu0 %v1276
        %v1512 = vpop.f32.mrf.mxu0
        %v1513 = vadd.f32 0.0, %v1512
        %v1514 = vpop.f32.mrf.mxu0
        %v1515 = vpop.f32.mrf.mxu0
        %v1516 = vadd.f32 0.0, %v1515
        %v1517 = vpop.f32.mrf.mxu0
        %1518 = vdwg.mxu0
        %v1519 = vadd.f32 %v1187, %v1377
        %v1520 = vadd.f32 %v1188, %v1380
        %v1521 = vadd.f32 %v1189, %v1385
        %v1522 = vadd.f32 %v1190, %v1388
        %v1523 = vadd.f32 %v1191, %v1393
        %v1524 = vadd.f32 %v1192, %v1396
        %v1525 = vadd.f32 %v1193, %v1401
        %v1526 = vadd.f32 %v1194, %v1404
        %v1527 = vadd.f32 %v1195, %v1409
        %v1528 = vadd.f32 %v1196, %v1412
        %v1529 = vadd.f32 %v1197, %v1417
        %v1530 = vadd.f32 %v1198, %v1420
        %v1531 = vadd.f32 %v1199, %v1425
        %v1532 = vadd.f32 %v1200, %v1428
        %v1533 = vadd.f32 %v1201, %v1433
        %v1534 = vadd.f32 %v1202, %v1436
        %v1535 = vadd.f32 %v1203, %v1441
        %v1536 = vadd.f32 %v1204, %v1444
        %v1537 = vadd.f32 %v1205, %v1449
        %v1538 = vadd.f32 %v1206, %v1452
        %v1539 = vadd.f32 %v1207, %v1457
        %v1540 = vadd.f32 %v1208, %v1460
        %v1541 = vadd.f32 %v1209, %v1465
        %v1542 = vadd.f32 %v1210, %v1468
        %v1543 = vadd.f32 %v1211, %v1473
        %v1544 = vadd.f32 %v1212, %v1476
        %v1545 = vadd.f32 %v1213, %v1481
        %v1546 = vadd.f32 %v1214, %v1484
        %v1547 = vadd.f32 %v1215, %v1489
        %v1548 = vadd.f32 %v1216, %v1492
        %v1549 = vadd.f32 %v1217, %v1497
        %v1550 = vadd.f32 %v1218, %v1500
        %v1551 = vadd.f32 %v1219, %v1505
        %v1552 = vadd.f32 %v1220, %v1508
        %v1553 = vadd.f32 %v1221, %v1513
        %v1554 = vadd.f32 %v1222, %v1516
        %v1555 = vld [vmem:[%s262 + $0x13] sm:$0xff]
        %v1556 = vld [vmem:[%s262 + $0x1b] sm:$0xff]
        %v1557 = vld [vmem:[%s262 + $0x23] sm:$0xff]
        %v1558 = vld [vmem:[%s262 + $0x2b] sm:$0xff]
        %v1559 = vld [vmem:[%s262 + $0x33] sm:$0xff]
        %v1560 = vld [vmem:[%s262 + $0x3b] sm:$0xff]
        %v1561 = vld [vmem:[%s262 + $0x43] sm:$0xff]
        %v1562 = vld [vmem:[%s262 + $0x4b] sm:$0xff]
        %v1563 = vld [vmem:[%s262 + $0x53] sm:$0xff]
        %v1564 = vld [vmem:[%s262 + $0x5b] sm:$0xff]
        %v1565 = vld [vmem:[%s262 + $0x63] sm:$0xff]
        %v1566 = vld [vmem:[%s262 + $0x6b] sm:$0xff]
        %v1567 = vld [vmem:[%s262 + $0x73] sm:$0xff]
        %v1568 = vld [vmem:[%s262 + $0x7b] sm:$0xff]
        %v1569 = vld [vmem:[%s262 + $0x83] sm:$0xff]
        %v1570 = vld [vmem:[%s262 + $0x8b] sm:$0xff]
        %v1571 = vld [vmem:[%s262 + $0x93] sm:$0xff]
        %v1572 = vld [vmem:[%s262 + $0x9b] sm:$0xff]
        %v1573 = vld [vmem:[%s262 + $0xa3] sm:$0xff]
        %v1574 = vld [vmem:[%s262 + $0xab] sm:$0xff]
        %v1575 = vld [vmem:[%s262 + $0xb3] sm:$0xff]
        %v1576 = vld [vmem:[%s262 + $0xbb] sm:$0xff]
        %v1577 = vld [vmem:[%s262 + $0xc3] sm:$0xff]
        %v1578 = vld [vmem:[%s262 + $0xcb] sm:$0xff]
        %v1579 = vld [vmem:[%s262 + $0xd3] sm:$0xff]
        %v1580 = vld [vmem:[%s262 + $0xdb] sm:$0xff]
        %v1581 = vld [vmem:[%s262 + $0xe3] sm:$0xff]
        %v1582 = vld [vmem:[%s262 + $0xeb] sm:$0xff]
        %v1583 = vld [vmem:[%s262 + $0xf3] sm:$0xff]
        %v1584 = vld [vmem:[%s262 + $0xfb] sm:$0xff]
        %v1585 = vld [vmem:[%s262 + $0x103] sm:$0xff]
        %v1586 = vld [vmem:[%s262 + $0x10b] sm:$0xff]
        %v1587 = vld [vmem:[%s262 + $0x113] sm:$0xff]
        %v1588 = vld [vmem:[%s262 + $0x11b] sm:$0xff]
        %v1589 = vld [vmem:[%s262 + $0x123] sm:$0xff]
        %v1590 = vld [vmem:[%s262 + $0x12b] sm:$0xff]
        %v1591 = vpack.c.bf16 %v1556, %v1555
        %v1592 = vpack.c.bf16 %v1558, %v1557
        %v1593 = vpack.c.bf16 %v1560, %v1559
        %v1594 = vpack.c.bf16 %v1562, %v1561
        %v1595 = vpack.c.bf16 %v1564, %v1563
        %v1596 = vpack.c.bf16 %v1566, %v1565
        %v1597 = vpack.c.bf16 %v1568, %v1567
        %v1598 = vpack.c.bf16 %v1570, %v1569
        %v1599 = vpack.c.bf16 %v1572, %v1571
        %v1600 = vpack.c.bf16 %v1574, %v1573
        %v1601 = vpack.c.bf16 %v1576, %v1575
        %v1602 = vpack.c.bf16 %v1578, %v1577
        %v1603 = vpack.c.bf16 %v1580, %v1579
        %v1604 = vpack.c.bf16 %v1582, %v1581
        %v1605 = vpack.c.bf16 %v1584, %v1583
        %v1606 = vpack.c.bf16 %v1586, %v1585
        %v1607 = vpack.c.bf16 %v1588, %v1587
        %v1608 = vpack.c.bf16 %v1590, %v1589
        %s1609 = scalar_lea.vmem [#allocation6], 256
        %v1610 = vld [vmem:[%s1609] sm:$0xf]
        %v1611 = vld [vmem:[%s1609 + $0x4] sm:$0xf]
        %v1612 = vld [vmem:[%s1609 + $0x8] sm:$0xf]
        %v1613 = vld [vmem:[%s1609 + $0xc] sm:$0xf]
        %v1614 = vld [vmem:[%s1609 + $0x10] sm:$0xf]
        %v1615 = vld [vmem:[%s1609 + $0x14] sm:$0xf]
        %v1616 = vld [vmem:[%s1609 + $0x18] sm:$0xf]
        %v1617 = vld [vmem:[%s1609 + $0x1c] sm:$0xf]
        %v1618 = vld [vmem:[%s1609 + $0x20] sm:$0xf]
        %v1619 = vld [vmem:[%s1609 + $0x24] sm:$0xf]
        %v1620 = vld [vmem:[%s1609 + $0x28] sm:$0xf]
        %v1621 = vld [vmem:[%s1609 + $0x2c] sm:$0xf]
        %v1622 = vld [vmem:[%s1609 + $0x30] sm:$0xf]
        %v1623 = vld [vmem:[%s1609 + $0x34] sm:$0xf]
        %v1624 = vld [vmem:[%s1609 + $0x38] sm:$0xf]
        %v1625 = vld [vmem:[%s1609 + $0x3c] sm:$0xf]
        %v1642 = vunpack.c.l.b16 %v1610
        %v1643 = vunpack.c.l.b16 %v1611
        %v1644 = vunpack.c.l.b16 %v1612
        %v1645 = vunpack.c.l.b16 %v1613
        %v1646 = vunpack.c.l.b16 %v1614
        %v1647 = vunpack.c.l.b16 %v1615
        %v1648 = vunpack.c.l.b16 %v1616
        %v1649 = vunpack.c.l.b16 %v1617
        %v1650 = vunpack.c.l.b16 %v1618
        %v1651 = vunpack.c.l.b16 %v1619
        %v1652 = vunpack.c.l.b16 %v1620
        %v1653 = vunpack.c.l.b16 %v1621
        %v1654 = vunpack.c.l.b16 %v1622
        %v1655 = vunpack.c.l.b16 %v1623
        %v1656 = vunpack.c.l.b16 %v1624
        %v1657 = vunpack.c.l.b16 %v1625
        %v1658 = vpack.c.b16 %v1643, %v1642
        %v1659 = vpack.c.b16 %v1645, %v1644
        %v1660 = vpack.c.b16 %v1647, %v1646
        %v1661 = vpack.c.b16 %v1649, %v1648
        %v1662 = vpack.c.b16 %v1651, %v1650
        %v1663 = vpack.c.b16 %v1653, %v1652
        %v1664 = vpack.c.b16 %v1655, %v1654
        %v1665 = vpack.c.b16 %v1657, %v1656
        %1674 = vmatprep.subr.bf16.mxu0 0
        %1675 = vmatpush1.bf16.msra.mxu0 %v1665
        %1676 = vmatprep.subr.bf16.mxu0 0
        %1677 = vmatpush1.bf16.msra.mxu0 %v1664
        %1678 = vmatprep.subr.bf16.mxu0 0
        %1679 = vmatpush1.bf16.msra.mxu0 %v1663
        %1680 = vmatprep.subr.bf16.mxu0 0
        %1681 = vmatpush1.bf16.msra.mxu0 %v1662
        %1682 = vmatprep.subr.bf16.mxu0 0
        %1683 = vmatpush1.bf16.msra.mxu0 %v1661
        %1684 = vmatprep.subr.bf16.mxu0 0
        %1685 = vmatpush1.bf16.msra.mxu0 %v1660
        %1686 = vmatprep.subr.bf16.mxu0 0
        %1687 = vmatpush1.bf16.msra.mxu0 %v1659
        %1688 = vmatprep.subr.bf16.mxu0 0
        %1689 = vmatpush1.bf16.msra.mxu0 %v1658
        %1690 = vmatprep.subr.bf16.mxu0 0
        %1691 = vmatpush2.bf16.msra.mxu0 0
        %1692 = vmatprep.subr.bf16.mxu0 0
        %1693 = vmatpush2.bf16.msra.mxu0 0
        %1694 = vmatprep.subr.bf16.mxu0 0
        %1695 = vmatpush2.bf16.msra.mxu0 0
        %1696 = vmatprep.subr.bf16.mxu0 0
        %1697 = vmatpush2.bf16.msra.mxu0 0
        %1698 = vmatprep.subr.bf16.mxu0 0
        %1699 = vmatpush2.bf16.msra.mxu0 0
        %1700 = vmatprep.subr.bf16.mxu0 0
        %1701 = vmatpush2.bf16.msra.mxu0 0
        %1702 = vmatprep.subr.bf16.mxu0 0
        %1703 = vmatpush2.bf16.msra.mxu0 0
        %1704 = vmatprep.subr.bf16.mxu0 0
        %1705 = vmatpush2.bf16.msra.mxu0 0
        %1706 = vmatprep.mubr.bf16.mxu0 0
        %1707 = vmatmul.mubr.bf16.gmra.mxu0 %v1591
        %v1708 = vpop.f32.mrf.mxu0
        %v1709 = vadd.f32 0.0, %v1708
        %v1710 = vpop.f32.mrf.mxu0
        %v1711 = vpop.f32.mrf.mxu0
        %v1712 = vadd.f32 0.0, %v1711
        %v1713 = vpop.f32.mrf.mxu0
        %1714 = vmatprep.mubr.bf16.mxu0 0
        %1715 = vmatmul.mubr.bf16.gmra.mxu0 %v1592
        %v1716 = vpop.f32.mrf.mxu0
        %v1717 = vadd.f32 0.0, %v1716
        %v1718 = vpop.f32.mrf.mxu0
        %v1719 = vpop.f32.mrf.mxu0
        %v1720 = vadd.f32 0.0, %v1719
        %v1721 = vpop.f32.mrf.mxu0
        %1722 = vmatprep.mubr.bf16.mxu0 0
        %1723 = vmatmul.mubr.bf16.gmra.mxu0 %v1593
        %v1724 = vpop.f32.mrf.mxu0
        %v1725 = vadd.f32 0.0, %v1724
        %v1726 = vpop.f32.mrf.mxu0
        %v1727 = vpop.f32.mrf.mxu0
        %v1728 = vadd.f32 0.0, %v1727
        %v1729 = vpop.f32.mrf.mxu0
        %1730 = vmatprep.mubr.bf16.mxu0 0
        %1731 = vmatmul.mubr.bf16.gmra.mxu0 %v1594
        %v1732 = vpop.f32.mrf.mxu0
        %v1733 = vadd.f32 0.0, %v1732
        %v1734 = vpop.f32.mrf.mxu0
        %v1735 = vpop.f32.mrf.mxu0
        %v1736 = vadd.f32 0.0, %v1735
        %v1737 = vpop.f32.mrf.mxu0
        %1738 = vmatprep.mubr.bf16.mxu0 0
        %1739 = vmatmul.mubr.bf16.gmra.mxu0 %v1595
        %v1740 = vpop.f32.mrf.mxu0
        %v1741 = vadd.f32 0.0, %v1740
        %v1742 = vpop.f32.mrf.mxu0
        %v1743 = vpop.f32.mrf.mxu0
        %v1744 = vadd.f32 0.0, %v1743
        %v1745 = vpop.f32.mrf.mxu0
        %1746 = vmatprep.mubr.bf16.mxu0 0
        %1747 = vmatmul.mubr.bf16.gmra.mxu0 %v1596
        %v1748 = vpop.f32.mrf.mxu0
        %v1749 = vadd.f32 0.0, %v1748
        %v1750 = vpop.f32.mrf.mxu0
        %v1751 = vpop.f32.mrf.mxu0
        %v1752 = vadd.f32 0.0, %v1751
        %v1753 = vpop.f32.mrf.mxu0
        %1754 = vmatprep.mubr.bf16.mxu0 0
        %1755 = vmatmul.mubr.bf16.gmra.mxu0 %v1597
        %v1756 = vpop.f32.mrf.mxu0
        %v1757 = vadd.f32 0.0, %v1756
        %v1758 = vpop.f32.mrf.mxu0
        %v1759 = vpop.f32.mrf.mxu0
        %v1760 = vadd.f32 0.0, %v1759
        %v1761 = vpop.f32.mrf.mxu0
        %1762 = vmatprep.mubr.bf16.mxu0 0
        %1763 = vmatmul.mubr.bf16.gmra.mxu0 %v1598
        %v1764 = vpop.f32.mrf.mxu0
        %v1765 = vadd.f32 0.0, %v1764
        %v1766 = vpop.f32.mrf.mxu0
        %v1767 = vpop.f32.mrf.mxu0
        %v1768 = vadd.f32 0.0, %v1767
        %v1769 = vpop.f32.mrf.mxu0
        %1770 = vmatprep.mubr.bf16.mxu0 0
        %1771 = vmatmul.mubr.bf16.gmra.mxu0 %v1599
        %v1772 = vpop.f32.mrf.mxu0
        %v1773 = vadd.f32 0.0, %v1772
        %v1774 = vpop.f32.mrf.mxu0
        %v1775 = vpop.f32.mrf.mxu0
        %v1776 = vadd.f32 0.0, %v1775
        %v1777 = vpop.f32.mrf.mxu0
        %1778 = vmatprep.mubr.bf16.mxu0 0
        %1779 = vmatmul.mubr.bf16.gmra.mxu0 %v1600
        %v1780 = vpop.f32.mrf.mxu0
        %v1781 = vadd.f32 0.0, %v1780
        %v1782 = vpop.f32.mrf.mxu0
        %v1783 = vpop.f32.mrf.mxu0
        %v1784 = vadd.f32 0.0, %v1783
        %v1785 = vpop.f32.mrf.mxu0
        %1786 = vmatprep.mubr.bf16.mxu0 0
        %1787 = vmatmul.mubr.bf16.gmra.mxu0 %v1601
        %v1788 = vpop.f32.mrf.mxu0
        %v1789 = vadd.f32 0.0, %v1788
        %v1790 = vpop.f32.mrf.mxu0
        %v1791 = vpop.f32.mrf.mxu0
        %v1792 = vadd.f32 0.0, %v1791
        %v1793 = vpop.f32.mrf.mxu0
        %1794 = vmatprep.mubr.bf16.mxu0 0
        %1795 = vmatmul.mubr.bf16.gmra.mxu0 %v1602
        %v1796 = vpop.f32.mrf.mxu0
        %v1797 = vadd.f32 0.0, %v1796
        %v1798 = vpop.f32.mrf.mxu0
        %v1799 = vpop.f32.mrf.mxu0
        %v1800 = vadd.f32 0.0, %v1799
        %v1801 = vpop.f32.mrf.mxu0
        %1802 = vmatprep.mubr.bf16.mxu0 0
        %1803 = vmatmul.mubr.bf16.gmra.mxu0 %v1603
        %v1804 = vpop.f32.mrf.mxu0
        %v1805 = vadd.f32 0.0, %v1804
        %v1806 = vpop.f32.mrf.mxu0
        %v1807 = vpop.f32.mrf.mxu0
        %v1808 = vadd.f32 0.0, %v1807
        %v1809 = vpop.f32.mrf.mxu0
        %1810 = vmatprep.mubr.bf16.mxu0 0
        %1811 = vmatmul.mubr.bf16.gmra.mxu0 %v1604
        %v1812 = vpop.f32.mrf.mxu0
        %v1813 = vadd.f32 0.0, %v1812
        %v1814 = vpop.f32.mrf.mxu0
        %v1815 = vpop.f32.mrf.mxu0
        %v1816 = vadd.f32 0.0, %v1815
        %v1817 = vpop.f32.mrf.mxu0
        %1818 = vmatprep.mubr.bf16.mxu0 0
        %1819 = vmatmul.mubr.bf16.gmra.mxu0 %v1605
        %v1820 = vpop.f32.mrf.mxu0
        %v1821 = vadd.f32 0.0, %v1820
        %v1822 = vpop.f32.mrf.mxu0
        %v1823 = vpop.f32.mrf.mxu0
        %v1824 = vadd.f32 0.0, %v1823
        %v1825 = vpop.f32.mrf.mxu0
        %1826 = vmatprep.mubr.bf16.mxu0 0
        %1827 = vmatmul.mubr.bf16.gmra.mxu0 %v1606
        %v1828 = vpop.f32.mrf.mxu0
        %v1829 = vadd.f32 0.0, %v1828
        %v1830 = vpop.f32.mrf.mxu0
        %v1831 = vpop.f32.mrf.mxu0
        %v1832 = vadd.f32 0.0, %v1831
        %v1833 = vpop.f32.mrf.mxu0
        %1834 = vmatprep.mubr.bf16.mxu0 0
        %1835 = vmatmul.mubr.bf16.gmra.mxu0 %v1607
        %v1836 = vpop.f32.mrf.mxu0
        %v1837 = vadd.f32 0.0, %v1836
        %v1838 = vpop.f32.mrf.mxu0
        %v1839 = vpop.f32.mrf.mxu0
        %v1840 = vadd.f32 0.0, %v1839
        %v1841 = vpop.f32.mrf.mxu0
        %1842 = vmatprep.mubr.bf16.mxu0 0
        %1843 = vmatmul.mubr.bf16.gmra.mxu0 %v1608
        %v1844 = vpop.f32.mrf.mxu0
        %v1845 = vadd.f32 0.0, %v1844
        %v1846 = vpop.f32.mrf.mxu0
        %v1847 = vpop.f32.mrf.mxu0
        %v1848 = vadd.f32 0.0, %v1847
        %v1849 = vpop.f32.mrf.mxu0
        %1850 = vdwg.mxu0
        %v1851 = vadd.f32 %v1519, %v1709
        %v1852 = vadd.f32 %v1520, %v1712
        %v1853 = vadd.f32 %v1521, %v1717
        %v1854 = vadd.f32 %v1522, %v1720
        %v1855 = vadd.f32 %v1523, %v1725
        %v1856 = vadd.f32 %v1524, %v1728
        %v1857 = vadd.f32 %v1525, %v1733
        %v1858 = vadd.f32 %v1526, %v1736
        %v1859 = vadd.f32 %v1527, %v1741
        %v1860 = vadd.f32 %v1528, %v1744
        %v1861 = vadd.f32 %v1529, %v1749
        %v1862 = vadd.f32 %v1530, %v1752
        %v1863 = vadd.f32 %v1531, %v1757
        %v1864 = vadd.f32 %v1532, %v1760
        %v1865 = vadd.f32 %v1533, %v1765
        %v1866 = vadd.f32 %v1534, %v1768
        %v1867 = vadd.f32 %v1535, %v1773
        %v1868 = vadd.f32 %v1536, %v1776
        %v1869 = vadd.f32 %v1537, %v1781
        %v1870 = vadd.f32 %v1538, %v1784
        %v1871 = vadd.f32 %v1539, %v1789
        %v1872 = vadd.f32 %v1540, %v1792
        %v1873 = vadd.f32 %v1541, %v1797
        %v1874 = vadd.f32 %v1542, %v1800
        %v1875 = vadd.f32 %v1543, %v1805
        %v1876 = vadd.f32 %v1544, %v1808
        %v1877 = vadd.f32 %v1545, %v1813
        %v1878 = vadd.f32 %v1546, %v1816
        %v1879 = vadd.f32 %v1547, %v1821
        %v1880 = vadd.f32 %v1548, %v1824
        %v1881 = vadd.f32 %v1549, %v1829
        %v1882 = vadd.f32 %v1550, %v1832
        %v1883 = vadd.f32 %v1551, %v1837
        %v1884 = vadd.f32 %v1552, %v1840
        %v1885 = vadd.f32 %v1553, %v1845
        %v1886 = vadd.f32 %v1554, %v1848
        %v1887 = vld [vmem:[%s262 + $0x14] sm:$0xff]
        %v1888 = vld [vmem:[%s262 + $0x1c] sm:$0xff]
        %v1889 = vld [vmem:[%s262 + $0x24] sm:$0xff]
        %v1890 = vld [vmem:[%s262 + $0x2c] sm:$0xff]
        %v1891 = vld [vmem:[%s262 + $0x34] sm:$0xff]
        %v1892 = vld [vmem:[%s262 + $0x3c] sm:$0xff]
        %v1893 = vld [vmem:[%s262 + $0x44] sm:$0xff]
        %v1894 = vld [vmem:[%s262 + $0x4c] sm:$0xff]
        %v1895 = vld [vmem:[%s262 + $0x54] sm:$0xff]
        %v1896 = vld [vmem:[%s262 + $0x5c] sm:$0xff]
        %v1897 = vld [vmem:[%s262 + $0x64] sm:$0xff]
        %v1898 = vld [vmem:[%s262 + $0x6c] sm:$0xff]
        %v1899 = vld [vmem:[%s262 + $0x74] sm:$0xff]
        %v1900 = vld [vmem:[%s262 + $0x7c] sm:$0xff]
        %v1901 = vld [vmem:[%s262 + $0x84] sm:$0xff]
        %v1902 = vld [vmem:[%s262 + $0x8c] sm:$0xff]
        %v1903 = vld [vmem:[%s262 + $0x94] sm:$0xff]
        %v1904 = vld [vmem:[%s262 + $0x9c] sm:$0xff]
        %v1905 = vld [vmem:[%s262 + $0xa4] sm:$0xff]
        %v1906 = vld [vmem:[%s262 + $0xac] sm:$0xff]
        %v1907 = vld [vmem:[%s262 + $0xb4] sm:$0xff]
        %v1908 = vld [vmem:[%s262 + $0xbc] sm:$0xff]
        %v1909 = vld [vmem:[%s262 + $0xc4] sm:$0xff]
        %v1910 = vld [vmem:[%s262 + $0xcc] sm:$0xff]
        %v1911 = vld [vmem:[%s262 + $0xd4] sm:$0xff]
        %v1912 = vld [vmem:[%s262 + $0xdc] sm:$0xff]
        %v1913 = vld [vmem:[%s262 + $0xe4] sm:$0xff]
        %v1914 = vld [vmem:[%s262 + $0xec] sm:$0xff]
        %v1915 = vld [vmem:[%s262 + $0xf4] sm:$0xff]
        %v1916 = vld [vmem:[%s262 + $0xfc] sm:$0xff]
        %v1917 = vld [vmem:[%s262 + $0x104] sm:$0xff]
        %v1918 = vld [vmem:[%s262 + $0x10c] sm:$0xff]
        %v1919 = vld [vmem:[%s262 + $0x114] sm:$0xff]
        %v1920 = vld [vmem:[%s262 + $0x11c] sm:$0xff]
        %v1921 = vld [vmem:[%s262 + $0x124] sm:$0xff]
        %v1922 = vld [vmem:[%s262 + $0x12c] sm:$0xff]
        %v1923 = vpack.c.bf16 %v1888, %v1887
        %v1924 = vpack.c.bf16 %v1890, %v1889
        %v1925 = vpack.c.bf16 %v1892, %v1891
        %v1926 = vpack.c.bf16 %v1894, %v1893
        %v1927 = vpack.c.bf16 %v1896, %v1895
        %v1928 = vpack.c.bf16 %v1898, %v1897
        %v1929 = vpack.c.bf16 %v1900, %v1899
        %v1930 = vpack.c.bf16 %v1902, %v1901
        %v1931 = vpack.c.bf16 %v1904, %v1903
        %v1932 = vpack.c.bf16 %v1906, %v1905
        %v1933 = vpack.c.bf16 %v1908, %v1907
        %v1934 = vpack.c.bf16 %v1910, %v1909
        %v1935 = vpack.c.bf16 %v1912, %v1911
        %v1936 = vpack.c.bf16 %v1914, %v1913
        %v1937 = vpack.c.bf16 %v1916, %v1915
        %v1938 = vpack.c.bf16 %v1918, %v1917
        %v1939 = vpack.c.bf16 %v1920, %v1919
        %v1940 = vpack.c.bf16 %v1922, %v1921
        %s1941 = scalar_lea.vmem [#allocation6], 320
        %v1942 = vld [vmem:[%s1941] sm:$0xf]
        %v1943 = vld [vmem:[%s1941 + $0x4] sm:$0xf]
        %v1944 = vld [vmem:[%s1941 + $0x8] sm:$0xf]
        %v1945 = vld [vmem:[%s1941 + $0xc] sm:$0xf]
        %v1946 = vld [vmem:[%s1941 + $0x10] sm:$0xf]
        %v1947 = vld [vmem:[%s1941 + $0x14] sm:$0xf]
        %v1948 = vld [vmem:[%s1941 + $0x18] sm:$0xf]
        %v1949 = vld [vmem:[%s1941 + $0x1c] sm:$0xf]
        %v1950 = vld [vmem:[%s1941 + $0x20] sm:$0xf]
        %v1951 = vld [vmem:[%s1941 + $0x24] sm:$0xf]
        %v1952 = vld [vmem:[%s1941 + $0x28] sm:$0xf]
        %v1953 = vld [vmem:[%s1941 + $0x2c] sm:$0xf]
        %v1954 = vld [vmem:[%s1941 + $0x30] sm:$0xf]
        %v1955 = vld [vmem:[%s1941 + $0x34] sm:$0xf]
        %v1956 = vld [vmem:[%s1941 + $0x38] sm:$0xf]
        %v1957 = vld [vmem:[%s1941 + $0x3c] sm:$0xf]
        %v1974 = vunpack.c.l.b16 %v1942
        %v1975 = vunpack.c.l.b16 %v1943
        %v1976 = vunpack.c.l.b16 %v1944
        %v1977 = vunpack.c.l.b16 %v1945
        %v1978 = vunpack.c.l.b16 %v1946
        %v1979 = vunpack.c.l.b16 %v1947
        %v1980 = vunpack.c.l.b16 %v1948
        %v1981 = vunpack.c.l.b16 %v1949
        %v1982 = vunpack.c.l.b16 %v1950
        %v1983 = vunpack.c.l.b16 %v1951
        %v1984 = vunpack.c.l.b16 %v1952
        %v1985 = vunpack.c.l.b16 %v1953
        %v1986 = vunpack.c.l.b16 %v1954
        %v1987 = vunpack.c.l.b16 %v1955
        %v1988 = vunpack.c.l.b16 %v1956
        %v1989 = vunpack.c.l.b16 %v1957
        %v1990 = vpack.c.b16 %v1975, %v1974
        %v1991 = vpack.c.b16 %v1977, %v1976
        %v1992 = vpack.c.b16 %v1979, %v1978
        %v1993 = vpack.c.b16 %v1981, %v1980
        %v1994 = vpack.c.b16 %v1983, %v1982
        %v1995 = vpack.c.b16 %v1985, %v1984
        %v1996 = vpack.c.b16 %v1987, %v1986
        %v1997 = vpack.c.b16 %v1989, %v1988
        %2006 = vmatprep.subr.bf16.mxu0 0
        %2007 = vmatpush1.bf16.msra.mxu0 %v1997
        %2008 = vmatprep.subr.bf16.mxu0 0
        %2009 = vmatpush1.bf16.msra.mxu0 %v1996
        %2010 = vmatprep.subr.bf16.mxu0 0
        %2011 = vmatpush1.bf16.msra.mxu0 %v1995
        %2012 = vmatprep.subr.bf16.mxu0 0
        %2013 = vmatpush1.bf16.msra.mxu0 %v1994
        %2014 = vmatprep.subr.bf16.mxu0 0
        %2015 = vmatpush1.bf16.msra.mxu0 %v1993
        %2016 = vmatprep.subr.bf16.mxu0 0
        %2017 = vmatpush1.bf16.msra.mxu0 %v1992
        %2018 = vmatprep.subr.bf16.mxu0 0
        %2019 = vmatpush1.bf16.msra.mxu0 %v1991
        %2020 = vmatprep.subr.bf16.mxu0 0
        %2021 = vmatpush1.bf16.msra.mxu0 %v1990
        %2022 = vmatprep.subr.bf16.mxu0 0
        %2023 = vmatpush2.bf16.msra.mxu0 0
        %2024 = vmatprep.subr.bf16.mxu0 0
        %2025 = vmatpush2.bf16.msra.mxu0 0
        %2026 = vmatprep.subr.bf16.mxu0 0
        %2027 = vmatpush2.bf16.msra.mxu0 0
        %2028 = vmatprep.subr.bf16.mxu0 0
        %2029 = vmatpush2.bf16.msra.mxu0 0
        %2030 = vmatprep.subr.bf16.mxu0 0
        %2031 = vmatpush2.bf16.msra.mxu0 0
        %2032 = vmatprep.subr.bf16.mxu0 0
        %2033 = vmatpush2.bf16.msra.mxu0 0
        %2034 = vmatprep.subr.bf16.mxu0 0
        %2035 = vmatpush2.bf16.msra.mxu0 0
        %2036 = vmatprep.subr.bf16.mxu0 0
        %2037 = vmatpush2.bf16.msra.mxu0 0
        %2038 = vmatprep.mubr.bf16.mxu0 0
        %2039 = vmatmul.mubr.bf16.gmra.mxu0 %v1923
        %v2040 = vpop.f32.mrf.mxu0
        %v2041 = vadd.f32 0.0, %v2040
        %v2042 = vpop.f32.mrf.mxu0
        %v2043 = vpop.f32.mrf.mxu0
        %v2044 = vadd.f32 0.0, %v2043
        %v2045 = vpop.f32.mrf.mxu0
        %2046 = vmatprep.mubr.bf16.mxu0 0
        %2047 = vmatmul.mubr.bf16.gmra.mxu0 %v1924
        %v2048 = vpop.f32.mrf.mxu0
        %v2049 = vadd.f32 0.0, %v2048
        %v2050 = vpop.f32.mrf.mxu0
        %v2051 = vpop.f32.mrf.mxu0
        %v2052 = vadd.f32 0.0, %v2051
        %v2053 = vpop.f32.mrf.mxu0
        %2054 = vmatprep.mubr.bf16.mxu0 0
        %2055 = vmatmul.mubr.bf16.gmra.mxu0 %v1925
        %v2056 = vpop.f32.mrf.mxu0
        %v2057 = vadd.f32 0.0, %v2056
        %v2058 = vpop.f32.mrf.mxu0
        %v2059 = vpop.f32.mrf.mxu0
        %v2060 = vadd.f32 0.0, %v2059
        %v2061 = vpop.f32.mrf.mxu0
        %2062 = vmatprep.mubr.bf16.mxu0 0
        %2063 = vmatmul.mubr.bf16.gmra.mxu0 %v1926
        %v2064 = vpop.f32.mrf.mxu0
        %v2065 = vadd.f32 0.0, %v2064
        %v2066 = vpop.f32.mrf.mxu0
        %v2067 = vpop.f32.mrf.mxu0
        %v2068 = vadd.f32 0.0, %v2067
        %v2069 = vpop.f32.mrf.mxu0
        %2070 = vmatprep.mubr.bf16.mxu0 0
        %2071 = vmatmul.mubr.bf16.gmra.mxu0 %v1927
        %v2072 = vpop.f32.mrf.mxu0
        %v2073 = vadd.f32 0.0, %v2072
        %v2074 = vpop.f32.mrf.mxu0
        %v2075 = vpop.f32.mrf.mxu0
        %v2076 = vadd.f32 0.0, %v2075
        %v2077 = vpop.f32.mrf.mxu0
        %2078 = vmatprep.mubr.bf16.mxu0 0
        %2079 = vmatmul.mubr.bf16.gmra.mxu0 %v1928
        %v2080 = vpop.f32.mrf.mxu0
        %v2081 = vadd.f32 0.0, %v2080
        %v2082 = vpop.f32.mrf.mxu0
        %v2083 = vpop.f32.mrf.mxu0
        %v2084 = vadd.f32 0.0, %v2083
        %v2085 = vpop.f32.mrf.mxu0
        %2086 = vmatprep.mubr.bf16.mxu0 0
        %2087 = vmatmul.mubr.bf16.gmra.mxu0 %v1929
        %v2088 = vpop.f32.mrf.mxu0
        %v2089 = vadd.f32 0.0, %v2088
        %v2090 = vpop.f32.mrf.mxu0
        %v2091 = vpop.f32.mrf.mxu0
        %v2092 = vadd.f32 0.0, %v2091
        %v2093 = vpop.f32.mrf.mxu0
        %2094 = vmatprep.mubr.bf16.mxu0 0
        %2095 = vmatmul.mubr.bf16.gmra.mxu0 %v1930
        %v2096 = vpop.f32.mrf.mxu0
        %v2097 = vadd.f32 0.0, %v2096
        %v2098 = vpop.f32.mrf.mxu0
        %v2099 = vpop.f32.mrf.mxu0
        %v2100 = vadd.f32 0.0, %v2099
        %v2101 = vpop.f32.mrf.mxu0
        %2102 = vmatprep.mubr.bf16.mxu0 0
        %2103 = vmatmul.mubr.bf16.gmra.mxu0 %v1931
        %v2104 = vpop.f32.mrf.mxu0
        %v2105 = vadd.f32 0.0, %v2104
        %v2106 = vpop.f32.mrf.mxu0
        %v2107 = vpop.f32.mrf.mxu0
        %v2108 = vadd.f32 0.0, %v2107
        %v2109 = vpop.f32.mrf.mxu0
        %2110 = vmatprep.mubr.bf16.mxu0 0
        %2111 = vmatmul.mubr.bf16.gmra.mxu0 %v1932
        %v2112 = vpop.f32.mrf.mxu0
        %v2113 = vadd.f32 0.0, %v2112
        %v2114 = vpop.f32.mrf.mxu0
        %v2115 = vpop.f32.mrf.mxu0
        %v2116 = vadd.f32 0.0, %v2115
        %v2117 = vpop.f32.mrf.mxu0
        %2118 = vmatprep.mubr.bf16.mxu0 0
        %2119 = vmatmul.mubr.bf16.gmra.mxu0 %v1933
        %v2120 = vpop.f32.mrf.mxu0
        %v2121 = vadd.f32 0.0, %v2120
        %v2122 = vpop.f32.mrf.mxu0
        %v2123 = vpop.f32.mrf.mxu0
        %v2124 = vadd.f32 0.0, %v2123
        %v2125 = vpop.f32.mrf.mxu0
        %2126 = vmatprep.mubr.bf16.mxu0 0
        %2127 = vmatmul.mubr.bf16.gmra.mxu0 %v1934
        %v2128 = vpop.f32.mrf.mxu0
        %v2129 = vadd.f32 0.0, %v2128
        %v2130 = vpop.f32.mrf.mxu0
        %v2131 = vpop.f32.mrf.mxu0
        %v2132 = vadd.f32 0.0, %v2131
        %v2133 = vpop.f32.mrf.mxu0
        %2134 = vmatprep.mubr.bf16.mxu0 0
        %2135 = vmatmul.mubr.bf16.gmra.mxu0 %v1935
        %v2136 = vpop.f32.mrf.mxu0
        %v2137 = vadd.f32 0.0, %v2136
        %v2138 = vpop.f32.mrf.mxu0
        %v2139 = vpop.f32.mrf.mxu0
        %v2140 = vadd.f32 0.0, %v2139
        %v2141 = vpop.f32.mrf.mxu0
        %2142 = vmatprep.mubr.bf16.mxu0 0
        %2143 = vmatmul.mubr.bf16.gmra.mxu0 %v1936
        %v2144 = vpop.f32.mrf.mxu0
        %v2145 = vadd.f32 0.0, %v2144
        %v2146 = vpop.f32.mrf.mxu0
        %v2147 = vpop.f32.mrf.mxu0
        %v2148 = vadd.f32 0.0, %v2147
        %v2149 = vpop.f32.mrf.mxu0
        %2150 = vmatprep.mubr.bf16.mxu0 0
        %2151 = vmatmul.mubr.bf16.gmra.mxu0 %v1937
        %v2152 = vpop.f32.mrf.mxu0
        %v2153 = vadd.f32 0.0, %v2152
        %v2154 = vpop.f32.mrf.mxu0
        %v2155 = vpop.f32.mrf.mxu0
        %v2156 = vadd.f32 0.0, %v2155
        %v2157 = vpop.f32.mrf.mxu0
        %2158 = vmatprep.mubr.bf16.mxu0 0
        %2159 = vmatmul.mubr.bf16.gmra.mxu0 %v1938
        %v2160 = vpop.f32.mrf.mxu0
        %v2161 = vadd.f32 0.0, %v2160
        %v2162 = vpop.f32.mrf.mxu0
        %v2163 = vpop.f32.mrf.mxu0
        %v2164 = vadd.f32 0.0, %v2163
        %v2165 = vpop.f32.mrf.mxu0
        %2166 = vmatprep.mubr.bf16.mxu0 0
        %2167 = vmatmul.mubr.bf16.gmra.mxu0 %v1939
        %v2168 = vpop.f32.mrf.mxu0
        %v2169 = vadd.f32 0.0, %v2168
        %v2170 = vpop.f32.mrf.mxu0
        %v2171 = vpop.f32.mrf.mxu0
        %v2172 = vadd.f32 0.0, %v2171
        %v2173 = vpop.f32.mrf.mxu0
        %2174 = vmatprep.mubr.bf16.mxu0 0
        %2175 = vmatmul.mubr.bf16.gmra.mxu0 %v1940
        %v2176 = vpop.f32.mrf.mxu0
        %v2177 = vadd.f32 0.0, %v2176
        %v2178 = vpop.f32.mrf.mxu0
        %v2179 = vpop.f32.mrf.mxu0
        %v2180 = vadd.f32 0.0, %v2179
        %v2181 = vpop.f32.mrf.mxu0
        %2182 = vdwg.mxu0
        %v2183 = vadd.f32 %v1851, %v2041
        %v2184 = vadd.f32 %v1852, %v2044
        %v2185 = vadd.f32 %v1853, %v2049
        %v2186 = vadd.f32 %v1854, %v2052
        %v2187 = vadd.f32 %v1855, %v2057
        %v2188 = vadd.f32 %v1856, %v2060
        %v2189 = vadd.f32 %v1857, %v2065
        %v2190 = vadd.f32 %v1858, %v2068
        %v2191 = vadd.f32 %v1859, %v2073
        %v2192 = vadd.f32 %v1860, %v2076
        %v2193 = vadd.f32 %v1861, %v2081
        %v2194 = vadd.f32 %v1862, %v2084
        %v2195 = vadd.f32 %v1863, %v2089
        %v2196 = vadd.f32 %v1864, %v2092
        %v2197 = vadd.f32 %v1865, %v2097
        %v2198 = vadd.f32 %v1866, %v2100
        %v2199 = vadd.f32 %v1867, %v2105
        %v2200 = vadd.f32 %v1868, %v2108
        %v2201 = vadd.f32 %v1869, %v2113
        %v2202 = vadd.f32 %v1870, %v2116
        %v2203 = vadd.f32 %v1871, %v2121
        %v2204 = vadd.f32 %v1872, %v2124
        %v2205 = vadd.f32 %v1873, %v2129
        %v2206 = vadd.f32 %v1874, %v2132
        %v2207 = vadd.f32 %v1875, %v2137
        %v2208 = vadd.f32 %v1876, %v2140
        %v2209 = vadd.f32 %v1877, %v2145
        %v2210 = vadd.f32 %v1878, %v2148
        %v2211 = vadd.f32 %v1879, %v2153
        %v2212 = vadd.f32 %v1880, %v2156
        %v2213 = vadd.f32 %v1881, %v2161
        %v2214 = vadd.f32 %v1882, %v2164
        %v2215 = vadd.f32 %v1883, %v2169
        %v2216 = vadd.f32 %v1884, %v2172
        %v2217 = vadd.f32 %v1885, %v2177
        %v2218 = vadd.f32 %v1886, %v2180
        %v2219 = vld [vmem:[%s262 + $0x24] sm:$0xff]
        %v2220 = vld [vmem:[%s262 + $0x2c] sm:$0xff]
        %v2221 = vld [vmem:[%s262 + $0x34] sm:$0xff]
        %v2222 = vld [vmem:[%s262 + $0x3c] sm:$0xff]
        %v2223 = vld [vmem:[%s262 + $0x44] sm:$0xff]
        %v2224 = vld [vmem:[%s262 + $0x4c] sm:$0xff]
        %v2225 = vld [vmem:[%s262 + $0x54] sm:$0xff]
        %v2226 = vld [vmem:[%s262 + $0x5c] sm:$0xff]
        %v2227 = vld [vmem:[%s262 + $0x64] sm:$0xff]
        %v2228 = vld [vmem:[%s262 + $0x6c] sm:$0xff]
        %v2229 = vld [vmem:[%s262 + $0x74] sm:$0xff]
        %v2230 = vld [vmem:[%s262 + $0x7c] sm:$0xff]
        %v2231 = vld [vmem:[%s262 + $0x84] sm:$0xff]
        %v2232 = vld [vmem:[%s262 + $0x8c] sm:$0xff]
        %v2233 = vld [vmem:[%s262 + $0x94] sm:$0xff]
        %v2234 = vld [vmem:[%s262 + $0x9c] sm:$0xff]
        %v2235 = vld [vmem:[%s262 + $0xa4] sm:$0xff]
        %v2236 = vld [vmem:[%s262 + $0xac] sm:$0xff]
        %v2237 = vld [vmem:[%s262 + $0xb4] sm:$0xff]
        %v2238 = vld [vmem:[%s262 + $0xbc] sm:$0xff]
        %v2239 = vld [vmem:[%s262 + $0xc4] sm:$0xff]
        %v2240 = vld [vmem:[%s262 + $0xcc] sm:$0xff]
        %v2241 = vld [vmem:[%s262 + $0xd4] sm:$0xff]
        %v2242 = vld [vmem:[%s262 + $0xdc] sm:$0xff]
        %v2243 = vld [vmem:[%s262 + $0xe4] sm:$0xff]
        %v2244 = vld [vmem:[%s262 + $0xec] sm:$0xff]
        %v2245 = vld [vmem:[%s262 + $0xf4] sm:$0xff]
        %v2246 = vld [vmem:[%s262 + $0xfc] sm:$0xff]
        %v2247 = vld [vmem:[%s262 + $0x104] sm:$0xff]
        %v2248 = vld [vmem:[%s262 + $0x10c] sm:$0xff]
        %v2249 = vld [vmem:[%s262 + $0x114] sm:$0xff]
        %v2250 = vld [vmem:[%s262 + $0x11c] sm:$0xff]
        %v2251 = vld [vmem:[%s262 + $0x124] sm:$0xff]
        %v2252 = vld [vmem:[%s262 + $0x12c] sm:$0xff]
        %v2253 = vld [vmem:[%s262 + $0x134] sm:$0xff]
        %v2254 = vld [vmem:[%s262 + $0x13c] sm:$0xff]
        %v2255 = vpack.c.bf16 %v2220, %v2219
        %v2256 = vpack.c.bf16 %v2222, %v2221
        %v2257 = vpack.c.bf16 %v2224, %v2223
        %v2258 = vpack.c.bf16 %v2226, %v2225
        %v2259 = vpack.c.bf16 %v2228, %v2227
        %v2260 = vpack.c.bf16 %v2230, %v2229
        %v2261 = vpack.c.bf16 %v2232, %v2231
        %v2262 = vpack.c.bf16 %v2234, %v2233
        %v2263 = vpack.c.bf16 %v2236, %v2235
        %v2264 = vpack.c.bf16 %v2238, %v2237
        %v2265 = vpack.c.bf16 %v2240, %v2239
        %v2266 = vpack.c.bf16 %v2242, %v2241
        %v2267 = vpack.c.bf16 %v2244, %v2243
        %v2268 = vpack.c.bf16 %v2246, %v2245
        %v2269 = vpack.c.bf16 %v2248, %v2247
        %v2270 = vpack.c.bf16 %v2250, %v2249
        %v2271 = vpack.c.bf16 %v2252, %v2251
        %v2272 = vpack.c.bf16 %v2254, %v2253
        %s2273 = scalar_lea.vmem [#allocation6], 384
        %v2274 = vld [vmem:[%s2273] sm:$0xf]
        %v2275 = vld [vmem:[%s2273 + $0x4] sm:$0xf]
        %v2276 = vld [vmem:[%s2273 + $0x8] sm:$0xf]
        %v2277 = vld [vmem:[%s2273 + $0xc] sm:$0xf]
        %v2278 = vld [vmem:[%s2273 + $0x10] sm:$0xf]
        %v2279 = vld [vmem:[%s2273 + $0x14] sm:$0xf]
        %v2280 = vld [vmem:[%s2273 + $0x18] sm:$0xf]
        %v2281 = vld [vmem:[%s2273 + $0x1c] sm:$0xf]
        %v2282 = vld [vmem:[%s2273 + $0x20] sm:$0xf]
        %v2283 = vld [vmem:[%s2273 + $0x24] sm:$0xf]
        %v2284 = vld [vmem:[%s2273 + $0x28] sm:$0xf]
        %v2285 = vld [vmem:[%s2273 + $0x2c] sm:$0xf]
        %v2286 = vld [vmem:[%s2273 + $0x30] sm:$0xf]
        %v2287 = vld [vmem:[%s2273 + $0x34] sm:$0xf]
        %v2288 = vld [vmem:[%s2273 + $0x38] sm:$0xf]
        %v2289 = vld [vmem:[%s2273 + $0x3c] sm:$0xf]
        %v2306 = vunpack.c.l.b16 %v2274
        %v2307 = vunpack.c.l.b16 %v2275
        %v2308 = vunpack.c.l.b16 %v2276
        %v2309 = vunpack.c.l.b16 %v2277
        %v2310 = vunpack.c.l.b16 %v2278
        %v2311 = vunpack.c.l.b16 %v2279
        %v2312 = vunpack.c.l.b16 %v2280
        %v2313 = vunpack.c.l.b16 %v2281
        %v2314 = vunpack.c.l.b16 %v2282
        %v2315 = vunpack.c.l.b16 %v2283
        %v2316 = vunpack.c.l.b16 %v2284
        %v2317 = vunpack.c.l.b16 %v2285
        %v2318 = vunpack.c.l.b16 %v2286
        %v2319 = vunpack.c.l.b16 %v2287
        %v2320 = vunpack.c.l.b16 %v2288
        %v2321 = vunpack.c.l.b16 %v2289
        %v2322 = vpack.c.b16 %v2307, %v2306
        %v2323 = vpack.c.b16 %v2309, %v2308
        %v2324 = vpack.c.b16 %v2311, %v2310
        %v2325 = vpack.c.b16 %v2313, %v2312
        %v2326 = vpack.c.b16 %v2315, %v2314
        %v2327 = vpack.c.b16 %v2317, %v2316
        %v2328 = vpack.c.b16 %v2319, %v2318
        %v2329 = vpack.c.b16 %v2321, %v2320
        %2338 = vmatprep.subr.bf16.mxu0 0
        %2339 = vmatpush1.bf16.msra.mxu0 %v2329
        %2340 = vmatprep.subr.bf16.mxu0 0
        %2341 = vmatpush1.bf16.msra.mxu0 %v2328
        %2342 = vmatprep.subr.bf16.mxu0 0
        %2343 = vmatpush1.bf16.msra.mxu0 %v2327
        %2344 = vmatprep.subr.bf16.mxu0 0
        %2345 = vmatpush1.bf16.msra.mxu0 %v2326
        %2346 = vmatprep.subr.bf16.mxu0 0
        %2347 = vmatpush1.bf16.msra.mxu0 %v2325
        %2348 = vmatprep.subr.bf16.mxu0 0
        %2349 = vmatpush1.bf16.msra.mxu0 %v2324
        %2350 = vmatprep.subr.bf16.mxu0 0
        %2351 = vmatpush1.bf16.msra.mxu0 %v2323
        %2352 = vmatprep.subr.bf16.mxu0 0
        %2353 = vmatpush1.bf16.msra.mxu0 %v2322
        %2354 = vmatprep.subr.bf16.mxu0 0
        %2355 = vmatpush2.bf16.msra.mxu0 0
        %2356 = vmatprep.subr.bf16.mxu0 0
        %2357 = vmatpush2.bf16.msra.mxu0 0
        %2358 = vmatprep.subr.bf16.mxu0 0
        %2359 = vmatpush2.bf16.msra.mxu0 0
        %2360 = vmatprep.subr.bf16.mxu0 0
        %2361 = vmatpush2.bf16.msra.mxu0 0
        %2362 = vmatprep.subr.bf16.mxu0 0
        %2363 = vmatpush2.bf16.msra.mxu0 0
        %2364 = vmatprep.subr.bf16.mxu0 0
        %2365 = vmatpush2.bf16.msra.mxu0 0
        %2366 = vmatprep.subr.bf16.mxu0 0
        %2367 = vmatpush2.bf16.msra.mxu0 0
        %2368 = vmatprep.subr.bf16.mxu0 0
        %2369 = vmatpush2.bf16.msra.mxu0 0
        %2370 = vmatprep.mubr.bf16.mxu0 0
        %2371 = vmatmul.mubr.bf16.gmra.mxu0 %v2255
        %v2372 = vpop.f32.mrf.mxu0
        %v2373 = vadd.f32 0.0, %v2372
        %v2374 = vpop.f32.mrf.mxu0
        %v2375 = vpop.f32.mrf.mxu0
        %v2376 = vadd.f32 0.0, %v2375
        %v2377 = vpop.f32.mrf.mxu0
        %2378 = vmatprep.mubr.bf16.mxu0 0
        %2379 = vmatmul.mubr.bf16.gmra.mxu0 %v2256
        %v2380 = vpop.f32.mrf.mxu0
        %v2381 = vadd.f32 0.0, %v2380
        %v2382 = vpop.f32.mrf.mxu0
        %v2383 = vpop.f32.mrf.mxu0
        %v2384 = vadd.f32 0.0, %v2383
        %v2385 = vpop.f32.mrf.mxu0
        %2386 = vmatprep.mubr.bf16.mxu0 0
        %2387 = vmatmul.mubr.bf16.gmra.mxu0 %v2257
        %v2388 = vpop.f32.mrf.mxu0
        %v2389 = vadd.f32 0.0, %v2388
        %v2390 = vpop.f32.mrf.mxu0
        %v2391 = vpop.f32.mrf.mxu0
        %v2392 = vadd.f32 0.0, %v2391
        %v2393 = vpop.f32.mrf.mxu0
        %2394 = vmatprep.mubr.bf16.mxu0 0
        %2395 = vmatmul.mubr.bf16.gmra.mxu0 %v2258
        %v2396 = vpop.f32.mrf.mxu0
        %v2397 = vadd.f32 0.0, %v2396
        %v2398 = vpop.f32.mrf.mxu0
        %v2399 = vpop.f32.mrf.mxu0
        %v2400 = vadd.f32 0.0, %v2399
        %v2401 = vpop.f32.mrf.mxu0
        %2402 = vmatprep.mubr.bf16.mxu0 0
        %2403 = vmatmul.mubr.bf16.gmra.mxu0 %v2259
        %v2404 = vpop.f32.mrf.mxu0
        %v2405 = vadd.f32 0.0, %v2404
        %v2406 = vpop.f32.mrf.mxu0
        %v2407 = vpop.f32.mrf.mxu0
        %v2408 = vadd.f32 0.0, %v2407
        %v2409 = vpop.f32.mrf.mxu0
        %2410 = vmatprep.mubr.bf16.mxu0 0
        %2411 = vmatmul.mubr.bf16.gmra.mxu0 %v2260
        %v2412 = vpop.f32.mrf.mxu0
        %v2413 = vadd.f32 0.0, %v2412
        %v2414 = vpop.f32.mrf.mxu0
        %v2415 = vpop.f32.mrf.mxu0
        %v2416 = vadd.f32 0.0, %v2415
        %v2417 = vpop.f32.mrf.mxu0
        %2418 = vmatprep.mubr.bf16.mxu0 0
        %2419 = vmatmul.mubr.bf16.gmra.mxu0 %v2261
        %v2420 = vpop.f32.mrf.mxu0
        %v2421 = vadd.f32 0.0, %v2420
        %v2422 = vpop.f32.mrf.mxu0
        %v2423 = vpop.f32.mrf.mxu0
        %v2424 = vadd.f32 0.0, %v2423
        %v2425 = vpop.f32.mrf.mxu0
        %2426 = vmatprep.mubr.bf16.mxu0 0
        %2427 = vmatmul.mubr.bf16.gmra.mxu0 %v2262
        %v2428 = vpop.f32.mrf.mxu0
        %v2429 = vadd.f32 0.0, %v2428
        %v2430 = vpop.f32.mrf.mxu0
        %v2431 = vpop.f32.mrf.mxu0
        %v2432 = vadd.f32 0.0, %v2431
        %v2433 = vpop.f32.mrf.mxu0
        %2434 = vmatprep.mubr.bf16.mxu0 0
        %2435 = vmatmul.mubr.bf16.gmra.mxu0 %v2263
        %v2436 = vpop.f32.mrf.mxu0
        %v2437 = vadd.f32 0.0, %v2436
        %v2438 = vpop.f32.mrf.mxu0
        %v2439 = vpop.f32.mrf.mxu0
        %v2440 = vadd.f32 0.0, %v2439
        %v2441 = vpop.f32.mrf.mxu0
        %2442 = vmatprep.mubr.bf16.mxu0 0
        %2443 = vmatmul.mubr.bf16.gmra.mxu0 %v2264
        %v2444 = vpop.f32.mrf.mxu0
        %v2445 = vadd.f32 0.0, %v2444
        %v2446 = vpop.f32.mrf.mxu0
        %v2447 = vpop.f32.mrf.mxu0
        %v2448 = vadd.f32 0.0, %v2447
        %v2449 = vpop.f32.mrf.mxu0
        %2450 = vmatprep.mubr.bf16.mxu0 0
        %2451 = vmatmul.mubr.bf16.gmra.mxu0 %v2265
        %v2452 = vpop.f32.mrf.mxu0
        %v2453 = vadd.f32 0.0, %v2452
        %v2454 = vpop.f32.mrf.mxu0
        %v2455 = vpop.f32.mrf.mxu0
        %v2456 = vadd.f32 0.0, %v2455
        %v2457 = vpop.f32.mrf.mxu0
        %2458 = vmatprep.mubr.bf16.mxu0 0
        %2459 = vmatmul.mubr.bf16.gmra.mxu0 %v2266
        %v2460 = vpop.f32.mrf.mxu0
        %v2461 = vadd.f32 0.0, %v2460
        %v2462 = vpop.f32.mrf.mxu0
        %v2463 = vpop.f32.mrf.mxu0
        %v2464 = vadd.f32 0.0, %v2463
        %v2465 = vpop.f32.mrf.mxu0
        %2466 = vmatprep.mubr.bf16.mxu0 0
        %2467 = vmatmul.mubr.bf16.gmra.mxu0 %v2267
        %v2468 = vpop.f32.mrf.mxu0
        %v2469 = vadd.f32 0.0, %v2468
        %v2470 = vpop.f32.mrf.mxu0
        %v2471 = vpop.f32.mrf.mxu0
        %v2472 = vadd.f32 0.0, %v2471
        %v2473 = vpop.f32.mrf.mxu0
        %2474 = vmatprep.mubr.bf16.mxu0 0
        %2475 = vmatmul.mubr.bf16.gmra.mxu0 %v2268
        %v2476 = vpop.f32.mrf.mxu0
        %v2477 = vadd.f32 0.0, %v2476
        %v2478 = vpop.f32.mrf.mxu0
        %v2479 = vpop.f32.mrf.mxu0
        %v2480 = vadd.f32 0.0, %v2479
        %v2481 = vpop.f32.mrf.mxu0
        %2482 = vmatprep.mubr.bf16.mxu0 0
        %2483 = vmatmul.mubr.bf16.gmra.mxu0 %v2269
        %v2484 = vpop.f32.mrf.mxu0
        %v2485 = vadd.f32 0.0, %v2484
        %v2486 = vpop.f32.mrf.mxu0
        %v2487 = vpop.f32.mrf.mxu0
        %v2488 = vadd.f32 0.0, %v2487
        %v2489 = vpop.f32.mrf.mxu0
        %2490 = vmatprep.mubr.bf16.mxu0 0
        %2491 = vmatmul.mubr.bf16.gmra.mxu0 %v2270
        %v2492 = vpop.f32.mrf.mxu0
        %v2493 = vadd.f32 0.0, %v2492
        %v2494 = vpop.f32.mrf.mxu0
        %v2495 = vpop.f32.mrf.mxu0
        %v2496 = vadd.f32 0.0, %v2495
        %v2497 = vpop.f32.mrf.mxu0
        %2498 = vmatprep.mubr.bf16.mxu0 0
        %2499 = vmatmul.mubr.bf16.gmra.mxu0 %v2271
        %v2500 = vpop.f32.mrf.mxu0
        %v2501 = vadd.f32 0.0, %v2500
        %v2502 = vpop.f32.mrf.mxu0
        %v2503 = vpop.f32.mrf.mxu0
        %v2504 = vadd.f32 0.0, %v2503
        %v2505 = vpop.f32.mrf.mxu0
        %2506 = vmatprep.mubr.bf16.mxu0 0
        %2507 = vmatmul.mubr.bf16.gmra.mxu0 %v2272
        %v2508 = vpop.f32.mrf.mxu0
        %v2509 = vadd.f32 0.0, %v2508
        %v2510 = vpop.f32.mrf.mxu0
        %v2511 = vpop.f32.mrf.mxu0
        %v2512 = vadd.f32 0.0, %v2511
        %v2513 = vpop.f32.mrf.mxu0
        %2514 = vdwg.mxu0
        %v2515 = vadd.f32 %v2183, %v2373
        %v2516 = vadd.f32 %v2184, %v2376
        %v2517 = vadd.f32 %v2185, %v2381
        %v2518 = vadd.f32 %v2186, %v2384
        %v2519 = vadd.f32 %v2187, %v2389
        %v2520 = vadd.f32 %v2188, %v2392
        %v2521 = vadd.f32 %v2189, %v2397
        %v2522 = vadd.f32 %v2190, %v2400
        %v2523 = vadd.f32 %v2191, %v2405
        %v2524 = vadd.f32 %v2192, %v2408
        %v2525 = vadd.f32 %v2193, %v2413
        %v2526 = vadd.f32 %v2194, %v2416
        %v2527 = vadd.f32 %v2195, %v2421
        %v2528 = vadd.f32 %v2196, %v2424
        %v2529 = vadd.f32 %v2197, %v2429
        %v2530 = vadd.f32 %v2198, %v2432
        %v2531 = vadd.f32 %v2199, %v2437
        %v2532 = vadd.f32 %v2200, %v2440
        %v2533 = vadd.f32 %v2201, %v2445
        %v2534 = vadd.f32 %v2202, %v2448
        %v2535 = vadd.f32 %v2203, %v2453
        %v2536 = vadd.f32 %v2204, %v2456
        %v2537 = vadd.f32 %v2205, %v2461
        %v2538 = vadd.f32 %v2206, %v2464
        %v2539 = vadd.f32 %v2207, %v2469
        %v2540 = vadd.f32 %v2208, %v2472
        %v2541 = vadd.f32 %v2209, %v2477
        %v2542 = vadd.f32 %v2210, %v2480
        %v2543 = vadd.f32 %v2211, %v2485
        %v2544 = vadd.f32 %v2212, %v2488
        %v2545 = vadd.f32 %v2213, %v2493
        %v2546 = vadd.f32 %v2214, %v2496
        %v2547 = vadd.f32 %v2215, %v2501
        %v2548 = vadd.f32 %v2216, %v2504
        %v2549 = vadd.f32 %v2217, %v2509
        %v2550 = vadd.f32 %v2218, %v2512
        %v2551 = vld [vmem:[%s262 + $0x25] sm:$0xff]
        %v2552 = vld [vmem:[%s262 + $0x2d] sm:$0xff]
        %v2553 = vld [vmem:[%s262 + $0x35] sm:$0xff]
        %v2554 = vld [vmem:[%s262 + $0x3d] sm:$0xff]
        %v2555 = vld [vmem:[%s262 + $0x45] sm:$0xff]
        %v2556 = vld [vmem:[%s262 + $0x4d] sm:$0xff]
        %v2557 = vld [vmem:[%s262 + $0x55] sm:$0xff]
        %v2558 = vld [vmem:[%s262 + $0x5d] sm:$0xff]
        %v2559 = vld [vmem:[%s262 + $0x65] sm:$0xff]
        %v2560 = vld [vmem:[%s262 + $0x6d] sm:$0xff]
        %v2561 = vld [vmem:[%s262 + $0x75] sm:$0xff]
        %v2562 = vld [vmem:[%s262 + $0x7d] sm:$0xff]
        %v2563 = vld [vmem:[%s262 + $0x85] sm:$0xff]
        %v2564 = vld [vmem:[%s262 + $0x8d] sm:$0xff]
        %v2565 = vld [vmem:[%s262 + $0x95] sm:$0xff]
        %v2566 = vld [vmem:[%s262 + $0x9d] sm:$0xff]
        %v2567 = vld [vmem:[%s262 + $0xa5] sm:$0xff]
        %v2568 = vld [vmem:[%s262 + $0xad] sm:$0xff]
        %v2569 = vld [vmem:[%s262 + $0xb5] sm:$0xff]
        %v2570 = vld [vmem:[%s262 + $0xbd] sm:$0xff]
        %v2571 = vld [vmem:[%s262 + $0xc5] sm:$0xff]
        %v2572 = vld [vmem:[%s262 + $0xcd] sm:$0xff]
        %v2573 = vld [vmem:[%s262 + $0xd5] sm:$0xff]
        %v2574 = vld [vmem:[%s262 + $0xdd] sm:$0xff]
        %v2575 = vld [vmem:[%s262 + $0xe5] sm:$0xff]
        %v2576 = vld [vmem:[%s262 + $0xed] sm:$0xff]
        %v2577 = vld [vmem:[%s262 + $0xf5] sm:$0xff]
        %v2578 = vld [vmem:[%s262 + $0xfd] sm:$0xff]
        %v2579 = vld [vmem:[%s262 + $0x105] sm:$0xff]
        %v2580 = vld [vmem:[%s262 + $0x10d] sm:$0xff]
        %v2581 = vld [vmem:[%s262 + $0x115] sm:$0xff]
        %v2582 = vld [vmem:[%s262 + $0x11d] sm:$0xff]
        %v2583 = vld [vmem:[%s262 + $0x125] sm:$0xff]
        %v2584 = vld [vmem:[%s262 + $0x12d] sm:$0xff]
        %v2585 = vld [vmem:[%s262 + $0x135] sm:$0xff]
        %v2586 = vld [vmem:[%s262 + $0x13d] sm:$0xff]
        %v2587 = vpack.c.bf16 %v2552, %v2551
        %v2588 = vpack.c.bf16 %v2554, %v2553
        %v2589 = vpack.c.bf16 %v2556, %v2555
        %v2590 = vpack.c.bf16 %v2558, %v2557
        %v2591 = vpack.c.bf16 %v2560, %v2559
        %v2592 = vpack.c.bf16 %v2562, %v2561
        %v2593 = vpack.c.bf16 %v2564, %v2563
        %v2594 = vpack.c.bf16 %v2566, %v2565
        %v2595 = vpack.c.bf16 %v2568, %v2567
        %v2596 = vpack.c.bf16 %v2570, %v2569
        %v2597 = vpack.c.bf16 %v2572, %v2571
        %v2598 = vpack.c.bf16 %v2574, %v2573
        %v2599 = vpack.c.bf16 %v2576, %v2575
        %v2600 = vpack.c.bf16 %v2578, %v2577
        %v2601 = vpack.c.bf16 %v2580, %v2579
        %v2602 = vpack.c.bf16 %v2582, %v2581
        %v2603 = vpack.c.bf16 %v2584, %v2583
        %v2604 = vpack.c.bf16 %v2586, %v2585
        %s2605 = scalar_lea.vmem [#allocation6], 448
        %v2606 = vld [vmem:[%s2605] sm:$0xf]
        %v2607 = vld [vmem:[%s2605 + $0x4] sm:$0xf]
        %v2608 = vld [vmem:[%s2605 + $0x8] sm:$0xf]
        %v2609 = vld [vmem:[%s2605 + $0xc] sm:$0xf]
        %v2610 = vld [vmem:[%s2605 + $0x10] sm:$0xf]
        %v2611 = vld [vmem:[%s2605 + $0x14] sm:$0xf]
        %v2612 = vld [vmem:[%s2605 + $0x18] sm:$0xf]
        %v2613 = vld [vmem:[%s2605 + $0x1c] sm:$0xf]
        %v2614 = vld [vmem:[%s2605 + $0x20] sm:$0xf]
        %v2615 = vld [vmem:[%s2605 + $0x24] sm:$0xf]
        %v2616 = vld [vmem:[%s2605 + $0x28] sm:$0xf]
        %v2617 = vld [vmem:[%s2605 + $0x2c] sm:$0xf]
        %v2618 = vld [vmem:[%s2605 + $0x30] sm:$0xf]
        %v2619 = vld [vmem:[%s2605 + $0x34] sm:$0xf]
        %v2620 = vld [vmem:[%s2605 + $0x38] sm:$0xf]
        %v2621 = vld [vmem:[%s2605 + $0x3c] sm:$0xf]
        %v2638 = vunpack.c.l.b16 %v2606
        %v2639 = vunpack.c.l.b16 %v2607
        %v2640 = vunpack.c.l.b16 %v2608
        %v2641 = vunpack.c.l.b16 %v2609
        %v2642 = vunpack.c.l.b16 %v2610
        %v2643 = vunpack.c.l.b16 %v2611
        %v2644 = vunpack.c.l.b16 %v2612
        %v2645 = vunpack.c.l.b16 %v2613
        %v2646 = vunpack.c.l.b16 %v2614
        %v2647 = vunpack.c.l.b16 %v2615
        %v2648 = vunpack.c.l.b16 %v2616
        %v2649 = vunpack.c.l.b16 %v2617
        %v2650 = vunpack.c.l.b16 %v2618
        %v2651 = vunpack.c.l.b16 %v2619
        %v2652 = vunpack.c.l.b16 %v2620
        %v2653 = vunpack.c.l.b16 %v2621
        %v2654 = vpack.c.b16 %v2639, %v2638
        %v2655 = vpack.c.b16 %v2641, %v2640
        %v2656 = vpack.c.b16 %v2643, %v2642
        %v2657 = vpack.c.b16 %v2645, %v2644
        %v2658 = vpack.c.b16 %v2647, %v2646
        %v2659 = vpack.c.b16 %v2649, %v2648
        %v2660 = vpack.c.b16 %v2651, %v2650
        %v2661 = vpack.c.b16 %v2653, %v2652
        %2670 = vmatprep.subr.bf16.mxu0 0
        %2671 = vmatpush1.bf16.msra.mxu0 %v2661
        %2672 = vmatprep.subr.bf16.mxu0 0
        %2673 = vmatpush1.bf16.msra.mxu0 %v2660
        %2674 = vmatprep.subr.bf16.mxu0 0
        %2675 = vmatpush1.bf16.msra.mxu0 %v2659
        %2676 = vmatprep.subr.bf16.mxu0 0
        %2677 = vmatpush1.bf16.msra.mxu0 %v2658
        %2678 = vmatprep.subr.bf16.mxu0 0
        %2679 = vmatpush1.bf16.msra.mxu0 %v2657
        %2680 = vmatprep.subr.bf16.mxu0 0
        %2681 = vmatpush1.bf16.msra.mxu0 %v2656
        %2682 = vmatprep.subr.bf16.mxu0 0
        %2683 = vmatpush1.bf16.msra.mxu0 %v2655
        %2684 = vmatprep.subr.bf16.mxu0 0
        %2685 = vmatpush1.bf16.msra.mxu0 %v2654
        %2686 = vmatprep.subr.bf16.mxu0 0
        %2687 = vmatpush2.bf16.msra.mxu0 0
        %2688 = vmatprep.subr.bf16.mxu0 0
        %2689 = vmatpush2.bf16.msra.mxu0 0
        %2690 = vmatprep.subr.bf16.mxu0 0
        %2691 = vmatpush2.bf16.msra.mxu0 0
        %2692 = vmatprep.subr.bf16.mxu0 0
        %2693 = vmatpush2.bf16.msra.mxu0 0
        %2694 = vmatprep.subr.bf16.mxu0 0
        %2695 = vmatpush2.bf16.msra.mxu0 0
        %2696 = vmatprep.subr.bf16.mxu0 0
        %2697 = vmatpush2.bf16.msra.mxu0 0
        %2698 = vmatprep.subr.bf16.mxu0 0
        %2699 = vmatpush2.bf16.msra.mxu0 0
        %2700 = vmatprep.subr.bf16.mxu0 0
        %2701 = vmatpush2.bf16.msra.mxu0 0
        %2702 = vmatprep.mubr.bf16.mxu0 0
        %2703 = vmatmul.mubr.bf16.gmra.mxu0 %v2587
        %v2704 = vpop.f32.mrf.mxu0
        %v2705 = vadd.f32 0.0, %v2704
        %v2706 = vpop.f32.mrf.mxu0
        %v2707 = vpop.f32.mrf.mxu0
        %v2708 = vadd.f32 0.0, %v2707
        %v2709 = vpop.f32.mrf.mxu0
        %2710 = vmatprep.mubr.bf16.mxu0 0
        %2711 = vmatmul.mubr.bf16.gmra.mxu0 %v2588
        %v2712 = vpop.f32.mrf.mxu0
        %v2713 = vadd.f32 0.0, %v2712
        %v2714 = vpop.f32.mrf.mxu0
        %v2715 = vpop.f32.mrf.mxu0
        %v2716 = vadd.f32 0.0, %v2715
        %v2717 = vpop.f32.mrf.mxu0
        %2718 = vmatprep.mubr.bf16.mxu0 0
        %2719 = vmatmul.mubr.bf16.gmra.mxu0 %v2589
        %v2720 = vpop.f32.mrf.mxu0
        %v2721 = vadd.f32 0.0, %v2720
        %v2722 = vpop.f32.mrf.mxu0
        %v2723 = vpop.f32.mrf.mxu0
        %v2724 = vadd.f32 0.0, %v2723
        %v2725 = vpop.f32.mrf.mxu0
        %2726 = vmatprep.mubr.bf16.mxu0 0
        %2727 = vmatmul.mubr.bf16.gmra.mxu0 %v2590
        %v2728 = vpop.f32.mrf.mxu0
        %v2729 = vadd.f32 0.0, %v2728
        %v2730 = vpop.f32.mrf.mxu0
        %v2731 = vpop.f32.mrf.mxu0
        %v2732 = vadd.f32 0.0, %v2731
        %v2733 = vpop.f32.mrf.mxu0
        %2734 = vmatprep.mubr.bf16.mxu0 0
        %2735 = vmatmul.mubr.bf16.gmra.mxu0 %v2591
        %v2736 = vpop.f32.mrf.mxu0
        %v2737 = vadd.f32 0.0, %v2736
        %v2738 = vpop.f32.mrf.mxu0
        %v2739 = vpop.f32.mrf.mxu0
        %v2740 = vadd.f32 0.0, %v2739
        %v2741 = vpop.f32.mrf.mxu0
        %2742 = vmatprep.mubr.bf16.mxu0 0
        %2743 = vmatmul.mubr.bf16.gmra.mxu0 %v2592
        %v2744 = vpop.f32.mrf.mxu0
        %v2745 = vadd.f32 0.0, %v2744
        %v2746 = vpop.f32.mrf.mxu0
        %v2747 = vpop.f32.mrf.mxu0
        %v2748 = vadd.f32 0.0, %v2747
        %v2749 = vpop.f32.mrf.mxu0
        %2750 = vmatprep.mubr.bf16.mxu0 0
        %2751 = vmatmul.mubr.bf16.gmra.mxu0 %v2593
        %v2752 = vpop.f32.mrf.mxu0
        %v2753 = vadd.f32 0.0, %v2752
        %v2754 = vpop.f32.mrf.mxu0
        %v2755 = vpop.f32.mrf.mxu0
        %v2756 = vadd.f32 0.0, %v2755
        %v2757 = vpop.f32.mrf.mxu0
        %2758 = vmatprep.mubr.bf16.mxu0 0
        %2759 = vmatmul.mubr.bf16.gmra.mxu0 %v2594
        %v2760 = vpop.f32.mrf.mxu0
        %v2761 = vadd.f32 0.0, %v2760
        %v2762 = vpop.f32.mrf.mxu0
        %v2763 = vpop.f32.mrf.mxu0
        %v2764 = vadd.f32 0.0, %v2763
        %v2765 = vpop.f32.mrf.mxu0
        %2766 = vmatprep.mubr.bf16.mxu0 0
        %2767 = vmatmul.mubr.bf16.gmra.mxu0 %v2595
        %v2768 = vpop.f32.mrf.mxu0
        %v2769 = vadd.f32 0.0, %v2768
        %v2770 = vpop.f32.mrf.mxu0
        %v2771 = vpop.f32.mrf.mxu0
        %v2772 = vadd.f32 0.0, %v2771
        %v2773 = vpop.f32.mrf.mxu0
        %2774 = vmatprep.mubr.bf16.mxu0 0
        %2775 = vmatmul.mubr.bf16.gmra.mxu0 %v2596
        %v2776 = vpop.f32.mrf.mxu0
        %v2777 = vadd.f32 0.0, %v2776
        %v2778 = vpop.f32.mrf.mxu0
        %v2779 = vpop.f32.mrf.mxu0
        %v2780 = vadd.f32 0.0, %v2779
        %v2781 = vpop.f32.mrf.mxu0
        %2782 = vmatprep.mubr.bf16.mxu0 0
        %2783 = vmatmul.mubr.bf16.gmra.mxu0 %v2597
        %v2784 = vpop.f32.mrf.mxu0
        %v2785 = vadd.f32 0.0, %v2784
        %v2786 = vpop.f32.mrf.mxu0
        %v2787 = vpop.f32.mrf.mxu0
        %v2788 = vadd.f32 0.0, %v2787
        %v2789 = vpop.f32.mrf.mxu0
        %2790 = vmatprep.mubr.bf16.mxu0 0
        %2791 = vmatmul.mubr.bf16.gmra.mxu0 %v2598
        %v2792 = vpop.f32.mrf.mxu0
        %v2793 = vadd.f32 0.0, %v2792
        %v2794 = vpop.f32.mrf.mxu0
        %v2795 = vpop.f32.mrf.mxu0
        %v2796 = vadd.f32 0.0, %v2795
        %v2797 = vpop.f32.mrf.mxu0
        %2798 = vmatprep.mubr.bf16.mxu0 0
        %2799 = vmatmul.mubr.bf16.gmra.mxu0 %v2599
        %v2800 = vpop.f32.mrf.mxu0
        %v2801 = vadd.f32 0.0, %v2800
        %v2802 = vpop.f32.mrf.mxu0
        %v2803 = vpop.f32.mrf.mxu0
        %v2804 = vadd.f32 0.0, %v2803
        %v2805 = vpop.f32.mrf.mxu0
        %2806 = vmatprep.mubr.bf16.mxu0 0
        %2807 = vmatmul.mubr.bf16.gmra.mxu0 %v2600
        %v2808 = vpop.f32.mrf.mxu0
        %v2809 = vadd.f32 0.0, %v2808
        %v2810 = vpop.f32.mrf.mxu0
        %v2811 = vpop.f32.mrf.mxu0
        %v2812 = vadd.f32 0.0, %v2811
        %v2813 = vpop.f32.mrf.mxu0
        %2814 = vmatprep.mubr.bf16.mxu0 0
        %2815 = vmatmul.mubr.bf16.gmra.mxu0 %v2601
        %v2816 = vpop.f32.mrf.mxu0
        %v2817 = vadd.f32 0.0, %v2816
        %v2818 = vpop.f32.mrf.mxu0
        %v2819 = vpop.f32.mrf.mxu0
        %v2820 = vadd.f32 0.0, %v2819
        %v2821 = vpop.f32.mrf.mxu0
        %2822 = vmatprep.mubr.bf16.mxu0 0
        %2823 = vmatmul.mubr.bf16.gmra.mxu0 %v2602
        %v2824 = vpop.f32.mrf.mxu0
        %v2825 = vadd.f32 0.0, %v2824
        %v2826 = vpop.f32.mrf.mxu0
        %v2827 = vpop.f32.mrf.mxu0
        %v2828 = vadd.f32 0.0, %v2827
        %v2829 = vpop.f32.mrf.mxu0
        %2830 = vmatprep.mubr.bf16.mxu0 0
        %2831 = vmatmul.mubr.bf16.gmra.mxu0 %v2603
        %v2832 = vpop.f32.mrf.mxu0
        %v2833 = vadd.f32 0.0, %v2832
        %v2834 = vpop.f32.mrf.mxu0
        %v2835 = vpop.f32.mrf.mxu0
        %v2836 = vadd.f32 0.0, %v2835
        %v2837 = vpop.f32.mrf.mxu0
        %2838 = vmatprep.mubr.bf16.mxu0 0
        %2839 = vmatmul.mubr.bf16.gmra.mxu0 %v2604
        %v2840 = vpop.f32.mrf.mxu0
        %v2841 = vadd.f32 0.0, %v2840
        %v2842 = vpop.f32.mrf.mxu0
        %v2843 = vpop.f32.mrf.mxu0
        %v2844 = vadd.f32 0.0, %v2843
        %v2845 = vpop.f32.mrf.mxu0
        %2846 = vdwg.mxu0
        %v2847 = vadd.f32 %v2515, %v2705
        %v2848 = vadd.f32 %v2516, %v2708
        %v2849 = vadd.f32 %v2517, %v2713
        %v2850 = vadd.f32 %v2518, %v2716
        %v2851 = vadd.f32 %v2519, %v2721
        %v2852 = vadd.f32 %v2520, %v2724
        %v2853 = vadd.f32 %v2521, %v2729
        %v2854 = vadd.f32 %v2522, %v2732
        %v2855 = vadd.f32 %v2523, %v2737
        %v2856 = vadd.f32 %v2524, %v2740
        %v2857 = vadd.f32 %v2525, %v2745
        %v2858 = vadd.f32 %v2526, %v2748
        %v2859 = vadd.f32 %v2527, %v2753
        %v2860 = vadd.f32 %v2528, %v2756
        %v2861 = vadd.f32 %v2529, %v2761
        %v2862 = vadd.f32 %v2530, %v2764
        %v2863 = vadd.f32 %v2531, %v2769
        %v2864 = vadd.f32 %v2532, %v2772
        %v2865 = vadd.f32 %v2533, %v2777
        %v2866 = vadd.f32 %v2534, %v2780
        %v2867 = vadd.f32 %v2535, %v2785
        %v2868 = vadd.f32 %v2536, %v2788
        %v2869 = vadd.f32 %v2537, %v2793
        %v2870 = vadd.f32 %v2538, %v2796
        %v2871 = vadd.f32 %v2539, %v2801
        %v2872 = vadd.f32 %v2540, %v2804
        %v2873 = vadd.f32 %v2541, %v2809
        %v2874 = vadd.f32 %v2542, %v2812
        %v2875 = vadd.f32 %v2543, %v2817
        %v2876 = vadd.f32 %v2544, %v2820
        %v2877 = vadd.f32 %v2545, %v2825
        %v2878 = vadd.f32 %v2546, %v2828
        %v2879 = vadd.f32 %v2547, %v2833
        %v2880 = vadd.f32 %v2548, %v2836
        %v2881 = vadd.f32 %v2549, %v2841
        %v2882 = vadd.f32 %v2550, %v2844
        %v2883 = vld [vmem:[%s262 + $0x26] sm:$0xff]
        %v2884 = vld [vmem:[%s262 + $0x2e] sm:$0xff]
        %v2885 = vld [vmem:[%s262 + $0x36] sm:$0xff]
        %v2886 = vld [vmem:[%s262 + $0x3e] sm:$0xff]
        %v2887 = vld [vmem:[%s262 + $0x46] sm:$0xff]
        %v2888 = vld [vmem:[%s262 + $0x4e] sm:$0xff]
        %v2889 = vld [vmem:[%s262 + $0x56] sm:$0xff]
        %v2890 = vld [vmem:[%s262 + $0x5e] sm:$0xff]
        %v2891 = vld [vmem:[%s262 + $0x66] sm:$0xff]
        %v2892 = vld [vmem:[%s262 + $0x6e] sm:$0xff]
        %v2893 = vld [vmem:[%s262 + $0x76] sm:$0xff]
        %v2894 = vld [vmem:[%s262 + $0x7e] sm:$0xff]
        %v2895 = vld [vmem:[%s262 + $0x86] sm:$0xff]
        %v2896 = vld [vmem:[%s262 + $0x8e] sm:$0xff]
        %v2897 = vld [vmem:[%s262 + $0x96] sm:$0xff]
        %v2898 = vld [vmem:[%s262 + $0x9e] sm:$0xff]
        %v2899 = vld [vmem:[%s262 + $0xa6] sm:$0xff]
        %v2900 = vld [vmem:[%s262 + $0xae] sm:$0xff]
        %v2901 = vld [vmem:[%s262 + $0xb6] sm:$0xff]
        %v2902 = vld [vmem:[%s262 + $0xbe] sm:$0xff]
        %v2903 = vld [vmem:[%s262 + $0xc6] sm:$0xff]
        %v2904 = vld [vmem:[%s262 + $0xce] sm:$0xff]
        %v2905 = vld [vmem:[%s262 + $0xd6] sm:$0xff]
        %v2906 = vld [vmem:[%s262 + $0xde] sm:$0xff]
        %v2907 = vld [vmem:[%s262 + $0xe6] sm:$0xff]
        %v2908 = vld [vmem:[%s262 + $0xee] sm:$0xff]
        %v2909 = vld [vmem:[%s262 + $0xf6] sm:$0xff]
        %v2910 = vld [vmem:[%s262 + $0xfe] sm:$0xff]
        %v2911 = vld [vmem:[%s262 + $0x106] sm:$0xff]
        %v2912 = vld [vmem:[%s262 + $0x10e] sm:$0xff]
        %v2913 = vld [vmem:[%s262 + $0x116] sm:$0xff]
        %v2914 = vld [vmem:[%s262 + $0x11e] sm:$0xff]
        %v2915 = vld [vmem:[%s262 + $0x126] sm:$0xff]
        %v2916 = vld [vmem:[%s262 + $0x12e] sm:$0xff]
        %v2917 = vld [vmem:[%s262 + $0x136] sm:$0xff]
        %v2918 = vld [vmem:[%s262 + $0x13e] sm:$0xff]
        %v2919 = vpack.c.bf16 %v2884, %v2883
        %v2920 = vpack.c.bf16 %v2886, %v2885
        %v2921 = vpack.c.bf16 %v2888, %v2887
        %v2922 = vpack.c.bf16 %v2890, %v2889
        %v2923 = vpack.c.bf16 %v2892, %v2891
        %v2924 = vpack.c.bf16 %v2894, %v2893
        %v2925 = vpack.c.bf16 %v2896, %v2895
        %v2926 = vpack.c.bf16 %v2898, %v2897
        %v2927 = vpack.c.bf16 %v2900, %v2899
        %v2928 = vpack.c.bf16 %v2902, %v2901
        %v2929 = vpack.c.bf16 %v2904, %v2903
        %v2930 = vpack.c.bf16 %v2906, %v2905
        %v2931 = vpack.c.bf16 %v2908, %v2907
        %v2932 = vpack.c.bf16 %v2910, %v2909
        %v2933 = vpack.c.bf16 %v2912, %v2911
        %v2934 = vpack.c.bf16 %v2914, %v2913
        %v2935 = vpack.c.bf16 %v2916, %v2915
        %v2936 = vpack.c.bf16 %v2918, %v2917
        %s2937 = scalar_lea.vmem [#allocation6], 512
        %v2938 = vld [vmem:[%s2937] sm:$0xf]
        %v2939 = vld [vmem:[%s2937 + $0x4] sm:$0xf]
        %v2940 = vld [vmem:[%s2937 + $0x8] sm:$0xf]
        %v2941 = vld [vmem:[%s2937 + $0xc] sm:$0xf]
        %v2942 = vld [vmem:[%s2937 + $0x10] sm:$0xf]
        %v2943 = vld [vmem:[%s2937 + $0x14] sm:$0xf]
        %v2944 = vld [vmem:[%s2937 + $0x18] sm:$0xf]
        %v2945 = vld [vmem:[%s2937 + $0x1c] sm:$0xf]
        %v2946 = vld [vmem:[%s2937 + $0x20] sm:$0xf]
        %v2947 = vld [vmem:[%s2937 + $0x24] sm:$0xf]
        %v2948 = vld [vmem:[%s2937 + $0x28] sm:$0xf]
        %v2949 = vld [vmem:[%s2937 + $0x2c] sm:$0xf]
        %v2950 = vld [vmem:[%s2937 + $0x30] sm:$0xf]
        %v2951 = vld [vmem:[%s2937 + $0x34] sm:$0xf]
        %v2952 = vld [vmem:[%s2937 + $0x38] sm:$0xf]
        %v2953 = vld [vmem:[%s2937 + $0x3c] sm:$0xf]
        %v2970 = vunpack.c.l.b16 %v2938
        %v2971 = vunpack.c.l.b16 %v2939
        %v2972 = vunpack.c.l.b16 %v2940
        %v2973 = vunpack.c.l.b16 %v2941
        %v2974 = vunpack.c.l.b16 %v2942
        %v2975 = vunpack.c.l.b16 %v2943
        %v2976 = vunpack.c.l.b16 %v2944
        %v2977 = vunpack.c.l.b16 %v2945
        %v2978 = vunpack.c.l.b16 %v2946
        %v2979 = vunpack.c.l.b16 %v2947
        %v2980 = vunpack.c.l.b16 %v2948
        %v2981 = vunpack.c.l.b16 %v2949
        %v2982 = vunpack.c.l.b16 %v2950
        %v2983 = vunpack.c.l.b16 %v2951
        %v2984 = vunpack.c.l.b16 %v2952
        %v2985 = vunpack.c.l.b16 %v2953
        %v2986 = vpack.c.b16 %v2971, %v2970
        %v2987 = vpack.c.b16 %v2973, %v2972
        %v2988 = vpack.c.b16 %v2975, %v2974
        %v2989 = vpack.c.b16 %v2977, %v2976
        %v2990 = vpack.c.b16 %v2979, %v2978
        %v2991 = vpack.c.b16 %v2981, %v2980
        %v2992 = vpack.c.b16 %v2983, %v2982
        %v2993 = vpack.c.b16 %v2985, %v2984
        %3002 = vmatprep.subr.bf16.mxu0 0
        %3003 = vmatpush1.bf16.msra.mxu0 %v2993
        %3004 = vmatprep.subr.bf16.mxu0 0
        %3005 = vmatpush1.bf16.msra.mxu0 %v2992
        %3006 = vmatprep.subr.bf16.mxu0 0
        %3007 = vmatpush1.bf16.msra.mxu0 %v2991
        %3008 = vmatprep.subr.bf16.mxu0 0
        %3009 = vmatpush1.bf16.msra.mxu0 %v2990
        %3010 = vmatprep.subr.bf16.mxu0 0
        %3011 = vmatpush1.bf16.msra.mxu0 %v2989
        %3012 = vmatprep.subr.bf16.mxu0 0
        %3013 = vmatpush1.bf16.msra.mxu0 %v2988
        %3014 = vmatprep.subr.bf16.mxu0 0
        %3015 = vmatpush1.bf16.msra.mxu0 %v2987
        %3016 = vmatprep.subr.bf16.mxu0 0
        %3017 = vmatpush1.bf16.msra.mxu0 %v2986
        %3018 = vmatprep.subr.bf16.mxu0 0
        %3019 = vmatpush2.bf16.msra.mxu0 0
        %3020 = vmatprep.subr.bf16.mxu0 0
        %3021 = vmatpush2.bf16.msra.mxu0 0
        %3022 = vmatprep.subr.bf16.mxu0 0
        %3023 = vmatpush2.bf16.msra.mxu0 0
        %3024 = vmatprep.subr.bf16.mxu0 0
        %3025 = vmatpush2.bf16.msra.mxu0 0
        %3026 = vmatprep.subr.bf16.mxu0 0
        %3027 = vmatpush2.bf16.msra.mxu0 0
        %3028 = vmatprep.subr.bf16.mxu0 0
        %3029 = vmatpush2.bf16.msra.mxu0 0
        %3030 = vmatprep.subr.bf16.mxu0 0
        %3031 = vmatpush2.bf16.msra.mxu0 0
        %3032 = vmatprep.subr.bf16.mxu0 0
        %3033 = vmatpush2.bf16.msra.mxu0 0
        %3034 = vmatprep.mubr.bf16.mxu0 0
        %3035 = vmatmul.mubr.bf16.gmra.mxu0 %v2919
        %v3036 = vpop.f32.mrf.mxu0
        %v3037 = vadd.f32 0.0, %v3036
        %v3038 = vpop.f32.mrf.mxu0
        %v3039 = vpop.f32.mrf.mxu0
        %v3040 = vadd.f32 0.0, %v3039
        %v3041 = vpop.f32.mrf.mxu0
        %3042 = vmatprep.mubr.bf16.mxu0 0
        %3043 = vmatmul.mubr.bf16.gmra.mxu0 %v2920
        %v3044 = vpop.f32.mrf.mxu0
        %v3045 = vadd.f32 0.0, %v3044
        %v3046 = vpop.f32.mrf.mxu0
        %v3047 = vpop.f32.mrf.mxu0
        %v3048 = vadd.f32 0.0, %v3047
        %v3049 = vpop.f32.mrf.mxu0
        %3050 = vmatprep.mubr.bf16.mxu0 0
        %3051 = vmatmul.mubr.bf16.gmra.mxu0 %v2921
        %v3052 = vpop.f32.mrf.mxu0
        %v3053 = vadd.f32 0.0, %v3052
        %v3054 = vpop.f32.mrf.mxu0
        %v3055 = vpop.f32.mrf.mxu0
        %v3056 = vadd.f32 0.0, %v3055
        %v3057 = vpop.f32.mrf.mxu0
        %3058 = vmatprep.mubr.bf16.mxu0 0
        %3059 = vmatmul.mubr.bf16.gmra.mxu0 %v2922
        %v3060 = vpop.f32.mrf.mxu0
        %v3061 = vadd.f32 0.0, %v3060
        %v3062 = vpop.f32.mrf.mxu0
        %v3063 = vpop.f32.mrf.mxu0
        %v3064 = vadd.f32 0.0, %v3063
        %v3065 = vpop.f32.mrf.mxu0
        %3066 = vmatprep.mubr.bf16.mxu0 0
        %3067 = vmatmul.mubr.bf16.gmra.mxu0 %v2923
        %v3068 = vpop.f32.mrf.mxu0
        %v3069 = vadd.f32 0.0, %v3068
        %v3070 = vpop.f32.mrf.mxu0
        %v3071 = vpop.f32.mrf.mxu0
        %v3072 = vadd.f32 0.0, %v3071
        %v3073 = vpop.f32.mrf.mxu0
        %3074 = vmatprep.mubr.bf16.mxu0 0
        %3075 = vmatmul.mubr.bf16.gmra.mxu0 %v2924
        %v3076 = vpop.f32.mrf.mxu0
        %v3077 = vadd.f32 0.0, %v3076
        %v3078 = vpop.f32.mrf.mxu0
        %v3079 = vpop.f32.mrf.mxu0
        %v3080 = vadd.f32 0.0, %v3079
        %v3081 = vpop.f32.mrf.mxu0
        %3082 = vmatprep.mubr.bf16.mxu0 0
        %3083 = vmatmul.mubr.bf16.gmra.mxu0 %v2925
        %v3084 = vpop.f32.mrf.mxu0
        %v3085 = vadd.f32 0.0, %v3084
        %v3086 = vpop.f32.mrf.mxu0
        %v3087 = vpop.f32.mrf.mxu0
        %v3088 = vadd.f32 0.0, %v3087
        %v3089 = vpop.f32.mrf.mxu0
        %3090 = vmatprep.mubr.bf16.mxu0 0
        %3091 = vmatmul.mubr.bf16.gmra.mxu0 %v2926
        %v3092 = vpop.f32.mrf.mxu0
        %v3093 = vadd.f32 0.0, %v3092
        %v3094 = vpop.f32.mrf.mxu0
        %v3095 = vpop.f32.mrf.mxu0
        %v3096 = vadd.f32 0.0, %v3095
        %v3097 = vpop.f32.mrf.mxu0
        %3098 = vmatprep.mubr.bf16.mxu0 0
        %3099 = vmatmul.mubr.bf16.gmra.mxu0 %v2927
        %v3100 = vpop.f32.mrf.mxu0
        %v3101 = vadd.f32 0.0, %v3100
        %v3102 = vpop.f32.mrf.mxu0
        %v3103 = vpop.f32.mrf.mxu0
        %v3104 = vadd.f32 0.0, %v3103
        %v3105 = vpop.f32.mrf.mxu0
        %3106 = vmatprep.mubr.bf16.mxu0 0
        %3107 = vmatmul.mubr.bf16.gmra.mxu0 %v2928
        %v3108 = vpop.f32.mrf.mxu0
        %v3109 = vadd.f32 0.0, %v3108
        %v3110 = vpop.f32.mrf.mxu0
        %v3111 = vpop.f32.mrf.mxu0
        %v3112 = vadd.f32 0.0, %v3111
        %v3113 = vpop.f32.mrf.mxu0
        %3114 = vmatprep.mubr.bf16.mxu0 0
        %3115 = vmatmul.mubr.bf16.gmra.mxu0 %v2929
        %v3116 = vpop.f32.mrf.mxu0
        %v3117 = vadd.f32 0.0, %v3116
        %v3118 = vpop.f32.mrf.mxu0
        %v3119 = vpop.f32.mrf.mxu0
        %v3120 = vadd.f32 0.0, %v3119
        %v3121 = vpop.f32.mrf.mxu0
        %3122 = vmatprep.mubr.bf16.mxu0 0
        %3123 = vmatmul.mubr.bf16.gmra.mxu0 %v2930
        %v3124 = vpop.f32.mrf.mxu0
        %v3125 = vadd.f32 0.0, %v3124
        %v3126 = vpop.f32.mrf.mxu0
        %v3127 = vpop.f32.mrf.mxu0
        %v3128 = vadd.f32 0.0, %v3127
        %v3129 = vpop.f32.mrf.mxu0
        %3130 = vmatprep.mubr.bf16.mxu0 0
        %3131 = vmatmul.mubr.bf16.gmra.mxu0 %v2931
        %v3132 = vpop.f32.mrf.mxu0
        %v3133 = vadd.f32 0.0, %v3132
        %v3134 = vpop.f32.mrf.mxu0
        %v3135 = vpop.f32.mrf.mxu0
        %v3136 = vadd.f32 0.0, %v3135
        %v3137 = vpop.f32.mrf.mxu0
        %3138 = vmatprep.mubr.bf16.mxu0 0
        %3139 = vmatmul.mubr.bf16.gmra.mxu0 %v2932
        %v3140 = vpop.f32.mrf.mxu0
        %v3141 = vadd.f32 0.0, %v3140
        %v3142 = vpop.f32.mrf.mxu0
        %v3143 = vpop.f32.mrf.mxu0
        %v3144 = vadd.f32 0.0, %v3143
        %v3145 = vpop.f32.mrf.mxu0
        %3146 = vmatprep.mubr.bf16.mxu0 0
        %3147 = vmatmul.mubr.bf16.gmra.mxu0 %v2933
        %v3148 = vpop.f32.mrf.mxu0
        %v3149 = vadd.f32 0.0, %v3148
        %v3150 = vpop.f32.mrf.mxu0
        %v3151 = vpop.f32.mrf.mxu0
        %v3152 = vadd.f32 0.0, %v3151
        %v3153 = vpop.f32.mrf.mxu0
        %3154 = vmatprep.mubr.bf16.mxu0 0
        %3155 = vmatmul.mubr.bf16.gmra.mxu0 %v2934
        %v3156 = vpop.f32.mrf.mxu0
        %v3157 = vadd.f32 0.0, %v3156
        %v3158 = vpop.f32.mrf.mxu0
        %v3159 = vpop.f32.mrf.mxu0
        %v3160 = vadd.f32 0.0, %v3159
        %v3161 = vpop.f32.mrf.mxu0
        %3162 = vmatprep.mubr.bf16.mxu0 0
        %3163 = vmatmul.mubr.bf16.gmra.mxu0 %v2935
        %v3164 = vpop.f32.mrf.mxu0
        %v3165 = vadd.f32 0.0, %v3164
        %v3166 = vpop.f32.mrf.mxu0
        %v3167 = vpop.f32.mrf.mxu0
        %v3168 = vadd.f32 0.0, %v3167
        %v3169 = vpop.f32.mrf.mxu0
        %3170 = vmatprep.mubr.bf16.mxu0 0
        %3171 = vmatmul.mubr.bf16.gmra.mxu0 %v2936
        %v3172 = vpop.f32.mrf.mxu0
        %v3173 = vadd.f32 0.0, %v3172
        %v3174 = vpop.f32.mrf.mxu0
        %v3175 = vpop.f32.mrf.mxu0
        %v3176 = vadd.f32 0.0, %v3175
        %v3177 = vpop.f32.mrf.mxu0
        %3178 = vdwg.mxu0
        %v3179 = vadd.f32 %v2847, %v3037
        %v3180 = vadd.f32 %v2848, %v3040
        %v3181 = vadd.f32 %v2849, %v3045
        %v3182 = vadd.f32 %v2850, %v3048
        %v3183 = vadd.f32 %v2851, %v3053
        %v3184 = vadd.f32 %v2852, %v3056
        %v3185 = vadd.f32 %v2853, %v3061
        %v3186 = vadd.f32 %v2854, %v3064
        %v3187 = vadd.f32 %v2855, %v3069
        %v3188 = vadd.f32 %v2856, %v3072
        %v3189 = vadd.f32 %v2857, %v3077
        %v3190 = vadd.f32 %v2858, %v3080
        %v3191 = vadd.f32 %v2859, %v3085
        %v3192 = vadd.f32 %v2860, %v3088
        %v3193 = vadd.f32 %v2861, %v3093
        %v3194 = vadd.f32 %v2862, %v3096
        %v3195 = vadd.f32 %v2863, %v3101
        %v3196 = vadd.f32 %v2864, %v3104
        %v3197 = vadd.f32 %v2865, %v3109
        %v3198 = vadd.f32 %v2866, %v3112
        %v3199 = vadd.f32 %v2867, %v3117
        %v3200 = vadd.f32 %v2868, %v3120
        %v3201 = vadd.f32 %v2869, %v3125
        %v3202 = vadd.f32 %v2870, %v3128
        %v3203 = vadd.f32 %v2871, %v3133
        %v3204 = vadd.f32 %v2872, %v3136
        %v3205 = vadd.f32 %v2873, %v3141
        %v3206 = vadd.f32 %v2874, %v3144
        %v3207 = vadd.f32 %v2875, %v3149
        %v3208 = vadd.f32 %v2876, %v3152
        %v3209 = vadd.f32 %v2877, %v3157
        %v3210 = vadd.f32 %v2878, %v3160
        %v3211 = vadd.f32 %v2879, %v3165
        %v3212 = vadd.f32 %v2880, %v3168
        %v3213 = vadd.f32 %v2881, %v3173
        %v3214 = vadd.f32 %v2882, %v3176
        %v3215 = vld [vmem:[%s2] sm:$0x1]
        %v3217 = vlaneseq
        %v3218 = vshrl.u32 %v3217, 7
        %v3219 = vsub.s32 0, %v3218
        %v3220 = vrot.slane %v3215, %v3219
        %v3222 = vadd.f32 %v3179, %v3220
        %v3223 = vadd.f32 %v3180, %v3220
        %v3224 = vadd.f32 %v3181, %v3220
        %v3225 = vadd.f32 %v3182, %v3220
        %v3226 = vadd.f32 %v3183, %v3220
        %v3227 = vadd.f32 %v3184, %v3220
        %v3228 = vadd.f32 %v3185, %v3220
        %v3229 = vadd.f32 %v3186, %v3220
        %v3230 = vadd.f32 %v3187, %v3220
        %v3231 = vadd.f32 %v3188, %v3220
        %v3232 = vadd.f32 %v3189, %v3220
        %v3233 = vadd.f32 %v3190, %v3220
        %v3234 = vadd.f32 %v3191, %v3220
        %v3235 = vadd.f32 %v3192, %v3220
        %v3236 = vadd.f32 %v3193, %v3220
        %v3237 = vadd.f32 %v3194, %v3220
        %v3238 = vadd.f32 %v3195, %v3220
        %v3239 = vadd.f32 %v3196, %v3220
        %v3240 = vadd.f32 %v3197, %v3220
        %v3241 = vadd.f32 %v3198, %v3220
        %v3242 = vadd.f32 %v3199, %v3220
        %v3243 = vadd.f32 %v3200, %v3220
        %v3244 = vadd.f32 %v3201, %v3220
        %v3245 = vadd.f32 %v3202, %v3220
        %v3246 = vadd.f32 %v3203, %v3220
        %v3247 = vadd.f32 %v3204, %v3220
        %v3248 = vadd.f32 %v3205, %v3220
        %v3249 = vadd.f32 %v3206, %v3220
        %v3250 = vadd.f32 %v3207, %v3220
        %v3251 = vadd.f32 %v3208, %v3220
        %v3252 = vadd.f32 %v3209, %v3220
        %v3253 = vadd.f32 %v3210, %v3220
        %v3254 = vadd.f32 %v3211, %v3220
        %v3255 = vadd.f32 %v3212, %v3220
        %v3256 = vadd.f32 %v3213, %v3220
        %v3257 = vadd.f32 %v3214, %v3220
        %v3258 = vmax.f32 %v3222, 0.0
        %v3259 = vmax.f32 %v3223, 0.0
        %v3260 = vmax.f32 %v3224, 0.0
        %v3261 = vmax.f32 %v3225, 0.0
        %v3262 = vmax.f32 %v3226, 0.0
        %v3263 = vmax.f32 %v3227, 0.0
        %v3264 = vmax.f32 %v3228, 0.0
        %v3265 = vmax.f32 %v3229, 0.0
        %v3266 = vmax.f32 %v3230, 0.0
        %v3267 = vmax.f32 %v3231, 0.0
        %v3268 = vmax.f32 %v3232, 0.0
        %v3269 = vmax.f32 %v3233, 0.0
        %v3270 = vmax.f32 %v3234, 0.0
        %v3271 = vmax.f32 %v3235, 0.0
        %v3272 = vmax.f32 %v3236, 0.0
        %v3273 = vmax.f32 %v3237, 0.0
        %v3274 = vmax.f32 %v3238, 0.0
        %v3275 = vmax.f32 %v3239, 0.0
        %v3276 = vmax.f32 %v3240, 0.0
        %v3277 = vmax.f32 %v3241, 0.0
        %v3278 = vmax.f32 %v3242, 0.0
        %v3279 = vmax.f32 %v3243, 0.0
        %v3280 = vmax.f32 %v3244, 0.0
        %v3281 = vmax.f32 %v3245, 0.0
        %v3282 = vmax.f32 %v3246, 0.0
        %v3283 = vmax.f32 %v3247, 0.0
        %v3284 = vmax.f32 %v3248, 0.0
        %v3285 = vmax.f32 %v3249, 0.0
        %v3286 = vmax.f32 %v3250, 0.0
        %v3287 = vmax.f32 %v3251, 0.0
        %v3288 = vmax.f32 %v3252, 0.0
        %v3289 = vmax.f32 %v3253, 0.0
        %v3290 = vmax.f32 %v3254, 0.0
        %v3291 = vmax.f32 %v3255, 0.0
        %v3292 = vmax.f32 %v3256, 0.0
        %v3293 = vmax.f32 %v3257, 0.0
        %v3294 = vld [vmem:[%s5] sm:$0xff]
        %v3295 = vld [vmem:[%s5 + $0x8] sm:$0xff]
        %v3296 = vld [vmem:[%s5 + $0x10] sm:$0xff]
        %v3297 = vld [vmem:[%s5 + $0x18] sm:$0xff]
        %v3298 = vld [vmem:[%s5 + $0x20] sm:$0xff]
        %v3299 = vld [vmem:[%s5 + $0x28] sm:$0xff]
        %v3300 = vld [vmem:[%s5 + $0x30] sm:$0xff]
        %v3301 = vld [vmem:[%s5 + $0x38] sm:$0xff]
        %v3302 = vld [vmem:[%s5 + $0x40] sm:$0xff]
        %v3303 = vld [vmem:[%s5 + $0x48] sm:$0xff]
        %v3304 = vld [vmem:[%s5 + $0x50] sm:$0xff]
        %v3305 = vld [vmem:[%s5 + $0x58] sm:$0xff]
        %v3306 = vld [vmem:[%s5 + $0x60] sm:$0xff]
        %v3307 = vld [vmem:[%s5 + $0x68] sm:$0xff]
        %v3308 = vld [vmem:[%s5 + $0x70] sm:$0xff]
        %v3309 = vld [vmem:[%s5 + $0x78] sm:$0xff]
        %v3310 = vld [vmem:[%s5 + $0x80] sm:$0xff]
        %v3311 = vld [vmem:[%s5 + $0x88] sm:$0xff]
        %v3312 = vld [vmem:[%s5 + $0x90] sm:$0xff]
        %v3313 = vld [vmem:[%s5 + $0x98] sm:$0xff]
        %v3314 = vld [vmem:[%s5 + $0xa0] sm:$0xff]
        %v3315 = vld [vmem:[%s5 + $0xa8] sm:$0xff]
        %v3316 = vld [vmem:[%s5 + $0xb0] sm:$0xff]
        %v3317 = vld [vmem:[%s5 + $0xb8] sm:$0xff]
        %v3318 = vld [vmem:[%s5 + $0xc0] sm:$0xff]
        %v3319 = vld [vmem:[%s5 + $0xc8] sm:$0xff]
        %v3320 = vld [vmem:[%s5 + $0xd0] sm:$0xff]
        %v3321 = vld [vmem:[%s5 + $0xd8] sm:$0xff]
        %v3322 = vld [vmem:[%s5 + $0xe0] sm:$0xff]
        %v3323 = vld [vmem:[%s5 + $0xe8] sm:$0xff]
        %v3324 = vld [vmem:[%s5 + $0xf0] sm:$0xff]
        %v3325 = vld [vmem:[%s5 + $0xf8] sm:$0xff]
        %v3326 = vld [vmem:[%s5 + $0x100] sm:$0xff]
        %v3327 = vld [vmem:[%s5 + $0x108] sm:$0xff]
        %v3328 = vld [vmem:[%s5 + $0x110] sm:$0xff]
        %v3329 = vld [vmem:[%s5 + $0x118] sm:$0xff]
        %3331 = vset.pattern.permute.xlu0 0
        %3332 = vperm.xlu0 %3331, %v3294
        %v3333 = vpop.permute.xlu0 %3332
        %3336 = vset.pattern.permute.xlu0 0
        %3337 = vperm.xlu0 %3336, %v3295
        %v3338 = vpop.permute.xlu0 %3337
        %3341 = vset.pattern.permute.xlu0 0
        %3342 = vperm.xlu0 %3341, %v3296
        %v3343 = vpop.permute.xlu0 %3342
        %3346 = vset.pattern.permute.xlu0 0
        %3347 = vperm.xlu0 %3346, %v3297
        %v3348 = vpop.permute.xlu0 %3347
        %3351 = vset.pattern.permute.xlu0 0
        %3352 = vperm.xlu0 %3351, %v3298
        %v3353 = vpop.permute.xlu0 %3352
        %3356 = vset.pattern.permute.xlu0 0
        %3357 = vperm.xlu0 %3356, %v3299
        %v3358 = vpop.permute.xlu0 %3357
        %3361 = vset.pattern.permute.xlu0 0
        %3362 = vperm.xlu0 %3361, %v3300
        %v3363 = vpop.permute.xlu0 %3362
        %3366 = vset.pattern.permute.xlu0 0
        %3367 = vperm.xlu0 %3366, %v3301
        %v3368 = vpop.permute.xlu0 %3367
        %3371 = vset.pattern.permute.xlu0 0
        %3372 = vperm.xlu0 %3371, %v3302
        %v3373 = vpop.permute.xlu0 %3372
        %3376 = vset.pattern.permute.xlu0 0
        %3377 = vperm.xlu0 %3376, %v3303
        %v3378 = vpop.permute.xlu0 %3377
        %3381 = vset.pattern.permute.xlu0 0
        %3382 = vperm.xlu0 %3381, %v3304
        %v3383 = vpop.permute.xlu0 %3382
        %3386 = vset.pattern.permute.xlu0 0
        %3387 = vperm.xlu0 %3386, %v3305
        %v3388 = vpop.permute.xlu0 %3387
        %3391 = vset.pattern.permute.xlu0 0
        %3392 = vperm.xlu0 %3391, %v3306
        %v3393 = vpop.permute.xlu0 %3392
        %3396 = vset.pattern.permute.xlu0 0
        %3397 = vperm.xlu0 %3396, %v3307
        %v3398 = vpop.permute.xlu0 %3397
        %3401 = vset.pattern.permute.xlu0 0
        %3402 = vperm.xlu0 %3401, %v3308
        %v3403 = vpop.permute.xlu0 %3402
        %3406 = vset.pattern.permute.xlu0 0
        %3407 = vperm.xlu0 %3406, %v3309
        %v3408 = vpop.permute.xlu0 %3407
        %3411 = vset.pattern.permute.xlu0 0
        %3412 = vperm.xlu0 %3411, %v3310
        %v3413 = vpop.permute.xlu0 %3412
        %3416 = vset.pattern.permute.xlu0 0
        %3417 = vperm.xlu0 %3416, %v3311
        %v3418 = vpop.permute.xlu0 %3417
        %3421 = vset.pattern.permute.xlu0 0
        %3422 = vperm.xlu0 %3421, %v3312
        %v3423 = vpop.permute.xlu0 %3422
        %3426 = vset.pattern.permute.xlu0 0
        %3427 = vperm.xlu0 %3426, %v3313
        %v3428 = vpop.permute.xlu0 %3427
        %3431 = vset.pattern.permute.xlu0 0
        %3432 = vperm.xlu0 %3431, %v3314
        %v3433 = vpop.permute.xlu0 %3432
        %3436 = vset.pattern.permute.xlu0 0
        %3437 = vperm.xlu0 %3436, %v3315
        %v3438 = vpop.permute.xlu0 %3437
        %3441 = vset.pattern.permute.xlu0 0
        %3442 = vperm.xlu0 %3441, %v3316
        %v3443 = vpop.permute.xlu0 %3442
        %3446 = vset.pattern.permute.xlu0 0
        %3447 = vperm.xlu0 %3446, %v3317
        %v3448 = vpop.permute.xlu0 %3447
        %3451 = vset.pattern.permute.xlu0 0
        %3452 = vperm.xlu0 %3451, %v3318
        %v3453 = vpop.permute.xlu0 %3452
        %3456 = vset.pattern.permute.xlu0 0
        %3457 = vperm.xlu0 %3456, %v3319
        %v3458 = vpop.permute.xlu0 %3457
        %3461 = vset.pattern.permute.xlu0 0
        %3462 = vperm.xlu0 %3461, %v3320
        %v3463 = vpop.permute.xlu0 %3462
        %3466 = vset.pattern.permute.xlu0 0
        %3467 = vperm.xlu0 %3466, %v3321
        %v3468 = vpop.permute.xlu0 %3467
        %3471 = vset.pattern.permute.xlu0 0
        %3472 = vperm.xlu0 %3471, %v3322
        %v3473 = vpop.permute.xlu0 %3472
        %3476 = vset.pattern.permute.xlu0 0
        %3477 = vperm.xlu0 %3476, %v3323
        %v3478 = vpop.permute.xlu0 %3477
        %3481 = vset.pattern.permute.xlu0 0
        %3482 = vperm.xlu0 %3481, %v3324
        %v3483 = vpop.permute.xlu0 %3482
        %3486 = vset.pattern.permute.xlu0 0
        %3487 = vperm.xlu0 %3486, %v3325
        %v3488 = vpop.permute.xlu0 %3487
        %3491 = vset.pattern.permute.xlu0 0
        %3492 = vperm.xlu0 %3491, %v3326
        %v3493 = vpop.permute.xlu0 %3492
        %3496 = vset.pattern.permute.xlu0 0
        %3497 = vperm.xlu0 %3496, %v3327
        %v3498 = vpop.permute.xlu0 %3497
        %3501 = vset.pattern.permute.xlu0 0
        %3502 = vperm.xlu0 %3501, %v3328
        %v3503 = vpop.permute.xlu0 %3502
        %3506 = vset.pattern.permute.xlu0 0
        %3507 = vperm.xlu0 %3506, %v3329
        %v3508 = vpop.permute.xlu0 %3507
        %v3510 = vmul.f32 %v3258, %v3333
        %v3511 = vmul.f32 %v3259, %v3338
        %v3512 = vmul.f32 %v3260, %v3343
        %v3513 = vmul.f32 %v3261, %v3348
        %v3514 = vmul.f32 %v3262, %v3353
        %v3515 = vmul.f32 %v3263, %v3358
        %v3516 = vmul.f32 %v3264, %v3363
        %v3517 = vmul.f32 %v3265, %v3368
        %v3518 = vmul.f32 %v3266, %v3373
        %v3519 = vmul.f32 %v3267, %v3378
        %v3520 = vmul.f32 %v3268, %v3383
        %v3521 = vmul.f32 %v3269, %v3388
        %v3522 = vmul.f32 %v3270, %v3393
        %v3523 = vmul.f32 %v3271, %v3398
        %v3524 = vmul.f32 %v3272, %v3403
        %v3525 = vmul.f32 %v3273, %v3408
        %v3526 = vmul.f32 %v3274, %v3413
        %v3527 = vmul.f32 %v3275, %v3418
        %v3528 = vmul.f32 %v3276, %v3423
        %v3529 = vmul.f32 %v3277, %v3428
        %v3530 = vmul.f32 %v3278, %v3433
        %v3531 = vmul.f32 %v3279, %v3438
        %v3532 = vmul.f32 %v3280, %v3443
        %v3533 = vmul.f32 %v3281, %v3448
        %v3534 = vmul.f32 %v3282, %v3453
        %v3535 = vmul.f32 %v3283, %v3458
        %v3536 = vmul.f32 %v3284, %v3463
        %v3537 = vmul.f32 %v3285, %v3468
        %v3538 = vmul.f32 %v3286, %v3473
        %v3539 = vmul.f32 %v3287, %v3478
        %v3540 = vmul.f32 %v3288, %v3483
        %v3541 = vmul.f32 %v3289, %v3488
        %v3542 = vmul.f32 %v3290, %v3493
        %v3543 = vmul.f32 %v3291, %v3498
        %v3544 = vmul.f32 %v3292, %v3503
        %v3545 = vmul.f32 %v3293, %v3508
        %3546 = vst [vmem:[#allocation2] sm:$0xff] 0.0
        %3547 = vst [vmem:[#allocation2 + $0x8] sm:$0xff] 0.0
        %3548 = vst [vmem:[#allocation2 + $0x10] sm:$0x7] 0.0
        %3549 = vst [vmem:[#allocation2 + $0x133] sm:$0xff] 0.0
        %3550 = vst [vmem:[#allocation2 + $0x13b] sm:$0xff] 0.0
        %3551 = vst [vmem:[#allocation2 + $0x143] sm:$0xff] 0.0
        %3552 = vst [vmem:[#allocation2 + $0x14b] sm:$0xff] 0.0
        %3553 = vst [vmem:[#allocation2 + $0x153] sm:$0x1f] 0.0
        %3554 = vst [vmem:[#allocation2 + $0x13] sm:$0xff] %v3510
        %3555 = vst [vmem:[#allocation2 + $0x1b] sm:$0xff] %v3511
        %3556 = vst [vmem:[#allocation2 + $0x23] sm:$0xff] %v3512
        %3557 = vst [vmem:[#allocation2 + $0x2b] sm:$0xff] %v3513
        %3558 = vst [vmem:[#allocation2 + $0x33] sm:$0xff] %v3514
        %3559 = vst [vmem:[#allocation2 + $0x3b] sm:$0xff] %v3515
        %3560 = vst [vmem:[#allocation2 + $0x43] sm:$0xff] %v3516
        %3561 = vst [vmem:[#allocation2 + $0x4b] sm:$0xff] %v3517
        %3562 = vst [vmem:[#allocation2 + $0x53] sm:$0xff] %v3518
        %3563 = vst [vmem:[#allocation2 + $0x5b] sm:$0xff] %v3519
        %3564 = vst [vmem:[#allocation2 + $0x63] sm:$0xff] %v3520
        %3565 = vst [vmem:[#allocation2 + $0x6b] sm:$0xff] %v3521
        %3566 = vst [vmem:[#allocation2 + $0x73] sm:$0xff] %v3522
        %3567 = vst [vmem:[#allocation2 + $0x7b] sm:$0xff] %v3523
        %3568 = vst [vmem:[#allocation2 + $0x83] sm:$0xff] %v3524
        %3569 = vst [vmem:[#allocation2 + $0x8b] sm:$0xff] %v3525
        %3570 = vst [vmem:[#allocation2 + $0x93] sm:$0xff] %v3526
        %3571 = vst [vmem:[#allocation2 + $0x9b] sm:$0xff] %v3527
        %3572 = vst [vmem:[#allocation2 + $0xa3] sm:$0xff] %v3528
        %3573 = vst [vmem:[#allocation2 + $0xab] sm:$0xff] %v3529
        %3574 = vst [vmem:[#allocation2 + $0xb3] sm:$0xff] %v3530
        %3575 = vst [vmem:[#allocation2 + $0xbb] sm:$0xff] %v3531
        %3576 = vst [vmem:[#allocation2 + $0xc3] sm:$0xff] %v3532
        %3577 = vst [vmem:[#allocation2 + $0xcb] sm:$0xff] %v3533
        %3578 = vst [vmem:[#allocation2 + $0xd3] sm:$0xff] %v3534
        %3579 = vst [vmem:[#allocation2 + $0xdb] sm:$0xff] %v3535
        %3580 = vst [vmem:[#allocation2 + $0xe3] sm:$0xff] %v3536
        %3581 = vst [vmem:[#allocation2 + $0xeb] sm:$0xff] %v3537
        %3582 = vst [vmem:[#allocation2 + $0xf3] sm:$0xff] %v3538
        %3583 = vst [vmem:[#allocation2 + $0xfb] sm:$0xff] %v3539
        %3584 = vst [vmem:[#allocation2 + $0x103] sm:$0xff] %v3540
        %3585 = vst [vmem:[#allocation2 + $0x10b] sm:$0xff] %v3541
        %3586 = vst [vmem:[#allocation2 + $0x113] sm:$0xff] %v3542
        %3587 = vst [vmem:[#allocation2 + $0x11b] sm:$0xff] %v3543
        %3588 = vst [vmem:[#allocation2 + $0x123] sm:$0xff] %v3544
        %3589 = vst [vmem:[#allocation2 + $0x12b] sm:$0xff] %v3545
        %v3590 = vld [vmem:[#allocation2] sm:$0xff]
        %v3591 = vld [vmem:[#allocation2 + $0x8] sm:$0xff]
        %v3592 = vld [vmem:[#allocation2 + $0x10] sm:$0xff]
        %v3593 = vld [vmem:[#allocation2 + $0x18] sm:$0xff]
        %v3594 = vld [vmem:[#allocation2 + $0x20] sm:$0xff]
        %v3595 = vld [vmem:[#allocation2 + $0x28] sm:$0xff]
        %v3596 = vld [vmem:[#allocation2 + $0x30] sm:$0xff]
        %v3597 = vld [vmem:[#allocation2 + $0x38] sm:$0xff]
        %v3598 = vld [vmem:[#allocation2 + $0x40] sm:$0xff]
        %v3599 = vld [vmem:[#allocation2 + $0x48] sm:$0xff]
        %v3600 = vld [vmem:[#allocation2 + $0x50] sm:$0xff]
        %v3601 = vld [vmem:[#allocation2 + $0x58] sm:$0xff]
        %v3602 = vld [vmem:[#allocation2 + $0x60] sm:$0xff]
        %v3603 = vld [vmem:[#allocation2 + $0x68] sm:$0xff]
        %v3604 = vld [vmem:[#allocation2 + $0x70] sm:$0xff]
        %v3605 = vld [vmem:[#allocation2 + $0x78] sm:$0xff]
        %v3606 = vld [vmem:[#allocation2 + $0x80] sm:$0xff]
        %v3607 = vld [vmem:[#allocation2 + $0x88] sm:$0xff]
        %v3608 = vld [vmem:[#allocation2 + $0x90] sm:$0xff]
        %v3609 = vld [vmem:[#allocation2 + $0x98] sm:$0xff]
        %v3610 = vld [vmem:[#allocation2 + $0xa0] sm:$0xff]
        %v3611 = vld [vmem:[#allocation2 + $0xa8] sm:$0xff]
        %v3612 = vld [vmem:[#allocation2 + $0xb0] sm:$0xff]
        %v3613 = vld [vmem:[#allocation2 + $0xb8] sm:$0xff]
        %v3614 = vld [vmem:[#allocation2 + $0xc0] sm:$0xff]
        %v3615 = vld [vmem:[#allocation2 + $0xc8] sm:$0xff]
        %v3616 = vld [vmem:[#allocation2 + $0xd0] sm:$0xff]
        %v3617 = vld [vmem:[#allocation2 + $0xd8] sm:$0xff]
        %v3618 = vld [vmem:[#allocation2 + $0xe0] sm:$0xff]
        %v3619 = vld [vmem:[#allocation2 + $0xe8] sm:$0xff]
        %v3620 = vld [vmem:[#allocation2 + $0xf0] sm:$0xff]
        %v3621 = vld [vmem:[#allocation2 + $0xf8] sm:$0xff]
        %v3622 = vld [vmem:[#allocation2 + $0x100] sm:$0xff]
        %v3623 = vld [vmem:[#allocation2 + $0x108] sm:$0xff]
        %v3624 = vld [vmem:[#allocation2 + $0x110] sm:$0xff]
        %v3625 = vld [vmem:[#allocation2 + $0x118] sm:$0xff]
        %v3626 = vpack.c.bf16 %v3591, %v3590
        %v3627 = vpack.c.bf16 %v3593, %v3592
        %v3628 = vpack.c.bf16 %v3595, %v3594
        %v3629 = vpack.c.bf16 %v3597, %v3596
        %v3630 = vpack.c.bf16 %v3599, %v3598
        %v3631 = vpack.c.bf16 %v3601, %v3600
        %v3632 = vpack.c.bf16 %v3603, %v3602
        %v3633 = vpack.c.bf16 %v3605, %v3604
        %v3634 = vpack.c.bf16 %v3607, %v3606
        %v3635 = vpack.c.bf16 %v3609, %v3608
        %v3636 = vpack.c.bf16 %v3611, %v3610
        %v3637 = vpack.c.bf16 %v3613, %v3612
        %v3638 = vpack.c.bf16 %v3615, %v3614
        %v3639 = vpack.c.bf16 %v3617, %v3616
        %v3640 = vpack.c.bf16 %v3619, %v3618
        %v3641 = vpack.c.bf16 %v3621, %v3620
        %v3642 = vpack.c.bf16 %v3623, %v3622
        %v3643 = vpack.c.bf16 %v3625, %v3624
        %v3644 = vld [vmem:[#allocation8] sm:$0xf]
        %v3645 = vld [vmem:[#allocation8 + $0x4] sm:$0xf]
        %v3646 = vld [vmem:[#allocation8 + $0x8] sm:$0xf]
        %v3647 = vld [vmem:[#allocation8 + $0xc] sm:$0xf]
        %v3648 = vld [vmem:[#allocation8 + $0x10] sm:$0xf]
        %v3649 = vld [vmem:[#allocation8 + $0x14] sm:$0xf]
        %v3650 = vld [vmem:[#allocation8 + $0x18] sm:$0xf]
        %v3651 = vld [vmem:[#allocation8 + $0x1c] sm:$0xf]
        %v3652 = vld [vmem:[#allocation8 + $0x20] sm:$0xf]
        %v3653 = vld [vmem:[#allocation8 + $0x24] sm:$0xf]
        %v3654 = vld [vmem:[#allocation8 + $0x28] sm:$0xf]
        %v3655 = vld [vmem:[#allocation8 + $0x2c] sm:$0xf]
        %v3656 = vld [vmem:[#allocation8 + $0x30] sm:$0xf]
        %v3657 = vld [vmem:[#allocation8 + $0x34] sm:$0xf]
        %v3658 = vld [vmem:[#allocation8 + $0x38] sm:$0xf]
        %v3659 = vld [vmem:[#allocation8 + $0x3c] sm:$0xf]
        %v3660 = vld [vmem:[#allocation2 + $0x1] sm:$0xff]
        %v3661 = vld [vmem:[#allocation2 + $0x9] sm:$0xff]
        %v3662 = vld [vmem:[#allocation2 + $0x11] sm:$0xff]
        %v3663 = vld [vmem:[#allocation2 + $0x19] sm:$0xff]
        %v3664 = vld [vmem:[#allocation2 + $0x21] sm:$0xff]
        %v3665 = vld [vmem:[#allocation2 + $0x29] sm:$0xff]
        %v3666 = vld [vmem:[#allocation2 + $0x31] sm:$0xff]
        %v3667 = vld [vmem:[#allocation2 + $0x39] sm:$0xff]
        %v3668 = vld [vmem:[#allocation2 + $0x41] sm:$0xff]
        %v3669 = vld [vmem:[#allocation2 + $0x49] sm:$0xff]
        %v3670 = vld [vmem:[#allocation2 + $0x51] sm:$0xff]
        %v3671 = vld [vmem:[#allocation2 + $0x59] sm:$0xff]
        %v3672 = vld [vmem:[#allocation2 + $0x61] sm:$0xff]
        %v3673 = vld [vmem:[#allocation2 + $0x69] sm:$0xff]
        %v3674 = vld [vmem:[#allocation2 + $0x71] sm:$0xff]
        %v3675 = vld [vmem:[#allocation2 + $0x79] sm:$0xff]
        %v3676 = vld [vmem:[#allocation2 + $0x81] sm:$0xff]
        %v3677 = vld [vmem:[#allocation2 + $0x89] sm:$0xff]
        %v3678 = vld [vmem:[#allocation2 + $0x91] sm:$0xff]
        %v3679 = vld [vmem:[#allocation2 + $0x99] sm:$0xff]
        %v3680 = vld [vmem:[#allocation2 + $0xa1] sm:$0xff]
        %v3681 = vld [vmem:[#allocation2 + $0xa9] sm:$0xff]
        %v3682 = vld [vmem:[#allocation2 + $0xb1] sm:$0xff]
        %v3683 = vld [vmem:[#allocation2 + $0xb9] sm:$0xff]
        %v3684 = vld [vmem:[#allocation2 + $0xc1] sm:$0xff]
        %v3685 = vld [vmem:[#allocation2 + $0xc9] sm:$0xff]
        %v3686 = vld [vmem:[#allocation2 + $0xd1] sm:$0xff]
        %v3687 = vld [vmem:[#allocation2 + $0xd9] sm:$0xff]
        %v3688 = vld [vmem:[#allocation2 + $0xe1] sm:$0xff]
        %v3689 = vld [vmem:[#allocation2 + $0xe9] sm:$0xff]
        %v3690 = vld [vmem:[#allocation2 + $0xf1] sm:$0xff]
        %v3691 = vld [vmem:[#allocation2 + $0xf9] sm:$0xff]
        %v3692 = vld [vmem:[#allocation2 + $0x101] sm:$0xff]
        %v3693 = vld [vmem:[#allocation2 + $0x109] sm:$0xff]
        %v3694 = vld [vmem:[#allocation2 + $0x111] sm:$0xff]
        %v3695 = vld [vmem:[#allocation2 + $0x119] sm:$0xff]
        %v3696 = vpack.c.bf16 %v3661, %v3660
        %v3697 = vpack.c.bf16 %v3663, %v3662
        %v3698 = vpack.c.bf16 %v3665, %v3664
        %v3699 = vpack.c.bf16 %v3667, %v3666
        %v3700 = vpack.c.bf16 %v3669, %v3668
        %v3701 = vpack.c.bf16 %v3671, %v3670
        %v3702 = vpack.c.bf16 %v3673, %v3672
        %v3703 = vpack.c.bf16 %v3675, %v3674
        %v3704 = vpack.c.bf16 %v3677, %v3676
        %v3705 = vpack.c.bf16 %v3679, %v3678
        %v3706 = vpack.c.bf16 %v3681, %v3680
        %v3707 = vpack.c.bf16 %v3683, %v3682
        %v3708 = vpack.c.bf16 %v3685, %v3684
        %v3709 = vpack.c.bf16 %v3687, %v3686
        %v3710 = vpack.c.bf16 %v3689, %v3688
        %v3711 = vpack.c.bf16 %v3691, %v3690
        %v3712 = vpack.c.bf16 %v3693, %v3692
        %v3713 = vpack.c.bf16 %v3695, %v3694
        %s3714 = scalar_lea.vmem [#allocation8], 64
        %v3715 = vld [vmem:[%s3714] sm:$0xf]
        %v3716 = vld [vmem:[%s3714 + $0x4] sm:$0xf]
        %v3717 = vld [vmem:[%s3714 + $0x8] sm:$0xf]
        %v3718 = vld [vmem:[%s3714 + $0xc] sm:$0xf]
        %v3719 = vld [vmem:[%s3714 + $0x10] sm:$0xf]
        %v3720 = vld [vmem:[%s3714 + $0x14] sm:$0xf]
        %v3721 = vld [vmem:[%s3714 + $0x18] sm:$0xf]
        %v3722 = vld [vmem:[%s3714 + $0x1c] sm:$0xf]
        %v3723 = vld [vmem:[%s3714 + $0x20] sm:$0xf]
        %v3724 = vld [vmem:[%s3714 + $0x24] sm:$0xf]
        %v3725 = vld [vmem:[%s3714 + $0x28] sm:$0xf]
        %v3726 = vld [vmem:[%s3714 + $0x2c] sm:$0xf]
        %v3727 = vld [vmem:[%s3714 + $0x30] sm:$0xf]
        %v3728 = vld [vmem:[%s3714 + $0x34] sm:$0xf]
        %v3729 = vld [vmem:[%s3714 + $0x38] sm:$0xf]
        %v3730 = vld [vmem:[%s3714 + $0x3c] sm:$0xf]
        %v3747 = vunpack.c.l.b16 %v3715
        %v3748 = vunpack.c.l.b16 %v3716
        %v3749 = vunpack.c.l.b16 %v3717
        %v3750 = vunpack.c.l.b16 %v3718
        %v3751 = vunpack.c.l.b16 %v3719
        %v3752 = vunpack.c.l.b16 %v3720
        %v3753 = vunpack.c.l.b16 %v3721
        %v3754 = vunpack.c.l.b16 %v3722
        %v3755 = vunpack.c.l.b16 %v3723
        %v3756 = vunpack.c.l.b16 %v3724
        %v3757 = vunpack.c.l.b16 %v3725
        %v3758 = vunpack.c.l.b16 %v3726
        %v3759 = vunpack.c.l.b16 %v3727
        %v3760 = vunpack.c.l.b16 %v3728
        %v3761 = vunpack.c.l.b16 %v3729
        %v3762 = vunpack.c.l.b16 %v3730
        %v3763 = vpack.c.b16 %v3748, %v3747
        %v3764 = vpack.c.b16 %v3750, %v3749
        %v3765 = vpack.c.b16 %v3752, %v3751
        %v3766 = vpack.c.b16 %v3754, %v3753
        %v3767 = vpack.c.b16 %v3756, %v3755
        %v3768 = vpack.c.b16 %v3758, %v3757
        %v3769 = vpack.c.b16 %v3760, %v3759
        %v3770 = vpack.c.b16 %v3762, %v3761
        %3779 = vmatprep.subr.bf16.mxu0 0
        %3780 = vmatpush1.bf16.msra.mxu0 %v3770
        %3781 = vmatprep.subr.bf16.mxu0 0
        %3782 = vmatpush1.bf16.msra.mxu0 %v3769
        %3783 = vmatprep.subr.bf16.mxu0 0
        %3784 = vmatpush1.bf16.msra.mxu0 %v3768
        %3785 = vmatprep.subr.bf16.mxu0 0
        %3786 = vmatpush1.bf16.msra.mxu0 %v3767
        %3787 = vmatprep.subr.bf16.mxu0 0
        %3788 = vmatpush1.bf16.msra.mxu0 %v3766
        %3789 = vmatprep.subr.bf16.mxu0 0
        %3790 = vmatpush1.bf16.msra.mxu0 %v3765
        %3791 = vmatprep.subr.bf16.mxu0 0
        %3792 = vmatpush1.bf16.msra.mxu0 %v3764
        %3793 = vmatprep.subr.bf16.mxu0 0
        %3794 = vmatpush1.bf16.msra.mxu0 %v3763
        %3795 = vmatprep.subr.bf16.mxu0 0
        %3796 = vmatpush2.bf16.msra.mxu0 0
        %3797 = vmatprep.subr.bf16.mxu0 0
        %3798 = vmatpush2.bf16.msra.mxu0 0
        %3799 = vmatprep.subr.bf16.mxu0 0
        %3800 = vmatpush2.bf16.msra.mxu0 0
        %3801 = vmatprep.subr.bf16.mxu0 0
        %3802 = vmatpush2.bf16.msra.mxu0 0
        %3803 = vmatprep.subr.bf16.mxu0 0
        %3804 = vmatpush2.bf16.msra.mxu0 0
        %3805 = vmatprep.subr.bf16.mxu0 0
        %3806 = vmatpush2.bf16.msra.mxu0 0
        %3807 = vmatprep.subr.bf16.mxu0 0
        %3808 = vmatpush2.bf16.msra.mxu0 0
        %3809 = vmatprep.subr.bf16.mxu0 0
        %3810 = vmatpush2.bf16.msra.mxu0 0
        %3811 = vmatprep.mubr.bf16.mxu0 0
        %3812 = vmatmul.mubr.bf16.gmra.mxu0 %v3696
        %v3813 = vpop.f32.mrf.mxu0
        %v3814 = vadd.f32 0.0, %v3813
        %v3815 = vpop.f32.mrf.mxu0
        %v3816 = vpop.f32.mrf.mxu0
        %v3817 = vadd.f32 0.0, %v3816
        %v3818 = vpop.f32.mrf.mxu0
        %3819 = vmatprep.mubr.bf16.mxu0 0
        %3820 = vmatmul.mubr.bf16.gmra.mxu0 %v3697
        %v3821 = vpop.f32.mrf.mxu0
        %v3822 = vadd.f32 0.0, %v3821
        %v3823 = vpop.f32.mrf.mxu0
        %v3824 = vpop.f32.mrf.mxu0
        %v3825 = vadd.f32 0.0, %v3824
        %v3826 = vpop.f32.mrf.mxu0
        %3827 = vmatprep.mubr.bf16.mxu0 0
        %3828 = vmatmul.mubr.bf16.gmra.mxu0 %v3698
        %v3829 = vpop.f32.mrf.mxu0
        %v3830 = vadd.f32 0.0, %v3829
        %v3831 = vpop.f32.mrf.mxu0
        %v3832 = vpop.f32.mrf.mxu0
        %v3833 = vadd.f32 0.0, %v3832
        %v3834 = vpop.f32.mrf.mxu0
        %3835 = vmatprep.mubr.bf16.mxu0 0
        %3836 = vmatmul.mubr.bf16.gmra.mxu0 %v3699
        %v3837 = vpop.f32.mrf.mxu0
        %v3838 = vadd.f32 0.0, %v3837
        %v3839 = vpop.f32.mrf.mxu0
        %v3840 = vpop.f32.mrf.mxu0
        %v3841 = vadd.f32 0.0, %v3840
        %v3842 = vpop.f32.mrf.mxu0
        %3843 = vmatprep.mubr.bf16.mxu0 0
        %3844 = vmatmul.mubr.bf16.gmra.mxu0 %v3700
        %v3845 = vpop.f32.mrf.mxu0
        %v3846 = vadd.f32 0.0, %v3845
        %v3847 = vpop.f32.mrf.mxu0
        %v3848 = vpop.f32.mrf.mxu0
        %v3849 = vadd.f32 0.0, %v3848
        %v3850 = vpop.f32.mrf.mxu0
        %3851 = vmatprep.mubr.bf16.mxu0 0
        %3852 = vmatmul.mubr.bf16.gmra.mxu0 %v3701
        %v3853 = vpop.f32.mrf.mxu0
        %v3854 = vadd.f32 0.0, %v3853
        %v3855 = vpop.f32.mrf.mxu0
        %v3856 = vpop.f32.mrf.mxu0
        %v3857 = vadd.f32 0.0, %v3856
        %v3858 = vpop.f32.mrf.mxu0
        %3859 = vmatprep.mubr.bf16.mxu0 0
        %3860 = vmatmul.mubr.bf16.gmra.mxu0 %v3702
        %v3861 = vpop.f32.mrf.mxu0
        %v3862 = vadd.f32 0.0, %v3861
        %v3863 = vpop.f32.mrf.mxu0
        %v3864 = vpop.f32.mrf.mxu0
        %v3865 = vadd.f32 0.0, %v3864
        %v3866 = vpop.f32.mrf.mxu0
        %3867 = vmatprep.mubr.bf16.mxu0 0
        %3868 = vmatmul.mubr.bf16.gmra.mxu0 %v3703
        %v3869 = vpop.f32.mrf.mxu0
        %v3870 = vadd.f32 0.0, %v3869
        %v3871 = vpop.f32.mrf.mxu0
        %v3872 = vpop.f32.mrf.mxu0
        %v3873 = vadd.f32 0.0, %v3872
        %v3874 = vpop.f32.mrf.mxu0
        %3875 = vmatprep.mubr.bf16.mxu0 0
        %3876 = vmatmul.mubr.bf16.gmra.mxu0 %v3704
        %v3877 = vpop.f32.mrf.mxu0
        %v3878 = vadd.f32 0.0, %v3877
        %v3879 = vpop.f32.mrf.mxu0
        %v3880 = vpop.f32.mrf.mxu0
        %v3881 = vadd.f32 0.0, %v3880
        %v3882 = vpop.f32.mrf.mxu0
        %3883 = vmatprep.mubr.bf16.mxu0 0
        %3884 = vmatmul.mubr.bf16.gmra.mxu0 %v3705
        %v3885 = vpop.f32.mrf.mxu0
        %v3886 = vadd.f32 0.0, %v3885
        %v3887 = vpop.f32.mrf.mxu0
        %v3888 = vpop.f32.mrf.mxu0
        %v3889 = vadd.f32 0.0, %v3888
        %v3890 = vpop.f32.mrf.mxu0
        %3891 = vmatprep.mubr.bf16.mxu0 0
        %3892 = vmatmul.mubr.bf16.gmra.mxu0 %v3706
        %v3893 = vpop.f32.mrf.mxu0
        %v3894 = vadd.f32 0.0, %v3893
        %v3895 = vpop.f32.mrf.mxu0
        %v3896 = vpop.f32.mrf.mxu0
        %v3897 = vadd.f32 0.0, %v3896
        %v3898 = vpop.f32.mrf.mxu0
        %3899 = vmatprep.mubr.bf16.mxu0 0
        %3900 = vmatmul.mubr.bf16.gmra.mxu0 %v3707
        %v3901 = vpop.f32.mrf.mxu0
        %v3902 = vadd.f32 0.0, %v3901
        %v3903 = vpop.f32.mrf.mxu0
        %v3904 = vpop.f32.mrf.mxu0
        %v3905 = vadd.f32 0.0, %v3904
        %v3906 = vpop.f32.mrf.mxu0
        %3907 = vmatprep.mubr.bf16.mxu0 0
        %3908 = vmatmul.mubr.bf16.gmra.mxu0 %v3708
        %v3909 = vpop.f32.mrf.mxu0
        %v3910 = vadd.f32 0.0, %v3909
        %v3911 = vpop.f32.mrf.mxu0
        %v3912 = vpop.f32.mrf.mxu0
        %v3913 = vadd.f32 0.0, %v3912
        %v3914 = vpop.f32.mrf.mxu0
        %3915 = vmatprep.mubr.bf16.mxu0 0
        %3916 = vmatmul.mubr.bf16.gmra.mxu0 %v3709
        %v3917 = vpop.f32.mrf.mxu0
        %v3918 = vadd.f32 0.0, %v3917
        %v3919 = vpop.f32.mrf.mxu0
        %v3920 = vpop.f32.mrf.mxu0
        %v3921 = vadd.f32 0.0, %v3920
        %v3922 = vpop.f32.mrf.mxu0
        %3923 = vmatprep.mubr.bf16.mxu0 0
        %3924 = vmatmul.mubr.bf16.gmra.mxu0 %v3710
        %v3925 = vpop.f32.mrf.mxu0
        %v3926 = vadd.f32 0.0, %v3925
        %v3927 = vpop.f32.mrf.mxu0
        %v3928 = vpop.f32.mrf.mxu0
        %v3929 = vadd.f32 0.0, %v3928
        %v3930 = vpop.f32.mrf.mxu0
        %3931 = vmatprep.mubr.bf16.mxu0 0
        %3932 = vmatmul.mubr.bf16.gmra.mxu0 %v3711
        %v3933 = vpop.f32.mrf.mxu0
        %v3934 = vadd.f32 0.0, %v3933
        %v3935 = vpop.f32.mrf.mxu0
        %v3936 = vpop.f32.mrf.mxu0
        %v3937 = vadd.f32 0.0, %v3936
        %v3938 = vpop.f32.mrf.mxu0
        %3939 = vmatprep.mubr.bf16.mxu0 0
        %3940 = vmatmul.mubr.bf16.gmra.mxu0 %v3712
        %v3941 = vpop.f32.mrf.mxu0
        %v3942 = vadd.f32 0.0, %v3941
        %v3943 = vpop.f32.mrf.mxu0
        %v3944 = vpop.f32.mrf.mxu0
        %v3945 = vadd.f32 0.0, %v3944
        %v3946 = vpop.f32.mrf.mxu0
        %3947 = vmatprep.mubr.bf16.mxu0 0
        %3948 = vmatmul.mubr.bf16.gmra.mxu0 %v3713
        %v3949 = vpop.f32.mrf.mxu0
        %v3950 = vadd.f32 0.0, %v3949
        %v3951 = vpop.f32.mrf.mxu0
        %v3952 = vpop.f32.mrf.mxu0
        %v3953 = vadd.f32 0.0, %v3952
        %v3954 = vpop.f32.mrf.mxu0
        %3955 = vdwg.mxu0
        %v3972 = vunpack.c.l.b16 %v3644
        %v3973 = vunpack.c.l.b16 %v3645
        %v3974 = vunpack.c.l.b16 %v3646
        %v3975 = vunpack.c.l.b16 %v3647
        %v3976 = vunpack.c.l.b16 %v3648
        %v3977 = vunpack.c.l.b16 %v3649
        %v3978 = vunpack.c.l.b16 %v3650
        %v3979 = vunpack.c.l.b16 %v3651
        %v3980 = vunpack.c.l.b16 %v3652
        %v3981 = vunpack.c.l.b16 %v3653
        %v3982 = vunpack.c.l.b16 %v3654
        %v3983 = vunpack.c.l.b16 %v3655
        %v3984 = vunpack.c.l.b16 %v3656
        %v3985 = vunpack.c.l.b16 %v3657
        %v3986 = vunpack.c.l.b16 %v3658
        %v3987 = vunpack.c.l.b16 %v3659
        %v3988 = vpack.c.b16 %v3973, %v3972
        %v3989 = vpack.c.b16 %v3975, %v3974
        %v3990 = vpack.c.b16 %v3977, %v3976
        %v3991 = vpack.c.b16 %v3979, %v3978
        %v3992 = vpack.c.b16 %v3981, %v3980
        %v3993 = vpack.c.b16 %v3983, %v3982
        %v3994 = vpack.c.b16 %v3985, %v3984
        %v3995 = vpack.c.b16 %v3987, %v3986
        %4004 = vmatprep.subr.bf16.mxu0 0
        %4005 = vmatpush1.bf16.msra.mxu0 %v3995
        %4006 = vmatprep.subr.bf16.mxu0 0
        %4007 = vmatpush1.bf16.msra.mxu0 %v3994
        %4008 = vmatprep.subr.bf16.mxu0 0
        %4009 = vmatpush1.bf16.msra.mxu0 %v3993
        %4010 = vmatprep.subr.bf16.mxu0 0
        %4011 = vmatpush1.bf16.msra.mxu0 %v3992
        %4012 = vmatprep.subr.bf16.mxu0 0
        %4013 = vmatpush1.bf16.msra.mxu0 %v3991
        %4014 = vmatprep.subr.bf16.mxu0 0
        %4015 = vmatpush1.bf16.msra.mxu0 %v3990
        %4016 = vmatprep.subr.bf16.mxu0 0
        %4017 = vmatpush1.bf16.msra.mxu0 %v3989
        %4018 = vmatprep.subr.bf16.mxu0 0
        %4019 = vmatpush1.bf16.msra.mxu0 %v3988
        %4020 = vmatprep.subr.bf16.mxu0 0
        %4021 = vmatpush2.bf16.msra.mxu0 0
        %4022 = vmatprep.subr.bf16.mxu0 0
        %4023 = vmatpush2.bf16.msra.mxu0 0
        %4024 = vmatprep.subr.bf16.mxu0 0
        %4025 = vmatpush2.bf16.msra.mxu0 0
        %4026 = vmatprep.subr.bf16.mxu0 0
        %4027 = vmatpush2.bf16.msra.mxu0 0
        %4028 = vmatprep.subr.bf16.mxu0 0
        %4029 = vmatpush2.bf16.msra.mxu0 0
        %4030 = vmatprep.subr.bf16.mxu0 0
        %4031 = vmatpush2.bf16.msra.mxu0 0
        %4032 = vmatprep.subr.bf16.mxu0 0
        %4033 = vmatpush2.bf16.msra.mxu0 0
        %4034 = vmatprep.subr.bf16.mxu0 0
        %4035 = vmatpush2.bf16.msra.mxu0 0
        %4036 = vmatprep.mubr.bf16.mxu0 0
        %4037 = vmatmul.mubr.bf16.gmra.mxu0 %v3626
        %v4038 = vpop.f32.mrf.mxu0
        %v4039 = vadd.f32 %v3814, %v4038
        %v4040 = vpop.f32.mrf.mxu0
        %v4041 = vpop.f32.mrf.mxu0
        %v4042 = vadd.f32 %v3817, %v4041
        %v4043 = vpop.f32.mrf.mxu0
        %4044 = vmatprep.mubr.bf16.mxu0 0
        %4045 = vmatmul.mubr.bf16.gmra.mxu0 %v3627
        %v4046 = vpop.f32.mrf.mxu0
        %v4047 = vadd.f32 %v3822, %v4046
        %v4048 = vpop.f32.mrf.mxu0
        %v4049 = vpop.f32.mrf.mxu0
        %v4050 = vadd.f32 %v3825, %v4049
        %v4051 = vpop.f32.mrf.mxu0
        %4052 = vmatprep.mubr.bf16.mxu0 0
        %4053 = vmatmul.mubr.bf16.gmra.mxu0 %v3628
        %v4054 = vpop.f32.mrf.mxu0
        %v4055 = vadd.f32 %v3830, %v4054
        %v4056 = vpop.f32.mrf.mxu0
        %v4057 = vpop.f32.mrf.mxu0
        %v4058 = vadd.f32 %v3833, %v4057
        %v4059 = vpop.f32.mrf.mxu0
        %4060 = vmatprep.mubr.bf16.mxu0 0
        %4061 = vmatmul.mubr.bf16.gmra.mxu0 %v3629
        %v4062 = vpop.f32.mrf.mxu0
        %v4063 = vadd.f32 %v3838, %v4062
        %v4064 = vpop.f32.mrf.mxu0
        %v4065 = vpop.f32.mrf.mxu0
        %v4066 = vadd.f32 %v3841, %v4065
        %v4067 = vpop.f32.mrf.mxu0
        %4068 = vmatprep.mubr.bf16.mxu0 0
        %4069 = vmatmul.mubr.bf16.gmra.mxu0 %v3630
        %v4070 = vpop.f32.mrf.mxu0
        %v4071 = vadd.f32 %v3846, %v4070
        %v4072 = vpop.f32.mrf.mxu0
        %v4073 = vpop.f32.mrf.mxu0
        %v4074 = vadd.f32 %v3849, %v4073
        %v4075 = vpop.f32.mrf.mxu0
        %4076 = vmatprep.mubr.bf16.mxu0 0
        %4077 = vmatmul.mubr.bf16.gmra.mxu0 %v3631
        %v4078 = vpop.f32.mrf.mxu0
        %v4079 = vadd.f32 %v3854, %v4078
        %v4080 = vpop.f32.mrf.mxu0
        %v4081 = vpop.f32.mrf.mxu0
        %v4082 = vadd.f32 %v3857, %v4081
        %v4083 = vpop.f32.mrf.mxu0
        %4084 = vmatprep.mubr.bf16.mxu0 0
        %4085 = vmatmul.mubr.bf16.gmra.mxu0 %v3632
        %v4086 = vpop.f32.mrf.mxu0
        %v4087 = vadd.f32 %v3862, %v4086
        %v4088 = vpop.f32.mrf.mxu0
        %v4089 = vpop.f32.mrf.mxu0
        %v4090 = vadd.f32 %v3865, %v4089
        %v4091 = vpop.f32.mrf.mxu0
        %4092 = vmatprep.mubr.bf16.mxu0 0
        %4093 = vmatmul.mubr.bf16.gmra.mxu0 %v3633
        %v4094 = vpop.f32.mrf.mxu0
        %v4095 = vadd.f32 %v3870, %v4094
        %v4096 = vpop.f32.mrf.mxu0
        %v4097 = vpop.f32.mrf.mxu0
        %v4098 = vadd.f32 %v3873, %v4097
        %v4099 = vpop.f32.mrf.mxu0
        %4100 = vmatprep.mubr.bf16.mxu0 0
        %4101 = vmatmul.mubr.bf16.gmra.mxu0 %v3634
        %v4102 = vpop.f32.mrf.mxu0
        %v4103 = vadd.f32 %v3878, %v4102
        %v4104 = vpop.f32.mrf.mxu0
        %v4105 = vpop.f32.mrf.mxu0
        %v4106 = vadd.f32 %v3881, %v4105
        %v4107 = vpop.f32.mrf.mxu0
        %4108 = vmatprep.mubr.bf16.mxu0 0
        %4109 = vmatmul.mubr.bf16.gmra.mxu0 %v3635
        %v4110 = vpop.f32.mrf.mxu0
        %v4111 = vadd.f32 %v3886, %v4110
        %v4112 = vpop.f32.mrf.mxu0
        %v4113 = vpop.f32.mrf.mxu0
        %v4114 = vadd.f32 %v3889, %v4113
        %v4115 = vpop.f32.mrf.mxu0
        %4116 = vmatprep.mubr.bf16.mxu0 0
        %4117 = vmatmul.mubr.bf16.gmra.mxu0 %v3636
        %v4118 = vpop.f32.mrf.mxu0
        %v4119 = vadd.f32 %v3894, %v4118
        %v4120 = vpop.f32.mrf.mxu0
        %v4121 = vpop.f32.mrf.mxu0
        %v4122 = vadd.f32 %v3897, %v4121
        %v4123 = vpop.f32.mrf.mxu0
        %4124 = vmatprep.mubr.bf16.mxu0 0
        %4125 = vmatmul.mubr.bf16.gmra.mxu0 %v3637
        %v4126 = vpop.f32.mrf.mxu0
        %v4127 = vadd.f32 %v3902, %v4126
        %v4128 = vpop.f32.mrf.mxu0
        %v4129 = vpop.f32.mrf.mxu0
        %v4130 = vadd.f32 %v3905, %v4129
        %v4131 = vpop.f32.mrf.mxu0
        %4132 = vmatprep.mubr.bf16.mxu0 0
        %4133 = vmatmul.mubr.bf16.gmra.mxu0 %v3638
        %v4134 = vpop.f32.mrf.mxu0
        %v4135 = vadd.f32 %v3910, %v4134
        %v4136 = vpop.f32.mrf.mxu0
        %v4137 = vpop.f32.mrf.mxu0
        %v4138 = vadd.f32 %v3913, %v4137
        %v4139 = vpop.f32.mrf.mxu0
        %4140 = vmatprep.mubr.bf16.mxu0 0
        %4141 = vmatmul.mubr.bf16.gmra.mxu0 %v3639
        %v4142 = vpop.f32.mrf.mxu0
        %v4143 = vadd.f32 %v3918, %v4142
        %v4144 = vpop.f32.mrf.mxu0
        %v4145 = vpop.f32.mrf.mxu0
        %v4146 = vadd.f32 %v3921, %v4145
        %v4147 = vpop.f32.mrf.mxu0
        %4148 = vmatprep.mubr.bf16.mxu0 0
        %4149 = vmatmul.mubr.bf16.gmra.mxu0 %v3640
        %v4150 = vpop.f32.mrf.mxu0
        %v4151 = vadd.f32 %v3926, %v4150
        %v4152 = vpop.f32.mrf.mxu0
        %v4153 = vpop.f32.mrf.mxu0
        %v4154 = vadd.f32 %v3929, %v4153
        %v4155 = vpop.f32.mrf.mxu0
        %4156 = vmatprep.mubr.bf16.mxu0 0
        %4157 = vmatmul.mubr.bf16.gmra.mxu0 %v3641
        %v4158 = vpop.f32.mrf.mxu0
        %v4159 = vadd.f32 %v3934, %v4158
        %v4160 = vpop.f32.mrf.mxu0
        %v4161 = vpop.f32.mrf.mxu0
        %v4162 = vadd.f32 %v3937, %v4161
        %v4163 = vpop.f32.mrf.mxu0
        %4164 = vmatprep.mubr.bf16.mxu0 0
        %4165 = vmatmul.mubr.bf16.gmra.mxu0 %v3642
        %v4166 = vpop.f32.mrf.mxu0
        %v4167 = vadd.f32 %v3942, %v4166
        %v4168 = vpop.f32.mrf.mxu0
        %v4169 = vpop.f32.mrf.mxu0
        %v4170 = vadd.f32 %v3945, %v4169
        %v4171 = vpop.f32.mrf.mxu0
        %4172 = vmatprep.mubr.bf16.mxu0 0
        %4173 = vmatmul.mubr.bf16.gmra.mxu0 %v3643
        %v4174 = vpop.f32.mrf.mxu0
        %v4175 = vadd.f32 %v3950, %v4174
        %v4176 = vpop.f32.mrf.mxu0
        %v4177 = vpop.f32.mrf.mxu0
        %v4178 = vadd.f32 %v3953, %v4177
        %v4179 = vpop.f32.mrf.mxu0
        %4180 = vdwg.mxu0
        %v4181 = vld [vmem:[#allocation2 + $0x2] sm:$0xff]
        %v4182 = vld [vmem:[#allocation2 + $0xa] sm:$0xff]
        %v4183 = vld [vmem:[#allocation2 + $0x12] sm:$0xff]
        %v4184 = vld [vmem:[#allocation2 + $0x1a] sm:$0xff]
        %v4185 = vld [vmem:[#allocation2 + $0x22] sm:$0xff]
        %v4186 = vld [vmem:[#allocation2 + $0x2a] sm:$0xff]
        %v4187 = vld [vmem:[#allocation2 + $0x32] sm:$0xff]
        %v4188 = vld [vmem:[#allocation2 + $0x3a] sm:$0xff]
        %v4189 = vld [vmem:[#allocation2 + $0x42] sm:$0xff]
        %v4190 = vld [vmem:[#allocation2 + $0x4a] sm:$0xff]
        %v4191 = vld [vmem:[#allocation2 + $0x52] sm:$0xff]
        %v4192 = vld [vmem:[#allocation2 + $0x5a] sm:$0xff]
        %v4193 = vld [vmem:[#allocation2 + $0x62] sm:$0xff]
        %v4194 = vld [vmem:[#allocation2 + $0x6a] sm:$0xff]
        %v4195 = vld [vmem:[#allocation2 + $0x72] sm:$0xff]
        %v4196 = vld [vmem:[#allocation2 + $0x7a] sm:$0xff]
        %v4197 = vld [vmem:[#allocation2 + $0x82] sm:$0xff]
        %v4198 = vld [vmem:[#allocation2 + $0x8a] sm:$0xff]
        %v4199 = vld [vmem:[#allocation2 + $0x92] sm:$0xff]
        %v4200 = vld [vmem:[#allocation2 + $0x9a] sm:$0xff]
        %v4201 = vld [vmem:[#allocation2 + $0xa2] sm:$0xff]
        %v4202 = vld [vmem:[#allocation2 + $0xaa] sm:$0xff]
        %v4203 = vld [vmem:[#allocation2 + $0xb2] sm:$0xff]
        %v4204 = vld [vmem:[#allocation2 + $0xba] sm:$0xff]
        %v4205 = vld [vmem:[#allocation2 + $0xc2] sm:$0xff]
        %v4206 = vld [vmem:[#allocation2 + $0xca] sm:$0xff]
        %v4207 = vld [vmem:[#allocation2 + $0xd2] sm:$0xff]
        %v4208 = vld [vmem:[#allocation2 + $0xda] sm:$0xff]
        %v4209 = vld [vmem:[#allocation2 + $0xe2] sm:$0xff]
        %v4210 = vld [vmem:[#allocation2 + $0xea] sm:$0xff]
        %v4211 = vld [vmem:[#allocation2 + $0xf2] sm:$0xff]
        %v4212 = vld [vmem:[#allocation2 + $0xfa] sm:$0xff]
        %v4213 = vld [vmem:[#allocation2 + $0x102] sm:$0xff]
        %v4214 = vld [vmem:[#allocation2 + $0x10a] sm:$0xff]
        %v4215 = vld [vmem:[#allocation2 + $0x112] sm:$0xff]
        %v4216 = vld [vmem:[#allocation2 + $0x11a] sm:$0xff]
        %v4217 = vpack.c.bf16 %v4182, %v4181
        %v4218 = vpack.c.bf16 %v4184, %v4183
        %v4219 = vpack.c.bf16 %v4186, %v4185
        %v4220 = vpack.c.bf16 %v4188, %v4187
        %v4221 = vpack.c.bf16 %v4190, %v4189
        %v4222 = vpack.c.bf16 %v4192, %v4191
        %v4223 = vpack.c.bf16 %v4194, %v4193
        %v4224 = vpack.c.bf16 %v4196, %v4195
        %v4225 = vpack.c.bf16 %v4198, %v4197
        %v4226 = vpack.c.bf16 %v4200, %v4199
        %v4227 = vpack.c.bf16 %v4202, %v4201
        %v4228 = vpack.c.bf16 %v4204, %v4203
        %v4229 = vpack.c.bf16 %v4206, %v4205
        %v4230 = vpack.c.bf16 %v4208, %v4207
        %v4231 = vpack.c.bf16 %v4210, %v4209
        %v4232 = vpack.c.bf16 %v4212, %v4211
        %v4233 = vpack.c.bf16 %v4214, %v4213
        %v4234 = vpack.c.bf16 %v4216, %v4215
        %s4235 = scalar_lea.vmem [#allocation8], 128
        %v4236 = vld [vmem:[%s4235] sm:$0xf]
        %v4237 = vld [vmem:[%s4235 + $0x4] sm:$0xf]
        %v4238 = vld [vmem:[%s4235 + $0x8] sm:$0xf]
        %v4239 = vld [vmem:[%s4235 + $0xc] sm:$0xf]
        %v4240 = vld [vmem:[%s4235 + $0x10] sm:$0xf]
        %v4241 = vld [vmem:[%s4235 + $0x14] sm:$0xf]
        %v4242 = vld [vmem:[%s4235 + $0x18] sm:$0xf]
        %v4243 = vld [vmem:[%s4235 + $0x1c] sm:$0xf]
        %v4244 = vld [vmem:[%s4235 + $0x20] sm:$0xf]
        %v4245 = vld [vmem:[%s4235 + $0x24] sm:$0xf]
        %v4246 = vld [vmem:[%s4235 + $0x28] sm:$0xf]
        %v4247 = vld [vmem:[%s4235 + $0x2c] sm:$0xf]
        %v4248 = vld [vmem:[%s4235 + $0x30] sm:$0xf]
        %v4249 = vld [vmem:[%s4235 + $0x34] sm:$0xf]
        %v4250 = vld [vmem:[%s4235 + $0x38] sm:$0xf]
        %v4251 = vld [vmem:[%s4235 + $0x3c] sm:$0xf]
        %v4268 = vunpack.c.l.b16 %v4236
        %v4269 = vunpack.c.l.b16 %v4237
        %v4270 = vunpack.c.l.b16 %v4238
        %v4271 = vunpack.c.l.b16 %v4239
        %v4272 = vunpack.c.l.b16 %v4240
        %v4273 = vunpack.c.l.b16 %v4241
        %v4274 = vunpack.c.l.b16 %v4242
        %v4275 = vunpack.c.l.b16 %v4243
        %v4276 = vunpack.c.l.b16 %v4244
        %v4277 = vunpack.c.l.b16 %v4245
        %v4278 = vunpack.c.l.b16 %v4246
        %v4279 = vunpack.c.l.b16 %v4247
        %v4280 = vunpack.c.l.b16 %v4248
        %v4281 = vunpack.c.l.b16 %v4249
        %v4282 = vunpack.c.l.b16 %v4250
        %v4283 = vunpack.c.l.b16 %v4251
        %v4284 = vpack.c.b16 %v4269, %v4268
        %v4285 = vpack.c.b16 %v4271, %v4270
        %v4286 = vpack.c.b16 %v4273, %v4272
        %v4287 = vpack.c.b16 %v4275, %v4274
        %v4288 = vpack.c.b16 %v4277, %v4276
        %v4289 = vpack.c.b16 %v4279, %v4278
        %v4290 = vpack.c.b16 %v4281, %v4280
        %v4291 = vpack.c.b16 %v4283, %v4282
        %4300 = vmatprep.subr.bf16.mxu0 0
        %4301 = vmatpush1.bf16.msra.mxu0 %v4291
        %4302 = vmatprep.subr.bf16.mxu0 0
        %4303 = vmatpush1.bf16.msra.mxu0 %v4290
        %4304 = vmatprep.subr.bf16.mxu0 0
        %4305 = vmatpush1.bf16.msra.mxu0 %v4289
        %4306 = vmatprep.subr.bf16.mxu0 0
        %4307 = vmatpush1.bf16.msra.mxu0 %v4288
        %4308 = vmatprep.subr.bf16.mxu0 0
        %4309 = vmatpush1.bf16.msra.mxu0 %v4287
        %4310 = vmatprep.subr.bf16.mxu0 0
        %4311 = vmatpush1.bf16.msra.mxu0 %v4286
        %4312 = vmatprep.subr.bf16.mxu0 0
        %4313 = vmatpush1.bf16.msra.mxu0 %v4285
        %4314 = vmatprep.subr.bf16.mxu0 0
        %4315 = vmatpush1.bf16.msra.mxu0 %v4284
        %4316 = vmatprep.subr.bf16.mxu0 0
        %4317 = vmatpush2.bf16.msra.mxu0 0
        %4318 = vmatprep.subr.bf16.mxu0 0
        %4319 = vmatpush2.bf16.msra.mxu0 0
        %4320 = vmatprep.subr.bf16.mxu0 0
        %4321 = vmatpush2.bf16.msra.mxu0 0
        %4322 = vmatprep.subr.bf16.mxu0 0
        %4323 = vmatpush2.bf16.msra.mxu0 0
        %4324 = vmatprep.subr.bf16.mxu0 0
        %4325 = vmatpush2.bf16.msra.mxu0 0
        %4326 = vmatprep.subr.bf16.mxu0 0
        %4327 = vmatpush2.bf16.msra.mxu0 0
        %4328 = vmatprep.subr.bf16.mxu0 0
        %4329 = vmatpush2.bf16.msra.mxu0 0
        %4330 = vmatprep.subr.bf16.mxu0 0
        %4331 = vmatpush2.bf16.msra.mxu0 0
        %4332 = vmatprep.mubr.bf16.mxu0 0
        %4333 = vmatmul.mubr.bf16.gmra.mxu0 %v4217
        %v4334 = vpop.f32.mrf.mxu0
        %v4335 = vadd.f32 0.0, %v4334
        %v4336 = vpop.f32.mrf.mxu0
        %v4337 = vpop.f32.mrf.mxu0
        %v4338 = vadd.f32 0.0, %v4337
        %v4339 = vpop.f32.mrf.mxu0
        %4340 = vmatprep.mubr.bf16.mxu0 0
        %4341 = vmatmul.mubr.bf16.gmra.mxu0 %v4218
        %v4342 = vpop.f32.mrf.mxu0
        %v4343 = vadd.f32 0.0, %v4342
        %v4344 = vpop.f32.mrf.mxu0
        %v4345 = vpop.f32.mrf.mxu0
        %v4346 = vadd.f32 0.0, %v4345
        %v4347 = vpop.f32.mrf.mxu0
        %4348 = vmatprep.mubr.bf16.mxu0 0
        %4349 = vmatmul.mubr.bf16.gmra.mxu0 %v4219
        %v4350 = vpop.f32.mrf.mxu0
        %v4351 = vadd.f32 0.0, %v4350
        %v4352 = vpop.f32.mrf.mxu0
        %v4353 = vpop.f32.mrf.mxu0
        %v4354 = vadd.f32 0.0, %v4353
        %v4355 = vpop.f32.mrf.mxu0
        %4356 = vmatprep.mubr.bf16.mxu0 0
        %4357 = vmatmul.mubr.bf16.gmra.mxu0 %v4220
        %v4358 = vpop.f32.mrf.mxu0
        %v4359 = vadd.f32 0.0, %v4358
        %v4360 = vpop.f32.mrf.mxu0
        %v4361 = vpop.f32.mrf.mxu0
        %v4362 = vadd.f32 0.0, %v4361
        %v4363 = vpop.f32.mrf.mxu0
        %4364 = vmatprep.mubr.bf16.mxu0 0
        %4365 = vmatmul.mubr.bf16.gmra.mxu0 %v4221
        %v4366 = vpop.f32.mrf.mxu0
        %v4367 = vadd.f32 0.0, %v4366
        %v4368 = vpop.f32.mrf.mxu0
        %v4369 = vpop.f32.mrf.mxu0
        %v4370 = vadd.f32 0.0, %v4369
        %v4371 = vpop.f32.mrf.mxu0
        %4372 = vmatprep.mubr.bf16.mxu0 0
        %4373 = vmatmul.mubr.bf16.gmra.mxu0 %v4222
        %v4374 = vpop.f32.mrf.mxu0
        %v4375 = vadd.f32 0.0, %v4374
        %v4376 = vpop.f32.mrf.mxu0
        %v4377 = vpop.f32.mrf.mxu0
        %v4378 = vadd.f32 0.0, %v4377
        %v4379 = vpop.f32.mrf.mxu0
        %4380 = vmatprep.mubr.bf16.mxu0 0
        %4381 = vmatmul.mubr.bf16.gmra.mxu0 %v4223
        %v4382 = vpop.f32.mrf.mxu0
        %v4383 = vadd.f32 0.0, %v4382
        %v4384 = vpop.f32.mrf.mxu0
        %v4385 = vpop.f32.mrf.mxu0
        %v4386 = vadd.f32 0.0, %v4385
        %v4387 = vpop.f32.mrf.mxu0
        %4388 = vmatprep.mubr.bf16.mxu0 0
        %4389 = vmatmul.mubr.bf16.gmra.mxu0 %v4224
        %v4390 = vpop.f32.mrf.mxu0
        %v4391 = vadd.f32 0.0, %v4390
        %v4392 = vpop.f32.mrf.mxu0
        %v4393 = vpop.f32.mrf.mxu0
        %v4394 = vadd.f32 0.0, %v4393
        %v4395 = vpop.f32.mrf.mxu0
        %4396 = vmatprep.mubr.bf16.mxu0 0
        %4397 = vmatmul.mubr.bf16.gmra.mxu0 %v4225
        %v4398 = vpop.f32.mrf.mxu0
        %v4399 = vadd.f32 0.0, %v4398
        %v4400 = vpop.f32.mrf.mxu0
        %v4401 = vpop.f32.mrf.mxu0
        %v4402 = vadd.f32 0.0, %v4401
        %v4403 = vpop.f32.mrf.mxu0
        %4404 = vmatprep.mubr.bf16.mxu0 0
        %4405 = vmatmul.mubr.bf16.gmra.mxu0 %v4226
        %v4406 = vpop.f32.mrf.mxu0
        %v4407 = vadd.f32 0.0, %v4406
        %v4408 = vpop.f32.mrf.mxu0
        %v4409 = vpop.f32.mrf.mxu0
        %v4410 = vadd.f32 0.0, %v4409
        %v4411 = vpop.f32.mrf.mxu0
        %4412 = vmatprep.mubr.bf16.mxu0 0
        %4413 = vmatmul.mubr.bf16.gmra.mxu0 %v4227
        %v4414 = vpop.f32.mrf.mxu0
        %v4415 = vadd.f32 0.0, %v4414
        %v4416 = vpop.f32.mrf.mxu0
        %v4417 = vpop.f32.mrf.mxu0
        %v4418 = vadd.f32 0.0, %v4417
        %v4419 = vpop.f32.mrf.mxu0
        %4420 = vmatprep.mubr.bf16.mxu0 0
        %4421 = vmatmul.mubr.bf16.gmra.mxu0 %v4228
        %v4422 = vpop.f32.mrf.mxu0
        %v4423 = vadd.f32 0.0, %v4422
        %v4424 = vpop.f32.mrf.mxu0
        %v4425 = vpop.f32.mrf.mxu0
        %v4426 = vadd.f32 0.0, %v4425
        %v4427 = vpop.f32.mrf.mxu0
        %4428 = vmatprep.mubr.bf16.mxu0 0
        %4429 = vmatmul.mubr.bf16.gmra.mxu0 %v4229
        %v4430 = vpop.f32.mrf.mxu0
        %v4431 = vadd.f32 0.0, %v4430
        %v4432 = vpop.f32.mrf.mxu0
        %v4433 = vpop.f32.mrf.mxu0
        %v4434 = vadd.f32 0.0, %v4433
        %v4435 = vpop.f32.mrf.mxu0
        %4436 = vmatprep.mubr.bf16.mxu0 0
        %4437 = vmatmul.mubr.bf16.gmra.mxu0 %v4230
        %v4438 = vpop.f32.mrf.mxu0
        %v4439 = vadd.f32 0.0, %v4438
        %v4440 = vpop.f32.mrf.mxu0
        %v4441 = vpop.f32.mrf.mxu0
        %v4442 = vadd.f32 0.0, %v4441
        %v4443 = vpop.f32.mrf.mxu0
        %4444 = vmatprep.mubr.bf16.mxu0 0
        %4445 = vmatmul.mubr.bf16.gmra.mxu0 %v4231
        %v4446 = vpop.f32.mrf.mxu0
        %v4447 = vadd.f32 0.0, %v4446
        %v4448 = vpop.f32.mrf.mxu0
        %v4449 = vpop.f32.mrf.mxu0
        %v4450 = vadd.f32 0.0, %v4449
        %v4451 = vpop.f32.mrf.mxu0
        %4452 = vmatprep.mubr.bf16.mxu0 0
        %4453 = vmatmul.mubr.bf16.gmra.mxu0 %v4232
        %v4454 = vpop.f32.mrf.mxu0
        %v4455 = vadd.f32 0.0, %v4454
        %v4456 = vpop.f32.mrf.mxu0
        %v4457 = vpop.f32.mrf.mxu0
        %v4458 = vadd.f32 0.0, %v4457
        %v4459 = vpop.f32.mrf.mxu0
        %4460 = vmatprep.mubr.bf16.mxu0 0
        %4461 = vmatmul.mubr.bf16.gmra.mxu0 %v4233
        %v4462 = vpop.f32.mrf.mxu0
        %v4463 = vadd.f32 0.0, %v4462
        %v4464 = vpop.f32.mrf.mxu0
        %v4465 = vpop.f32.mrf.mxu0
        %v4466 = vadd.f32 0.0, %v4465
        %v4467 = vpop.f32.mrf.mxu0
        %4468 = vmatprep.mubr.bf16.mxu0 0
        %4469 = vmatmul.mubr.bf16.gmra.mxu0 %v4234
        %v4470 = vpop.f32.mrf.mxu0
        %v4471 = vadd.f32 0.0, %v4470
        %v4472 = vpop.f32.mrf.mxu0
        %v4473 = vpop.f32.mrf.mxu0
        %v4474 = vadd.f32 0.0, %v4473
        %v4475 = vpop.f32.mrf.mxu0
        %4476 = vdwg.mxu0
        %v4477 = vadd.f32 %v4039, %v4335
        %v4478 = vadd.f32 %v4042, %v4338
        %v4479 = vadd.f32 %v4047, %v4343
        %v4480 = vadd.f32 %v4050, %v4346
        %v4481 = vadd.f32 %v4055, %v4351
        %v4482 = vadd.f32 %v4058, %v4354
        %v4483 = vadd.f32 %v4063, %v4359
        %v4484 = vadd.f32 %v4066, %v4362
        %v4485 = vadd.f32 %v4071, %v4367
        %v4486 = vadd.f32 %v4074, %v4370
        %v4487 = vadd.f32 %v4079, %v4375
        %v4488 = vadd.f32 %v4082, %v4378
        %v4489 = vadd.f32 %v4087, %v4383
        %v4490 = vadd.f32 %v4090, %v4386
        %v4491 = vadd.f32 %v4095, %v4391
        %v4492 = vadd.f32 %v4098, %v4394
        %v4493 = vadd.f32 %v4103, %v4399
        %v4494 = vadd.f32 %v4106, %v4402
        %v4495 = vadd.f32 %v4111, %v4407
        %v4496 = vadd.f32 %v4114, %v4410
        %v4497 = vadd.f32 %v4119, %v4415
        %v4498 = vadd.f32 %v4122, %v4418
        %v4499 = vadd.f32 %v4127, %v4423
        %v4500 = vadd.f32 %v4130, %v4426
        %v4501 = vadd.f32 %v4135, %v4431
        %v4502 = vadd.f32 %v4138, %v4434
        %v4503 = vadd.f32 %v4143, %v4439
        %v4504 = vadd.f32 %v4146, %v4442
        %v4505 = vadd.f32 %v4151, %v4447
        %v4506 = vadd.f32 %v4154, %v4450
        %v4507 = vadd.f32 %v4159, %v4455
        %v4508 = vadd.f32 %v4162, %v4458
        %v4509 = vadd.f32 %v4167, %v4463
        %v4510 = vadd.f32 %v4170, %v4466
        %v4511 = vadd.f32 %v4175, %v4471
        %v4512 = vadd.f32 %v4178, %v4474
        %v4513 = vld [vmem:[#allocation2 + $0x12] sm:$0xff]
        %v4514 = vld [vmem:[#allocation2 + $0x1a] sm:$0xff]
        %v4515 = vld [vmem:[#allocation2 + $0x22] sm:$0xff]
        %v4516 = vld [vmem:[#allocation2 + $0x2a] sm:$0xff]
        %v4517 = vld [vmem:[#allocation2 + $0x32] sm:$0xff]
        %v4518 = vld [vmem:[#allocation2 + $0x3a] sm:$0xff]
        %v4519 = vld [vmem:[#allocation2 + $0x42] sm:$0xff]
        %v4520 = vld [vmem:[#allocation2 + $0x4a] sm:$0xff]
        %v4521 = vld [vmem:[#allocation2 + $0x52] sm:$0xff]
        %v4522 = vld [vmem:[#allocation2 + $0x5a] sm:$0xff]
        %v4523 = vld [vmem:[#allocation2 + $0x62] sm:$0xff]
        %v4524 = vld [vmem:[#allocation2 + $0x6a] sm:$0xff]
        %v4525 = vld [vmem:[#allocation2 + $0x72] sm:$0xff]
        %v4526 = vld [vmem:[#allocation2 + $0x7a] sm:$0xff]
        %v4527 = vld [vmem:[#allocation2 + $0x82] sm:$0xff]
        %v4528 = vld [vmem:[#allocation2 + $0x8a] sm:$0xff]
        %v4529 = vld [vmem:[#allocation2 + $0x92] sm:$0xff]
        %v4530 = vld [vmem:[#allocation2 + $0x9a] sm:$0xff]
        %v4531 = vld [vmem:[#allocation2 + $0xa2] sm:$0xff]
        %v4532 = vld [vmem:[#allocation2 + $0xaa] sm:$0xff]
        %v4533 = vld [vmem:[#allocation2 + $0xb2] sm:$0xff]
        %v4534 = vld [vmem:[#allocation2 + $0xba] sm:$0xff]
        %v4535 = vld [vmem:[#allocation2 + $0xc2] sm:$0xff]
        %v4536 = vld [vmem:[#allocation2 + $0xca] sm:$0xff]
        %v4537 = vld [vmem:[#allocation2 + $0xd2] sm:$0xff]
        %v4538 = vld [vmem:[#allocation2 + $0xda] sm:$0xff]
        %v4539 = vld [vmem:[#allocation2 + $0xe2] sm:$0xff]
        %v4540 = vld [vmem:[#allocation2 + $0xea] sm:$0xff]
        %v4541 = vld [vmem:[#allocation2 + $0xf2] sm:$0xff]
        %v4542 = vld [vmem:[#allocation2 + $0xfa] sm:$0xff]
        %v4543 = vld [vmem:[#allocation2 + $0x102] sm:$0xff]
        %v4544 = vld [vmem:[#allocation2 + $0x10a] sm:$0xff]
        %v4545 = vld [vmem:[#allocation2 + $0x112] sm:$0xff]
        %v4546 = vld [vmem:[#allocation2 + $0x11a] sm:$0xff]
        %v4547 = vld [vmem:[#allocation2 + $0x122] sm:$0xff]
        %v4548 = vld [vmem:[#allocation2 + $0x12a] sm:$0xff]
        %v4549 = vpack.c.bf16 %v4514, %v4513
        %v4550 = vpack.c.bf16 %v4516, %v4515
        %v4551 = vpack.c.bf16 %v4518, %v4517
        %v4552 = vpack.c.bf16 %v4520, %v4519
        %v4553 = vpack.c.bf16 %v4522, %v4521
        %v4554 = vpack.c.bf16 %v4524, %v4523
        %v4555 = vpack.c.bf16 %v4526, %v4525
        %v4556 = vpack.c.bf16 %v4528, %v4527
        %v4557 = vpack.c.bf16 %v4530, %v4529
        %v4558 = vpack.c.bf16 %v4532, %v4531
        %v4559 = vpack.c.bf16 %v4534, %v4533
        %v4560 = vpack.c.bf16 %v4536, %v4535
        %v4561 = vpack.c.bf16 %v4538, %v4537
        %v4562 = vpack.c.bf16 %v4540, %v4539
        %v4563 = vpack.c.bf16 %v4542, %v4541
        %v4564 = vpack.c.bf16 %v4544, %v4543
        %v4565 = vpack.c.bf16 %v4546, %v4545
        %v4566 = vpack.c.bf16 %v4548, %v4547
        %s4567 = scalar_lea.vmem [#allocation8], 192
        %v4568 = vld [vmem:[%s4567] sm:$0xf]
        %v4569 = vld [vmem:[%s4567 + $0x4] sm:$0xf]
        %v4570 = vld [vmem:[%s4567 + $0x8] sm:$0xf]
        %v4571 = vld [vmem:[%s4567 + $0xc] sm:$0xf]
        %v4572 = vld [vmem:[%s4567 + $0x10] sm:$0xf]
        %v4573 = vld [vmem:[%s4567 + $0x14] sm:$0xf]
        %v4574 = vld [vmem:[%s4567 + $0x18] sm:$0xf]
        %v4575 = vld [vmem:[%s4567 + $0x1c] sm:$0xf]
        %v4576 = vld [vmem:[%s4567 + $0x20] sm:$0xf]
        %v4577 = vld [vmem:[%s4567 + $0x24] sm:$0xf]
        %v4578 = vld [vmem:[%s4567 + $0x28] sm:$0xf]
        %v4579 = vld [vmem:[%s4567 + $0x2c] sm:$0xf]
        %v4580 = vld [vmem:[%s4567 + $0x30] sm:$0xf]
        %v4581 = vld [vmem:[%s4567 + $0x34] sm:$0xf]
        %v4582 = vld [vmem:[%s4567 + $0x38] sm:$0xf]
        %v4583 = vld [vmem:[%s4567 + $0x3c] sm:$0xf]
        %v4600 = vunpack.c.l.b16 %v4568
        %v4601 = vunpack.c.l.b16 %v4569
        %v4602 = vunpack.c.l.b16 %v4570
        %v4603 = vunpack.c.l.b16 %v4571
        %v4604 = vunpack.c.l.b16 %v4572
        %v4605 = vunpack.c.l.b16 %v4573
        %v4606 = vunpack.c.l.b16 %v4574
        %v4607 = vunpack.c.l.b16 %v4575
        %v4608 = vunpack.c.l.b16 %v4576
        %v4609 = vunpack.c.l.b16 %v4577
        %v4610 = vunpack.c.l.b16 %v4578
        %v4611 = vunpack.c.l.b16 %v4579
        %v4612 = vunpack.c.l.b16 %v4580
        %v4613 = vunpack.c.l.b16 %v4581
        %v4614 = vunpack.c.l.b16 %v4582
        %v4615 = vunpack.c.l.b16 %v4583
        %v4616 = vpack.c.b16 %v4601, %v4600
        %v4617 = vpack.c.b16 %v4603, %v4602
        %v4618 = vpack.c.b16 %v4605, %v4604
        %v4619 = vpack.c.b16 %v4607, %v4606
        %v4620 = vpack.c.b16 %v4609, %v4608
        %v4621 = vpack.c.b16 %v4611, %v4610
        %v4622 = vpack.c.b16 %v4613, %v4612
        %v4623 = vpack.c.b16 %v4615, %v4614
        %4632 = vmatprep.subr.bf16.mxu0 0
        %4633 = vmatpush1.bf16.msra.mxu0 %v4623
        %4634 = vmatprep.subr.bf16.mxu0 0
        %4635 = vmatpush1.bf16.msra.mxu0 %v4622
        %4636 = vmatprep.subr.bf16.mxu0 0
        %4637 = vmatpush1.bf16.msra.mxu0 %v4621
        %4638 = vmatprep.subr.bf16.mxu0 0
        %4639 = vmatpush1.bf16.msra.mxu0 %v4620
        %4640 = vmatprep.subr.bf16.mxu0 0
        %4641 = vmatpush1.bf16.msra.mxu0 %v4619
        %4642 = vmatprep.subr.bf16.mxu0 0
        %4643 = vmatpush1.bf16.msra.mxu0 %v4618
        %4644 = vmatprep.subr.bf16.mxu0 0
        %4645 = vmatpush1.bf16.msra.mxu0 %v4617
        %4646 = vmatprep.subr.bf16.mxu0 0
        %4647 = vmatpush1.bf16.msra.mxu0 %v4616
        %4648 = vmatprep.subr.bf16.mxu0 0
        %4649 = vmatpush2.bf16.msra.mxu0 0
        %4650 = vmatprep.subr.bf16.mxu0 0
        %4651 = vmatpush2.bf16.msra.mxu0 0
        %4652 = vmatprep.subr.bf16.mxu0 0
        %4653 = vmatpush2.bf16.msra.mxu0 0
        %4654 = vmatprep.subr.bf16.mxu0 0
        %4655 = vmatpush2.bf16.msra.mxu0 0
        %4656 = vmatprep.subr.bf16.mxu0 0
        %4657 = vmatpush2.bf16.msra.mxu0 0
        %4658 = vmatprep.subr.bf16.mxu0 0
        %4659 = vmatpush2.bf16.msra.mxu0 0
        %4660 = vmatprep.subr.bf16.mxu0 0
        %4661 = vmatpush2.bf16.msra.mxu0 0
        %4662 = vmatprep.subr.bf16.mxu0 0
        %4663 = vmatpush2.bf16.msra.mxu0 0
        %4664 = vmatprep.mubr.bf16.mxu0 0
        %4665 = vmatmul.mubr.bf16.gmra.mxu0 %v4549
        %v4666 = vpop.f32.mrf.mxu0
        %v4667 = vadd.f32 0.0, %v4666
        %v4668 = vpop.f32.mrf.mxu0
        %v4669 = vpop.f32.mrf.mxu0
        %v4670 = vadd.f32 0.0, %v4669
        %v4671 = vpop.f32.mrf.mxu0
        %4672 = vmatprep.mubr.bf16.mxu0 0
        %4673 = vmatmul.mubr.bf16.gmra.mxu0 %v4550
        %v4674 = vpop.f32.mrf.mxu0
        %v4675 = vadd.f32 0.0, %v4674
        %v4676 = vpop.f32.mrf.mxu0
        %v4677 = vpop.f32.mrf.mxu0
        %v4678 = vadd.f32 0.0, %v4677
        %v4679 = vpop.f32.mrf.mxu0
        %4680 = vmatprep.mubr.bf16.mxu0 0
        %4681 = vmatmul.mubr.bf16.gmra.mxu0 %v4551
        %v4682 = vpop.f32.mrf.mxu0
        %v4683 = vadd.f32 0.0, %v4682
        %v4684 = vpop.f32.mrf.mxu0
        %v4685 = vpop.f32.mrf.mxu0
        %v4686 = vadd.f32 0.0, %v4685
        %v4687 = vpop.f32.mrf.mxu0
        %4688 = vmatprep.mubr.bf16.mxu0 0
        %4689 = vmatmul.mubr.bf16.gmra.mxu0 %v4552
        %v4690 = vpop.f32.mrf.mxu0
        %v4691 = vadd.f32 0.0, %v4690
        %v4692 = vpop.f32.mrf.mxu0
        %v4693 = vpop.f32.mrf.mxu0
        %v4694 = vadd.f32 0.0, %v4693
        %v4695 = vpop.f32.mrf.mxu0
        %4696 = vmatprep.mubr.bf16.mxu0 0
        %4697 = vmatmul.mubr.bf16.gmra.mxu0 %v4553
        %v4698 = vpop.f32.mrf.mxu0
        %v4699 = vadd.f32 0.0, %v4698
        %v4700 = vpop.f32.mrf.mxu0
        %v4701 = vpop.f32.mrf.mxu0
        %v4702 = vadd.f32 0.0, %v4701
        %v4703 = vpop.f32.mrf.mxu0
        %4704 = vmatprep.mubr.bf16.mxu0 0
        %4705 = vmatmul.mubr.bf16.gmra.mxu0 %v4554
        %v4706 = vpop.f32.mrf.mxu0
        %v4707 = vadd.f32 0.0, %v4706
        %v4708 = vpop.f32.mrf.mxu0
        %v4709 = vpop.f32.mrf.mxu0
        %v4710 = vadd.f32 0.0, %v4709
        %v4711 = vpop.f32.mrf.mxu0
        %4712 = vmatprep.mubr.bf16.mxu0 0
        %4713 = vmatmul.mubr.bf16.gmra.mxu0 %v4555
        %v4714 = vpop.f32.mrf.mxu0
        %v4715 = vadd.f32 0.0, %v4714
        %v4716 = vpop.f32.mrf.mxu0
        %v4717 = vpop.f32.mrf.mxu0
        %v4718 = vadd.f32 0.0, %v4717
        %v4719 = vpop.f32.mrf.mxu0
        %4720 = vmatprep.mubr.bf16.mxu0 0
        %4721 = vmatmul.mubr.bf16.gmra.mxu0 %v4556
        %v4722 = vpop.f32.mrf.mxu0
        %v4723 = vadd.f32 0.0, %v4722
        %v4724 = vpop.f32.mrf.mxu0
        %v4725 = vpop.f32.mrf.mxu0
        %v4726 = vadd.f32 0.0, %v4725
        %v4727 = vpop.f32.mrf.mxu0
        %4728 = vmatprep.mubr.bf16.mxu0 0
        %4729 = vmatmul.mubr.bf16.gmra.mxu0 %v4557
        %v4730 = vpop.f32.mrf.mxu0
        %v4731 = vadd.f32 0.0, %v4730
        %v4732 = vpop.f32.mrf.mxu0
        %v4733 = vpop.f32.mrf.mxu0
        %v4734 = vadd.f32 0.0, %v4733
        %v4735 = vpop.f32.mrf.mxu0
        %4736 = vmatprep.mubr.bf16.mxu0 0
        %4737 = vmatmul.mubr.bf16.gmra.mxu0 %v4558
        %v4738 = vpop.f32.mrf.mxu0
        %v4739 = vadd.f32 0.0, %v4738
        %v4740 = vpop.f32.mrf.mxu0
        %v4741 = vpop.f32.mrf.mxu0
        %v4742 = vadd.f32 0.0, %v4741
        %v4743 = vpop.f32.mrf.mxu0
        %4744 = vmatprep.mubr.bf16.mxu0 0
        %4745 = vmatmul.mubr.bf16.gmra.mxu0 %v4559
        %v4746 = vpop.f32.mrf.mxu0
        %v4747 = vadd.f32 0.0, %v4746
        %v4748 = vpop.f32.mrf.mxu0
        %v4749 = vpop.f32.mrf.mxu0
        %v4750 = vadd.f32 0.0, %v4749
        %v4751 = vpop.f32.mrf.mxu0
        %4752 = vmatprep.mubr.bf16.mxu0 0
        %4753 = vmatmul.mubr.bf16.gmra.mxu0 %v4560
        %v4754 = vpop.f32.mrf.mxu0
        %v4755 = vadd.f32 0.0, %v4754
        %v4756 = vpop.f32.mrf.mxu0
        %v4757 = vpop.f32.mrf.mxu0
        %v4758 = vadd.f32 0.0, %v4757
        %v4759 = vpop.f32.mrf.mxu0
        %4760 = vmatprep.mubr.bf16.mxu0 0
        %4761 = vmatmul.mubr.bf16.gmra.mxu0 %v4561
        %v4762 = vpop.f32.mrf.mxu0
        %v4763 = vadd.f32 0.0, %v4762
        %v4764 = vpop.f32.mrf.mxu0
        %v4765 = vpop.f32.mrf.mxu0
        %v4766 = vadd.f32 0.0, %v4765
        %v4767 = vpop.f32.mrf.mxu0
        %4768 = vmatprep.mubr.bf16.mxu0 0
        %4769 = vmatmul.mubr.bf16.gmra.mxu0 %v4562
        %v4770 = vpop.f32.mrf.mxu0
        %v4771 = vadd.f32 0.0, %v4770
        %v4772 = vpop.f32.mrf.mxu0
        %v4773 = vpop.f32.mrf.mxu0
        %v4774 = vadd.f32 0.0, %v4773
        %v4775 = vpop.f32.mrf.mxu0
        %4776 = vmatprep.mubr.bf16.mxu0 0
        %4777 = vmatmul.mubr.bf16.gmra.mxu0 %v4563
        %v4778 = vpop.f32.mrf.mxu0
        %v4779 = vadd.f32 0.0, %v4778
        %v4780 = vpop.f32.mrf.mxu0
        %v4781 = vpop.f32.mrf.mxu0
        %v4782 = vadd.f32 0.0, %v4781
        %v4783 = vpop.f32.mrf.mxu0
        %4784 = vmatprep.mubr.bf16.mxu0 0
        %4785 = vmatmul.mubr.bf16.gmra.mxu0 %v4564
        %v4786 = vpop.f32.mrf.mxu0
        %v4787 = vadd.f32 0.0, %v4786
        %v4788 = vpop.f32.mrf.mxu0
        %v4789 = vpop.f32.mrf.mxu0
        %v4790 = vadd.f32 0.0, %v4789
        %v4791 = vpop.f32.mrf.mxu0
        %4792 = vmatprep.mubr.bf16.mxu0 0
        %4793 = vmatmul.mubr.bf16.gmra.mxu0 %v4565
        %v4794 = vpop.f32.mrf.mxu0
        %v4795 = vadd.f32 0.0, %v4794
        %v4796 = vpop.f32.mrf.mxu0
        %v4797 = vpop.f32.mrf.mxu0
        %v4798 = vadd.f32 0.0, %v4797
        %v4799 = vpop.f32.mrf.mxu0
        %4800 = vmatprep.mubr.bf16.mxu0 0
        %4801 = vmatmul.mubr.bf16.gmra.mxu0 %v4566
        %v4802 = vpop.f32.mrf.mxu0
        %v4803 = vadd.f32 0.0, %v4802
        %v4804 = vpop.f32.mrf.mxu0
        %v4805 = vpop.f32.mrf.mxu0
        %v4806 = vadd.f32 0.0, %v4805
        %v4807 = vpop.f32.mrf.mxu0
        %4808 = vdwg.mxu0
        %v4809 = vadd.f32 %v4477, %v4667
        %v4810 = vadd.f32 %v4478, %v4670
        %v4811 = vadd.f32 %v4479, %v4675
        %v4812 = vadd.f32 %v4480, %v4678
        %v4813 = vadd.f32 %v4481, %v4683
        %v4814 = vadd.f32 %v4482, %v4686
        %v4815 = vadd.f32 %v4483, %v4691
        %v4816 = vadd.f32 %v4484, %v4694
        %v4817 = vadd.f32 %v4485, %v4699
        %v4818 = vadd.f32 %v4486, %v4702
        %v4819 = vadd.f32 %v4487, %v4707
        %v4820 = vadd.f32 %v4488, %v4710
        %v4821 = vadd.f32 %v4489, %v4715
        %v4822 = vadd.f32 %v4490, %v4718
        %v4823 = vadd.f32 %v4491, %v4723
        %v4824 = vadd.f32 %v4492, %v4726
        %v4825 = vadd.f32 %v4493, %v4731
        %v4826 = vadd.f32 %v4494, %v4734
        %v4827 = vadd.f32 %v4495, %v4739
        %v4828 = vadd.f32 %v4496, %v4742
        %v4829 = vadd.f32 %v4497, %v4747
        %v4830 = vadd.f32 %v4498, %v4750
        %v4831 = vadd.f32 %v4499, %v4755
        %v4832 = vadd.f32 %v4500, %v4758
        %v4833 = vadd.f32 %v4501, %v4763
        %v4834 = vadd.f32 %v4502, %v4766
        %v4835 = vadd.f32 %v4503, %v4771
        %v4836 = vadd.f32 %v4504, %v4774
        %v4837 = vadd.f32 %v4505, %v4779
        %v4838 = vadd.f32 %v4506, %v4782
        %v4839 = vadd.f32 %v4507, %v4787
        %v4840 = vadd.f32 %v4508, %v4790
        %v4841 = vadd.f32 %v4509, %v4795
        %v4842 = vadd.f32 %v4510, %v4798
        %v4843 = vadd.f32 %v4511, %v4803
        %v4844 = vadd.f32 %v4512, %v4806
        %v4845 = vld [vmem:[#allocation2 + $0x13] sm:$0xff]
        %v4846 = vld [vmem:[#allocation2 + $0x1b] sm:$0xff]
        %v4847 = vld [vmem:[#allocation2 + $0x23] sm:$0xff]
        %v4848 = vld [vmem:[#allocation2 + $0x2b] sm:$0xff]
        %v4849 = vld [vmem:[#allocation2 + $0x33] sm:$0xff]
        %v4850 = vld [vmem:[#allocation2 + $0x3b] sm:$0xff]
        %v4851 = vld [vmem:[#allocation2 + $0x43] sm:$0xff]
        %v4852 = vld [vmem:[#allocation2 + $0x4b] sm:$0xff]
        %v4853 = vld [vmem:[#allocation2 + $0x53] sm:$0xff]
        %v4854 = vld [vmem:[#allocation2 + $0x5b] sm:$0xff]
        %v4855 = vld [vmem:[#allocation2 + $0x63] sm:$0xff]
        %v4856 = vld [vmem:[#allocation2 + $0x6b] sm:$0xff]
        %v4857 = vld [vmem:[#allocation2 + $0x73] sm:$0xff]
        %v4858 = vld [vmem:[#allocation2 + $0x7b] sm:$0xff]
        %v4859 = vld [vmem:[#allocation2 + $0x83] sm:$0xff]
        %v4860 = vld [vmem:[#allocation2 + $0x8b] sm:$0xff]
        %v4861 = vld [vmem:[#allocation2 + $0x93] sm:$0xff]
        %v4862 = vld [vmem:[#allocation2 + $0x9b] sm:$0xff]
        %v4863 = vld [vmem:[#allocation2 + $0xa3] sm:$0xff]
        %v4864 = vld [vmem:[#allocation2 + $0xab] sm:$0xff]
        %v4865 = vld [vmem:[#allocation2 + $0xb3] sm:$0xff]
        %v4866 = vld [vmem:[#allocation2 + $0xbb] sm:$0xff]
        %v4867 = vld [vmem:[#allocation2 + $0xc3] sm:$0xff]
        %v4868 = vld [vmem:[#allocation2 + $0xcb] sm:$0xff]
        %v4869 = vld [vmem:[#allocation2 + $0xd3] sm:$0xff]
        %v4870 = vld [vmem:[#allocation2 + $0xdb] sm:$0xff]
        %v4871 = vld [vmem:[#allocation2 + $0xe3] sm:$0xff]
        %v4872 = vld [vmem:[#allocation2 + $0xeb] sm:$0xff]
        %v4873 = vld [vmem:[#allocation2 + $0xf3] sm:$0xff]
        %v4874 = vld [vmem:[#allocation2 + $0xfb] sm:$0xff]
        %v4875 = vld [vmem:[#allocation2 + $0x103] sm:$0xff]
        %v4876 = vld [vmem:[#allocation2 + $0x10b] sm:$0xff]
        %v4877 = vld [vmem:[#allocation2 + $0x113] sm:$0xff]
        %v4878 = vld [vmem:[#allocation2 + $0x11b] sm:$0xff]
        %v4879 = vld [vmem:[#allocation2 + $0x123] sm:$0xff]
        %v4880 = vld [vmem:[#allocation2 + $0x12b] sm:$0xff]
        %v4881 = vpack.c.bf16 %v4846, %v4845
        %v4882 = vpack.c.bf16 %v4848, %v4847
        %v4883 = vpack.c.bf16 %v4850, %v4849
        %v4884 = vpack.c.bf16 %v4852, %v4851
        %v4885 = vpack.c.bf16 %v4854, %v4853
        %v4886 = vpack.c.bf16 %v4856, %v4855
        %v4887 = vpack.c.bf16 %v4858, %v4857
        %v4888 = vpack.c.bf16 %v4860, %v4859
        %v4889 = vpack.c.bf16 %v4862, %v4861
        %v4890 = vpack.c.bf16 %v4864, %v4863
        %v4891 = vpack.c.bf16 %v4866, %v4865
        %v4892 = vpack.c.bf16 %v4868, %v4867
        %v4893 = vpack.c.bf16 %v4870, %v4869
        %v4894 = vpack.c.bf16 %v4872, %v4871
        %v4895 = vpack.c.bf16 %v4874, %v4873
        %v4896 = vpack.c.bf16 %v4876, %v4875
        %v4897 = vpack.c.bf16 %v4878, %v4877
        %v4898 = vpack.c.bf16 %v4880, %v4879
        %s4899 = scalar_lea.vmem [#allocation8], 256
        %v4900 = vld [vmem:[%s4899] sm:$0xf]
        %v4901 = vld [vmem:[%s4899 + $0x4] sm:$0xf]
        %v4902 = vld [vmem:[%s4899 + $0x8] sm:$0xf]
        %v4903 = vld [vmem:[%s4899 + $0xc] sm:$0xf]
        %v4904 = vld [vmem:[%s4899 + $0x10] sm:$0xf]
        %v4905 = vld [vmem:[%s4899 + $0x14] sm:$0xf]
        %v4906 = vld [vmem:[%s4899 + $0x18] sm:$0xf]
        %v4907 = vld [vmem:[%s4899 + $0x1c] sm:$0xf]
        %v4908 = vld [vmem:[%s4899 + $0x20] sm:$0xf]
        %v4909 = vld [vmem:[%s4899 + $0x24] sm:$0xf]
        %v4910 = vld [vmem:[%s4899 + $0x28] sm:$0xf]
        %v4911 = vld [vmem:[%s4899 + $0x2c] sm:$0xf]
        %v4912 = vld [vmem:[%s4899 + $0x30] sm:$0xf]
        %v4913 = vld [vmem:[%s4899 + $0x34] sm:$0xf]
        %v4914 = vld [vmem:[%s4899 + $0x38] sm:$0xf]
        %v4915 = vld [vmem:[%s4899 + $0x3c] sm:$0xf]
        %v4932 = vunpack.c.l.b16 %v4900
        %v4933 = vunpack.c.l.b16 %v4901
        %v4934 = vunpack.c.l.b16 %v4902
        %v4935 = vunpack.c.l.b16 %v4903
        %v4936 = vunpack.c.l.b16 %v4904
        %v4937 = vunpack.c.l.b16 %v4905
        %v4938 = vunpack.c.l.b16 %v4906
        %v4939 = vunpack.c.l.b16 %v4907
        %v4940 = vunpack.c.l.b16 %v4908
        %v4941 = vunpack.c.l.b16 %v4909
        %v4942 = vunpack.c.l.b16 %v4910
        %v4943 = vunpack.c.l.b16 %v4911
        %v4944 = vunpack.c.l.b16 %v4912
        %v4945 = vunpack.c.l.b16 %v4913
        %v4946 = vunpack.c.l.b16 %v4914
        %v4947 = vunpack.c.l.b16 %v4915
        %v4948 = vpack.c.b16 %v4933, %v4932
        %v4949 = vpack.c.b16 %v4935, %v4934
        %v4950 = vpack.c.b16 %v4937, %v4936
        %v4951 = vpack.c.b16 %v4939, %v4938
        %v4952 = vpack.c.b16 %v4941, %v4940
        %v4953 = vpack.c.b16 %v4943, %v4942
        %v4954 = vpack.c.b16 %v4945, %v4944
        %v4955 = vpack.c.b16 %v4947, %v4946
        %4964 = vmatprep.subr.bf16.mxu0 0
        %4965 = vmatpush1.bf16.msra.mxu0 %v4955
        %4966 = vmatprep.subr.bf16.mxu0 0
        %4967 = vmatpush1.bf16.msra.mxu0 %v4954
        %4968 = vmatprep.subr.bf16.mxu0 0
        %4969 = vmatpush1.bf16.msra.mxu0 %v4953
        %4970 = vmatprep.subr.bf16.mxu0 0
        %4971 = vmatpush1.bf16.msra.mxu0 %v4952
        %4972 = vmatprep.subr.bf16.mxu0 0
        %4973 = vmatpush1.bf16.msra.mxu0 %v4951
        %4974 = vmatprep.subr.bf16.mxu0 0
        %4975 = vmatpush1.bf16.msra.mxu0 %v4950
        %4976 = vmatprep.subr.bf16.mxu0 0
        %4977 = vmatpush1.bf16.msra.mxu0 %v4949
        %4978 = vmatprep.subr.bf16.mxu0 0
        %4979 = vmatpush1.bf16.msra.mxu0 %v4948
        %4980 = vmatprep.subr.bf16.mxu0 0
        %4981 = vmatpush2.bf16.msra.mxu0 0
        %4982 = vmatprep.subr.bf16.mxu0 0
        %4983 = vmatpush2.bf16.msra.mxu0 0
        %4984 = vmatprep.subr.bf16.mxu0 0
        %4985 = vmatpush2.bf16.msra.mxu0 0
        %4986 = vmatprep.subr.bf16.mxu0 0
        %4987 = vmatpush2.bf16.msra.mxu0 0
        %4988 = vmatprep.subr.bf16.mxu0 0
        %4989 = vmatpush2.bf16.msra.mxu0 0
        %4990 = vmatprep.subr.bf16.mxu0 0
        %4991 = vmatpush2.bf16.msra.mxu0 0
        %4992 = vmatprep.subr.bf16.mxu0 0
        %4993 = vmatpush2.bf16.msra.mxu0 0
        %4994 = vmatprep.subr.bf16.mxu0 0
        %4995 = vmatpush2.bf16.msra.mxu0 0
        %4996 = vmatprep.mubr.bf16.mxu0 0
        %4997 = vmatmul.mubr.bf16.gmra.mxu0 %v4881
        %v4998 = vpop.f32.mrf.mxu0
        %v4999 = vadd.f32 0.0, %v4998
        %v5000 = vpop.f32.mrf.mxu0
        %v5001 = vpop.f32.mrf.mxu0
        %v5002 = vadd.f32 0.0, %v5001
        %v5003 = vpop.f32.mrf.mxu0
        %5004 = vmatprep.mubr.bf16.mxu0 0
        %5005 = vmatmul.mubr.bf16.gmra.mxu0 %v4882
        %v5006 = vpop.f32.mrf.mxu0
        %v5007 = vadd.f32 0.0, %v5006
        %v5008 = vpop.f32.mrf.mxu0
        %v5009 = vpop.f32.mrf.mxu0
        %v5010 = vadd.f32 0.0, %v5009
        %v5011 = vpop.f32.mrf.mxu0
        %5012 = vmatprep.mubr.bf16.mxu0 0
        %5013 = vmatmul.mubr.bf16.gmra.mxu0 %v4883
        %v5014 = vpop.f32.mrf.mxu0
        %v5015 = vadd.f32 0.0, %v5014
        %v5016 = vpop.f32.mrf.mxu0
        %v5017 = vpop.f32.mrf.mxu0
        %v5018 = vadd.f32 0.0, %v5017
        %v5019 = vpop.f32.mrf.mxu0
        %5020 = vmatprep.mubr.bf16.mxu0 0
        %5021 = vmatmul.mubr.bf16.gmra.mxu0 %v4884
        %v5022 = vpop.f32.mrf.mxu0
        %v5023 = vadd.f32 0.0, %v5022
        %v5024 = vpop.f32.mrf.mxu0
        %v5025 = vpop.f32.mrf.mxu0
        %v5026 = vadd.f32 0.0, %v5025
        %v5027 = vpop.f32.mrf.mxu0
        %5028 = vmatprep.mubr.bf16.mxu0 0
        %5029 = vmatmul.mubr.bf16.gmra.mxu0 %v4885
        %v5030 = vpop.f32.mrf.mxu0
        %v5031 = vadd.f32 0.0, %v5030
        %v5032 = vpop.f32.mrf.mxu0
        %v5033 = vpop.f32.mrf.mxu0
        %v5034 = vadd.f32 0.0, %v5033
        %v5035 = vpop.f32.mrf.mxu0
        %5036 = vmatprep.mubr.bf16.mxu0 0
        %5037 = vmatmul.mubr.bf16.gmra.mxu0 %v4886
        %v5038 = vpop.f32.mrf.mxu0
        %v5039 = vadd.f32 0.0, %v5038
        %v5040 = vpop.f32.mrf.mxu0
        %v5041 = vpop.f32.mrf.mxu0
        %v5042 = vadd.f32 0.0, %v5041
        %v5043 = vpop.f32.mrf.mxu0
        %5044 = vmatprep.mubr.bf16.mxu0 0
        %5045 = vmatmul.mubr.bf16.gmra.mxu0 %v4887
        %v5046 = vpop.f32.mrf.mxu0
        %v5047 = vadd.f32 0.0, %v5046
        %v5048 = vpop.f32.mrf.mxu0
        %v5049 = vpop.f32.mrf.mxu0
        %v5050 = vadd.f32 0.0, %v5049
        %v5051 = vpop.f32.mrf.mxu0
        %5052 = vmatprep.mubr.bf16.mxu0 0
        %5053 = vmatmul.mubr.bf16.gmra.mxu0 %v4888
        %v5054 = vpop.f32.mrf.mxu0
        %v5055 = vadd.f32 0.0, %v5054
        %v5056 = vpop.f32.mrf.mxu0
        %v5057 = vpop.f32.mrf.mxu0
        %v5058 = vadd.f32 0.0, %v5057
        %v5059 = vpop.f32.mrf.mxu0
        %5060 = vmatprep.mubr.bf16.mxu0 0
        %5061 = vmatmul.mubr.bf16.gmra.mxu0 %v4889
        %v5062 = vpop.f32.mrf.mxu0
        %v5063 = vadd.f32 0.0, %v5062
        %v5064 = vpop.f32.mrf.mxu0
        %v5065 = vpop.f32.mrf.mxu0
        %v5066 = vadd.f32 0.0, %v5065
        %v5067 = vpop.f32.mrf.mxu0
        %5068 = vmatprep.mubr.bf16.mxu0 0
        %5069 = vmatmul.mubr.bf16.gmra.mxu0 %v4890
        %v5070 = vpop.f32.mrf.mxu0
        %v5071 = vadd.f32 0.0, %v5070
        %v5072 = vpop.f32.mrf.mxu0
        %v5073 = vpop.f32.mrf.mxu0
        %v5074 = vadd.f32 0.0, %v5073
        %v5075 = vpop.f32.mrf.mxu0
        %5076 = vmatprep.mubr.bf16.mxu0 0
        %5077 = vmatmul.mubr.bf16.gmra.mxu0 %v4891
        %v5078 = vpop.f32.mrf.mxu0
        %v5079 = vadd.f32 0.0, %v5078
        %v5080 = vpop.f32.mrf.mxu0
        %v5081 = vpop.f32.mrf.mxu0
        %v5082 = vadd.f32 0.0, %v5081
        %v5083 = vpop.f32.mrf.mxu0
        %5084 = vmatprep.mubr.bf16.mxu0 0
        %5085 = vmatmul.mubr.bf16.gmra.mxu0 %v4892
        %v5086 = vpop.f32.mrf.mxu0
        %v5087 = vadd.f32 0.0, %v5086
        %v5088 = vpop.f32.mrf.mxu0
        %v5089 = vpop.f32.mrf.mxu0
        %v5090 = vadd.f32 0.0, %v5089
        %v5091 = vpop.f32.mrf.mxu0
        %5092 = vmatprep.mubr.bf16.mxu0 0
        %5093 = vmatmul.mubr.bf16.gmra.mxu0 %v4893
        %v5094 = vpop.f32.mrf.mxu0
        %v5095 = vadd.f32 0.0, %v5094
        %v5096 = vpop.f32.mrf.mxu0
        %v5097 = vpop.f32.mrf.mxu0
        %v5098 = vadd.f32 0.0, %v5097
        %v5099 = vpop.f32.mrf.mxu0
        %5100 = vmatprep.mubr.bf16.mxu0 0
        %5101 = vmatmul.mubr.bf16.gmra.mxu0 %v4894
        %v5102 = vpop.f32.mrf.mxu0
        %v5103 = vadd.f32 0.0, %v5102
        %v5104 = vpop.f32.mrf.mxu0
        %v5105 = vpop.f32.mrf.mxu0
        %v5106 = vadd.f32 0.0, %v5105
        %v5107 = vpop.f32.mrf.mxu0
        %5108 = vmatprep.mubr.bf16.mxu0 0
        %5109 = vmatmul.mubr.bf16.gmra.mxu0 %v4895
        %v5110 = vpop.f32.mrf.mxu0
        %v5111 = vadd.f32 0.0, %v5110
        %v5112 = vpop.f32.mrf.mxu0
        %v5113 = vpop.f32.mrf.mxu0
        %v5114 = vadd.f32 0.0, %v5113
        %v5115 = vpop.f32.mrf.mxu0
        %5116 = vmatprep.mubr.bf16.mxu0 0
        %5117 = vmatmul.mubr.bf16.gmra.mxu0 %v4896
        %v5118 = vpop.f32.mrf.mxu0
        %v5119 = vadd.f32 0.0, %v5118
        %v5120 = vpop.f32.mrf.mxu0
        %v5121 = vpop.f32.mrf.mxu0
        %v5122 = vadd.f32 0.0, %v5121
        %v5123 = vpop.f32.mrf.mxu0
        %5124 = vmatprep.mubr.bf16.mxu0 0
        %5125 = vmatmul.mubr.bf16.gmra.mxu0 %v4897
        %v5126 = vpop.f32.mrf.mxu0
        %v5127 = vadd.f32 0.0, %v5126
        %v5128 = vpop.f32.mrf.mxu0
        %v5129 = vpop.f32.mrf.mxu0
        %v5130 = vadd.f32 0.0, %v5129
        %v5131 = vpop.f32.mrf.mxu0
        %5132 = vmatprep.mubr.bf16.mxu0 0
        %5133 = vmatmul.mubr.bf16.gmra.mxu0 %v4898
        %v5134 = vpop.f32.mrf.mxu0
        %v5135 = vadd.f32 0.0, %v5134
        %v5136 = vpop.f32.mrf.mxu0
        %v5137 = vpop.f32.mrf.mxu0
        %v5138 = vadd.f32 0.0, %v5137
        %v5139 = vpop.f32.mrf.mxu0
        %5140 = vdwg.mxu0
        %v5141 = vadd.f32 %v4809, %v4999
        %v5142 = vadd.f32 %v4810, %v5002
        %v5143 = vadd.f32 %v4811, %v5007
        %v5144 = vadd.f32 %v4812, %v5010
        %v5145 = vadd.f32 %v4813, %v5015
        %v5146 = vadd.f32 %v4814, %v5018
        %v5147 = vadd.f32 %v4815, %v5023
        %v5148 = vadd.f32 %v4816, %v5026
        %v5149 = vadd.f32 %v4817, %v5031
        %v5150 = vadd.f32 %v4818, %v5034
        %v5151 = vadd.f32 %v4819, %v5039
        %v5152 = vadd.f32 %v4820, %v5042
        %v5153 = vadd.f32 %v4821, %v5047
        %v5154 = vadd.f32 %v4822, %v5050
        %v5155 = vadd.f32 %v4823, %v5055
        %v5156 = vadd.f32 %v4824, %v5058
        %v5157 = vadd.f32 %v4825, %v5063
        %v5158 = vadd.f32 %v4826, %v5066
        %v5159 = vadd.f32 %v4827, %v5071
        %v5160 = vadd.f32 %v4828, %v5074
        %v5161 = vadd.f32 %v4829, %v5079
        %v5162 = vadd.f32 %v4830, %v5082
        %v5163 = vadd.f32 %v4831, %v5087
        %v5164 = vadd.f32 %v4832, %v5090
        %v5165 = vadd.f32 %v4833, %v5095
        %v5166 = vadd.f32 %v4834, %v5098
        %v5167 = vadd.f32 %v4835, %v5103
        %v5168 = vadd.f32 %v4836, %v5106
        %v5169 = vadd.f32 %v4837, %v5111
        %v5170 = vadd.f32 %v4838, %v5114
        %v5171 = vadd.f32 %v4839, %v5119
        %v5172 = vadd.f32 %v4840, %v5122
        %v5173 = vadd.f32 %v4841, %v5127
        %v5174 = vadd.f32 %v4842, %v5130
        %v5175 = vadd.f32 %v4843, %v5135
        %v5176 = vadd.f32 %v4844, %v5138
        %v5177 = vld [vmem:[#allocation2 + $0x14] sm:$0xff]
        %v5178 = vld [vmem:[#allocation2 + $0x1c] sm:$0xff]
        %v5179 = vld [vmem:[#allocation2 + $0x24] sm:$0xff]
        %v5180 = vld [vmem:[#allocation2 + $0x2c] sm:$0xff]
        %v5181 = vld [vmem:[#allocation2 + $0x34] sm:$0xff]
        %v5182 = vld [vmem:[#allocation2 + $0x3c] sm:$0xff]
        %v5183 = vld [vmem:[#allocation2 + $0x44] sm:$0xff]
        %v5184 = vld [vmem:[#allocation2 + $0x4c] sm:$0xff]
        %v5185 = vld [vmem:[#allocation2 + $0x54] sm:$0xff]
        %v5186 = vld [vmem:[#allocation2 + $0x5c] sm:$0xff]
        %v5187 = vld [vmem:[#allocation2 + $0x64] sm:$0xff]
        %v5188 = vld [vmem:[#allocation2 + $0x6c] sm:$0xff]
        %v5189 = vld [vmem:[#allocation2 + $0x74] sm:$0xff]
        %v5190 = vld [vmem:[#allocation2 + $0x7c] sm:$0xff]
        %v5191 = vld [vmem:[#allocation2 + $0x84] sm:$0xff]
        %v5192 = vld [vmem:[#allocation2 + $0x8c] sm:$0xff]
        %v5193 = vld [vmem:[#allocation2 + $0x94] sm:$0xff]
        %v5194 = vld [vmem:[#allocation2 + $0x9c] sm:$0xff]
        %v5195 = vld [vmem:[#allocation2 + $0xa4] sm:$0xff]
        %v5196 = vld [vmem:[#allocation2 + $0xac] sm:$0xff]
        %v5197 = vld [vmem:[#allocation2 + $0xb4] sm:$0xff]
        %v5198 = vld [vmem:[#allocation2 + $0xbc] sm:$0xff]
        %v5199 = vld [vmem:[#allocation2 + $0xc4] sm:$0xff]
        %v5200 = vld [vmem:[#allocation2 + $0xcc] sm:$0xff]
        %v5201 = vld [vmem:[#allocation2 + $0xd4] sm:$0xff]
        %v5202 = vld [vmem:[#allocation2 + $0xdc] sm:$0xff]
        %v5203 = vld [vmem:[#allocation2 + $0xe4] sm:$0xff]
        %v5204 = vld [vmem:[#allocation2 + $0xec] sm:$0xff]
        %v5205 = vld [vmem:[#allocation2 + $0xf4] sm:$0xff]
        %v5206 = vld [vmem:[#allocation2 + $0xfc] sm:$0xff]
        %v5207 = vld [vmem:[#allocation2 + $0x104] sm:$0xff]
        %v5208 = vld [vmem:[#allocation2 + $0x10c] sm:$0xff]
        %v5209 = vld [vmem:[#allocation2 + $0x114] sm:$0xff]
        %v5210 = vld [vmem:[#allocation2 + $0x11c] sm:$0xff]
        %v5211 = vld [vmem:[#allocation2 + $0x124] sm:$0xff]
        %v5212 = vld [vmem:[#allocation2 + $0x12c] sm:$0xff]
        %v5213 = vpack.c.bf16 %v5178, %v5177
        %v5214 = vpack.c.bf16 %v5180, %v5179
        %v5215 = vpack.c.bf16 %v5182, %v5181
        %v5216 = vpack.c.bf16 %v5184, %v5183
        %v5217 = vpack.c.bf16 %v5186, %v5185
        %v5218 = vpack.c.bf16 %v5188, %v5187
        %v5219 = vpack.c.bf16 %v5190, %v5189
        %v5220 = vpack.c.bf16 %v5192, %v5191
        %v5221 = vpack.c.bf16 %v5194, %v5193
        %v5222 = vpack.c.bf16 %v5196, %v5195
        %v5223 = vpack.c.bf16 %v5198, %v5197
        %v5224 = vpack.c.bf16 %v5200, %v5199
        %v5225 = vpack.c.bf16 %v5202, %v5201
        %v5226 = vpack.c.bf16 %v5204, %v5203
        %v5227 = vpack.c.bf16 %v5206, %v5205
        %v5228 = vpack.c.bf16 %v5208, %v5207
        %v5229 = vpack.c.bf16 %v5210, %v5209
        %v5230 = vpack.c.bf16 %v5212, %v5211
        %s5231 = scalar_lea.vmem [#allocation8], 320
        %v5232 = vld [vmem:[%s5231] sm:$0xf]
        %v5233 = vld [vmem:[%s5231 + $0x4] sm:$0xf]
        %v5234 = vld [vmem:[%s5231 + $0x8] sm:$0xf]
        %v5235 = vld [vmem:[%s5231 + $0xc] sm:$0xf]
        %v5236 = vld [vmem:[%s5231 + $0x10] sm:$0xf]
        %v5237 = vld [vmem:[%s5231 + $0x14] sm:$0xf]
        %v5238 = vld [vmem:[%s5231 + $0x18] sm:$0xf]
        %v5239 = vld [vmem:[%s5231 + $0x1c] sm:$0xf]
        %v5240 = vld [vmem:[%s5231 + $0x20] sm:$0xf]
        %v5241 = vld [vmem:[%s5231 + $0x24] sm:$0xf]
        %v5242 = vld [vmem:[%s5231 + $0x28] sm:$0xf]
        %v5243 = vld [vmem:[%s5231 + $0x2c] sm:$0xf]
        %v5244 = vld [vmem:[%s5231 + $0x30] sm:$0xf]
        %v5245 = vld [vmem:[%s5231 + $0x34] sm:$0xf]
        %v5246 = vld [vmem:[%s5231 + $0x38] sm:$0xf]
        %v5247 = vld [vmem:[%s5231 + $0x3c] sm:$0xf]
        %v5264 = vunpack.c.l.b16 %v5232
        %v5265 = vunpack.c.l.b16 %v5233
        %v5266 = vunpack.c.l.b16 %v5234
        %v5267 = vunpack.c.l.b16 %v5235
        %v5268 = vunpack.c.l.b16 %v5236
        %v5269 = vunpack.c.l.b16 %v5237
        %v5270 = vunpack.c.l.b16 %v5238
        %v5271 = vunpack.c.l.b16 %v5239
        %v5272 = vunpack.c.l.b16 %v5240
        %v5273 = vunpack.c.l.b16 %v5241
        %v5274 = vunpack.c.l.b16 %v5242
        %v5275 = vunpack.c.l.b16 %v5243
        %v5276 = vunpack.c.l.b16 %v5244
        %v5277 = vunpack.c.l.b16 %v5245
        %v5278 = vunpack.c.l.b16 %v5246
        %v5279 = vunpack.c.l.b16 %v5247
        %v5280 = vpack.c.b16 %v5265, %v5264
        %v5281 = vpack.c.b16 %v5267, %v5266
        %v5282 = vpack.c.b16 %v5269, %v5268
        %v5283 = vpack.c.b16 %v5271, %v5270
        %v5284 = vpack.c.b16 %v5273, %v5272
        %v5285 = vpack.c.b16 %v5275, %v5274
        %v5286 = vpack.c.b16 %v5277, %v5276
        %v5287 = vpack.c.b16 %v5279, %v5278
        %5296 = vmatprep.subr.bf16.mxu0 0
        %5297 = vmatpush1.bf16.msra.mxu0 %v5287
        %5298 = vmatprep.subr.bf16.mxu0 0
        %5299 = vmatpush1.bf16.msra.mxu0 %v5286
        %5300 = vmatprep.subr.bf16.mxu0 0
        %5301 = vmatpush1.bf16.msra.mxu0 %v5285
        %5302 = vmatprep.subr.bf16.mxu0 0
        %5303 = vmatpush1.bf16.msra.mxu0 %v5284
        %5304 = vmatprep.subr.bf16.mxu0 0
        %5305 = vmatpush1.bf16.msra.mxu0 %v5283
        %5306 = vmatprep.subr.bf16.mxu0 0
        %5307 = vmatpush1.bf16.msra.mxu0 %v5282
        %5308 = vmatprep.subr.bf16.mxu0 0
        %5309 = vmatpush1.bf16.msra.mxu0 %v5281
        %5310 = vmatprep.subr.bf16.mxu0 0
        %5311 = vmatpush1.bf16.msra.mxu0 %v5280
        %5312 = vmatprep.subr.bf16.mxu0 0
        %5313 = vmatpush2.bf16.msra.mxu0 0
        %5314 = vmatprep.subr.bf16.mxu0 0
        %5315 = vmatpush2.bf16.msra.mxu0 0
        %5316 = vmatprep.subr.bf16.mxu0 0
        %5317 = vmatpush2.bf16.msra.mxu0 0
        %5318 = vmatprep.subr.bf16.mxu0 0
        %5319 = vmatpush2.bf16.msra.mxu0 0
        %5320 = vmatprep.subr.bf16.mxu0 0
        %5321 = vmatpush2.bf16.msra.mxu0 0
        %5322 = vmatprep.subr.bf16.mxu0 0
        %5323 = vmatpush2.bf16.msra.mxu0 0
        %5324 = vmatprep.subr.bf16.mxu0 0
        %5325 = vmatpush2.bf16.msra.mxu0 0
        %5326 = vmatprep.subr.bf16.mxu0 0
        %5327 = vmatpush2.bf16.msra.mxu0 0
        %5328 = vmatprep.mubr.bf16.mxu0 0
        %5329 = vmatmul.mubr.bf16.gmra.mxu0 %v5213
        %v5330 = vpop.f32.mrf.mxu0
        %v5331 = vadd.f32 0.0, %v5330
        %v5332 = vpop.f32.mrf.mxu0
        %v5333 = vpop.f32.mrf.mxu0
        %v5334 = vadd.f32 0.0, %v5333
        %v5335 = vpop.f32.mrf.mxu0
        %5336 = vmatprep.mubr.bf16.mxu0 0
        %5337 = vmatmul.mubr.bf16.gmra.mxu0 %v5214
        %v5338 = vpop.f32.mrf.mxu0
        %v5339 = vadd.f32 0.0, %v5338
        %v5340 = vpop.f32.mrf.mxu0
        %v5341 = vpop.f32.mrf.mxu0
        %v5342 = vadd.f32 0.0, %v5341
        %v5343 = vpop.f32.mrf.mxu0
        %5344 = vmatprep.mubr.bf16.mxu0 0
        %5345 = vmatmul.mubr.bf16.gmra.mxu0 %v5215
        %v5346 = vpop.f32.mrf.mxu0
        %v5347 = vadd.f32 0.0, %v5346
        %v5348 = vpop.f32.mrf.mxu0
        %v5349 = vpop.f32.mrf.mxu0
        %v5350 = vadd.f32 0.0, %v5349
        %v5351 = vpop.f32.mrf.mxu0
        %5352 = vmatprep.mubr.bf16.mxu0 0
        %5353 = vmatmul.mubr.bf16.gmra.mxu0 %v5216
        %v5354 = vpop.f32.mrf.mxu0
        %v5355 = vadd.f32 0.0, %v5354
        %v5356 = vpop.f32.mrf.mxu0
        %v5357 = vpop.f32.mrf.mxu0
        %v5358 = vadd.f32 0.0, %v5357
        %v5359 = vpop.f32.mrf.mxu0
        %5360 = vmatprep.mubr.bf16.mxu0 0
        %5361 = vmatmul.mubr.bf16.gmra.mxu0 %v5217
        %v5362 = vpop.f32.mrf.mxu0
        %v5363 = vadd.f32 0.0, %v5362
        %v5364 = vpop.f32.mrf.mxu0
        %v5365 = vpop.f32.mrf.mxu0
        %v5366 = vadd.f32 0.0, %v5365
        %v5367 = vpop.f32.mrf.mxu0
        %5368 = vmatprep.mubr.bf16.mxu0 0
        %5369 = vmatmul.mubr.bf16.gmra.mxu0 %v5218
        %v5370 = vpop.f32.mrf.mxu0
        %v5371 = vadd.f32 0.0, %v5370
        %v5372 = vpop.f32.mrf.mxu0
        %v5373 = vpop.f32.mrf.mxu0
        %v5374 = vadd.f32 0.0, %v5373
        %v5375 = vpop.f32.mrf.mxu0
        %5376 = vmatprep.mubr.bf16.mxu0 0
        %5377 = vmatmul.mubr.bf16.gmra.mxu0 %v5219
        %v5378 = vpop.f32.mrf.mxu0
        %v5379 = vadd.f32 0.0, %v5378
        %v5380 = vpop.f32.mrf.mxu0
        %v5381 = vpop.f32.mrf.mxu0
        %v5382 = vadd.f32 0.0, %v5381
        %v5383 = vpop.f32.mrf.mxu0
        %5384 = vmatprep.mubr.bf16.mxu0 0
        %5385 = vmatmul.mubr.bf16.gmra.mxu0 %v5220
        %v5386 = vpop.f32.mrf.mxu0
        %v5387 = vadd.f32 0.0, %v5386
        %v5388 = vpop.f32.mrf.mxu0
        %v5389 = vpop.f32.mrf.mxu0
        %v5390 = vadd.f32 0.0, %v5389
        %v5391 = vpop.f32.mrf.mxu0
        %5392 = vmatprep.mubr.bf16.mxu0 0
        %5393 = vmatmul.mubr.bf16.gmra.mxu0 %v5221
        %v5394 = vpop.f32.mrf.mxu0
        %v5395 = vadd.f32 0.0, %v5394
        %v5396 = vpop.f32.mrf.mxu0
        %v5397 = vpop.f32.mrf.mxu0
        %v5398 = vadd.f32 0.0, %v5397
        %v5399 = vpop.f32.mrf.mxu0
        %5400 = vmatprep.mubr.bf16.mxu0 0
        %5401 = vmatmul.mubr.bf16.gmra.mxu0 %v5222
        %v5402 = vpop.f32.mrf.mxu0
        %v5403 = vadd.f32 0.0, %v5402
        %v5404 = vpop.f32.mrf.mxu0
        %v5405 = vpop.f32.mrf.mxu0
        %v5406 = vadd.f32 0.0, %v5405
        %v5407 = vpop.f32.mrf.mxu0
        %5408 = vmatprep.mubr.bf16.mxu0 0
        %5409 = vmatmul.mubr.bf16.gmra.mxu0 %v5223
        %v5410 = vpop.f32.mrf.mxu0
        %v5411 = vadd.f32 0.0, %v5410
        %v5412 = vpop.f32.mrf.mxu0
        %v5413 = vpop.f32.mrf.mxu0
        %v5414 = vadd.f32 0.0, %v5413
        %v5415 = vpop.f32.mrf.mxu0
        %5416 = vmatprep.mubr.bf16.mxu0 0
        %5417 = vmatmul.mubr.bf16.gmra.mxu0 %v5224
        %v5418 = vpop.f32.mrf.mxu0
        %v5419 = vadd.f32 0.0, %v5418
        %v5420 = vpop.f32.mrf.mxu0
        %v5421 = vpop.f32.mrf.mxu0
        %v5422 = vadd.f32 0.0, %v5421
        %v5423 = vpop.f32.mrf.mxu0
        %5424 = vmatprep.mubr.bf16.mxu0 0
        %5425 = vmatmul.mubr.bf16.gmra.mxu0 %v5225
        %v5426 = vpop.f32.mrf.mxu0
        %v5427 = vadd.f32 0.0, %v5426
        %v5428 = vpop.f32.mrf.mxu0
        %v5429 = vpop.f32.mrf.mxu0
        %v5430 = vadd.f32 0.0, %v5429
        %v5431 = vpop.f32.mrf.mxu0
        %5432 = vmatprep.mubr.bf16.mxu0 0
        %5433 = vmatmul.mubr.bf16.gmra.mxu0 %v5226
        %v5434 = vpop.f32.mrf.mxu0
        %v5435 = vadd.f32 0.0, %v5434
        %v5436 = vpop.f32.mrf.mxu0
        %v5437 = vpop.f32.mrf.mxu0
        %v5438 = vadd.f32 0.0, %v5437
        %v5439 = vpop.f32.mrf.mxu0
        %5440 = vmatprep.mubr.bf16.mxu0 0
        %5441 = vmatmul.mubr.bf16.gmra.mxu0 %v5227
        %v5442 = vpop.f32.mrf.mxu0
        %v5443 = vadd.f32 0.0, %v5442
        %v5444 = vpop.f32.mrf.mxu0
        %v5445 = vpop.f32.mrf.mxu0
        %v5446 = vadd.f32 0.0, %v5445
        %v5447 = vpop.f32.mrf.mxu0
        %5448 = vmatprep.mubr.bf16.mxu0 0
        %5449 = vmatmul.mubr.bf16.gmra.mxu0 %v5228
        %v5450 = vpop.f32.mrf.mxu0
        %v5451 = vadd.f32 0.0, %v5450
        %v5452 = vpop.f32.mrf.mxu0
        %v5453 = vpop.f32.mrf.mxu0
        %v5454 = vadd.f32 0.0, %v5453
        %v5455 = vpop.f32.mrf.mxu0
        %5456 = vmatprep.mubr.bf16.mxu0 0
        %5457 = vmatmul.mubr.bf16.gmra.mxu0 %v5229
        %v5458 = vpop.f32.mrf.mxu0
        %v5459 = vadd.f32 0.0, %v5458
        %v5460 = vpop.f32.mrf.mxu0
        %v5461 = vpop.f32.mrf.mxu0
        %v5462 = vadd.f32 0.0, %v5461
        %v5463 = vpop.f32.mrf.mxu0
        %5464 = vmatprep.mubr.bf16.mxu0 0
        %5465 = vmatmul.mubr.bf16.gmra.mxu0 %v5230
        %v5466 = vpop.f32.mrf.mxu0
        %v5467 = vadd.f32 0.0, %v5466
        %v5468 = vpop.f32.mrf.mxu0
        %v5469 = vpop.f32.mrf.mxu0
        %v5470 = vadd.f32 0.0, %v5469
        %v5471 = vpop.f32.mrf.mxu0
        %5472 = vdwg.mxu0
        %v5473 = vadd.f32 %v5141, %v5331
        %v5474 = vadd.f32 %v5142, %v5334
        %v5475 = vadd.f32 %v5143, %v5339
        %v5476 = vadd.f32 %v5144, %v5342
        %v5477 = vadd.f32 %v5145, %v5347
        %v5478 = vadd.f32 %v5146, %v5350
        %v5479 = vadd.f32 %v5147, %v5355
        %v5480 = vadd.f32 %v5148, %v5358
        %v5481 = vadd.f32 %v5149, %v5363
        %v5482 = vadd.f32 %v5150, %v5366
        %v5483 = vadd.f32 %v5151, %v5371
        %v5484 = vadd.f32 %v5152, %v5374
        %v5485 = vadd.f32 %v5153, %v5379
        %v5486 = vadd.f32 %v5154, %v5382
        %v5487 = vadd.f32 %v5155, %v5387
        %v5488 = vadd.f32 %v5156, %v5390
        %v5489 = vadd.f32 %v5157, %v5395
        %v5490 = vadd.f32 %v5158, %v5398
        %v5491 = vadd.f32 %v5159, %v5403
        %v5492 = vadd.f32 %v5160, %v5406
        %v5493 = vadd.f32 %v5161, %v5411
        %v5494 = vadd.f32 %v5162, %v5414
        %v5495 = vadd.f32 %v5163, %v5419
        %v5496 = vadd.f32 %v5164, %v5422
        %v5497 = vadd.f32 %v5165, %v5427
        %v5498 = vadd.f32 %v5166, %v5430
        %v5499 = vadd.f32 %v5167, %v5435
        %v5500 = vadd.f32 %v5168, %v5438
        %v5501 = vadd.f32 %v5169, %v5443
        %v5502 = vadd.f32 %v5170, %v5446
        %v5503 = vadd.f32 %v5171, %v5451
        %v5504 = vadd.f32 %v5172, %v5454
        %v5505 = vadd.f32 %v5173, %v5459
        %v5506 = vadd.f32 %v5174, %v5462
        %v5507 = vadd.f32 %v5175, %v5467
        %v5508 = vadd.f32 %v5176, %v5470
        %v5509 = vld [vmem:[#allocation2 + $0x24] sm:$0xff]
        %v5510 = vld [vmem:[#allocation2 + $0x2c] sm:$0xff]
        %v5511 = vld [vmem:[#allocation2 + $0x34] sm:$0xff]
        %v5512 = vld [vmem:[#allocation2 + $0x3c] sm:$0xff]
        %v5513 = vld [vmem:[#allocation2 + $0x44] sm:$0xff]
        %v5514 = vld [vmem:[#allocation2 + $0x4c] sm:$0xff]
        %v5515 = vld [vmem:[#allocation2 + $0x54] sm:$0xff]
        %v5516 = vld [vmem:[#allocation2 + $0x5c] sm:$0xff]
        %v5517 = vld [vmem:[#allocation2 + $0x64] sm:$0xff]
        %v5518 = vld [vmem:[#allocation2 + $0x6c] sm:$0xff]
        %v5519 = vld [vmem:[#allocation2 + $0x74] sm:$0xff]
        %v5520 = vld [vmem:[#allocation2 + $0x7c] sm:$0xff]
        %v5521 = vld [vmem:[#allocation2 + $0x84] sm:$0xff]
        %v5522 = vld [vmem:[#allocation2 + $0x8c] sm:$0xff]
        %v5523 = vld [vmem:[#allocation2 + $0x94] sm:$0xff]
        %v5524 = vld [vmem:[#allocation2 + $0x9c] sm:$0xff]
        %v5525 = vld [vmem:[#allocation2 + $0xa4] sm:$0xff]
        %v5526 = vld [vmem:[#allocation2 + $0xac] sm:$0xff]
        %v5527 = vld [vmem:[#allocation2 + $0xb4] sm:$0xff]
        %v5528 = vld [vmem:[#allocation2 + $0xbc] sm:$0xff]
        %v5529 = vld [vmem:[#allocation2 + $0xc4] sm:$0xff]
        %v5530 = vld [vmem:[#allocation2 + $0xcc] sm:$0xff]
        %v5531 = vld [vmem:[#allocation2 + $0xd4] sm:$0xff]
        %v5532 = vld [vmem:[#allocation2 + $0xdc] sm:$0xff]
        %v5533 = vld [vmem:[#allocation2 + $0xe4] sm:$0xff]
        %v5534 = vld [vmem:[#allocation2 + $0xec] sm:$0xff]
        %v5535 = vld [vmem:[#allocation2 + $0xf4] sm:$0xff]
        %v5536 = vld [vmem:[#allocation2 + $0xfc] sm:$0xff]
        %v5537 = vld [vmem:[#allocation2 + $0x104] sm:$0xff]
        %v5538 = vld [vmem:[#allocation2 + $0x10c] sm:$0xff]
        %v5539 = vld [vmem:[#allocation2 + $0x114] sm:$0xff]
        %v5540 = vld [vmem:[#allocation2 + $0x11c] sm:$0xff]
        %v5541 = vld [vmem:[#allocation2 + $0x124] sm:$0xff]
        %v5542 = vld [vmem:[#allocation2 + $0x12c] sm:$0xff]
        %v5543 = vld [vmem:[#allocation2 + $0x134] sm:$0xff]
        %v5544 = vld [vmem:[#allocation2 + $0x13c] sm:$0xff]
        %v5545 = vpack.c.bf16 %v5510, %v5509
        %v5546 = vpack.c.bf16 %v5512, %v5511
        %v5547 = vpack.c.bf16 %v5514, %v5513
        %v5548 = vpack.c.bf16 %v5516, %v5515
        %v5549 = vpack.c.bf16 %v5518, %v5517
        %v5550 = vpack.c.bf16 %v5520, %v5519
        %v5551 = vpack.c.bf16 %v5522, %v5521
        %v5552 = vpack.c.bf16 %v5524, %v5523
        %v5553 = vpack.c.bf16 %v5526, %v5525
        %v5554 = vpack.c.bf16 %v5528, %v5527
        %v5555 = vpack.c.bf16 %v5530, %v5529
        %v5556 = vpack.c.bf16 %v5532, %v5531
        %v5557 = vpack.c.bf16 %v5534, %v5533
        %v5558 = vpack.c.bf16 %v5536, %v5535
        %v5559 = vpack.c.bf16 %v5538, %v5537
        %v5560 = vpack.c.bf16 %v5540, %v5539
        %v5561 = vpack.c.bf16 %v5542, %v5541
        %v5562 = vpack.c.bf16 %v5544, %v5543
        %s5563 = scalar_lea.vmem [#allocation8], 384
        %v5564 = vld [vmem:[%s5563] sm:$0xf]
        %v5565 = vld [vmem:[%s5563 + $0x4] sm:$0xf]
        %v5566 = vld [vmem:[%s5563 + $0x8] sm:$0xf]
        %v5567 = vld [vmem:[%s5563 + $0xc] sm:$0xf]
        %v5568 = vld [vmem:[%s5563 + $0x10] sm:$0xf]
        %v5569 = vld [vmem:[%s5563 + $0x14] sm:$0xf]
        %v5570 = vld [vmem:[%s5563 + $0x18] sm:$0xf]
        %v5571 = vld [vmem:[%s5563 + $0x1c] sm:$0xf]
        %v5572 = vld [vmem:[%s5563 + $0x20] sm:$0xf]
        %v5573 = vld [vmem:[%s5563 + $0x24] sm:$0xf]
        %v5574 = vld [vmem:[%s5563 + $0x28] sm:$0xf]
        %v5575 = vld [vmem:[%s5563 + $0x2c] sm:$0xf]
        %v5576 = vld [vmem:[%s5563 + $0x30] sm:$0xf]
        %v5577 = vld [vmem:[%s5563 + $0x34] sm:$0xf]
        %v5578 = vld [vmem:[%s5563 + $0x38] sm:$0xf]
        %v5579 = vld [vmem:[%s5563 + $0x3c] sm:$0xf]
        %v5596 = vunpack.c.l.b16 %v5564
        %v5597 = vunpack.c.l.b16 %v5565
        %v5598 = vunpack.c.l.b16 %v5566
        %v5599 = vunpack.c.l.b16 %v5567
        %v5600 = vunpack.c.l.b16 %v5568
        %v5601 = vunpack.c.l.b16 %v5569
        %v5602 = vunpack.c.l.b16 %v5570
        %v5603 = vunpack.c.l.b16 %v5571
        %v5604 = vunpack.c.l.b16 %v5572
        %v5605 = vunpack.c.l.b16 %v5573
        %v5606 = vunpack.c.l.b16 %v5574
        %v5607 = vunpack.c.l.b16 %v5575
        %v5608 = vunpack.c.l.b16 %v5576
        %v5609 = vunpack.c.l.b16 %v5577
        %v5610 = vunpack.c.l.b16 %v5578
        %v5611 = vunpack.c.l.b16 %v5579
        %v5612 = vpack.c.b16 %v5597, %v5596
        %v5613 = vpack.c.b16 %v5599, %v5598
        %v5614 = vpack.c.b16 %v5601, %v5600
        %v5615 = vpack.c.b16 %v5603, %v5602
        %v5616 = vpack.c.b16 %v5605, %v5604
        %v5617 = vpack.c.b16 %v5607, %v5606
        %v5618 = vpack.c.b16 %v5609, %v5608
        %v5619 = vpack.c.b16 %v5611, %v5610
        %5628 = vmatprep.subr.bf16.mxu0 0
        %5629 = vmatpush1.bf16.msra.mxu0 %v5619
        %5630 = vmatprep.subr.bf16.mxu0 0
        %5631 = vmatpush1.bf16.msra.mxu0 %v5618
        %5632 = vmatprep.subr.bf16.mxu0 0
        %5633 = vmatpush1.bf16.msra.mxu0 %v5617
        %5634 = vmatprep.subr.bf16.mxu0 0
        %5635 = vmatpush1.bf16.msra.mxu0 %v5616
        %5636 = vmatprep.subr.bf16.mxu0 0
        %5637 = vmatpush1.bf16.msra.mxu0 %v5615
        %5638 = vmatprep.subr.bf16.mxu0 0
        %5639 = vmatpush1.bf16.msra.mxu0 %v5614
        %5640 = vmatprep.subr.bf16.mxu0 0
        %5641 = vmatpush1.bf16.msra.mxu0 %v5613
        %5642 = vmatprep.subr.bf16.mxu0 0
        %5643 = vmatpush1.bf16.msra.mxu0 %v5612
        %5644 = vmatprep.subr.bf16.mxu0 0
        %5645 = vmatpush2.bf16.msra.mxu0 0
        %5646 = vmatprep.subr.bf16.mxu0 0
        %5647 = vmatpush2.bf16.msra.mxu0 0
        %5648 = vmatprep.subr.bf16.mxu0 0
        %5649 = vmatpush2.bf16.msra.mxu0 0
        %5650 = vmatprep.subr.bf16.mxu0 0
        %5651 = vmatpush2.bf16.msra.mxu0 0
        %5652 = vmatprep.subr.bf16.mxu0 0
        %5653 = vmatpush2.bf16.msra.mxu0 0
        %5654 = vmatprep.subr.bf16.mxu0 0
        %5655 = vmatpush2.bf16.msra.mxu0 0
        %5656 = vmatprep.subr.bf16.mxu0 0
        %5657 = vmatpush2.bf16.msra.mxu0 0
        %5658 = vmatprep.subr.bf16.mxu0 0
        %5659 = vmatpush2.bf16.msra.mxu0 0
        %5660 = vmatprep.mubr.bf16.mxu0 0
        %5661 = vmatmul.mubr.bf16.gmra.mxu0 %v5545
        %v5662 = vpop.f32.mrf.mxu0
        %v5663 = vadd.f32 0.0, %v5662
        %v5664 = vpop.f32.mrf.mxu0
        %v5665 = vpop.f32.mrf.mxu0
        %v5666 = vadd.f32 0.0, %v5665
        %v5667 = vpop.f32.mrf.mxu0
        %5668 = vmatprep.mubr.bf16.mxu0 0
        %5669 = vmatmul.mubr.bf16.gmra.mxu0 %v5546
        %v5670 = vpop.f32.mrf.mxu0
        %v5671 = vadd.f32 0.0, %v5670
        %v5672 = vpop.f32.mrf.mxu0
        %v5673 = vpop.f32.mrf.mxu0
        %v5674 = vadd.f32 0.0, %v5673
        %v5675 = vpop.f32.mrf.mxu0
        %5676 = vmatprep.mubr.bf16.mxu0 0
        %5677 = vmatmul.mubr.bf16.gmra.mxu0 %v5547
        %v5678 = vpop.f32.mrf.mxu0
        %v5679 = vadd.f32 0.0, %v5678
        %v5680 = vpop.f32.mrf.mxu0
        %v5681 = vpop.f32.mrf.mxu0
        %v5682 = vadd.f32 0.0, %v5681
        %v5683 = vpop.f32.mrf.mxu0
        %5684 = vmatprep.mubr.bf16.mxu0 0
        %5685 = vmatmul.mubr.bf16.gmra.mxu0 %v5548
        %v5686 = vpop.f32.mrf.mxu0
        %v5687 = vadd.f32 0.0, %v5686
        %v5688 = vpop.f32.mrf.mxu0
        %v5689 = vpop.f32.mrf.mxu0
        %v5690 = vadd.f32 0.0, %v5689
        %v5691 = vpop.f32.mrf.mxu0
        %5692 = vmatprep.mubr.bf16.mxu0 0
        %5693 = vmatmul.mubr.bf16.gmra.mxu0 %v5549
        %v5694 = vpop.f32.mrf.mxu0
        %v5695 = vadd.f32 0.0, %v5694
        %v5696 = vpop.f32.mrf.mxu0
        %v5697 = vpop.f32.mrf.mxu0
        %v5698 = vadd.f32 0.0, %v5697
        %v5699 = vpop.f32.mrf.mxu0
        %5700 = vmatprep.mubr.bf16.mxu0 0
        %5701 = vmatmul.mubr.bf16.gmra.mxu0 %v5550
        %v5702 = vpop.f32.mrf.mxu0
        %v5703 = vadd.f32 0.0, %v5702
        %v5704 = vpop.f32.mrf.mxu0
        %v5705 = vpop.f32.mrf.mxu0
        %v5706 = vadd.f32 0.0, %v5705
        %v5707 = vpop.f32.mrf.mxu0
        %5708 = vmatprep.mubr.bf16.mxu0 0
        %5709 = vmatmul.mubr.bf16.gmra.mxu0 %v5551
        %v5710 = vpop.f32.mrf.mxu0
        %v5711 = vadd.f32 0.0, %v5710
        %v5712 = vpop.f32.mrf.mxu0
        %v5713 = vpop.f32.mrf.mxu0
        %v5714 = vadd.f32 0.0, %v5713
        %v5715 = vpop.f32.mrf.mxu0
        %5716 = vmatprep.mubr.bf16.mxu0 0
        %5717 = vmatmul.mubr.bf16.gmra.mxu0 %v5552
        %v5718 = vpop.f32.mrf.mxu0
        %v5719 = vadd.f32 0.0, %v5718
        %v5720 = vpop.f32.mrf.mxu0
        %v5721 = vpop.f32.mrf.mxu0
        %v5722 = vadd.f32 0.0, %v5721
        %v5723 = vpop.f32.mrf.mxu0
        %5724 = vmatprep.mubr.bf16.mxu0 0
        %5725 = vmatmul.mubr.bf16.gmra.mxu0 %v5553
        %v5726 = vpop.f32.mrf.mxu0
        %v5727 = vadd.f32 0.0, %v5726
        %v5728 = vpop.f32.mrf.mxu0
        %v5729 = vpop.f32.mrf.mxu0
        %v5730 = vadd.f32 0.0, %v5729
        %v5731 = vpop.f32.mrf.mxu0
        %5732 = vmatprep.mubr.bf16.mxu0 0
        %5733 = vmatmul.mubr.bf16.gmra.mxu0 %v5554
        %v5734 = vpop.f32.mrf.mxu0
        %v5735 = vadd.f32 0.0, %v5734
        %v5736 = vpop.f32.mrf.mxu0
        %v5737 = vpop.f32.mrf.mxu0
        %v5738 = vadd.f32 0.0, %v5737
        %v5739 = vpop.f32.mrf.mxu0
        %5740 = vmatprep.mubr.bf16.mxu0 0
        %5741 = vmatmul.mubr.bf16.gmra.mxu0 %v5555
        %v5742 = vpop.f32.mrf.mxu0
        %v5743 = vadd.f32 0.0, %v5742
        %v5744 = vpop.f32.mrf.mxu0
        %v5745 = vpop.f32.mrf.mxu0
        %v5746 = vadd.f32 0.0, %v5745
        %v5747 = vpop.f32.mrf.mxu0
        %5748 = vmatprep.mubr.bf16.mxu0 0
        %5749 = vmatmul.mubr.bf16.gmra.mxu0 %v5556
        %v5750 = vpop.f32.mrf.mxu0
        %v5751 = vadd.f32 0.0, %v5750
        %v5752 = vpop.f32.mrf.mxu0
        %v5753 = vpop.f32.mrf.mxu0
        %v5754 = vadd.f32 0.0, %v5753
        %v5755 = vpop.f32.mrf.mxu0
        %5756 = vmatprep.mubr.bf16.mxu0 0
        %5757 = vmatmul.mubr.bf16.gmra.mxu0 %v5557
        %v5758 = vpop.f32.mrf.mxu0
        %v5759 = vadd.f32 0.0, %v5758
        %v5760 = vpop.f32.mrf.mxu0
        %v5761 = vpop.f32.mrf.mxu0
        %v5762 = vadd.f32 0.0, %v5761
        %v5763 = vpop.f32.mrf.mxu0
        %5764 = vmatprep.mubr.bf16.mxu0 0
        %5765 = vmatmul.mubr.bf16.gmra.mxu0 %v5558
        %v5766 = vpop.f32.mrf.mxu0
        %v5767 = vadd.f32 0.0, %v5766
        %v5768 = vpop.f32.mrf.mxu0
        %v5769 = vpop.f32.mrf.mxu0
        %v5770 = vadd.f32 0.0, %v5769
        %v5771 = vpop.f32.mrf.mxu0
        %5772 = vmatprep.mubr.bf16.mxu0 0
        %5773 = vmatmul.mubr.bf16.gmra.mxu0 %v5559
        %v5774 = vpop.f32.mrf.mxu0
        %v5775 = vadd.f32 0.0, %v5774
        %v5776 = vpop.f32.mrf.mxu0
        %v5777 = vpop.f32.mrf.mxu0
        %v5778 = vadd.f32 0.0, %v5777
        %v5779 = vpop.f32.mrf.mxu0
        %5780 = vmatprep.mubr.bf16.mxu0 0
        %5781 = vmatmul.mubr.bf16.gmra.mxu0 %v5560
        %v5782 = vpop.f32.mrf.mxu0
        %v5783 = vadd.f32 0.0, %v5782
        %v5784 = vpop.f32.mrf.mxu0
        %v5785 = vpop.f32.mrf.mxu0
        %v5786 = vadd.f32 0.0, %v5785
        %v5787 = vpop.f32.mrf.mxu0
        %5788 = vmatprep.mubr.bf16.mxu0 0
        %5789 = vmatmul.mubr.bf16.gmra.mxu0 %v5561
        %v5790 = vpop.f32.mrf.mxu0
        %v5791 = vadd.f32 0.0, %v5790
        %v5792 = vpop.f32.mrf.mxu0
        %v5793 = vpop.f32.mrf.mxu0
        %v5794 = vadd.f32 0.0, %v5793
        %v5795 = vpop.f32.mrf.mxu0
        %5796 = vmatprep.mubr.bf16.mxu0 0
        %5797 = vmatmul.mubr.bf16.gmra.mxu0 %v5562
        %v5798 = vpop.f32.mrf.mxu0
        %v5799 = vadd.f32 0.0, %v5798
        %v5800 = vpop.f32.mrf.mxu0
        %v5801 = vpop.f32.mrf.mxu0
        %v5802 = vadd.f32 0.0, %v5801
        %v5803 = vpop.f32.mrf.mxu0
        %5804 = vdwg.mxu0
        %v5805 = vadd.f32 %v5473, %v5663
        %v5806 = vadd.f32 %v5474, %v5666
        %v5807 = vadd.f32 %v5475, %v5671
        %v5808 = vadd.f32 %v5476, %v5674
        %v5809 = vadd.f32 %v5477, %v5679
        %v5810 = vadd.f32 %v5478, %v5682
        %v5811 = vadd.f32 %v5479, %v5687
        %v5812 = vadd.f32 %v5480, %v5690
        %v5813 = vadd.f32 %v5481, %v5695
        %v5814 = vadd.f32 %v5482, %v5698
        %v5815 = vadd.f32 %v5483, %v5703
        %v5816 = vadd.f32 %v5484, %v5706
        %v5817 = vadd.f32 %v5485, %v5711
        %v5818 = vadd.f32 %v5486, %v5714
        %v5819 = vadd.f32 %v5487, %v5719
        %v5820 = vadd.f32 %v5488, %v5722
        %v5821 = vadd.f32 %v5489, %v5727
        %v5822 = vadd.f32 %v5490, %v5730
        %v5823 = vadd.f32 %v5491, %v5735
        %v5824 = vadd.f32 %v5492, %v5738
        %v5825 = vadd.f32 %v5493, %v5743
        %v5826 = vadd.f32 %v5494, %v5746
        %v5827 = vadd.f32 %v5495, %v5751
        %v5828 = vadd.f32 %v5496, %v5754
        %v5829 = vadd.f32 %v5497, %v5759
        %v5830 = vadd.f32 %v5498, %v5762
        %v5831 = vadd.f32 %v5499, %v5767
        %v5832 = vadd.f32 %v5500, %v5770
        %v5833 = vadd.f32 %v5501, %v5775
        %v5834 = vadd.f32 %v5502, %v5778
        %v5835 = vadd.f32 %v5503, %v5783
        %v5836 = vadd.f32 %v5504, %v5786
        %v5837 = vadd.f32 %v5505, %v5791
        %v5838 = vadd.f32 %v5506, %v5794
        %v5839 = vadd.f32 %v5507, %v5799
        %v5840 = vadd.f32 %v5508, %v5802
        %v5841 = vld [vmem:[#allocation2 + $0x25] sm:$0xff]
        %v5842 = vld [vmem:[#allocation2 + $0x2d] sm:$0xff]
        %v5843 = vld [vmem:[#allocation2 + $0x35] sm:$0xff]
        %v5844 = vld [vmem:[#allocation2 + $0x3d] sm:$0xff]
        %v5845 = vld [vmem:[#allocation2 + $0x45] sm:$0xff]
        %v5846 = vld [vmem:[#allocation2 + $0x4d] sm:$0xff]
        %v5847 = vld [vmem:[#allocation2 + $0x55] sm:$0xff]
        %v5848 = vld [vmem:[#allocation2 + $0x5d] sm:$0xff]
        %v5849 = vld [vmem:[#allocation2 + $0x65] sm:$0xff]
        %v5850 = vld [vmem:[#allocation2 + $0x6d] sm:$0xff]
        %v5851 = vld [vmem:[#allocation2 + $0x75] sm:$0xff]
        %v5852 = vld [vmem:[#allocation2 + $0x7d] sm:$0xff]
        %v5853 = vld [vmem:[#allocation2 + $0x85] sm:$0xff]
        %v5854 = vld [vmem:[#allocation2 + $0x8d] sm:$0xff]
        %v5855 = vld [vmem:[#allocation2 + $0x95] sm:$0xff]
        %v5856 = vld [vmem:[#allocation2 + $0x9d] sm:$0xff]
        %v5857 = vld [vmem:[#allocation2 + $0xa5] sm:$0xff]
        %v5858 = vld [vmem:[#allocation2 + $0xad] sm:$0xff]
        %v5859 = vld [vmem:[#allocation2 + $0xb5] sm:$0xff]
        %v5860 = vld [vmem:[#allocation2 + $0xbd] sm:$0xff]
        %v5861 = vld [vmem:[#allocation2 + $0xc5] sm:$0xff]
        %v5862 = vld [vmem:[#allocation2 + $0xcd] sm:$0xff]
        %v5863 = vld [vmem:[#allocation2 + $0xd5] sm:$0xff]
        %v5864 = vld [vmem:[#allocation2 + $0xdd] sm:$0xff]
        %v5865 = vld [vmem:[#allocation2 + $0xe5] sm:$0xff]
        %v5866 = vld [vmem:[#allocation2 + $0xed] sm:$0xff]
        %v5867 = vld [vmem:[#allocation2 + $0xf5] sm:$0xff]
        %v5868 = vld [vmem:[#allocation2 + $0xfd] sm:$0xff]
        %v5869 = vld [vmem:[#allocation2 + $0x105] sm:$0xff]
        %v5870 = vld [vmem:[#allocation2 + $0x10d] sm:$0xff]
        %v5871 = vld [vmem:[#allocation2 + $0x115] sm:$0xff]
        %v5872 = vld [vmem:[#allocation2 + $0x11d] sm:$0xff]
        %v5873 = vld [vmem:[#allocation2 + $0x125] sm:$0xff]
        %v5874 = vld [vmem:[#allocation2 + $0x12d] sm:$0xff]
        %v5875 = vld [vmem:[#allocation2 + $0x135] sm:$0xff]
        %v5876 = vld [vmem:[#allocation2 + $0x13d] sm:$0xff]
        %v5877 = vpack.c.bf16 %v5842, %v5841
        %v5878 = vpack.c.bf16 %v5844, %v5843
        %v5879 = vpack.c.bf16 %v5846, %v5845
        %v5880 = vpack.c.bf16 %v5848, %v5847
        %v5881 = vpack.c.bf16 %v5850, %v5849
        %v5882 = vpack.c.bf16 %v5852, %v5851
        %v5883 = vpack.c.bf16 %v5854, %v5853
        %v5884 = vpack.c.bf16 %v5856, %v5855
        %v5885 = vpack.c.bf16 %v5858, %v5857
        %v5886 = vpack.c.bf16 %v5860, %v5859
        %v5887 = vpack.c.bf16 %v5862, %v5861
        %v5888 = vpack.c.bf16 %v5864, %v5863
        %v5889 = vpack.c.bf16 %v5866, %v5865
        %v5890 = vpack.c.bf16 %v5868, %v5867
        %v5891 = vpack.c.bf16 %v5870, %v5869
        %v5892 = vpack.c.bf16 %v5872, %v5871
        %v5893 = vpack.c.bf16 %v5874, %v5873
        %v5894 = vpack.c.bf16 %v5876, %v5875
        %s5895 = scalar_lea.vmem [#allocation8], 448
        %v5896 = vld [vmem:[%s5895] sm:$0xf]
        %v5897 = vld [vmem:[%s5895 + $0x4] sm:$0xf]
        %v5898 = vld [vmem:[%s5895 + $0x8] sm:$0xf]
        %v5899 = vld [vmem:[%s5895 + $0xc] sm:$0xf]
        %v5900 = vld [vmem:[%s5895 + $0x10] sm:$0xf]
        %v5901 = vld [vmem:[%s5895 + $0x14] sm:$0xf]
        %v5902 = vld [vmem:[%s5895 + $0x18] sm:$0xf]
        %v5903 = vld [vmem:[%s5895 + $0x1c] sm:$0xf]
        %v5904 = vld [vmem:[%s5895 + $0x20] sm:$0xf]
        %v5905 = vld [vmem:[%s5895 + $0x24] sm:$0xf]
        %v5906 = vld [vmem:[%s5895 + $0x28] sm:$0xf]
        %v5907 = vld [vmem:[%s5895 + $0x2c] sm:$0xf]
        %v5908 = vld [vmem:[%s5895 + $0x30] sm:$0xf]
        %v5909 = vld [vmem:[%s5895 + $0x34] sm:$0xf]
        %v5910 = vld [vmem:[%s5895 + $0x38] sm:$0xf]
        %v5911 = vld [vmem:[%s5895 + $0x3c] sm:$0xf]
        %v5928 = vunpack.c.l.b16 %v5896
        %v5929 = vunpack.c.l.b16 %v5897
        %v5930 = vunpack.c.l.b16 %v5898
        %v5931 = vunpack.c.l.b16 %v5899
        %v5932 = vunpack.c.l.b16 %v5900
        %v5933 = vunpack.c.l.b16 %v5901
        %v5934 = vunpack.c.l.b16 %v5902
        %v5935 = vunpack.c.l.b16 %v5903
        %v5936 = vunpack.c.l.b16 %v5904
        %v5937 = vunpack.c.l.b16 %v5905
        %v5938 = vunpack.c.l.b16 %v5906
        %v5939 = vunpack.c.l.b16 %v5907
        %v5940 = vunpack.c.l.b16 %v5908
        %v5941 = vunpack.c.l.b16 %v5909
        %v5942 = vunpack.c.l.b16 %v5910
        %v5943 = vunpack.c.l.b16 %v5911
        %v5944 = vpack.c.b16 %v5929, %v5928
        %v5945 = vpack.c.b16 %v5931, %v5930
        %v5946 = vpack.c.b16 %v5933, %v5932
        %v5947 = vpack.c.b16 %v5935, %v5934
        %v5948 = vpack.c.b16 %v5937, %v5936
        %v5949 = vpack.c.b16 %v5939, %v5938
        %v5950 = vpack.c.b16 %v5941, %v5940
        %v5951 = vpack.c.b16 %v5943, %v5942
        %5960 = vmatprep.subr.bf16.mxu0 0
        %5961 = vmatpush1.bf16.msra.mxu0 %v5951
        %5962 = vmatprep.subr.bf16.mxu0 0
        %5963 = vmatpush1.bf16.msra.mxu0 %v5950
        %5964 = vmatprep.subr.bf16.mxu0 0
        %5965 = vmatpush1.bf16.msra.mxu0 %v5949
        %5966 = vmatprep.subr.bf16.mxu0 0
        %5967 = vmatpush1.bf16.msra.mxu0 %v5948
        %5968 = vmatprep.subr.bf16.mxu0 0
        %5969 = vmatpush1.bf16.msra.mxu0 %v5947
        %5970 = vmatprep.subr.bf16.mxu0 0
        %5971 = vmatpush1.bf16.msra.mxu0 %v5946
        %5972 = vmatprep.subr.bf16.mxu0 0
        %5973 = vmatpush1.bf16.msra.mxu0 %v5945
        %5974 = vmatprep.subr.bf16.mxu0 0
        %5975 = vmatpush1.bf16.msra.mxu0 %v5944
        %5976 = vmatprep.subr.bf16.mxu0 0
        %5977 = vmatpush2.bf16.msra.mxu0 0
        %5978 = vmatprep.subr.bf16.mxu0 0
        %5979 = vmatpush2.bf16.msra.mxu0 0
        %5980 = vmatprep.subr.bf16.mxu0 0
        %5981 = vmatpush2.bf16.msra.mxu0 0
        %5982 = vmatprep.subr.bf16.mxu0 0
        %5983 = vmatpush2.bf16.msra.mxu0 0
        %5984 = vmatprep.subr.bf16.mxu0 0
        %5985 = vmatpush2.bf16.msra.mxu0 0
        %5986 = vmatprep.subr.bf16.mxu0 0
        %5987 = vmatpush2.bf16.msra.mxu0 0
        %5988 = vmatprep.subr.bf16.mxu0 0
        %5989 = vmatpush2.bf16.msra.mxu0 0
        %5990 = vmatprep.subr.bf16.mxu0 0
        %5991 = vmatpush2.bf16.msra.mxu0 0
        %5992 = vmatprep.mubr.bf16.mxu0 0
        %5993 = vmatmul.mubr.bf16.gmra.mxu0 %v5877
        %v5994 = vpop.f32.mrf.mxu0
        %v5995 = vadd.f32 0.0, %v5994
        %v5996 = vpop.f32.mrf.mxu0
        %v5997 = vpop.f32.mrf.mxu0
        %v5998 = vadd.f32 0.0, %v5997
        %v5999 = vpop.f32.mrf.mxu0
        %6000 = vmatprep.mubr.bf16.mxu0 0
        %6001 = vmatmul.mubr.bf16.gmra.mxu0 %v5878
        %v6002 = vpop.f32.mrf.mxu0
        %v6003 = vadd.f32 0.0, %v6002
        %v6004 = vpop.f32.mrf.mxu0
        %v6005 = vpop.f32.mrf.mxu0
        %v6006 = vadd.f32 0.0, %v6005
        %v6007 = vpop.f32.mrf.mxu0
        %6008 = vmatprep.mubr.bf16.mxu0 0
        %6009 = vmatmul.mubr.bf16.gmra.mxu0 %v5879
        %v6010 = vpop.f32.mrf.mxu0
        %v6011 = vadd.f32 0.0, %v6010
        %v6012 = vpop.f32.mrf.mxu0
        %v6013 = vpop.f32.mrf.mxu0
        %v6014 = vadd.f32 0.0, %v6013
        %v6015 = vpop.f32.mrf.mxu0
        %6016 = vmatprep.mubr.bf16.mxu0 0
        %6017 = vmatmul.mubr.bf16.gmra.mxu0 %v5880
        %v6018 = vpop.f32.mrf.mxu0
        %v6019 = vadd.f32 0.0, %v6018
        %v6020 = vpop.f32.mrf.mxu0
        %v6021 = vpop.f32.mrf.mxu0
        %v6022 = vadd.f32 0.0, %v6021
        %v6023 = vpop.f32.mrf.mxu0
        %6024 = vmatprep.mubr.bf16.mxu0 0
        %6025 = vmatmul.mubr.bf16.gmra.mxu0 %v5881
        %v6026 = vpop.f32.mrf.mxu0
        %v6027 = vadd.f32 0.0, %v6026
        %v6028 = vpop.f32.mrf.mxu0
        %v6029 = vpop.f32.mrf.mxu0
        %v6030 = vadd.f32 0.0, %v6029
        %v6031 = vpop.f32.mrf.mxu0
        %6032 = vmatprep.mubr.bf16.mxu0 0
        %6033 = vmatmul.mubr.bf16.gmra.mxu0 %v5882
        %v6034 = vpop.f32.mrf.mxu0
        %v6035 = vadd.f32 0.0, %v6034
        %v6036 = vpop.f32.mrf.mxu0
        %v6037 = vpop.f32.mrf.mxu0
        %v6038 = vadd.f32 0.0, %v6037
        %v6039 = vpop.f32.mrf.mxu0
        %6040 = vmatprep.mubr.bf16.mxu0 0
        %6041 = vmatmul.mubr.bf16.gmra.mxu0 %v5883
        %v6042 = vpop.f32.mrf.mxu0
        %v6043 = vadd.f32 0.0, %v6042
        %v6044 = vpop.f32.mrf.mxu0
        %v6045 = vpop.f32.mrf.mxu0
        %v6046 = vadd.f32 0.0, %v6045
        %v6047 = vpop.f32.mrf.mxu0
        %6048 = vmatprep.mubr.bf16.mxu0 0
        %6049 = vmatmul.mubr.bf16.gmra.mxu0 %v5884
        %v6050 = vpop.f32.mrf.mxu0
        %v6051 = vadd.f32 0.0, %v6050
        %v6052 = vpop.f32.mrf.mxu0
        %v6053 = vpop.f32.mrf.mxu0
        %v6054 = vadd.f32 0.0, %v6053
        %v6055 = vpop.f32.mrf.mxu0
        %6056 = vmatprep.mubr.bf16.mxu0 0
        %6057 = vmatmul.mubr.bf16.gmra.mxu0 %v5885
        %v6058 = vpop.f32.mrf.mxu0
        %v6059 = vadd.f32 0.0, %v6058
        %v6060 = vpop.f32.mrf.mxu0
        %v6061 = vpop.f32.mrf.mxu0
        %v6062 = vadd.f32 0.0, %v6061
        %v6063 = vpop.f32.mrf.mxu0
        %6064 = vmatprep.mubr.bf16.mxu0 0
        %6065 = vmatmul.mubr.bf16.gmra.mxu0 %v5886
        %v6066 = vpop.f32.mrf.mxu0
        %v6067 = vadd.f32 0.0, %v6066
        %v6068 = vpop.f32.mrf.mxu0
        %v6069 = vpop.f32.mrf.mxu0
        %v6070 = vadd.f32 0.0, %v6069
        %v6071 = vpop.f32.mrf.mxu0
        %6072 = vmatprep.mubr.bf16.mxu0 0
        %6073 = vmatmul.mubr.bf16.gmra.mxu0 %v5887
        %v6074 = vpop.f32.mrf.mxu0
        %v6075 = vadd.f32 0.0, %v6074
        %v6076 = vpop.f32.mrf.mxu0
        %v6077 = vpop.f32.mrf.mxu0
        %v6078 = vadd.f32 0.0, %v6077
        %v6079 = vpop.f32.mrf.mxu0
        %6080 = vmatprep.mubr.bf16.mxu0 0
        %6081 = vmatmul.mubr.bf16.gmra.mxu0 %v5888
        %v6082 = vpop.f32.mrf.mxu0
        %v6083 = vadd.f32 0.0, %v6082
        %v6084 = vpop.f32.mrf.mxu0
        %v6085 = vpop.f32.mrf.mxu0
        %v6086 = vadd.f32 0.0, %v6085
        %v6087 = vpop.f32.mrf.mxu0
        %6088 = vmatprep.mubr.bf16.mxu0 0
        %6089 = vmatmul.mubr.bf16.gmra.mxu0 %v5889
        %v6090 = vpop.f32.mrf.mxu0
        %v6091 = vadd.f32 0.0, %v6090
        %v6092 = vpop.f32.mrf.mxu0
        %v6093 = vpop.f32.mrf.mxu0
        %v6094 = vadd.f32 0.0, %v6093
        %v6095 = vpop.f32.mrf.mxu0
        %6096 = vmatprep.mubr.bf16.mxu0 0
        %6097 = vmatmul.mubr.bf16.gmra.mxu0 %v5890
        %v6098 = vpop.f32.mrf.mxu0
        %v6099 = vadd.f32 0.0, %v6098
        %v6100 = vpop.f32.mrf.mxu0
        %v6101 = vpop.f32.mrf.mxu0
        %v6102 = vadd.f32 0.0, %v6101
        %v6103 = vpop.f32.mrf.mxu0
        %6104 = vmatprep.mubr.bf16.mxu0 0
        %6105 = vmatmul.mubr.bf16.gmra.mxu0 %v5891
        %v6106 = vpop.f32.mrf.mxu0
        %v6107 = vadd.f32 0.0, %v6106
        %v6108 = vpop.f32.mrf.mxu0
        %v6109 = vpop.f32.mrf.mxu0
        %v6110 = vadd.f32 0.0, %v6109
        %v6111 = vpop.f32.mrf.mxu0
        %6112 = vmatprep.mubr.bf16.mxu0 0
        %6113 = vmatmul.mubr.bf16.gmra.mxu0 %v5892
        %v6114 = vpop.f32.mrf.mxu0
        %v6115 = vadd.f32 0.0, %v6114
        %v6116 = vpop.f32.mrf.mxu0
        %v6117 = vpop.f32.mrf.mxu0
        %v6118 = vadd.f32 0.0, %v6117
        %v6119 = vpop.f32.mrf.mxu0
        %6120 = vmatprep.mubr.bf16.mxu0 0
        %6121 = vmatmul.mubr.bf16.gmra.mxu0 %v5893
        %v6122 = vpop.f32.mrf.mxu0
        %v6123 = vadd.f32 0.0, %v6122
        %v6124 = vpop.f32.mrf.mxu0
        %v6125 = vpop.f32.mrf.mxu0
        %v6126 = vadd.f32 0.0, %v6125
        %v6127 = vpop.f32.mrf.mxu0
        %6128 = vmatprep.mubr.bf16.mxu0 0
        %6129 = vmatmul.mubr.bf16.gmra.mxu0 %v5894
        %v6130 = vpop.f32.mrf.mxu0
        %v6131 = vadd.f32 0.0, %v6130
        %v6132 = vpop.f32.mrf.mxu0
        %v6133 = vpop.f32.mrf.mxu0
        %v6134 = vadd.f32 0.0, %v6133
        %v6135 = vpop.f32.mrf.mxu0
        %6136 = vdwg.mxu0
        %v6137 = vadd.f32 %v5805, %v5995
        %v6138 = vadd.f32 %v5806, %v5998
        %v6139 = vadd.f32 %v5807, %v6003
        %v6140 = vadd.f32 %v5808, %v6006
        %v6141 = vadd.f32 %v5809, %v6011
        %v6142 = vadd.f32 %v5810, %v6014
        %v6143 = vadd.f32 %v5811, %v6019
        %v6144 = vadd.f32 %v5812, %v6022
        %v6145 = vadd.f32 %v5813, %v6027
        %v6146 = vadd.f32 %v5814, %v6030
        %v6147 = vadd.f32 %v5815, %v6035
        %v6148 = vadd.f32 %v5816, %v6038
        %v6149 = vadd.f32 %v5817, %v6043
        %v6150 = vadd.f32 %v5818, %v6046
        %v6151 = vadd.f32 %v5819, %v6051
        %v6152 = vadd.f32 %v5820, %v6054
        %v6153 = vadd.f32 %v5821, %v6059
        %v6154 = vadd.f32 %v5822, %v6062
        %v6155 = vadd.f32 %v5823, %v6067
        %v6156 = vadd.f32 %v5824, %v6070
        %v6157 = vadd.f32 %v5825, %v6075
        %v6158 = vadd.f32 %v5826, %v6078
        %v6159 = vadd.f32 %v5827, %v6083
        %v6160 = vadd.f32 %v5828, %v6086
        %v6161 = vadd.f32 %v5829, %v6091
        %v6162 = vadd.f32 %v5830, %v6094
        %v6163 = vadd.f32 %v5831, %v6099
        %v6164 = vadd.f32 %v5832, %v6102
        %v6165 = vadd.f32 %v5833, %v6107
        %v6166 = vadd.f32 %v5834, %v6110
        %v6167 = vadd.f32 %v5835, %v6115
        %v6168 = vadd.f32 %v5836, %v6118
        %v6169 = vadd.f32 %v5837, %v6123
        %v6170 = vadd.f32 %v5838, %v6126
        %v6171 = vadd.f32 %v5839, %v6131
        %v6172 = vadd.f32 %v5840, %v6134
        %v6173 = vld [vmem:[#allocation2 + $0x26] sm:$0xff]
        %v6174 = vld [vmem:[#allocation2 + $0x2e] sm:$0xff]
        %v6175 = vld [vmem:[#allocation2 + $0x36] sm:$0xff]
        %v6176 = vld [vmem:[#allocation2 + $0x3e] sm:$0xff]
        %v6177 = vld [vmem:[#allocation2 + $0x46] sm:$0xff]
        %v6178 = vld [vmem:[#allocation2 + $0x4e] sm:$0xff]
        %v6179 = vld [vmem:[#allocation2 + $0x56] sm:$0xff]
        %v6180 = vld [vmem:[#allocation2 + $0x5e] sm:$0xff]
        %v6181 = vld [vmem:[#allocation2 + $0x66] sm:$0xff]
        %v6182 = vld [vmem:[#allocation2 + $0x6e] sm:$0xff]
        %v6183 = vld [vmem:[#allocation2 + $0x76] sm:$0xff]
        %v6184 = vld [vmem:[#allocation2 + $0x7e] sm:$0xff]
        %v6185 = vld [vmem:[#allocation2 + $0x86] sm:$0xff]
        %v6186 = vld [vmem:[#allocation2 + $0x8e] sm:$0xff]
        %v6187 = vld [vmem:[#allocation2 + $0x96] sm:$0xff]
        %v6188 = vld [vmem:[#allocation2 + $0x9e] sm:$0xff]
        %v6189 = vld [vmem:[#allocation2 + $0xa6] sm:$0xff]
        %v6190 = vld [vmem:[#allocation2 + $0xae] sm:$0xff]
        %v6191 = vld [vmem:[#allocation2 + $0xb6] sm:$0xff]
        %v6192 = vld [vmem:[#allocation2 + $0xbe] sm:$0xff]
        %v6193 = vld [vmem:[#allocation2 + $0xc6] sm:$0xff]
        %v6194 = vld [vmem:[#allocation2 + $0xce] sm:$0xff]
        %v6195 = vld [vmem:[#allocation2 + $0xd6] sm:$0xff]
        %v6196 = vld [vmem:[#allocation2 + $0xde] sm:$0xff]
        %v6197 = vld [vmem:[#allocation2 + $0xe6] sm:$0xff]
        %v6198 = vld [vmem:[#allocation2 + $0xee] sm:$0xff]
        %v6199 = vld [vmem:[#allocation2 + $0xf6] sm:$0xff]
        %v6200 = vld [vmem:[#allocation2 + $0xfe] sm:$0xff]
        %v6201 = vld [vmem:[#allocation2 + $0x106] sm:$0xff]
        %v6202 = vld [vmem:[#allocation2 + $0x10e] sm:$0xff]
        %v6203 = vld [vmem:[#allocation2 + $0x116] sm:$0xff]
        %v6204 = vld [vmem:[#allocation2 + $0x11e] sm:$0xff]
        %v6205 = vld [vmem:[#allocation2 + $0x126] sm:$0xff]
        %v6206 = vld [vmem:[#allocation2 + $0x12e] sm:$0xff]
        %v6207 = vld [vmem:[#allocation2 + $0x136] sm:$0xff]
        %v6208 = vld [vmem:[#allocation2 + $0x13e] sm:$0xff]
        %v6209 = vpack.c.bf16 %v6174, %v6173
        %v6210 = vpack.c.bf16 %v6176, %v6175
        %v6211 = vpack.c.bf16 %v6178, %v6177
        %v6212 = vpack.c.bf16 %v6180, %v6179
        %v6213 = vpack.c.bf16 %v6182, %v6181
        %v6214 = vpack.c.bf16 %v6184, %v6183
        %v6215 = vpack.c.bf16 %v6186, %v6185
        %v6216 = vpack.c.bf16 %v6188, %v6187
        %v6217 = vpack.c.bf16 %v6190, %v6189
        %v6218 = vpack.c.bf16 %v6192, %v6191
        %v6219 = vpack.c.bf16 %v6194, %v6193
        %v6220 = vpack.c.bf16 %v6196, %v6195
        %v6221 = vpack.c.bf16 %v6198, %v6197
        %v6222 = vpack.c.bf16 %v6200, %v6199
        %v6223 = vpack.c.bf16 %v6202, %v6201
        %v6224 = vpack.c.bf16 %v6204, %v6203
        %v6225 = vpack.c.bf16 %v6206, %v6205
        %v6226 = vpack.c.bf16 %v6208, %v6207
        %s6227 = scalar_lea.vmem [#allocation8], 512
        %v6228 = vld [vmem:[%s6227] sm:$0xf]
        %v6229 = vld [vmem:[%s6227 + $0x4] sm:$0xf]
        %v6230 = vld [vmem:[%s6227 + $0x8] sm:$0xf]
        %v6231 = vld [vmem:[%s6227 + $0xc] sm:$0xf]
        %v6232 = vld [vmem:[%s6227 + $0x10] sm:$0xf]
        %v6233 = vld [vmem:[%s6227 + $0x14] sm:$0xf]
        %v6234 = vld [vmem:[%s6227 + $0x18] sm:$0xf]
        %v6235 = vld [vmem:[%s6227 + $0x1c] sm:$0xf]
        %v6236 = vld [vmem:[%s6227 + $0x20] sm:$0xf]
        %v6237 = vld [vmem:[%s6227 + $0x24] sm:$0xf]
        %v6238 = vld [vmem:[%s6227 + $0x28] sm:$0xf]
        %v6239 = vld [vmem:[%s6227 + $0x2c] sm:$0xf]
        %v6240 = vld [vmem:[%s6227 + $0x30] sm:$0xf]
        %v6241 = vld [vmem:[%s6227 + $0x34] sm:$0xf]
        %v6242 = vld [vmem:[%s6227 + $0x38] sm:$0xf]
        %v6243 = vld [vmem:[%s6227 + $0x3c] sm:$0xf]
        %v6260 = vunpack.c.l.b16 %v6228
        %v6261 = vunpack.c.l.b16 %v6229
        %v6262 = vunpack.c.l.b16 %v6230
        %v6263 = vunpack.c.l.b16 %v6231
        %v6264 = vunpack.c.l.b16 %v6232
        %v6265 = vunpack.c.l.b16 %v6233
        %v6266 = vunpack.c.l.b16 %v6234
        %v6267 = vunpack.c.l.b16 %v6235
        %v6268 = vunpack.c.l.b16 %v6236
        %v6269 = vunpack.c.l.b16 %v6237
        %v6270 = vunpack.c.l.b16 %v6238
        %v6271 = vunpack.c.l.b16 %v6239
        %v6272 = vunpack.c.l.b16 %v6240
        %v6273 = vunpack.c.l.b16 %v6241
        %v6274 = vunpack.c.l.b16 %v6242
        %v6275 = vunpack.c.l.b16 %v6243
        %v6276 = vpack.c.b16 %v6261, %v6260
        %v6277 = vpack.c.b16 %v6263, %v6262
        %v6278 = vpack.c.b16 %v6265, %v6264
        %v6279 = vpack.c.b16 %v6267, %v6266
        %v6280 = vpack.c.b16 %v6269, %v6268
        %v6281 = vpack.c.b16 %v6271, %v6270
        %v6282 = vpack.c.b16 %v6273, %v6272
        %v6283 = vpack.c.b16 %v6275, %v6274
        %6292 = vmatprep.subr.bf16.mxu0 0
        %6293 = vmatpush1.bf16.msra.mxu0 %v6283
        %6294 = vmatprep.subr.bf16.mxu0 0
        %6295 = vmatpush1.bf16.msra.mxu0 %v6282
        %6296 = vmatprep.subr.bf16.mxu0 0
        %6297 = vmatpush1.bf16.msra.mxu0 %v6281
        %6298 = vmatprep.subr.bf16.mxu0 0
        %6299 = vmatpush1.bf16.msra.mxu0 %v6280
        %6300 = vmatprep.subr.bf16.mxu0 0
        %6301 = vmatpush1.bf16.msra.mxu0 %v6279
        %6302 = vmatprep.subr.bf16.mxu0 0
        %6303 = vmatpush1.bf16.msra.mxu0 %v6278
        %6304 = vmatprep.subr.bf16.mxu0 0
        %6305 = vmatpush1.bf16.msra.mxu0 %v6277
        %6306 = vmatprep.subr.bf16.mxu0 0
        %6307 = vmatpush1.bf16.msra.mxu0 %v6276
        %6308 = vmatprep.subr.bf16.mxu0 0
        %6309 = vmatpush2.bf16.msra.mxu0 0
        %6310 = vmatprep.subr.bf16.mxu0 0
        %6311 = vmatpush2.bf16.msra.mxu0 0
        %6312 = vmatprep.subr.bf16.mxu0 0
        %6313 = vmatpush2.bf16.msra.mxu0 0
        %6314 = vmatprep.subr.bf16.mxu0 0
        %6315 = vmatpush2.bf16.msra.mxu0 0
        %6316 = vmatprep.subr.bf16.mxu0 0
        %6317 = vmatpush2.bf16.msra.mxu0 0
        %6318 = vmatprep.subr.bf16.mxu0 0
        %6319 = vmatpush2.bf16.msra.mxu0 0
        %6320 = vmatprep.subr.bf16.mxu0 0
        %6321 = vmatpush2.bf16.msra.mxu0 0
        %6322 = vmatprep.subr.bf16.mxu0 0
        %6323 = vmatpush2.bf16.msra.mxu0 0
        %6324 = vmatprep.mubr.bf16.mxu0 0
        %6325 = vmatmul.mubr.bf16.gmra.mxu0 %v6209
        %v6326 = vpop.f32.mrf.mxu0
        %v6327 = vadd.f32 0.0, %v6326
        %v6328 = vpop.f32.mrf.mxu0
        %v6329 = vpop.f32.mrf.mxu0
        %v6330 = vadd.f32 0.0, %v6329
        %v6331 = vpop.f32.mrf.mxu0
        %6332 = vmatprep.mubr.bf16.mxu0 0
        %6333 = vmatmul.mubr.bf16.gmra.mxu0 %v6210
        %v6334 = vpop.f32.mrf.mxu0
        %v6335 = vadd.f32 0.0, %v6334
        %v6336 = vpop.f32.mrf.mxu0
        %v6337 = vpop.f32.mrf.mxu0
        %v6338 = vadd.f32 0.0, %v6337
        %v6339 = vpop.f32.mrf.mxu0
        %6340 = vmatprep.mubr.bf16.mxu0 0
        %6341 = vmatmul.mubr.bf16.gmra.mxu0 %v6211
        %v6342 = vpop.f32.mrf.mxu0
        %v6343 = vadd.f32 0.0, %v6342
        %v6344 = vpop.f32.mrf.mxu0
        %v6345 = vpop.f32.mrf.mxu0
        %v6346 = vadd.f32 0.0, %v6345
        %v6347 = vpop.f32.mrf.mxu0
        %6348 = vmatprep.mubr.bf16.mxu0 0
        %6349 = vmatmul.mubr.bf16.gmra.mxu0 %v6212
        %v6350 = vpop.f32.mrf.mxu0
        %v6351 = vadd.f32 0.0, %v6350
        %v6352 = vpop.f32.mrf.mxu0
        %v6353 = vpop.f32.mrf.mxu0
        %v6354 = vadd.f32 0.0, %v6353
        %v6355 = vpop.f32.mrf.mxu0
        %6356 = vmatprep.mubr.bf16.mxu0 0
        %6357 = vmatmul.mubr.bf16.gmra.mxu0 %v6213
        %v6358 = vpop.f32.mrf.mxu0
        %v6359 = vadd.f32 0.0, %v6358
        %v6360 = vpop.f32.mrf.mxu0
        %v6361 = vpop.f32.mrf.mxu0
        %v6362 = vadd.f32 0.0, %v6361
        %v6363 = vpop.f32.mrf.mxu0
        %6364 = vmatprep.mubr.bf16.mxu0 0
        %6365 = vmatmul.mubr.bf16.gmra.mxu0 %v6214
        %v6366 = vpop.f32.mrf.mxu0
        %v6367 = vadd.f32 0.0, %v6366
        %v6368 = vpop.f32.mrf.mxu0
        %v6369 = vpop.f32.mrf.mxu0
        %v6370 = vadd.f32 0.0, %v6369
        %v6371 = vpop.f32.mrf.mxu0
        %6372 = vmatprep.mubr.bf16.mxu0 0
        %6373 = vmatmul.mubr.bf16.gmra.mxu0 %v6215
        %v6374 = vpop.f32.mrf.mxu0
        %v6375 = vadd.f32 0.0, %v6374
        %v6376 = vpop.f32.mrf.mxu0
        %v6377 = vpop.f32.mrf.mxu0
        %v6378 = vadd.f32 0.0, %v6377
        %v6379 = vpop.f32.mrf.mxu0
        %6380 = vmatprep.mubr.bf16.mxu0 0
        %6381 = vmatmul.mubr.bf16.gmra.mxu0 %v6216
        %v6382 = vpop.f32.mrf.mxu0
        %v6383 = vadd.f32 0.0, %v6382
        %v6384 = vpop.f32.mrf.mxu0
        %v6385 = vpop.f32.mrf.mxu0
        %v6386 = vadd.f32 0.0, %v6385
        %v6387 = vpop.f32.mrf.mxu0
        %6388 = vmatprep.mubr.bf16.mxu0 0
        %6389 = vmatmul.mubr.bf16.gmra.mxu0 %v6217
        %v6390 = vpop.f32.mrf.mxu0
        %v6391 = vadd.f32 0.0, %v6390
        %v6392 = vpop.f32.mrf.mxu0
        %v6393 = vpop.f32.mrf.mxu0
        %v6394 = vadd.f32 0.0, %v6393
        %v6395 = vpop.f32.mrf.mxu0
        %6396 = vmatprep.mubr.bf16.mxu0 0
        %6397 = vmatmul.mubr.bf16.gmra.mxu0 %v6218
        %v6398 = vpop.f32.mrf.mxu0
        %v6399 = vadd.f32 0.0, %v6398
        %v6400 = vpop.f32.mrf.mxu0
        %v6401 = vpop.f32.mrf.mxu0
        %v6402 = vadd.f32 0.0, %v6401
        %v6403 = vpop.f32.mrf.mxu0
        %6404 = vmatprep.mubr.bf16.mxu0 0
        %6405 = vmatmul.mubr.bf16.gmra.mxu0 %v6219
        %v6406 = vpop.f32.mrf.mxu0
        %v6407 = vadd.f32 0.0, %v6406
        %v6408 = vpop.f32.mrf.mxu0
        %v6409 = vpop.f32.mrf.mxu0
        %v6410 = vadd.f32 0.0, %v6409
        %v6411 = vpop.f32.mrf.mxu0
        %6412 = vmatprep.mubr.bf16.mxu0 0
        %6413 = vmatmul.mubr.bf16.gmra.mxu0 %v6220
        %v6414 = vpop.f32.mrf.mxu0
        %v6415 = vadd.f32 0.0, %v6414
        %v6416 = vpop.f32.mrf.mxu0
        %v6417 = vpop.f32.mrf.mxu0
        %v6418 = vadd.f32 0.0, %v6417
        %v6419 = vpop.f32.mrf.mxu0
        %6420 = vmatprep.mubr.bf16.mxu0 0
        %6421 = vmatmul.mubr.bf16.gmra.mxu0 %v6221
        %v6422 = vpop.f32.mrf.mxu0
        %v6423 = vadd.f32 0.0, %v6422
        %v6424 = vpop.f32.mrf.mxu0
        %v6425 = vpop.f32.mrf.mxu0
        %v6426 = vadd.f32 0.0, %v6425
        %v6427 = vpop.f32.mrf.mxu0
        %6428 = vmatprep.mubr.bf16.mxu0 0
        %6429 = vmatmul.mubr.bf16.gmra.mxu0 %v6222
        %v6430 = vpop.f32.mrf.mxu0
        %v6431 = vadd.f32 0.0, %v6430
        %v6432 = vpop.f32.mrf.mxu0
        %v6433 = vpop.f32.mrf.mxu0
        %v6434 = vadd.f32 0.0, %v6433
        %v6435 = vpop.f32.mrf.mxu0
        %6436 = vmatprep.mubr.bf16.mxu0 0
        %6437 = vmatmul.mubr.bf16.gmra.mxu0 %v6223
        %v6438 = vpop.f32.mrf.mxu0
        %v6439 = vadd.f32 0.0, %v6438
        %v6440 = vpop.f32.mrf.mxu0
        %v6441 = vpop.f32.mrf.mxu0
        %v6442 = vadd.f32 0.0, %v6441
        %v6443 = vpop.f32.mrf.mxu0
        %6444 = vmatprep.mubr.bf16.mxu0 0
        %6445 = vmatmul.mubr.bf16.gmra.mxu0 %v6224
        %v6446 = vpop.f32.mrf.mxu0
        %v6447 = vadd.f32 0.0, %v6446
        %v6448 = vpop.f32.mrf.mxu0
        %v6449 = vpop.f32.mrf.mxu0
        %v6450 = vadd.f32 0.0, %v6449
        %v6451 = vpop.f32.mrf.mxu0
        %6452 = vmatprep.mubr.bf16.mxu0 0
        %6453 = vmatmul.mubr.bf16.gmra.mxu0 %v6225
        %v6454 = vpop.f32.mrf.mxu0
        %v6455 = vadd.f32 0.0, %v6454
        %v6456 = vpop.f32.mrf.mxu0
        %v6457 = vpop.f32.mrf.mxu0
        %v6458 = vadd.f32 0.0, %v6457
        %v6459 = vpop.f32.mrf.mxu0
        %6460 = vmatprep.mubr.bf16.mxu0 0
        %6461 = vmatmul.mubr.bf16.gmra.mxu0 %v6226
        %v6462 = vpop.f32.mrf.mxu0
        %v6463 = vadd.f32 0.0, %v6462
        %v6464 = vpop.f32.mrf.mxu0
        %v6465 = vpop.f32.mrf.mxu0
        %v6466 = vadd.f32 0.0, %v6465
        %v6467 = vpop.f32.mrf.mxu0
        %6468 = vdwg.mxu0
        %v6469 = vadd.f32 %v6137, %v6327
        %v6470 = vadd.f32 %v6138, %v6330
        %v6471 = vadd.f32 %v6139, %v6335
        %v6472 = vadd.f32 %v6140, %v6338
        %v6473 = vadd.f32 %v6141, %v6343
        %v6474 = vadd.f32 %v6142, %v6346
        %v6475 = vadd.f32 %v6143, %v6351
        %v6476 = vadd.f32 %v6144, %v6354
        %v6477 = vadd.f32 %v6145, %v6359
        %v6478 = vadd.f32 %v6146, %v6362
        %v6479 = vadd.f32 %v6147, %v6367
        %v6480 = vadd.f32 %v6148, %v6370
        %v6481 = vadd.f32 %v6149, %v6375
        %v6482 = vadd.f32 %v6150, %v6378
        %v6483 = vadd.f32 %v6151, %v6383
        %v6484 = vadd.f32 %v6152, %v6386
        %v6485 = vadd.f32 %v6153, %v6391
        %v6486 = vadd.f32 %v6154, %v6394
        %v6487 = vadd.f32 %v6155, %v6399
        %v6488 = vadd.f32 %v6156, %v6402
        %v6489 = vadd.f32 %v6157, %v6407
        %v6490 = vadd.f32 %v6158, %v6410
        %v6491 = vadd.f32 %v6159, %v6415
        %v6492 = vadd.f32 %v6160, %v6418
        %v6493 = vadd.f32 %v6161, %v6423
        %v6494 = vadd.f32 %v6162, %v6426
        %v6495 = vadd.f32 %v6163, %v6431
        %v6496 = vadd.f32 %v6164, %v6434
        %v6497 = vadd.f32 %v6165, %v6439
        %v6498 = vadd.f32 %v6166, %v6442
        %v6499 = vadd.f32 %v6167, %v6447
        %v6500 = vadd.f32 %v6168, %v6450
        %v6501 = vadd.f32 %v6169, %v6455
        %v6502 = vadd.f32 %v6170, %v6458
        %v6503 = vadd.f32 %v6171, %v6463
        %v6504 = vadd.f32 %v6172, %v6466
        %v6505 = vld [vmem:[%s262 + $0x13] sm:$0xff]
        %v6506 = vld [vmem:[%s262 + $0x1b] sm:$0xff]
        %v6507 = vld [vmem:[%s262 + $0x23] sm:$0xff]
        %v6508 = vld [vmem:[%s262 + $0x2b] sm:$0xff]
        %v6509 = vld [vmem:[%s262 + $0x33] sm:$0xff]
        %v6510 = vld [vmem:[%s262 + $0x3b] sm:$0xff]
        %v6511 = vld [vmem:[%s262 + $0x43] sm:$0xff]
        %v6512 = vld [vmem:[%s262 + $0x4b] sm:$0xff]
        %v6513 = vld [vmem:[%s262 + $0x53] sm:$0xff]
        %v6514 = vld [vmem:[%s262 + $0x5b] sm:$0xff]
        %v6515 = vld [vmem:[%s262 + $0x63] sm:$0xff]
        %v6516 = vld [vmem:[%s262 + $0x6b] sm:$0xff]
        %v6517 = vld [vmem:[%s262 + $0x73] sm:$0xff]
        %v6518 = vld [vmem:[%s262 + $0x7b] sm:$0xff]
        %v6519 = vld [vmem:[%s262 + $0x83] sm:$0xff]
        %v6520 = vld [vmem:[%s262 + $0x8b] sm:$0xff]
        %v6521 = vld [vmem:[%s262 + $0x93] sm:$0xff]
        %v6522 = vld [vmem:[%s262 + $0x9b] sm:$0xff]
        %v6523 = vld [vmem:[%s262 + $0xa3] sm:$0xff]
        %v6524 = vld [vmem:[%s262 + $0xab] sm:$0xff]
        %v6525 = vld [vmem:[%s262 + $0xb3] sm:$0xff]
        %v6526 = vld [vmem:[%s262 + $0xbb] sm:$0xff]
        %v6527 = vld [vmem:[%s262 + $0xc3] sm:$0xff]
        %v6528 = vld [vmem:[%s262 + $0xcb] sm:$0xff]
        %v6529 = vld [vmem:[%s262 + $0xd3] sm:$0xff]
        %v6530 = vld [vmem:[%s262 + $0xdb] sm:$0xff]
        %v6531 = vld [vmem:[%s262 + $0xe3] sm:$0xff]
        %v6532 = vld [vmem:[%s262 + $0xeb] sm:$0xff]
        %v6533 = vld [vmem:[%s262 + $0xf3] sm:$0xff]
        %v6534 = vld [vmem:[%s262 + $0xfb] sm:$0xff]
        %v6535 = vld [vmem:[%s262 + $0x103] sm:$0xff]
        %v6536 = vld [vmem:[%s262 + $0x10b] sm:$0xff]
        %v6537 = vld [vmem:[%s262 + $0x113] sm:$0xff]
        %v6538 = vld [vmem:[%s262 + $0x11b] sm:$0xff]
        %v6539 = vld [vmem:[%s262 + $0x123] sm:$0xff]
        %v6540 = vld [vmem:[%s262 + $0x12b] sm:$0xff]
        %v6541 = vld [vmem:[%s4] sm:$0x1]
        %v6543 = vlaneseq
        %v6544 = vshrl.u32 %v6543, 7
        %v6545 = vsub.s32 0, %v6544
        %v6546 = vrot.slane %v6541, %v6545
        %v6548 = vadd.f32 %v6469, %v6546
        %v6549 = vadd.f32 %v6470, %v6546
        %v6550 = vadd.f32 %v6471, %v6546
        %v6551 = vadd.f32 %v6472, %v6546
        %v6552 = vadd.f32 %v6473, %v6546
        %v6553 = vadd.f32 %v6474, %v6546
        %v6554 = vadd.f32 %v6475, %v6546
        %v6555 = vadd.f32 %v6476, %v6546
        %v6556 = vadd.f32 %v6477, %v6546
        %v6557 = vadd.f32 %v6478, %v6546
        %v6558 = vadd.f32 %v6479, %v6546
        %v6559 = vadd.f32 %v6480, %v6546
        %v6560 = vadd.f32 %v6481, %v6546
        %v6561 = vadd.f32 %v6482, %v6546
        %v6562 = vadd.f32 %v6483, %v6546
        %v6563 = vadd.f32 %v6484, %v6546
        %v6564 = vadd.f32 %v6485, %v6546
        %v6565 = vadd.f32 %v6486, %v6546
        %v6566 = vadd.f32 %v6487, %v6546
        %v6567 = vadd.f32 %v6488, %v6546
        %v6568 = vadd.f32 %v6489, %v6546
        %v6569 = vadd.f32 %v6490, %v6546
        %v6570 = vadd.f32 %v6491, %v6546
        %v6571 = vadd.f32 %v6492, %v6546
        %v6572 = vadd.f32 %v6493, %v6546
        %v6573 = vadd.f32 %v6494, %v6546
        %v6574 = vadd.f32 %v6495, %v6546
        %v6575 = vadd.f32 %v6496, %v6546
        %v6576 = vadd.f32 %v6497, %v6546
        %v6577 = vadd.f32 %v6498, %v6546
        %v6578 = vadd.f32 %v6499, %v6546
        %v6579 = vadd.f32 %v6500, %v6546
        %v6580 = vadd.f32 %v6501, %v6546
        %v6581 = vadd.f32 %v6502, %v6546
        %v6582 = vadd.f32 %v6503, %v6546
        %v6583 = vadd.f32 %v6504, %v6546
        %v6584 = vadd.f32 %v6548, %v6505
        %v6585 = vadd.f32 %v6549, %v6506
        %v6586 = vadd.f32 %v6550, %v6507
        %v6587 = vadd.f32 %v6551, %v6508
        %v6588 = vadd.f32 %v6552, %v6509
        %v6589 = vadd.f32 %v6553, %v6510
        %v6590 = vadd.f32 %v6554, %v6511
        %v6591 = vadd.f32 %v6555, %v6512
        %v6592 = vadd.f32 %v6556, %v6513
        %v6593 = vadd.f32 %v6557, %v6514
        %v6594 = vadd.f32 %v6558, %v6515
        %v6595 = vadd.f32 %v6559, %v6516
        %v6596 = vadd.f32 %v6560, %v6517
        %v6597 = vadd.f32 %v6561, %v6518
        %v6598 = vadd.f32 %v6562, %v6519
        %v6599 = vadd.f32 %v6563, %v6520
        %v6600 = vadd.f32 %v6564, %v6521
        %v6601 = vadd.f32 %v6565, %v6522
        %v6602 = vadd.f32 %v6566, %v6523
        %v6603 = vadd.f32 %v6567, %v6524
        %v6604 = vadd.f32 %v6568, %v6525
        %v6605 = vadd.f32 %v6569, %v6526
        %v6606 = vadd.f32 %v6570, %v6527
        %v6607 = vadd.f32 %v6571, %v6528
        %v6608 = vadd.f32 %v6572, %v6529
        %v6609 = vadd.f32 %v6573, %v6530
        %v6610 = vadd.f32 %v6574, %v6531
        %v6611 = vadd.f32 %v6575, %v6532
        %v6612 = vadd.f32 %v6576, %v6533
        %v6613 = vadd.f32 %v6577, %v6534
        %v6614 = vadd.f32 %v6578, %v6535
        %v6615 = vadd.f32 %v6579, %v6536
        %v6616 = vadd.f32 %v6580, %v6537
        %v6617 = vadd.f32 %v6581, %v6538
        %v6618 = vadd.f32 %v6582, %v6539
        %v6619 = vadd.f32 %v6583, %v6540
        %v6620 = vmax.f32 %v6584, 0.0
        %v6621 = vmax.f32 %v6585, 0.0
        %v6622 = vmax.f32 %v6586, 0.0
        %v6623 = vmax.f32 %v6587, 0.0
        %v6624 = vmax.f32 %v6588, 0.0
        %v6625 = vmax.f32 %v6589, 0.0
        %v6626 = vmax.f32 %v6590, 0.0
        %v6627 = vmax.f32 %v6591, 0.0
        %v6628 = vmax.f32 %v6592, 0.0
        %v6629 = vmax.f32 %v6593, 0.0
        %v6630 = vmax.f32 %v6594, 0.0
        %v6631 = vmax.f32 %v6595, 0.0
        %v6632 = vmax.f32 %v6596, 0.0
        %v6633 = vmax.f32 %v6597, 0.0
        %v6634 = vmax.f32 %v6598, 0.0
        %v6635 = vmax.f32 %v6599, 0.0
        %v6636 = vmax.f32 %v6600, 0.0
        %v6637 = vmax.f32 %v6601, 0.0
        %v6638 = vmax.f32 %v6602, 0.0
        %v6639 = vmax.f32 %v6603, 0.0
        %v6640 = vmax.f32 %v6604, 0.0
        %v6641 = vmax.f32 %v6605, 0.0
        %v6642 = vmax.f32 %v6606, 0.0
        %v6643 = vmax.f32 %v6607, 0.0
        %v6644 = vmax.f32 %v6608, 0.0
        %v6645 = vmax.f32 %v6609, 0.0
        %v6646 = vmax.f32 %v6610, 0.0
        %v6647 = vmax.f32 %v6611, 0.0
        %v6648 = vmax.f32 %v6612, 0.0
        %v6649 = vmax.f32 %v6613, 0.0
        %v6650 = vmax.f32 %v6614, 0.0
        %v6651 = vmax.f32 %v6615, 0.0
        %v6652 = vmax.f32 %v6616, 0.0
        %v6653 = vmax.f32 %v6617, 0.0
        %v6654 = vmax.f32 %v6618, 0.0
        %v6655 = vmax.f32 %v6619, 0.0
        %6656 = vst [vmem:[%s298] sm:$0xff] %v6620
        %6657 = vst [vmem:[%s298 + $0x8] sm:$0xff] %v6621
        %6658 = vst [vmem:[%s298 + $0x10] sm:$0xff] %v6622
        %6659 = vst [vmem:[%s298 + $0x18] sm:$0xff] %v6623
        %6660 = vst [vmem:[%s298 + $0x20] sm:$0xff] %v6624
        %6661 = vst [vmem:[%s298 + $0x28] sm:$0xff] %v6625
        %6662 = vst [vmem:[%s298 + $0x30] sm:$0xff] %v6626
        %6663 = vst [vmem:[%s298 + $0x38] sm:$0xff] %v6627
        %6664 = vst [vmem:[%s298 + $0x40] sm:$0xff] %v6628
        %6665 = vst [vmem:[%s298 + $0x48] sm:$0xff] %v6629
        %6666 = vst [vmem:[%s298 + $0x50] sm:$0xff] %v6630
        %6667 = vst [vmem:[%s298 + $0x58] sm:$0xff] %v6631
        %6668 = vst [vmem:[%s298 + $0x60] sm:$0xff] %v6632
        %6669 = vst [vmem:[%s298 + $0x68] sm:$0xff] %v6633
        %6670 = vst [vmem:[%s298 + $0x70] sm:$0xff] %v6634
        %6671 = vst [vmem:[%s298 + $0x78] sm:$0xff] %v6635
        %6672 = vst [vmem:[%s298 + $0x80] sm:$0xff] %v6636
        %6673 = vst [vmem:[%s298 + $0x88] sm:$0xff] %v6637
        %6674 = vst [vmem:[%s298 + $0x90] sm:$0xff] %v6638
        %6675 = vst [vmem:[%s298 + $0x98] sm:$0xff] %v6639
        %6676 = vst [vmem:[%s298 + $0xa0] sm:$0xff] %v6640
        %6677 = vst [vmem:[%s298 + $0xa8] sm:$0xff] %v6641
        %6678 = vst [vmem:[%s298 + $0xb0] sm:$0xff] %v6642
        %6679 = vst [vmem:[%s298 + $0xb8] sm:$0xff] %v6643
        %6680 = vst [vmem:[%s298 + $0xc0] sm:$0xff] %v6644
        %6681 = vst [vmem:[%s298 + $0xc8] sm:$0xff] %v6645
        %6682 = vst [vmem:[%s298 + $0xd0] sm:$0xff] %v6646
        %6683 = vst [vmem:[%s298 + $0xd8] sm:$0xff] %v6647
        %6684 = vst [vmem:[%s298 + $0xe0] sm:$0xff] %v6648
        %6685 = vst [vmem:[%s298 + $0xe8] sm:$0xff] %v6649
        %6686 = vst [vmem:[%s298 + $0xf0] sm:$0xff] %v6650
        %6687 = vst [vmem:[%s298 + $0xf8] sm:$0xff] %v6651
        %6688 = vst [vmem:[%s298 + $0x100] sm:$0xff] %v6652
        %6689 = vst [vmem:[%s298 + $0x108] sm:$0xff] %v6653
        %6690 = vst [vmem:[%s298 + $0x110] sm:$0xff] %v6654
        %6691 = vst [vmem:[%s298 + $0x118] sm:$0xff] %v6655
        %s6692 = sand.u32 %s163, 1
        %s6693 = scalar_lea.sflag [#allocation5], %s6692
        %s6694 = sand.u32 %s163, 1
        %s6695 = smul.addr %s6694, 288
        %s6696 = scalar_lea.vmem [#allocation9], %s6695
        // Predicated region
        $region57: #{tpu_custom_call.1} parent=43 // pred_check
          %p6697 = pneg %p173
        $region58: #{tpu_custom_call.1} parent=43 // pred_check_branch
          %6699 = sbr.rel (%p6697) target = $region60
        $region59: #{tpu_custom_call.1} parent=43 // pred_region
          %s6701 = ssub.s32 4608, 4608
          %6702 = vsyncadd %s6693, %s6701
          %s6703 = smul.addr %s24, 36
          %s6704 = smul.addr %s6703, 128
          %s6705 = scalar_lea.hbm %s6, %s6704
          %s6706 = sshll.u32 %s6696, 4
          %s6707 = int_to_ptr.vmem [resolvable:$true] %s6706
          %6712 = dma.vmem_to_hbm [thread:$0]  %s6707, 4608, %s6705, %s6693, 128, 128, 8
        $region60: #{tpu_custom_call.1} parent=43 // pred_fallthru
          _
      $region44: #{tpu_custom_call.1} parent=5 // pred_fallthru
        _
      %p6713 = scmp.le.s32.totalorder 2, %s19
      // Predicated region
      $region61: #{tpu_custom_call.1} parent=5 // pred_check
        %p6714 = pneg %p6713
      $region62: #{tpu_custom_call.1} parent=5 // pred_check_branch
        %6716 = sbr.rel (%p6714) target = $region64
      $region63: #{tpu_custom_call.1} parent=5 // pred_region
        %s6717 = ssub.s32 %s19, 2
        // Predicated region
        $region65: #{tpu_custom_call.1} parent=63 // pred_check
          %p6718 = pneg %p179
        $region66: #{tpu_custom_call.1} parent=63 // pred_check_branch
          %6720 = sbr.rel (%p6718) target = $region68
        $region67: #{tpu_custom_call.1} parent=63 // pred_region
          %s6721 = sand.u32 %s164, 1
          %s6722 = scalar_lea.sflag [#allocation5], %s6721
          %s6723 = sand.u32 %s164, 1
          %s6724 = smul.addr %s6723, 288
          %s6725 = scalar_lea.vmem [#allocation9], %s6724
          %6726 = dma.done %s6722, 4608
        $region68: #{tpu_custom_call.1} parent=63 // pred_fallthru
          _
      $region64: #{tpu_custom_call.1} parent=5 // pred_fallthru
        _
    $region6: #{tpu_custom_call.1} parent=1 // loop_footer
      %s23 = sadd.s32 1, %s19
    $region7: #{tpu_custom_call.1} parent=1 // loop_footer_branch
      %18 = sbr.rel target = $region3
    $region8: #{tpu_custom_call.1} parent=1 // loop_exit
      _
    %6727 = vsyncpa [#allocation4], 1
    %s6728 = scalar_lea.sflag [#allocation4], 1
    %6729 = vsyncpa %s6728, 1
    %6730 = vsyncpa [#allocation7], 1
    %6731 = vsyncpa [#allocation5], 1
    %s6732 = scalar_lea.sflag [#allocation5], 1
    %6733 = vsyncpa %s6732, 1

</llo_original>
